<compile_context>
chip_gen: v5e
topology: v5e:2x2
jax: 0.10.0
libtpu: 0.0.40
codegen_flags: <defaults>
</compile_context>

<pallas_src>
import math
import jax
import jax.numpy as jnp
from jax.experimental import pallas as pl
from jax.experimental.pallas import tpu as pltpu  # noqa: F401  (imported per convention)

BATCH = 2
SEQ = 8
DIM = 128          # dim_embedding (exactly one 128-lane tile -> lane-dense)
DIM_FF = 256       # dim_ff
NUM_HEADS = 8
HEAD_DIM = DIM // NUM_HEADS
LN_EPS = 1e-5
_SCALE = 1.0 / math.sqrt(HEAD_DIM)

BS = BATCH * SEQ          # flattened tokens
BH = BATCH * NUM_HEADS    # merged (batch, head) einsum batch dim


# ---------------------------------------------------------------- kernel ----

def _layer_norm(x, gamma, beta):
    mean = jnp.mean(x, axis=-1, keepdims=True)
    var = jnp.mean((x - mean) ** 2, axis=-1, keepdims=True)
    return (x - mean) * jax.lax.rsqrt(var + LN_EPS) * gamma + beta


def _rep_over_batch(w):
    """(H, a, b) -> (B*H, a, b): replicate over batch using leading-dim ops only."""
    return jnp.broadcast_to(w[None], (BATCH,) + w.shape).reshape((BH,) + w.shape[1:])


def _attn_ln_block(inp2, res2, wqkv_ref, wo_ref, bqkv_ref, vec_ref):
    """LayerNorm(MultiHeadSelfAttn(inp2) + res2).  inp2/res2: (B*S, D) f32.

    wqkv_ref: (3, H, D, hd)   stacked per-head Q/K/V weights (one DMA)
    wo_ref:   (H, hd, D)      per-head output-projection rows
    bqkv_ref: (3, B*H, 1, hd) per-head Q/K/V biases, pre-replicated over batch
    vec_ref:  (3, 1, D)       [bo, gamma, beta]
    """
    # Tokens replicated over heads: (B*S, D) -> (B*H, S, D)  (leading-dim reshapes only)
    x3 = inp2.reshape(BATCH, SEQ, DIM)
    x_rep = jnp.broadcast_to(x3[:, None], (BATCH, NUM_HEADS, SEQ, DIM)
                             ).reshape(BH, SEQ, DIM)

    def proj(i):  # head-major projection -> (B*H, S, hd)
        w = _rep_over_batch(wqkv_ref[i])                       # (B*H, D, hd)
        p = jnp.einsum("nsd,ndk->nsk", x_rep, w,
                       preferred_element_type=jnp.float32)
        return p + bqkv_ref[i]                                 # bias (B*H, 1, hd)

    q, k, v = proj(0), proj(1), proj(2)

    scores = jnp.einsum("nqd,nkd->nqk", q, k,
                        preferred_element_type=jnp.float32) * _SCALE     # (B*H, S, S)
    scores = scores - jnp.max(scores, axis=-1, keepdims=True)
    e = jnp.exp(scores)
    probs = e * pl.reciprocal(jnp.sum(e, axis=-1, keepdims=True), approx=True)
    ctx = jnp.einsum("nqk,nkd->nqd", probs, v,
                     preferred_element_type=jnp.float32)                 # (B*H, S, hd)

    # Output projection per head, then sum over heads (replaces the lane concat).
    wo_rep = _rep_over_batch(wo_ref[...])                                # (B*H, hd, D)
    per_head = jnp.einsum("nsd,nde->nse", ctx, wo_rep,
                          preferred_element_type=jnp.float32)            # (B*H, S, D)
    attn = jnp.sum(per_head.reshape(BATCH, NUM_HEADS, SEQ, DIM), axis=1
                   ).reshape(BS, DIM) + vec_ref[0]                       # + bo
    return _layer_norm(attn + res2, vec_ref[1], vec_ref[2])


def _decoder_layer_kernel(x_ref, enc_ref,
                          a1_wqkv, a1_wo, a1_bqkv, a1_vec,
                          a2_wqkv, a2_wo, a2_bqkv, a2_vec,
                          f_w1, f_b1, f_w2, f_vec,
                          out_ref):
    x2 = x_ref[...]                       # (B*S, D)
    enc2 = enc_ref[...]                   # (B*S, D)

    y1 = _attn_ln_block(x2, x2, a1_wqkv, a1_wo, a1_bqkv, a1_vec)
    y2 = _attn_ln_block(enc2, y1, a2_wqkv, a2_wo, a2_bqkv, a2_vec)

    h = jnp.maximum(jnp.dot(y2, f_w1[...], preferred_element_type=jnp.float32)
                    + f_b1[...], 0.0)
    ff = jnp.dot(h, f_w2[...], preferred_element_type=jnp.float32) + f_vec[0]
    out_ref[...] = _layer_norm(ff + y2, f_vec[1], f_vec[2]).astype(out_ref.dtype)


# ----------------------------------------------------- host-side param prep ---

def _pack_attn(p):
    def head_major(w):   # (D, D) -> (H, D, hd); head h owns output cols [h*hd:(h+1)*hd]
        return w.reshape(DIM, NUM_HEADS, HEAD_DIM).transpose(1, 0, 2)

    def bias_rep(b):     # (D,) -> (B*H, 1, hd), replicated over batch (n = b*H + h)
        return jnp.tile(b.reshape(NUM_HEADS, 1, HEAD_DIM), (BATCH, 1, 1))

    wqkv = jnp.stack([head_major(p["wq"]), head_major(p["wk"]), head_major(p["wv"])])
    wo = p["wo"].reshape(NUM_HEADS, HEAD_DIM, DIM)
    bqkv = jnp.stack([bias_rep(p["bq"]), bias_rep(p["bk"]), bias_rep(p["bv"])])
    vec = jnp.stack([p["bo"], p["gamma"], p["beta"]]).reshape(3, 1, DIM)
    return wqkv, wo, bqkv, vec


def _pack_ffn(p):
    vec = jnp.stack([p["b2"], p["gamma"], p["beta"]]).reshape(3, 1, DIM)
    return p["w1"], p["b1"].reshape(1, DIM_FF), p["w2"], vec


@jax.jit
def decoder_layer(x, encode_output, params):
    x2 = x.reshape(BS, DIM)
    enc2 = encode_output.reshape(BS, DIM)
    flat = (*_pack_attn(params["attn1"]), *_pack_attn(params["attn2"]),
            *_pack_ffn(params["ffn"]))
    out2 = pl.pallas_call(
        _decoder_layer_kernel,
        out_shape=jax.ShapeDtypeStruct((BS, DIM), jnp.float32),
    )(x2, enc2, *flat)
    return out2.reshape(BATCH, SEQ, DIM)


# --------------------------------------------------------------- parameters ---

def _uniform(key, shape, fan_in):
    bound = 1.0 / math.sqrt(fan_in)
    return jax.random.uniform(key, shape, jnp.float32, -bound, bound)


def init_params(key):
    ks = iter(jax.random.split(key, 24))

    def attn():
        return {
            "wq": _uniform(next(ks), (DIM, DIM), DIM), "bq": _uniform(next(ks), (DIM,), DIM),
            "wk": _uniform(next(ks), (DIM, DIM), DIM), "bk": _uniform(next(ks), (DIM,), DIM),
            "wv": _uniform(next(ks), (DIM, DIM), DIM), "bv": _uniform(next(ks), (DIM,), DIM),
            "wo": _uniform(next(ks), (DIM, DIM), DIM), "bo": _uniform(next(ks), (DIM,), DIM),
            "gamma": jnp.ones((DIM,), jnp.float32),
            "beta": jnp.zeros((DIM,), jnp.float32),
        }

    ffn = {
        "w1": _uniform(next(ks), (DIM, DIM_FF), DIM), "b1": _uniform(next(ks), (DIM_FF,), DIM),
        "w2": _uniform(next(ks), (DIM_FF, DIM), DIM_FF), "b2": _uniform(next(ks), (DIM,), DIM_FF),
        "gamma": jnp.ones((DIM,), jnp.float32),
        "beta": jnp.zeros((DIM,), jnp.float32),
    }
    return {"attn1": attn(), "attn2": attn(), "ffn": ffn}


# ------------------------------------------------------- pure-JAX reference ---

def _ref_ln(x, gamma, beta):
    mean = jnp.mean(x, axis=-1, keepdims=True)
    var = jnp.mean((x - mean) ** 2, axis=-1, keepdims=True)
    return (x - mean) * jax.lax.rsqrt(var + LN_EPS) * gamma + beta


def _ref_mha(x, p):
    B_, S_, D_ = x.shape
    q = x @ p["wq"] + p["bq"]
    k = x @ p["wk"] + p["bk"]
    v = x @ p["wv"] + p["bv"]

    def split(t):
        return t.reshape(B_, S_, NUM_HEADS, HEAD_DIM).transpose(0, 2, 1, 3)

    q, k, v = split(q), split(k), split(v)
    s = jnp.einsum("bhqd,bhkd->bhqk", q, k) * _SCALE
    a = jax.nn.softmax(s, axis=-1)
    o = jnp.einsum("bhqk,bhkd->bhqd", a, v).transpose(0, 2, 1, 3).reshape(B_, S_, D_)
    return o @ p["wo"] + p["bo"]


def _ref_decoder(x, enc, params):
    p1, p2, pf = params["attn1"], params["attn2"], params["ffn"]
    y1 = _ref_ln(_ref_mha(x, p1) + x, p1["gamma"], p1["beta"])
    y2 = _ref_ln(_ref_mha(enc, p2) + y1, p2["gamma"], p2["beta"])
    ff = jnp.maximum(y2 @ pf["w1"] + pf["b1"], 0.0) @ pf["w2"] + pf["b2"]
    return _ref_ln(ff + y2, pf["gamma"], pf["beta"])


# ------------------------------------------------------------------- main ----

if __name__ == "__main__":
    key = jax.random.PRNGKey(0)
    k_x, k_enc, k_p = jax.random.split(key, 3)
    x = jax.random.normal(k_x, (BATCH, SEQ, DIM), jnp.float32)
    encode_output = jax.random.normal(k_enc, (BATCH, SEQ, DIM), jnp.float32)
    params = init_params(k_p)

    out = jax.block_until_ready(decoder_layer(x, encode_output, params))
    ref = _ref_decoder(x, encode_output, params)

    assert out.shape == (BATCH, SEQ, DIM)
    # tolerance accounts for the approximate EUP reciprocal used in the softmax
    assert jnp.allclose(out, ref, rtol=3e-3, atol=3e-3), "mismatch vs pure-JAX reference"

    print("KERNEL_OK")
</pallas_src>

<mosaic_0001>
module attributes {stable_mosaic.version = 11 : i64} {
  func.func @_decoder_layer_kernel(%arg0: memref<16x128xf32, #tpu.memory_space<vmem>>, %arg1: memref<16x128xf32, #tpu.memory_space<vmem>>, %arg2: memref<3x8x128x16xf32, #tpu.memory_space<vmem>>, %arg3: memref<8x16x128xf32, #tpu.memory_space<vmem>>, %arg4: memref<3x16x1x16xf32, #tpu.memory_space<vmem>>, %arg5: memref<3x1x128xf32, #tpu.memory_space<vmem>>, %arg6: memref<3x8x128x16xf32, #tpu.memory_space<vmem>>, %arg7: memref<8x16x128xf32, #tpu.memory_space<vmem>>, %arg8: memref<3x16x1x16xf32, #tpu.memory_space<vmem>>, %arg9: memref<3x1x128xf32, #tpu.memory_space<vmem>>, %arg10: memref<128x256xf32, #tpu.memory_space<vmem>>, %arg11: memref<1x256xf32, #tpu.memory_space<vmem>>, %arg12: memref<256x128xf32, #tpu.memory_space<vmem>>, %arg13: memref<3x1x128xf32, #tpu.memory_space<vmem>>, %arg14: memref<16x128xf32, #tpu.memory_space<vmem>>) attributes {dimension_semantics = [], scalar_prefetch = 0 : i64, scratch_operands = 0 : i64, tpu.core_type = #tpu.core_type<tc>} {
    %c0 = arith.constant 0 : index
    %c0_0 = arith.constant 0 : index
    %0 = vector.load %arg0[%c0, %c0_0] : memref<16x128xf32, #tpu.memory_space<vmem>>, vector<16x128xf32>
    %c0_1 = arith.constant 0 : index
    %c0_2 = arith.constant 0 : index
    %1 = vector.load %arg1[%c0_1, %c0_2] : memref<16x128xf32, #tpu.memory_space<vmem>>, vector<16x128xf32>
    %2 = vector.shape_cast %0 : vector<16x128xf32> to vector<2x8x128xf32>
    %3 = vector.shape_cast %2 : vector<2x8x128xf32> to vector<2x1x8x128xf32>
    %4 = vector.shape_cast %3 : vector<2x1x8x128xf32> to vector<2x1x8x128xf32>
    %5 = vector.broadcast %4 : vector<2x1x8x128xf32> to vector<2x8x8x128xf32>
    %6 = vector.shape_cast %5 : vector<2x8x8x128xf32> to vector<16x8x128xf32>
    %c0_3 = arith.constant 0 : index
    %c0_4 = arith.constant 0 : index
    %c0_5 = arith.constant 0 : index
    %c0_6 = arith.constant 0 : index
    %7 = vector.load %arg2[%c0_3, %c0_4, %c0_5, %c0_6] : memref<3x8x128x16xf32, #tpu.memory_space<vmem>>, vector<1x8x128x16xf32>
    %8 = vector.shape_cast %7 : vector<1x8x128x16xf32> to vector<8x128x16xf32>
    %9 = vector.shape_cast %8 : vector<8x128x16xf32> to vector<1x8x128x16xf32>
    %10 = vector.shape_cast %9 : vector<1x8x128x16xf32> to vector<1x8x128x16xf32>
    %11 = vector.broadcast %10 : vector<1x8x128x16xf32> to vector<2x8x128x16xf32>
    %12 = vector.shape_cast %11 : vector<2x8x128x16xf32> to vector<16x128x16xf32>
    "tpu.trace_start"() <{level = 10 : i32, message = "nsd,ndk->nsk"}> : () -> ()
    %cst = arith.constant dense<0.000000e+00> : vector<16x8x16xf32>
    %13 = tpu.matmul %6, %12, %cst {dimension_numbers = #tpu.dot_dimension_numbers<[2], [1], [1], [2], [0, 0, 0, 1, 1, 2], [0], [0]>} : vector<16x8x128xf32>, vector<16x128x16xf32>, vector<16x8x16xf32> -> vector<16x8x16xf32>
    "tpu.trace_stop"() : () -> ()
    %c0_7 = arith.constant 0 : index
    %c0_8 = arith.constant 0 : index
    %c0_9 = arith.constant 0 : index
    %c0_10 = arith.constant 0 : index
    %14 = vector.load %arg4[%c0_7, %c0_8, %c0_9, %c0_10] : memref<3x16x1x16xf32, #tpu.memory_space<vmem>>, vector<1x16x1x16xf32>
    %15 = vector.shape_cast %14 : vector<1x16x1x16xf32> to vector<16x1x16xf32>
    %16 = vector.broadcast %15 : vector<16x1x16xf32> to vector<16x8x16xf32>
    %17 = arith.addf %13, %16 : vector<16x8x16xf32>
    %c1 = arith.constant 1 : index
    %c0_11 = arith.constant 0 : index
    %c0_12 = arith.constant 0 : index
    %c0_13 = arith.constant 0 : index
    %18 = vector.load %arg2[%c1, %c0_11, %c0_12, %c0_13] : memref<3x8x128x16xf32, #tpu.memory_space<vmem>>, vector<1x8x128x16xf32>
    %19 = vector.shape_cast %18 : vector<1x8x128x16xf32> to vector<8x128x16xf32>
    %20 = vector.shape_cast %19 : vector<8x128x16xf32> to vector<1x8x128x16xf32>
    %21 = vector.shape_cast %20 : vector<1x8x128x16xf32> to vector<1x8x128x16xf32>
    %22 = vector.broadcast %21 : vector<1x8x128x16xf32> to vector<2x8x128x16xf32>
    %23 = vector.shape_cast %22 : vector<2x8x128x16xf32> to vector<16x128x16xf32>
    "tpu.trace_start"() <{level = 10 : i32, message = "nsd,ndk->nsk"}> : () -> ()
    %cst_14 = arith.constant dense<0.000000e+00> : vector<16x8x16xf32>
    %24 = tpu.matmul %6, %23, %cst_14 {dimension_numbers = #tpu.dot_dimension_numbers<[2], [1], [1], [2], [0, 0, 0, 1, 1, 2], [0], [0]>} : vector<16x8x128xf32>, vector<16x128x16xf32>, vector<16x8x16xf32> -> vector<16x8x16xf32>
    "tpu.trace_stop"() : () -> ()
    %c1_15 = arith.constant 1 : index
    %c0_16 = arith.constant 0 : index
    %c0_17 = arith.constant 0 : index
    %c0_18 = arith.constant 0 : index
    %25 = vector.load %arg4[%c1_15, %c0_16, %c0_17, %c0_18] : memref<3x16x1x16xf32, #tpu.memory_space<vmem>>, vector<1x16x1x16xf32>
    %26 = vector.shape_cast %25 : vector<1x16x1x16xf32> to vector<16x1x16xf32>
    %27 = vector.broadcast %26 : vector<16x1x16xf32> to vector<16x8x16xf32>
    %28 = arith.addf %24, %27 : vector<16x8x16xf32>
    %c2 = arith.constant 2 : index
    %c0_19 = arith.constant 0 : index
    %c0_20 = arith.constant 0 : index
    %c0_21 = arith.constant 0 : index
    %29 = vector.load %arg2[%c2, %c0_19, %c0_20, %c0_21] : memref<3x8x128x16xf32, #tpu.memory_space<vmem>>, vector<1x8x128x16xf32>
    %30 = vector.shape_cast %29 : vector<1x8x128x16xf32> to vector<8x128x16xf32>
    %31 = vector.shape_cast %30 : vector<8x128x16xf32> to vector<1x8x128x16xf32>
    %32 = vector.shape_cast %31 : vector<1x8x128x16xf32> to vector<1x8x128x16xf32>
    %33 = vector.broadcast %32 : vector<1x8x128x16xf32> to vector<2x8x128x16xf32>
    %34 = vector.shape_cast %33 : vector<2x8x128x16xf32> to vector<16x128x16xf32>
    "tpu.trace_start"() <{level = 10 : i32, message = "nsd,ndk->nsk"}> : () -> ()
    %cst_22 = arith.constant dense<0.000000e+00> : vector<16x8x16xf32>
    %35 = tpu.matmul %6, %34, %cst_22 {dimension_numbers = #tpu.dot_dimension_numbers<[2], [1], [1], [2], [0, 0, 0, 1, 1, 2], [0], [0]>} : vector<16x8x128xf32>, vector<16x128x16xf32>, vector<16x8x16xf32> -> vector<16x8x16xf32>
    "tpu.trace_stop"() : () -> ()
    %c2_23 = arith.constant 2 : index
    %c0_24 = arith.constant 0 : index
    %c0_25 = arith.constant 0 : index
    %c0_26 = arith.constant 0 : index
    %36 = vector.load %arg4[%c2_23, %c0_24, %c0_25, %c0_26] : memref<3x16x1x16xf32, #tpu.memory_space<vmem>>, vector<1x16x1x16xf32>
    %37 = vector.shape_cast %36 : vector<1x16x1x16xf32> to vector<16x1x16xf32>
    %38 = vector.broadcast %37 : vector<16x1x16xf32> to vector<16x8x16xf32>
    %39 = arith.addf %35, %38 : vector<16x8x16xf32>
    "tpu.trace_start"() <{level = 10 : i32, message = "nqd,nkd->nqk"}> : () -> ()
    %cst_27 = arith.constant dense<0.000000e+00> : vector<16x8x8xf32>
    %40 = tpu.matmul %17, %28, %cst_27 {dimension_numbers = #tpu.dot_dimension_numbers<[2], [2], [1], [1], [0, 0, 0, 1, 1, 1], [0], [0]>} : vector<16x8x16xf32>, vector<16x8x16xf32>, vector<16x8x8xf32> -> vector<16x8x8xf32>
    "tpu.trace_stop"() : () -> ()
    %cst_28 = arith.constant 2.500000e-01 : f32
    %41 = vector.broadcast %cst_28 : f32 to vector<16x8x8xf32>
    %42 = arith.mulf %40, %41 : vector<16x8x8xf32>
    %cst_29 = arith.constant dense<0xFF800000> : vector<16x8xf32>
    %43 = vector.multi_reduction <maximumf>, %42, %cst_29 [2] : vector<16x8x8xf32> to vector<16x8xf32>
    %44 = vector.shape_cast %43 : vector<16x8xf32> to vector<16x8x1xf32>
    %45 = vector.broadcast %44 : vector<16x8x1xf32> to vector<16x8x8xf32>
    %46 = arith.subf %42, %45 : vector<16x8x8xf32>
    %47 = math.exp %46 : vector<16x8x8xf32>
    %cst_30 = arith.constant dense<0.000000e+00> : vector<16x8xf32>
    %48 = vector.multi_reduction <add>, %47, %cst_30 [2] : vector<16x8x8xf32> to vector<16x8xf32>
    %49 = vector.shape_cast %48 : vector<16x8xf32> to vector<16x8x1xf32>
    %50 = tpu.reciprocal %49 {approx = true} : vector<16x8x1xf32> -> vector<16x8x1xf32>
    %51 = vector.broadcast %50 : vector<16x8x1xf32> to vector<16x8x8xf32>
    %52 = arith.mulf %47, %51 : vector<16x8x8xf32>
    "tpu.trace_start"() <{level = 10 : i32, message = "nqk,nkd->nqd"}> : () -> ()
    %cst_31 = arith.constant dense<0.000000e+00> : vector<16x8x16xf32>
    %53 = tpu.matmul %52, %39, %cst_31 {dimension_numbers = #tpu.dot_dimension_numbers<[2], [1], [1], [2], [0, 0, 0, 1, 1, 2], [0], [0]>} : vector<16x8x8xf32>, vector<16x8x16xf32>, vector<16x8x16xf32> -> vector<16x8x16xf32>
    "tpu.trace_stop"() : () -> ()
    %c0_32 = arith.constant 0 : index
    %c0_33 = arith.constant 0 : index
    %c0_34 = arith.constant 0 : index
    %54 = vector.load %arg3[%c0_32, %c0_33, %c0_34] : memref<8x16x128xf32, #tpu.memory_space<vmem>>, vector<8x16x128xf32>
    %55 = vector.shape_cast %54 : vector<8x16x128xf32> to vector<1x8x16x128xf32>
    %56 = vector.shape_cast %55 : vector<1x8x16x128xf32> to vector<1x8x16x128xf32>
    %57 = vector.broadcast %56 : vector<1x8x16x128xf32> to vector<2x8x16x128xf32>
    %58 = vector.shape_cast %57 : vector<2x8x16x128xf32> to vector<16x16x128xf32>
    "tpu.trace_start"() <{level = 10 : i32, message = "nsd,nde->nse"}> : () -> ()
    %cst_35 = arith.constant dense<0.000000e+00> : vector<16x8x128xf32>
    %59 = tpu.matmul %53, %58, %cst_35 {dimension_numbers = #tpu.dot_dimension_numbers<[2], [1], [1], [2], [0, 0, 0, 1, 1, 2], [0], [0]>} : vector<16x8x16xf32>, vector<16x16x128xf32>, vector<16x8x128xf32> -> vector<16x8x128xf32>
    "tpu.trace_stop"() : () -> ()
    %60 = vector.shape_cast %59 : vector<16x8x128xf32> to vector<2x8x8x128xf32>
    %cst_36 = arith.constant dense<0.000000e+00> : vector<2x8x128xf32>
    %61 = vector.multi_reduction <add>, %60, %cst_36 [1] : vector<2x8x8x128xf32> to vector<2x8x128xf32>
    %62 = vector.shape_cast %61 : vector<2x8x128xf32> to vector<16x128xf32>
    %c0_37 = arith.constant 0 : index
    %c0_38 = arith.constant 0 : index
    %c0_39 = arith.constant 0 : index
    %63 = vector.load %arg5[%c0_37, %c0_38, %c0_39] : memref<3x1x128xf32, #tpu.memory_space<vmem>>, vector<1x1x128xf32>
    %64 = vector.shape_cast %63 : vector<1x1x128xf32> to vector<1x128xf32>
    %65 = vector.broadcast %64 : vector<1x128xf32> to vector<16x128xf32>
    %66 = arith.addf %62, %65 : vector<16x128xf32>
    %67 = arith.addf %66, %0 : vector<16x128xf32>
    %c1_40 = arith.constant 1 : index
    %c0_41 = arith.constant 0 : index
    %c0_42 = arith.constant 0 : index
    %68 = vector.load %arg5[%c1_40, %c0_41, %c0_42] : memref<3x1x128xf32, #tpu.memory_space<vmem>>, vector<1x1x128xf32>
    %69 = vector.shape_cast %68 : vector<1x1x128xf32> to vector<1x128xf32>
    %c2_43 = arith.constant 2 : index
    %c0_44 = arith.constant 0 : index
    %c0_45 = arith.constant 0 : index
    %70 = vector.load %arg5[%c2_43, %c0_44, %c0_45] : memref<3x1x128xf32, #tpu.memory_space<vmem>>, vector<1x1x128xf32>
    %71 = vector.shape_cast %70 : vector<1x1x128xf32> to vector<1x128xf32>
    %cst_46 = arith.constant dense<0.000000e+00> : vector<16xf32>
    %72 = vector.multi_reduction <add>, %67, %cst_46 [1] : vector<16x128xf32> to vector<16xf32>
    %73 = vector.shape_cast %72 : vector<16xf32> to vector<16x1xf32>
    %cst_47 = arith.constant 1.280000e+02 : f32
    %74 = vector.broadcast %cst_47 : f32 to vector<16x1xf32>
    %75 = arith.divf %73, %74 : vector<16x1xf32>
    %76 = vector.broadcast %75 : vector<16x1xf32> to vector<16x128xf32>
    %77 = arith.subf %67, %76 : vector<16x128xf32>
    %78 = arith.mulf %77, %77 : vector<16x128xf32>
    %cst_48 = arith.constant dense<0.000000e+00> : vector<16xf32>
    %79 = vector.multi_reduction <add>, %78, %cst_48 [1] : vector<16x128xf32> to vector<16xf32>
    %80 = vector.shape_cast %79 : vector<16xf32> to vector<16x1xf32>
    %cst_49 = arith.constant 1.280000e+02 : f32
    %81 = vector.broadcast %cst_49 : f32 to vector<16x1xf32>
    %82 = arith.divf %80, %81 : vector<16x1xf32>
    %83 = vector.broadcast %75 : vector<16x1xf32> to vector<16x128xf32>
    %84 = arith.subf %67, %83 : vector<16x128xf32>
    %cst_50 = arith.constant 9.99999974E-6 : f32
    %85 = vector.broadcast %cst_50 : f32 to vector<16x1xf32>
    %86 = arith.addf %82, %85 : vector<16x1xf32>
    %87 = math.rsqrt %86 : vector<16x1xf32>
    %88 = vector.broadcast %87 : vector<16x1xf32> to vector<16x128xf32>
    %89 = arith.mulf %84, %88 : vector<16x128xf32>
    %90 = vector.broadcast %69 : vector<1x128xf32> to vector<16x128xf32>
    %91 = arith.mulf %89, %90 : vector<16x128xf32>
    %92 = vector.broadcast %71 : vector<1x128xf32> to vector<16x128xf32>
    %93 = arith.addf %91, %92 : vector<16x128xf32>
    %94 = vector.shape_cast %1 : vector<16x128xf32> to vector<2x8x128xf32>
    %95 = vector.shape_cast %94 : vector<2x8x128xf32> to vector<2x1x8x128xf32>
    %96 = vector.shape_cast %95 : vector<2x1x8x128xf32> to vector<2x1x8x128xf32>
    %97 = vector.broadcast %96 : vector<2x1x8x128xf32> to vector<2x8x8x128xf32>
    %98 = vector.shape_cast %97 : vector<2x8x8x128xf32> to vector<16x8x128xf32>
    %c0_51 = arith.constant 0 : index
    %c0_52 = arith.constant 0 : index
    %c0_53 = arith.constant 0 : index
    %c0_54 = arith.constant 0 : index
    %99 = vector.load %arg6[%c0_51, %c0_52, %c0_53, %c0_54] : memref<3x8x128x16xf32, #tpu.memory_space<vmem>>, vector<1x8x128x16xf32>
    %100 = vector.shape_cast %99 : vector<1x8x128x16xf32> to vector<8x128x16xf32>
    %101 = vector.shape_cast %100 : vector<8x128x16xf32> to vector<1x8x128x16xf32>
    %102 = vector.shape_cast %101 : vector<1x8x128x16xf32> to vector<1x8x128x16xf32>
    %103 = vector.broadcast %102 : vector<1x8x128x16xf32> to vector<2x8x128x16xf32>
    %104 = vector.shape_cast %103 : vector<2x8x128x16xf32> to vector<16x128x16xf32>
    "tpu.trace_start"() <{level = 10 : i32, message = "nsd,ndk->nsk"}> : () -> ()
    %cst_55 = arith.constant dense<0.000000e+00> : vector<16x8x16xf32>
    %105 = tpu.matmul %98, %104, %cst_55 {dimension_numbers = #tpu.dot_dimension_numbers<[2], [1], [1], [2], [0, 0, 0, 1, 1, 2], [0], [0]>} : vector<16x8x128xf32>, vector<16x128x16xf32>, vector<16x8x16xf32> -> vector<16x8x16xf32>
    "tpu.trace_stop"() : () -> ()
    %c0_56 = arith.constant 0 : index
    %c0_57 = arith.constant 0 : index
    %c0_58 = arith.constant 0 : index
    %c0_59 = arith.constant 0 : index
    %106 = vector.load %arg8[%c0_56, %c0_57, %c0_58, %c0_59] : memref<3x16x1x16xf32, #tpu.memory_space<vmem>>, vector<1x16x1x16xf32>
    %107 = vector.shape_cast %106 : vector<1x16x1x16xf32> to vector<16x1x16xf32>
    %108 = vector.broadcast %107 : vector<16x1x16xf32> to vector<16x8x16xf32>
    %109 = arith.addf %105, %108 : vector<16x8x16xf32>
    %c1_60 = arith.constant 1 : index
    %c0_61 = arith.constant 0 : index
    %c0_62 = arith.constant 0 : index
    %c0_63 = arith.constant 0 : index
    %110 = vector.load %arg6[%c1_60, %c0_61, %c0_62, %c0_63] : memref<3x8x128x16xf32, #tpu.memory_space<vmem>>, vector<1x8x128x16xf32>
    %111 = vector.shape_cast %110 : vector<1x8x128x16xf32> to vector<8x128x16xf32>
    %112 = vector.shape_cast %111 : vector<8x128x16xf32> to vector<1x8x128x16xf32>
    %113 = vector.shape_cast %112 : vector<1x8x128x16xf32> to vector<1x8x128x16xf32>
    %114 = vector.broadcast %113 : vector<1x8x128x16xf32> to vector<2x8x128x16xf32>
    %115 = vector.shape_cast %114 : vector<2x8x128x16xf32> to vector<16x128x16xf32>
    "tpu.trace_start"() <{level = 10 : i32, message = "nsd,ndk->nsk"}> : () -> ()
    %cst_64 = arith.constant dense<0.000000e+00> : vector<16x8x16xf32>
    %116 = tpu.matmul %98, %115, %cst_64 {dimension_numbers = #tpu.dot_dimension_numbers<[2], [1], [1], [2], [0, 0, 0, 1, 1, 2], [0], [0]>} : vector<16x8x128xf32>, vector<16x128x16xf32>, vector<16x8x16xf32> -> vector<16x8x16xf32>
    "tpu.trace_stop"() : () -> ()
    %c1_65 = arith.constant 1 : index
    %c0_66 = arith.constant 0 : index
    %c0_67 = arith.constant 0 : index
    %c0_68 = arith.constant 0 : index
    %117 = vector.load %arg8[%c1_65, %c0_66, %c0_67, %c0_68] : memref<3x16x1x16xf32, #tpu.memory_space<vmem>>, vector<1x16x1x16xf32>
    %118 = vector.shape_cast %117 : vector<1x16x1x16xf32> to vector<16x1x16xf32>
    %119 = vector.broadcast %118 : vector<16x1x16xf32> to vector<16x8x16xf32>
    %120 = arith.addf %116, %119 : vector<16x8x16xf32>
    %c2_69 = arith.constant 2 : index
    %c0_70 = arith.constant 0 : index
    %c0_71 = arith.constant 0 : index
    %c0_72 = arith.constant 0 : index
    %121 = vector.load %arg6[%c2_69, %c0_70, %c0_71, %c0_72] : memref<3x8x128x16xf32, #tpu.memory_space<vmem>>, vector<1x8x128x16xf32>
    %122 = vector.shape_cast %121 : vector<1x8x128x16xf32> to vector<8x128x16xf32>
    %123 = vector.shape_cast %122 : vector<8x128x16xf32> to vector<1x8x128x16xf32>
    %124 = vector.shape_cast %123 : vector<1x8x128x16xf32> to vector<1x8x128x16xf32>
    %125 = vector.broadcast %124 : vector<1x8x128x16xf32> to vector<2x8x128x16xf32>
    %126 = vector.shape_cast %125 : vector<2x8x128x16xf32> to vector<16x128x16xf32>
    "tpu.trace_start"() <{level = 10 : i32, message = "nsd,ndk->nsk"}> : () -> ()
    %cst_73 = arith.constant dense<0.000000e+00> : vector<16x8x16xf32>
    %127 = tpu.matmul %98, %126, %cst_73 {dimension_numbers = #tpu.dot_dimension_numbers<[2], [1], [1], [2], [0, 0, 0, 1, 1, 2], [0], [0]>} : vector<16x8x128xf32>, vector<16x128x16xf32>, vector<16x8x16xf32> -> vector<16x8x16xf32>
    "tpu.trace_stop"() : () -> ()
    %c2_74 = arith.constant 2 : index
    %c0_75 = arith.constant 0 : index
    %c0_76 = arith.constant 0 : index
    %c0_77 = arith.constant 0 : index
    %128 = vector.load %arg8[%c2_74, %c0_75, %c0_76, %c0_77] : memref<3x16x1x16xf32, #tpu.memory_space<vmem>>, vector<1x16x1x16xf32>
    %129 = vector.shape_cast %128 : vector<1x16x1x16xf32> to vector<16x1x16xf32>
    %130 = vector.broadcast %129 : vector<16x1x16xf32> to vector<16x8x16xf32>
    %131 = arith.addf %127, %130 : vector<16x8x16xf32>
    "tpu.trace_start"() <{level = 10 : i32, message = "nqd,nkd->nqk"}> : () -> ()
    %cst_78 = arith.constant dense<0.000000e+00> : vector<16x8x8xf32>
    %132 = tpu.matmul %109, %120, %cst_78 {dimension_numbers = #tpu.dot_dimension_numbers<[2], [2], [1], [1], [0, 0, 0, 1, 1, 1], [0], [0]>} : vector<16x8x16xf32>, vector<16x8x16xf32>, vector<16x8x8xf32> -> vector<16x8x8xf32>
    "tpu.trace_stop"() : () -> ()
    %cst_79 = arith.constant 2.500000e-01 : f32
    %133 = vector.broadcast %cst_79 : f32 to vector<16x8x8xf32>
    %134 = arith.mulf %132, %133 : vector<16x8x8xf32>
    %cst_80 = arith.constant dense<0xFF800000> : vector<16x8xf32>
    %135 = vector.multi_reduction <maximumf>, %134, %cst_80 [2] : vector<16x8x8xf32> to vector<16x8xf32>
    %136 = vector.shape_cast %135 : vector<16x8xf32> to vector<16x8x1xf32>
    %137 = vector.broadcast %136 : vector<16x8x1xf32> to vector<16x8x8xf32>
    %138 = arith.subf %134, %137 : vector<16x8x8xf32>
    %139 = math.exp %138 : vector<16x8x8xf32>
    %cst_81 = arith.constant dense<0.000000e+00> : vector<16x8xf32>
    %140 = vector.multi_reduction <add>, %139, %cst_81 [2] : vector<16x8x8xf32> to vector<16x8xf32>
    %141 = vector.shape_cast %140 : vector<16x8xf32> to vector<16x8x1xf32>
    %142 = tpu.reciprocal %141 {approx = true} : vector<16x8x1xf32> -> vector<16x8x1xf32>
    %143 = vector.broadcast %142 : vector<16x8x1xf32> to vector<16x8x8xf32>
    %144 = arith.mulf %139, %143 : vector<16x8x8xf32>
    "tpu.trace_start"() <{level = 10 : i32, message = "nqk,nkd->nqd"}> : () -> ()
    %cst_82 = arith.constant dense<0.000000e+00> : vector<16x8x16xf32>
    %145 = tpu.matmul %144, %131, %cst_82 {dimension_numbers = #tpu.dot_dimension_numbers<[2], [1], [1], [2], [0, 0, 0, 1, 1, 2], [0], [0]>} : vector<16x8x8xf32>, vector<16x8x16xf32>, vector<16x8x16xf32> -> vector<16x8x16xf32>
    "tpu.trace_stop"() : () -> ()
    %c0_83 = arith.constant 0 : index
    %c0_84 = arith.constant 0 : index
    %c0_85 = arith.constant 0 : index
    %146 = vector.load %arg7[%c0_83, %c0_84, %c0_85] : memref<8x16x128xf32, #tpu.memory_space<vmem>>, vector<8x16x128xf32>
    %147 = vector.shape_cast %146 : vector<8x16x128xf32> to vector<1x8x16x128xf32>
    %148 = vector.shape_cast %147 : vector<1x8x16x128xf32> to vector<1x8x16x128xf32>
    %149 = vector.broadcast %148 : vector<1x8x16x128xf32> to vector<2x8x16x128xf32>
    %150 = vector.shape_cast %149 : vector<2x8x16x128xf32> to vector<16x16x128xf32>
    "tpu.trace_start"() <{level = 10 : i32, message = "nsd,nde->nse"}> : () -> ()
    %cst_86 = arith.constant dense<0.000000e+00> : vector<16x8x128xf32>
    %151 = tpu.matmul %145, %150, %cst_86 {dimension_numbers = #tpu.dot_dimension_numbers<[2], [1], [1], [2], [0, 0, 0, 1, 1, 2], [0], [0]>} : vector<16x8x16xf32>, vector<16x16x128xf32>, vector<16x8x128xf32> -> vector<16x8x128xf32>
    "tpu.trace_stop"() : () -> ()
    %152 = vector.shape_cast %151 : vector<16x8x128xf32> to vector<2x8x8x128xf32>
    %cst_87 = arith.constant dense<0.000000e+00> : vector<2x8x128xf32>
    %153 = vector.multi_reduction <add>, %152, %cst_87 [1] : vector<2x8x8x128xf32> to vector<2x8x128xf32>
    %154 = vector.shape_cast %153 : vector<2x8x128xf32> to vector<16x128xf32>
    %c0_88 = arith.constant 0 : index
    %c0_89 = arith.constant 0 : index
    %c0_90 = arith.constant 0 : index
    %155 = vector.load %arg9[%c0_88, %c0_89, %c0_90] : memref<3x1x128xf32, #tpu.memory_space<vmem>>, vector<1x1x128xf32>
    %156 = vector.shape_cast %155 : vector<1x1x128xf32> to vector<1x128xf32>
    %157 = vector.broadcast %156 : vector<1x128xf32> to vector<16x128xf32>
    %158 = arith.addf %154, %157 : vector<16x128xf32>
    %159 = arith.addf %158, %93 : vector<16x128xf32>
    %c1_91 = arith.constant 1 : index
    %c0_92 = arith.constant 0 : index
    %c0_93 = arith.constant 0 : index
    %160 = vector.load %arg9[%c1_91, %c0_92, %c0_93] : memref<3x1x128xf32, #tpu.memory_space<vmem>>, vector<1x1x128xf32>
    %161 = vector.shape_cast %160 : vector<1x1x128xf32> to vector<1x128xf32>
    %c2_94 = arith.constant 2 : index
    %c0_95 = arith.constant 0 : index
    %c0_96 = arith.constant 0 : index
    %162 = vector.load %arg9[%c2_94, %c0_95, %c0_96] : memref<3x1x128xf32, #tpu.memory_space<vmem>>, vector<1x1x128xf32>
    %163 = vector.shape_cast %162 : vector<1x1x128xf32> to vector<1x128xf32>
    %cst_97 = arith.constant dense<0.000000e+00> : vector<16xf32>
    %164 = vector.multi_reduction <add>, %159, %cst_97 [1] : vector<16x128xf32> to vector<16xf32>
    %165 = vector.shape_cast %164 : vector<16xf32> to vector<16x1xf32>
    %cst_98 = arith.constant 1.280000e+02 : f32
    %166 = vector.broadcast %cst_98 : f32 to vector<16x1xf32>
    %167 = arith.divf %165, %166 : vector<16x1xf32>
    %168 = vector.broadcast %167 : vector<16x1xf32> to vector<16x128xf32>
    %169 = arith.subf %159, %168 : vector<16x128xf32>
    %170 = arith.mulf %169, %169 : vector<16x128xf32>
    %cst_99 = arith.constant dense<0.000000e+00> : vector<16xf32>
    %171 = vector.multi_reduction <add>, %170, %cst_99 [1] : vector<16x128xf32> to vector<16xf32>
    %172 = vector.shape_cast %171 : vector<16xf32> to vector<16x1xf32>
    %cst_100 = arith.constant 1.280000e+02 : f32
    %173 = vector.broadcast %cst_100 : f32 to vector<16x1xf32>
    %174 = arith.divf %172, %173 : vector<16x1xf32>
    %175 = vector.broadcast %167 : vector<16x1xf32> to vector<16x128xf32>
    %176 = arith.subf %159, %175 : vector<16x128xf32>
    %cst_101 = arith.constant 9.99999974E-6 : f32
    %177 = vector.broadcast %cst_101 : f32 to vector<16x1xf32>
    %178 = arith.addf %174, %177 : vector<16x1xf32>
    %179 = math.rsqrt %178 : vector<16x1xf32>
    %180 = vector.broadcast %179 : vector<16x1xf32> to vector<16x128xf32>
    %181 = arith.mulf %176, %180 : vector<16x128xf32>
    %182 = vector.broadcast %161 : vector<1x128xf32> to vector<16x128xf32>
    %183 = arith.mulf %181, %182 : vector<16x128xf32>
    %184 = vector.broadcast %163 : vector<1x128xf32> to vector<16x128xf32>
    %185 = arith.addf %183, %184 : vector<16x128xf32>
    %c0_102 = arith.constant 0 : index
    %c0_103 = arith.constant 0 : index
    %186 = vector.load %arg10[%c0_102, %c0_103] : memref<128x256xf32, #tpu.memory_space<vmem>>, vector<128x256xf32>
    %cst_104 = arith.constant dense<0.000000e+00> : vector<16x256xf32>
    %187 = tpu.matmul %185, %186, %cst_104 {dimension_numbers = #tpu.dot_dimension_numbers<[1], [0], [0], [1], [0, 0, 1, 1], [], []>} : vector<16x128xf32>, vector<128x256xf32>, vector<16x256xf32> -> vector<16x256xf32>
    %c0_105 = arith.constant 0 : index
    %c0_106 = arith.constant 0 : index
    %188 = vector.load %arg11[%c0_105, %c0_106] : memref<1x256xf32, #tpu.memory_space<vmem>>, vector<1x256xf32>
    %189 = vector.broadcast %188 : vector<1x256xf32> to vector<16x256xf32>
    %190 = arith.addf %187, %189 : vector<16x256xf32>
    %cst_107 = arith.constant 0.000000e+00 : f32
    %191 = vector.broadcast %cst_107 : f32 to vector<16x256xf32>
    %192 = arith.maximumf %190, %191 : vector<16x256xf32>
    %c0_108 = arith.constant 0 : index
    %c0_109 = arith.constant 0 : index
    %193 = vector.load %arg12[%c0_108, %c0_109] : memref<256x128xf32, #tpu.memory_space<vmem>>, vector<256x128xf32>
    %cst_110 = arith.constant dense<0.000000e+00> : vector<16x128xf32>
    %194 = tpu.matmul %192, %193, %cst_110 {dimension_numbers = #tpu.dot_dimension_numbers<[1], [0], [0], [1], [0, 0, 1, 1], [], []>} : vector<16x256xf32>, vector<256x128xf32>, vector<16x128xf32> -> vector<16x128xf32>
    %c0_111 = arith.constant 0 : index
    %c0_112 = arith.constant 0 : index
    %c0_113 = arith.constant 0 : index
    %195 = vector.load %arg13[%c0_111, %c0_112, %c0_113] : memref<3x1x128xf32, #tpu.memory_space<vmem>>, vector<1x1x128xf32>
    %196 = vector.shape_cast %195 : vector<1x1x128xf32> to vector<1x128xf32>
    %197 = vector.broadcast %196 : vector<1x128xf32> to vector<16x128xf32>
    %198 = arith.addf %194, %197 : vector<16x128xf32>
    %199 = arith.addf %198, %185 : vector<16x128xf32>
    %c1_114 = arith.constant 1 : index
    %c0_115 = arith.constant 0 : index
    %c0_116 = arith.constant 0 : index
    %200 = vector.load %arg13[%c1_114, %c0_115, %c0_116] : memref<3x1x128xf32, #tpu.memory_space<vmem>>, vector<1x1x128xf32>
    %201 = vector.shape_cast %200 : vector<1x1x128xf32> to vector<1x128xf32>
    %c2_117 = arith.constant 2 : index
    %c0_118 = arith.constant 0 : index
    %c0_119 = arith.constant 0 : index
    %202 = vector.load %arg13[%c2_117, %c0_118, %c0_119] : memref<3x1x128xf32, #tpu.memory_space<vmem>>, vector<1x1x128xf32>
    %203 = vector.shape_cast %202 : vector<1x1x128xf32> to vector<1x128xf32>
    %cst_120 = arith.constant dense<0.000000e+00> : vector<16xf32>
    %204 = vector.multi_reduction <add>, %199, %cst_120 [1] : vector<16x128xf32> to vector<16xf32>
    %205 = vector.shape_cast %204 : vector<16xf32> to vector<16x1xf32>
    %cst_121 = arith.constant 1.280000e+02 : f32
    %206 = vector.broadcast %cst_121 : f32 to vector<16x1xf32>
    %207 = arith.divf %205, %206 : vector<16x1xf32>
    %208 = vector.broadcast %207 : vector<16x1xf32> to vector<16x128xf32>
    %209 = arith.subf %199, %208 : vector<16x128xf32>
    %210 = arith.mulf %209, %209 : vector<16x128xf32>
    %cst_122 = arith.constant dense<0.000000e+00> : vector<16xf32>
    %211 = vector.multi_reduction <add>, %210, %cst_122 [1] : vector<16x128xf32> to vector<16xf32>
    %212 = vector.shape_cast %211 : vector<16xf32> to vector<16x1xf32>
    %cst_123 = arith.constant 1.280000e+02 : f32
    %213 = vector.broadcast %cst_123 : f32 to vector<16x1xf32>
    %214 = arith.divf %212, %213 : vector<16x1xf32>
    %215 = vector.broadcast %207 : vector<16x1xf32> to vector<16x128xf32>
    %216 = arith.subf %199, %215 : vector<16x128xf32>
    %cst_124 = arith.constant 9.99999974E-6 : f32
    %217 = vector.broadcast %cst_124 : f32 to vector<16x1xf32>
    %218 = arith.addf %214, %217 : vector<16x1xf32>
    %219 = math.rsqrt %218 : vector<16x1xf32>
    %220 = vector.broadcast %219 : vector<16x1xf32> to vector<16x128xf32>
    %221 = arith.mulf %216, %220 : vector<16x128xf32>
    %222 = vector.broadcast %201 : vector<1x128xf32> to vector<16x128xf32>
    %223 = arith.mulf %221, %222 : vector<16x128xf32>
    %224 = vector.broadcast %203 : vector<1x128xf32> to vector<16x128xf32>
    %225 = arith.addf %223, %224 : vector<16x128xf32>
    %c0_125 = arith.constant 0 : index
    %c0_126 = arith.constant 0 : index
    %226 = vector.load %arg14[%c0_125, %c0_126] : memref<16x128xf32, #tpu.memory_space<vmem>>, vector<16x128xf32>
    tpu.vector_store %arg14[%c0_125, %c0_126], %225 {strides = array<i32>} : memref<16x128xf32, #tpu.memory_space<vmem>>, vector<16x128xf32>,
    return
  }
}

</mosaic_0001>

<llo_original>
// kernel: decoder_layer.1
$region0: #{decoder_layer.1}
  #allocation0 [shape = 'u32[]', space=smem, size = 0x4, offset = 0x4, fixed_abs, tag = 'smem constant byte address 0x4 - core index']
  #allocation1 [shape = 'u32[72,128]{1,0:T(1,128)}', space=vmem, size = 0x9000, scoped, tag = 'internal scratch']
  %s0 = inlined_call_operand.vmem [shape: f32[16,128], index: 0, kind: input, shape index: {}]
  %s1 = inlined_call_operand.vmem [shape: f32[16,128], index: 1, kind: input, shape index: {}]
  %s2 = inlined_call_operand.vmem [shape: f32[3,8,128,16], index: 2, kind: input, shape index: {}]
  %s3 = inlined_call_operand.vmem [shape: f32[8,16,128], index: 3, kind: input, shape index: {}]
  %s4 = inlined_call_operand.vmem [shape: f32[3,16,1,16], index: 4, kind: input, shape index: {}]
  %s5 = inlined_call_operand.vmem [shape: f32[3,1,128], index: 5, kind: input, shape index: {}]
  %s6 = inlined_call_operand.vmem [shape: f32[3,8,128,16], index: 6, kind: input, shape index: {}]
  %s7 = inlined_call_operand.vmem [shape: f32[8,16,128], index: 7, kind: input, shape index: {}]
  %s8 = inlined_call_operand.vmem [shape: f32[3,16,1,16], index: 8, kind: input, shape index: {}]
  %s9 = inlined_call_operand.vmem [shape: f32[3,1,128], index: 9, kind: input, shape index: {}]
  %s10 = inlined_call_operand.vmem [shape: f32[128,256], index: 10, kind: input, shape index: {}]
  %s11 = inlined_call_operand.vmem [shape: f32[1,256], index: 11, kind: input, shape index: {}]
  %s12 = inlined_call_operand.vmem [shape: f32[256,128], index: 12, kind: input, shape index: {}]
  %s13 = inlined_call_operand.vmem [shape: f32[3,1,128], index: 13, kind: input, shape index: {}]
  %s14 = inlined_call_operand.hbm [shape: f32[16,128], index: 14, kind: output, shape index: {}]
  %s15 = sld [smem:[#allocation0]]
  $region66: #{decoder_layer.1} parent=0
    _
  %s17 = ssub.s32 1, %s15
  %s18 = scalar_select 0, %s17, %s15
  $region1: #{decoder_layer.1} parent=0
    #allocation2 [shape = 'u8[8192]{0}', space=vmem, size = 0x2000, scoped, tag = 'output window, operand 0, single buffered']
    #allocation3 [shape = 's32[1]{0}', space=sflag, size = 0x4, scoped, tag = 'scoped memory for decoder_layer.1']
    %19 = vsyncpa [#allocation3], 0
    // Predicated region
    $region2: #{decoder_layer.1} parent=1 // pred_check
      _
    $region3: #{decoder_layer.1} parent=1 // pred_check_branch
      %21 = sbr.rel (0) target = $region5
    $region4: #{decoder_layer.1} parent=1 // pred_region
      _
    $region5: #{decoder_layer.1} parent=1 // pred_fallthru
      _
    // Predicated region
    $region6: #{decoder_layer.1} parent=1 // pred_check
      _
    $region7: #{decoder_layer.1} parent=1 // pred_check_branch
      %23 = sbr.rel (0) target = $region9
    $region8: #{decoder_layer.1} parent=1 // pred_region
      _
    $region9: #{decoder_layer.1} parent=1 // pred_fallthru
      _
    // Predicated region
    $region10: #{decoder_layer.1} parent=1 // pred_check
      _
    $region11: #{decoder_layer.1} parent=1 // pred_check_branch
      %25 = sbr.rel (0) target = $region13
    $region12: #{decoder_layer.1} parent=1 // pred_region
      _
    $region13: #{decoder_layer.1} parent=1 // pred_fallthru
      _
    // Predicated region
    $region14: #{decoder_layer.1} parent=1 // pred_check
      _
    $region15: #{decoder_layer.1} parent=1 // pred_check_branch
      %27 = sbr.rel (0) target = $region17
    $region16: #{decoder_layer.1} parent=1 // pred_region
      _
    $region17: #{decoder_layer.1} parent=1 // pred_fallthru
      _
    // Predicated region
    $region18: #{decoder_layer.1} parent=1 // pred_check
      _
    $region19: #{decoder_layer.1} parent=1 // pred_check_branch
      %29 = sbr.rel (0) target = $region21
    $region20: #{decoder_layer.1} parent=1 // pred_region
      _
    $region21: #{decoder_layer.1} parent=1 // pred_fallthru
      _
    // Predicated region
    $region22: #{decoder_layer.1} parent=1 // pred_check
      _
    $region23: #{decoder_layer.1} parent=1 // pred_check_branch
      %31 = sbr.rel (0) target = $region25
    $region24: #{decoder_layer.1} parent=1 // pred_region
      _
    $region25: #{decoder_layer.1} parent=1 // pred_fallthru
      _
    // Predicated region
    $region26: #{decoder_layer.1} parent=1 // pred_check
      _
    $region27: #{decoder_layer.1} parent=1 // pred_check_branch
      %33 = sbr.rel (0) target = $region29
    $region28: #{decoder_layer.1} parent=1 // pred_region
      _
    $region29: #{decoder_layer.1} parent=1 // pred_fallthru
      _
    // Predicated region
    $region30: #{decoder_layer.1} parent=1 // pred_check
      _
    $region31: #{decoder_layer.1} parent=1 // pred_check_branch
      %35 = sbr.rel (0) target = $region33
    $region32: #{decoder_layer.1} parent=1 // pred_region
      _
    $region33: #{decoder_layer.1} parent=1 // pred_fallthru
      _
    // Predicated region
    $region34: #{decoder_layer.1} parent=1 // pred_check
      _
    $region35: #{decoder_layer.1} parent=1 // pred_check_branch
      %37 = sbr.rel (0) target = $region37
    $region36: #{decoder_layer.1} parent=1 // pred_region
      _
    $region37: #{decoder_layer.1} parent=1 // pred_fallthru
      _
    // Predicated region
    $region38: #{decoder_layer.1} parent=1 // pred_check
      _
    $region39: #{decoder_layer.1} parent=1 // pred_check_branch
      %39 = sbr.rel (0) target = $region41
    $region40: #{decoder_layer.1} parent=1 // pred_region
      _
    $region41: #{decoder_layer.1} parent=1 // pred_fallthru
      _
    // Predicated region
    $region42: #{decoder_layer.1} parent=1 // pred_check
      _
    $region43: #{decoder_layer.1} parent=1 // pred_check_branch
      %41 = sbr.rel (0) target = $region45
    $region44: #{decoder_layer.1} parent=1 // pred_region
      _
    $region45: #{decoder_layer.1} parent=1 // pred_fallthru
      _
    // Predicated region
    $region46: #{decoder_layer.1} parent=1 // pred_check
      _
    $region47: #{decoder_layer.1} parent=1 // pred_check_branch
      %43 = sbr.rel (0) target = $region49
    $region48: #{decoder_layer.1} parent=1 // pred_region
      _
    $region49: #{decoder_layer.1} parent=1 // pred_fallthru
      _
    // Predicated region
    $region50: #{decoder_layer.1} parent=1 // pred_check
      _
    $region51: #{decoder_layer.1} parent=1 // pred_check_branch
      %45 = sbr.rel (0) target = $region53
    $region52: #{decoder_layer.1} parent=1 // pred_region
      _
    $region53: #{decoder_layer.1} parent=1 // pred_fallthru
      _
    // Predicated region
    $region54: #{decoder_layer.1} parent=1 // pred_check
      _
    $region55: #{decoder_layer.1} parent=1 // pred_check_branch
      %47 = sbr.rel (0) target = $region57
    $region56: #{decoder_layer.1} parent=1 // pred_region
      _
    $region57: #{decoder_layer.1} parent=1 // pred_fallthru
      _
    %v48 = vld [vmem:[%s0] sm:$0xff]
    %v49 = vld [vmem:[%s0 + $0x8] sm:$0xff]
    %v50 = vld [vmem:[%s1] sm:$0xff]
    %v51 = vld [vmem:[%s1 + $0x8] sm:$0xff]
    %v52 = vld [vmem:[%s2] sm:$0xff]
    %v53 = vld [vmem:[%s2 + $0x8] sm:$0xff]
    %v54 = vld [vmem:[%s2 + $0x10] sm:$0xff]
    %v55 = vld [vmem:[%s2 + $0x18] sm:$0xff]
    %v56 = vld [vmem:[%s2 + $0x20] sm:$0xff]
    %v57 = vld [vmem:[%s2 + $0x28] sm:$0xff]
    %v58 = vld [vmem:[%s2 + $0x30] sm:$0xff]
    %v59 = vld [vmem:[%s2 + $0x38] sm:$0xff]
    %v60 = vld [vmem:[%s2 + $0x40] sm:$0xff]
    %v61 = vld [vmem:[%s2 + $0x48] sm:$0xff]
    %v62 = vld [vmem:[%s2 + $0x50] sm:$0xff]
    %v63 = vld [vmem:[%s2 + $0x58] sm:$0xff]
    %v64 = vld [vmem:[%s2 + $0x60] sm:$0xff]
    %v65 = vld [vmem:[%s2 + $0x68] sm:$0xff]
    %v66 = vld [vmem:[%s2 + $0x70] sm:$0xff]
    %v67 = vld [vmem:[%s2 + $0x78] sm:$0xff]
    %v68 = vld [vmem:[%s2 + $0x80] sm:$0xff]
    %v69 = vld [vmem:[%s2 + $0x88] sm:$0xff]
    %v70 = vld [vmem:[%s2 + $0x90] sm:$0xff]
    %v71 = vld [vmem:[%s2 + $0x98] sm:$0xff]
    %v72 = vld [vmem:[%s2 + $0xa0] sm:$0xff]
    %v73 = vld [vmem:[%s2 + $0xa8] sm:$0xff]
    %v74 = vld [vmem:[%s2 + $0xb0] sm:$0xff]
    %v75 = vld [vmem:[%s2 + $0xb8] sm:$0xff]
    %v76 = vld [vmem:[%s2 + $0xc0] sm:$0xff]
    %v77 = vld [vmem:[%s2 + $0xc8] sm:$0xff]
    %v78 = vld [vmem:[%s2 + $0xd0] sm:$0xff]
    %v79 = vld [vmem:[%s2 + $0xd8] sm:$0xff]
    %v80 = vld [vmem:[%s2 + $0xe0] sm:$0xff]
    %v81 = vld [vmem:[%s2 + $0xe8] sm:$0xff]
    %v82 = vld [vmem:[%s2 + $0xf0] sm:$0xff]
    %v83 = vld [vmem:[%s2 + $0xf8] sm:$0xff]
    %v84 = vld [vmem:[%s2 + $0x100] sm:$0xff]
    %v85 = vld [vmem:[%s2 + $0x108] sm:$0xff]
    %v86 = vld [vmem:[%s2 + $0x110] sm:$0xff]
    %v87 = vld [vmem:[%s2 + $0x118] sm:$0xff]
    %v88 = vld [vmem:[%s2 + $0x120] sm:$0xff]
    %v89 = vld [vmem:[%s2 + $0x128] sm:$0xff]
    %v90 = vld [vmem:[%s2 + $0x130] sm:$0xff]
    %v91 = vld [vmem:[%s2 + $0x138] sm:$0xff]
    %v92 = vld [vmem:[%s2 + $0x140] sm:$0xff]
    %v93 = vld [vmem:[%s2 + $0x148] sm:$0xff]
    %v94 = vld [vmem:[%s2 + $0x150] sm:$0xff]
    %v95 = vld [vmem:[%s2 + $0x158] sm:$0xff]
    %v96 = vld [vmem:[%s2 + $0x160] sm:$0xff]
    %v97 = vld [vmem:[%s2 + $0x168] sm:$0xff]
    %v98 = vld [vmem:[%s2 + $0x170] sm:$0xff]
    %v99 = vld [vmem:[%s2 + $0x178] sm:$0xff]
    %v100 = vld [vmem:[%s2 + $0x180] sm:$0xff]
    %v101 = vld [vmem:[%s2 + $0x188] sm:$0xff]
    %v102 = vld [vmem:[%s2 + $0x190] sm:$0xff]
    %v103 = vld [vmem:[%s2 + $0x198] sm:$0xff]
    %v104 = vld [vmem:[%s2 + $0x1a0] sm:$0xff]
    %v105 = vld [vmem:[%s2 + $0x1a8] sm:$0xff]
    %v106 = vld [vmem:[%s2 + $0x1b0] sm:$0xff]
    %v107 = vld [vmem:[%s2 + $0x1b8] sm:$0xff]
    %v108 = vld [vmem:[%s2 + $0x1c0] sm:$0xff]
    %v109 = vld [vmem:[%s2 + $0x1c8] sm:$0xff]
    %v110 = vld [vmem:[%s2 + $0x1d0] sm:$0xff]
    %v111 = vld [vmem:[%s2 + $0x1d8] sm:$0xff]
    %v112 = vld [vmem:[%s2 + $0x1e0] sm:$0xff]
    %v113 = vld [vmem:[%s2 + $0x1e8] sm:$0xff]
    %v114 = vld [vmem:[%s2 + $0x1f0] sm:$0xff]
    %v115 = vld [vmem:[%s2 + $0x1f8] sm:$0xff]
    %v116 = vld [vmem:[%s2 + $0x200] sm:$0xff]
    %v117 = vld [vmem:[%s2 + $0x208] sm:$0xff]
    %v118 = vld [vmem:[%s2 + $0x210] sm:$0xff]
    %v119 = vld [vmem:[%s2 + $0x218] sm:$0xff]
    %v120 = vld [vmem:[%s2 + $0x220] sm:$0xff]
    %v121 = vld [vmem:[%s2 + $0x228] sm:$0xff]
    %v122 = vld [vmem:[%s2 + $0x230] sm:$0xff]
    %v123 = vld [vmem:[%s2 + $0x238] sm:$0xff]
    %v124 = vld [vmem:[%s2 + $0x240] sm:$0xff]
    %v125 = vld [vmem:[%s2 + $0x248] sm:$0xff]
    %v126 = vld [vmem:[%s2 + $0x250] sm:$0xff]
    %v127 = vld [vmem:[%s2 + $0x258] sm:$0xff]
    %v128 = vld [vmem:[%s2 + $0x260] sm:$0xff]
    %v129 = vld [vmem:[%s2 + $0x268] sm:$0xff]
    %v130 = vld [vmem:[%s2 + $0x270] sm:$0xff]
    %v131 = vld [vmem:[%s2 + $0x278] sm:$0xff]
    %v132 = vld [vmem:[%s2 + $0x280] sm:$0xff]
    %v133 = vld [vmem:[%s2 + $0x288] sm:$0xff]
    %v134 = vld [vmem:[%s2 + $0x290] sm:$0xff]
    %v135 = vld [vmem:[%s2 + $0x298] sm:$0xff]
    %v136 = vld [vmem:[%s2 + $0x2a0] sm:$0xff]
    %v137 = vld [vmem:[%s2 + $0x2a8] sm:$0xff]
    %v138 = vld [vmem:[%s2 + $0x2b0] sm:$0xff]
    %v139 = vld [vmem:[%s2 + $0x2b8] sm:$0xff]
    %v140 = vld [vmem:[%s2 + $0x2c0] sm:$0xff]
    %v141 = vld [vmem:[%s2 + $0x2c8] sm:$0xff]
    %v142 = vld [vmem:[%s2 + $0x2d0] sm:$0xff]
    %v143 = vld [vmem:[%s2 + $0x2d8] sm:$0xff]
    %v144 = vld [vmem:[%s2 + $0x2e0] sm:$0xff]
    %v145 = vld [vmem:[%s2 + $0x2e8] sm:$0xff]
    %v146 = vld [vmem:[%s2 + $0x2f0] sm:$0xff]
    %v147 = vld [vmem:[%s2 + $0x2f8] sm:$0xff]
    %v148 = vld [vmem:[%s2 + $0x300] sm:$0xff]
    %v149 = vld [vmem:[%s2 + $0x308] sm:$0xff]
    %v150 = vld [vmem:[%s2 + $0x310] sm:$0xff]
    %v151 = vld [vmem:[%s2 + $0x318] sm:$0xff]
    %v152 = vld [vmem:[%s2 + $0x320] sm:$0xff]
    %v153 = vld [vmem:[%s2 + $0x328] sm:$0xff]
    %v154 = vld [vmem:[%s2 + $0x330] sm:$0xff]
    %v155 = vld [vmem:[%s2 + $0x338] sm:$0xff]
    %v156 = vld [vmem:[%s2 + $0x340] sm:$0xff]
    %v157 = vld [vmem:[%s2 + $0x348] sm:$0xff]
    %v158 = vld [vmem:[%s2 + $0x350] sm:$0xff]
    %v159 = vld [vmem:[%s2 + $0x358] sm:$0xff]
    %v160 = vld [vmem:[%s2 + $0x360] sm:$0xff]
    %v161 = vld [vmem:[%s2 + $0x368] sm:$0xff]
    %v162 = vld [vmem:[%s2 + $0x370] sm:$0xff]
    %v163 = vld [vmem:[%s2 + $0x378] sm:$0xff]
    %v164 = vld [vmem:[%s2 + $0x380] sm:$0xff]
    %v165 = vld [vmem:[%s2 + $0x388] sm:$0xff]
    %v166 = vld [vmem:[%s2 + $0x390] sm:$0xff]
    %v167 = vld [vmem:[%s2 + $0x398] sm:$0xff]
    %v168 = vld [vmem:[%s2 + $0x3a0] sm:$0xff]
    %v169 = vld [vmem:[%s2 + $0x3a8] sm:$0xff]
    %v170 = vld [vmem:[%s2 + $0x3b0] sm:$0xff]
    %v171 = vld [vmem:[%s2 + $0x3b8] sm:$0xff]
    %v172 = vld [vmem:[%s2 + $0x3c0] sm:$0xff]
    %v173 = vld [vmem:[%s2 + $0x3c8] sm:$0xff]
    %v174 = vld [vmem:[%s2 + $0x3d0] sm:$0xff]
    %v175 = vld [vmem:[%s2 + $0x3d8] sm:$0xff]
    %v176 = vld [vmem:[%s2 + $0x3e0] sm:$0xff]
    %v177 = vld [vmem:[%s2 + $0x3e8] sm:$0xff]
    %v178 = vld [vmem:[%s2 + $0x3f0] sm:$0xff]
    %v179 = vld [vmem:[%s2 + $0x3f8] sm:$0xff]
    %v180 = vld [vmem:[%s4] sm:$0x1]
    %v181 = vld [vmem:[%s4 + $0x1] sm:$0x1]
    %v182 = vld [vmem:[%s4 + $0x2] sm:$0x1]
    %v183 = vld [vmem:[%s4 + $0x3] sm:$0x1]
    %v184 = vld [vmem:[%s4 + $0x4] sm:$0x1]
    %v185 = vld [vmem:[%s4 + $0x5] sm:$0x1]
    %v186 = vld [vmem:[%s4 + $0x6] sm:$0x1]
    %v187 = vld [vmem:[%s4 + $0x7] sm:$0x1]
    %v188 = vld [vmem:[%s4 + $0x8] sm:$0x1]
    %v189 = vld [vmem:[%s4 + $0x9] sm:$0x1]
    %v190 = vld [vmem:[%s4 + $0xa] sm:$0x1]
    %v191 = vld [vmem:[%s4 + $0xb] sm:$0x1]
    %v192 = vld [vmem:[%s4 + $0xc] sm:$0x1]
    %v193 = vld [vmem:[%s4 + $0xd] sm:$0x1]
    %v194 = vld [vmem:[%s4 + $0xe] sm:$0x1]
    %v195 = vld [vmem:[%s4 + $0xf] sm:$0x1]
    %v212 = vperm.slane %v180, 0
    %v213 = vperm.slane %v181, 0
    %v214 = vperm.slane %v182, 0
    %v215 = vperm.slane %v183, 0
    %v216 = vperm.slane %v184, 0
    %v217 = vperm.slane %v185, 0
    %v218 = vperm.slane %v186, 0
    %v219 = vperm.slane %v187, 0
    %v220 = vperm.slane %v188, 0
    %v221 = vperm.slane %v189, 0
    %v222 = vperm.slane %v190, 0
    %v223 = vperm.slane %v191, 0
    %v224 = vperm.slane %v192, 0
    %v225 = vperm.slane %v193, 0
    %v226 = vperm.slane %v194, 0
    %v227 = vperm.slane %v195, 0
    %244 = vmatpush.msra.mxu0 %v67
    %245 = vmatpush.msra.mxu0 %v66
    %246 = vmatpush.msra.mxu0 %v65
    %247 = vmatpush.msra.mxu0 %v64
    %248 = vmatpush.msra.mxu0 %v63
    %249 = vmatpush.msra.mxu0 %v62
    %250 = vmatpush.msra.mxu0 %v61
    %251 = vmatpush.msra.mxu0 %v60
    %252 = vmatpush.msra.mxu0 %v59
    %253 = vmatpush.msra.mxu0 %v58
    %254 = vmatpush.msra.mxu0 %v57
    %255 = vmatpush.msra.mxu0 %v56
    %256 = vmatpush.msra.mxu0 %v55
    %257 = vmatpush.msra.mxu0 %v54
    %258 = vmatpush.msra.mxu0 %v53
    %259 = vmatpush.msra.mxu0 %v52
    %260 = vmatmul.f32.gmra.mxu0 %v48
    %v261 = vpop.f32.mrf.mxu0
    %v262 = vadd.f32 %v212, %v261
    %263 = vdwg.mxu0
    %264 = vmatpush.msra.mxu0 %v83
    %265 = vmatpush.msra.mxu0 %v82
    %266 = vmatpush.msra.mxu0 %v81
    %267 = vmatpush.msra.mxu0 %v80
    %268 = vmatpush.msra.mxu0 %v79
    %269 = vmatpush.msra.mxu0 %v78
    %270 = vmatpush.msra.mxu0 %v77
    %271 = vmatpush.msra.mxu0 %v76
    %272 = vmatpush.msra.mxu0 %v75
    %273 = vmatpush.msra.mxu0 %v74
    %274 = vmatpush.msra.mxu0 %v73
    %275 = vmatpush.msra.mxu0 %v72
    %276 = vmatpush.msra.mxu0 %v71
    %277 = vmatpush.msra.mxu0 %v70
    %278 = vmatpush.msra.mxu0 %v69
    %279 = vmatpush.msra.mxu0 %v68
    %280 = vmatmul.f32.gmra.mxu0 %v48
    %v281 = vpop.f32.mrf.mxu0
    %v282 = vadd.f32 %v213, %v281
    %283 = vdwg.mxu0
    %284 = vmatpush.msra.mxu0 %v99
    %285 = vmatpush.msra.mxu0 %v98
    %286 = vmatpush.msra.mxu0 %v97
    %287 = vmatpush.msra.mxu0 %v96
    %288 = vmatpush.msra.mxu0 %v95
    %289 = vmatpush.msra.mxu0 %v94
    %290 = vmatpush.msra.mxu0 %v93
    %291 = vmatpush.msra.mxu0 %v92
    %292 = vmatpush.msra.mxu0 %v91
    %293 = vmatpush.msra.mxu0 %v90
    %294 = vmatpush.msra.mxu0 %v89
    %295 = vmatpush.msra.mxu0 %v88
    %296 = vmatpush.msra.mxu0 %v87
    %297 = vmatpush.msra.mxu0 %v86
    %298 = vmatpush.msra.mxu0 %v85
    %299 = vmatpush.msra.mxu0 %v84
    %300 = vmatmul.f32.gmra.mxu0 %v48
    %v301 = vpop.f32.mrf.mxu0
    %v302 = vadd.f32 %v214, %v301
    %303 = vdwg.mxu0
    %304 = vmatpush.msra.mxu0 %v115
    %305 = vmatpush.msra.mxu0 %v114
    %306 = vmatpush.msra.mxu0 %v113
    %307 = vmatpush.msra.mxu0 %v112
    %308 = vmatpush.msra.mxu0 %v111
    %309 = vmatpush.msra.mxu0 %v110
    %310 = vmatpush.msra.mxu0 %v109
    %311 = vmatpush.msra.mxu0 %v108
    %312 = vmatpush.msra.mxu0 %v107
    %313 = vmatpush.msra.mxu0 %v106
    %314 = vmatpush.msra.mxu0 %v105
    %315 = vmatpush.msra.mxu0 %v104
    %316 = vmatpush.msra.mxu0 %v103
    %317 = vmatpush.msra.mxu0 %v102
    %318 = vmatpush.msra.mxu0 %v101
    %319 = vmatpush.msra.mxu0 %v100
    %320 = vmatmul.f32.gmra.mxu0 %v48
    %v321 = vpop.f32.mrf.mxu0
    %v322 = vadd.f32 %v215, %v321
    %323 = vdwg.mxu0
    %324 = vmatpush.msra.mxu0 %v131
    %325 = vmatpush.msra.mxu0 %v130
    %326 = vmatpush.msra.mxu0 %v129
    %327 = vmatpush.msra.mxu0 %v128
    %328 = vmatpush.msra.mxu0 %v127
    %329 = vmatpush.msra.mxu0 %v126
    %330 = vmatpush.msra.mxu0 %v125
    %331 = vmatpush.msra.mxu0 %v124
    %332 = vmatpush.msra.mxu0 %v123
    %333 = vmatpush.msra.mxu0 %v122
    %334 = vmatpush.msra.mxu0 %v121
    %335 = vmatpush.msra.mxu0 %v120
    %336 = vmatpush.msra.mxu0 %v119
    %337 = vmatpush.msra.mxu0 %v118
    %338 = vmatpush.msra.mxu0 %v117
    %339 = vmatpush.msra.mxu0 %v116
    %340 = vmatmul.f32.gmra.mxu0 %v48
    %v341 = vpop.f32.mrf.mxu0
    %v342 = vadd.f32 %v216, %v341
    %343 = vdwg.mxu0
    %344 = vmatpush.msra.mxu0 %v147
    %345 = vmatpush.msra.mxu0 %v146
    %346 = vmatpush.msra.mxu0 %v145
    %347 = vmatpush.msra.mxu0 %v144
    %348 = vmatpush.msra.mxu0 %v143
    %349 = vmatpush.msra.mxu0 %v142
    %350 = vmatpush.msra.mxu0 %v141
    %351 = vmatpush.msra.mxu0 %v140
    %352 = vmatpush.msra.mxu0 %v139
    %353 = vmatpush.msra.mxu0 %v138
    %354 = vmatpush.msra.mxu0 %v137
    %355 = vmatpush.msra.mxu0 %v136
    %356 = vmatpush.msra.mxu0 %v135
    %357 = vmatpush.msra.mxu0 %v134
    %358 = vmatpush.msra.mxu0 %v133
    %359 = vmatpush.msra.mxu0 %v132
    %360 = vmatmul.f32.gmra.mxu0 %v48
    %v361 = vpop.f32.mrf.mxu0
    %v362 = vadd.f32 %v217, %v361
    %363 = vdwg.mxu0
    %364 = vmatpush.msra.mxu0 %v163
    %365 = vmatpush.msra.mxu0 %v162
    %366 = vmatpush.msra.mxu0 %v161
    %367 = vmatpush.msra.mxu0 %v160
    %368 = vmatpush.msra.mxu0 %v159
    %369 = vmatpush.msra.mxu0 %v158
    %370 = vmatpush.msra.mxu0 %v157
    %371 = vmatpush.msra.mxu0 %v156
    %372 = vmatpush.msra.mxu0 %v155
    %373 = vmatpush.msra.mxu0 %v154
    %374 = vmatpush.msra.mxu0 %v153
    %375 = vmatpush.msra.mxu0 %v152
    %376 = vmatpush.msra.mxu0 %v151
    %377 = vmatpush.msra.mxu0 %v150
    %378 = vmatpush.msra.mxu0 %v149
    %379 = vmatpush.msra.mxu0 %v148
    %380 = vmatmul.f32.gmra.mxu0 %v48
    %v381 = vpop.f32.mrf.mxu0
    %v382 = vadd.f32 %v218, %v381
    %383 = vdwg.mxu0
    %384 = vmatpush.msra.mxu0 %v179
    %385 = vmatpush.msra.mxu0 %v178
    %386 = vmatpush.msra.mxu0 %v177
    %387 = vmatpush.msra.mxu0 %v176
    %388 = vmatpush.msra.mxu0 %v175
    %389 = vmatpush.msra.mxu0 %v174
    %390 = vmatpush.msra.mxu0 %v173
    %391 = vmatpush.msra.mxu0 %v172
    %392 = vmatpush.msra.mxu0 %v171
    %393 = vmatpush.msra.mxu0 %v170
    %394 = vmatpush.msra.mxu0 %v169
    %395 = vmatpush.msra.mxu0 %v168
    %396 = vmatpush.msra.mxu0 %v167
    %397 = vmatpush.msra.mxu0 %v166
    %398 = vmatpush.msra.mxu0 %v165
    %399 = vmatpush.msra.mxu0 %v164
    %400 = vmatmul.f32.gmra.mxu0 %v48
    %v401 = vpop.f32.mrf.mxu0
    %v402 = vadd.f32 %v219, %v401
    %403 = vdwg.mxu0
    %404 = vmatpush.msra.mxu0 %v67
    %405 = vmatpush.msra.mxu0 %v66
    %406 = vmatpush.msra.mxu0 %v65
    %407 = vmatpush.msra.mxu0 %v64
    %408 = vmatpush.msra.mxu0 %v63
    %409 = vmatpush.msra.mxu0 %v62
    %410 = vmatpush.msra.mxu0 %v61
    %411 = vmatpush.msra.mxu0 %v60
    %412 = vmatpush.msra.mxu0 %v59
    %413 = vmatpush.msra.mxu0 %v58
    %414 = vmatpush.msra.mxu0 %v57
    %415 = vmatpush.msra.mxu0 %v56
    %416 = vmatpush.msra.mxu0 %v55
    %417 = vmatpush.msra.mxu0 %v54
    %418 = vmatpush.msra.mxu0 %v53
    %419 = vmatpush.msra.mxu0 %v52
    %420 = vmatmul.f32.gmra.mxu0 %v49
    %v421 = vpop.f32.mrf.mxu0
    %v422 = vadd.f32 %v220, %v421
    %423 = vdwg.mxu0
    %424 = vmatpush.msra.mxu0 %v83
    %425 = vmatpush.msra.mxu0 %v82
    %426 = vmatpush.msra.mxu0 %v81
    %427 = vmatpush.msra.mxu0 %v80
    %428 = vmatpush.msra.mxu0 %v79
    %429 = vmatpush.msra.mxu0 %v78
    %430 = vmatpush.msra.mxu0 %v77
    %431 = vmatpush.msra.mxu0 %v76
    %432 = vmatpush.msra.mxu0 %v75
    %433 = vmatpush.msra.mxu0 %v74
    %434 = vmatpush.msra.mxu0 %v73
    %435 = vmatpush.msra.mxu0 %v72
    %436 = vmatpush.msra.mxu0 %v71
    %437 = vmatpush.msra.mxu0 %v70
    %438 = vmatpush.msra.mxu0 %v69
    %439 = vmatpush.msra.mxu0 %v68
    %440 = vmatmul.f32.gmra.mxu0 %v49
    %v441 = vpop.f32.mrf.mxu0
    %v442 = vadd.f32 %v221, %v441
    %443 = vdwg.mxu0
    %444 = vmatpush.msra.mxu0 %v99
    %445 = vmatpush.msra.mxu0 %v98
    %446 = vmatpush.msra.mxu0 %v97
    %447 = vmatpush.msra.mxu0 %v96
    %448 = vmatpush.msra.mxu0 %v95
    %449 = vmatpush.msra.mxu0 %v94
    %450 = vmatpush.msra.mxu0 %v93
    %451 = vmatpush.msra.mxu0 %v92
    %452 = vmatpush.msra.mxu0 %v91
    %453 = vmatpush.msra.mxu0 %v90
    %454 = vmatpush.msra.mxu0 %v89
    %455 = vmatpush.msra.mxu0 %v88
    %456 = vmatpush.msra.mxu0 %v87
    %457 = vmatpush.msra.mxu0 %v86
    %458 = vmatpush.msra.mxu0 %v85
    %459 = vmatpush.msra.mxu0 %v84
    %460 = vmatmul.f32.gmra.mxu0 %v49
    %v461 = vpop.f32.mrf.mxu0
    %v462 = vadd.f32 %v222, %v461
    %463 = vdwg.mxu0
    %464 = vmatpush.msra.mxu0 %v115
    %465 = vmatpush.msra.mxu0 %v114
    %466 = vmatpush.msra.mxu0 %v113
    %467 = vmatpush.msra.mxu0 %v112
    %468 = vmatpush.msra.mxu0 %v111
    %469 = vmatpush.msra.mxu0 %v110
    %470 = vmatpush.msra.mxu0 %v109
    %471 = vmatpush.msra.mxu0 %v108
    %472 = vmatpush.msra.mxu0 %v107
    %473 = vmatpush.msra.mxu0 %v106
    %474 = vmatpush.msra.mxu0 %v105
    %475 = vmatpush.msra.mxu0 %v104
    %476 = vmatpush.msra.mxu0 %v103
    %477 = vmatpush.msra.mxu0 %v102
    %478 = vmatpush.msra.mxu0 %v101
    %479 = vmatpush.msra.mxu0 %v100
    %480 = vmatmul.f32.gmra.mxu0 %v49
    %v481 = vpop.f32.mrf.mxu0
    %v482 = vadd.f32 %v223, %v481
    %483 = vdwg.mxu0
    %484 = vmatpush.msra.mxu0 %v131
    %485 = vmatpush.msra.mxu0 %v130
    %486 = vmatpush.msra.mxu0 %v129
    %487 = vmatpush.msra.mxu0 %v128
    %488 = vmatpush.msra.mxu0 %v127
    %489 = vmatpush.msra.mxu0 %v126
    %490 = vmatpush.msra.mxu0 %v125
    %491 = vmatpush.msra.mxu0 %v124
    %492 = vmatpush.msra.mxu0 %v123
    %493 = vmatpush.msra.mxu0 %v122
    %494 = vmatpush.msra.mxu0 %v121
    %495 = vmatpush.msra.mxu0 %v120
    %496 = vmatpush.msra.mxu0 %v119
    %497 = vmatpush.msra.mxu0 %v118
    %498 = vmatpush.msra.mxu0 %v117
    %499 = vmatpush.msra.mxu0 %v116
    %500 = vmatmul.f32.gmra.mxu0 %v49
    %v501 = vpop.f32.mrf.mxu0
    %v502 = vadd.f32 %v224, %v501
    %503 = vdwg.mxu0
    %504 = vmatpush.msra.mxu0 %v147
    %505 = vmatpush.msra.mxu0 %v146
    %506 = vmatpush.msra.mxu0 %v145
    %507 = vmatpush.msra.mxu0 %v144
    %508 = vmatpush.msra.mxu0 %v143
    %509 = vmatpush.msra.mxu0 %v142
    %510 = vmatpush.msra.mxu0 %v141
    %511 = vmatpush.msra.mxu0 %v140
    %512 = vmatpush.msra.mxu0 %v139
    %513 = vmatpush.msra.mxu0 %v138
    %514 = vmatpush.msra.mxu0 %v137
    %515 = vmatpush.msra.mxu0 %v136
    %516 = vmatpush.msra.mxu0 %v135
    %517 = vmatpush.msra.mxu0 %v134
    %518 = vmatpush.msra.mxu0 %v133
    %519 = vmatpush.msra.mxu0 %v132
    %520 = vmatmul.f32.gmra.mxu0 %v49
    %v521 = vpop.f32.mrf.mxu0
    %v522 = vadd.f32 %v225, %v521
    %523 = vdwg.mxu0
    %524 = vmatpush.msra.mxu0 %v163
    %525 = vmatpush.msra.mxu0 %v162
    %526 = vmatpush.msra.mxu0 %v161
    %527 = vmatpush.msra.mxu0 %v160
    %528 = vmatpush.msra.mxu0 %v159
    %529 = vmatpush.msra.mxu0 %v158
    %530 = vmatpush.msra.mxu0 %v157
    %531 = vmatpush.msra.mxu0 %v156
    %532 = vmatpush.msra.mxu0 %v155
    %533 = vmatpush.msra.mxu0 %v154
    %534 = vmatpush.msra.mxu0 %v153
    %535 = vmatpush.msra.mxu0 %v152
    %536 = vmatpush.msra.mxu0 %v151
    %537 = vmatpush.msra.mxu0 %v150
    %538 = vmatpush.msra.mxu0 %v149
    %539 = vmatpush.msra.mxu0 %v148
    %540 = vmatmul.f32.gmra.mxu0 %v49
    %v541 = vpop.f32.mrf.mxu0
    %v542 = vadd.f32 %v226, %v541
    %543 = vdwg.mxu0
    %544 = vmatpush.msra.mxu0 %v179
    %545 = vmatpush.msra.mxu0 %v178
    %546 = vmatpush.msra.mxu0 %v177
    %547 = vmatpush.msra.mxu0 %v176
    %548 = vmatpush.msra.mxu0 %v175
    %549 = vmatpush.msra.mxu0 %v174
    %550 = vmatpush.msra.mxu0 %v173
    %551 = vmatpush.msra.mxu0 %v172
    %552 = vmatpush.msra.mxu0 %v171
    %553 = vmatpush.msra.mxu0 %v170
    %554 = vmatpush.msra.mxu0 %v169
    %555 = vmatpush.msra.mxu0 %v168
    %556 = vmatpush.msra.mxu0 %v167
    %557 = vmatpush.msra.mxu0 %v166
    %558 = vmatpush.msra.mxu0 %v165
    %559 = vmatpush.msra.mxu0 %v164
    %560 = vmatmul.f32.gmra.mxu0 %v49
    %v561 = vpop.f32.mrf.mxu0
    %v562 = vadd.f32 %v227, %v561
    %563 = vdwg.mxu0
    %s564 = scalar_lea.vmem %s2, 1024
    %v565 = vld [vmem:[%s564] sm:$0xff]
    %v566 = vld [vmem:[%s564 + $0x8] sm:$0xff]
    %v567 = vld [vmem:[%s564 + $0x10] sm:$0xff]
    %v568 = vld [vmem:[%s564 + $0x18] sm:$0xff]
    %v569 = vld [vmem:[%s564 + $0x20] sm:$0xff]
    %v570 = vld [vmem:[%s564 + $0x28] sm:$0xff]
    %v571 = vld [vmem:[%s564 + $0x30] sm:$0xff]
    %v572 = vld [vmem:[%s564 + $0x38] sm:$0xff]
    %v573 = vld [vmem:[%s564 + $0x40] sm:$0xff]
    %v574 = vld [vmem:[%s564 + $0x48] sm:$0xff]
    %v575 = vld [vmem:[%s564 + $0x50] sm:$0xff]
    %v576 = vld [vmem:[%s564 + $0x58] sm:$0xff]
    %v577 = vld [vmem:[%s564 + $0x60] sm:$0xff]
    %v578 = vld [vmem:[%s564 + $0x68] sm:$0xff]
    %v579 = vld [vmem:[%s564 + $0x70] sm:$0xff]
    %v580 = vld [vmem:[%s564 + $0x78] sm:$0xff]
    %v581 = vld [vmem:[%s564 + $0x80] sm:$0xff]
    %v582 = vld [vmem:[%s564 + $0x88] sm:$0xff]
    %v583 = vld [vmem:[%s564 + $0x90] sm:$0xff]
    %v584 = vld [vmem:[%s564 + $0x98] sm:$0xff]
    %v585 = vld [vmem:[%s564 + $0xa0] sm:$0xff]
    %v586 = vld [vmem:[%s564 + $0xa8] sm:$0xff]
    %v587 = vld [vmem:[%s564 + $0xb0] sm:$0xff]
    %v588 = vld [vmem:[%s564 + $0xb8] sm:$0xff]
    %v589 = vld [vmem:[%s564 + $0xc0] sm:$0xff]
    %v590 = vld [vmem:[%s564 + $0xc8] sm:$0xff]
    %v591 = vld [vmem:[%s564 + $0xd0] sm:$0xff]
    %v592 = vld [vmem:[%s564 + $0xd8] sm:$0xff]
    %v593 = vld [vmem:[%s564 + $0xe0] sm:$0xff]
    %v594 = vld [vmem:[%s564 + $0xe8] sm:$0xff]
    %v595 = vld [vmem:[%s564 + $0xf0] sm:$0xff]
    %v596 = vld [vmem:[%s564 + $0xf8] sm:$0xff]
    %v597 = vld [vmem:[%s564 + $0x100] sm:$0xff]
    %v598 = vld [vmem:[%s564 + $0x108] sm:$0xff]
    %v599 = vld [vmem:[%s564 + $0x110] sm:$0xff]
    %v600 = vld [vmem:[%s564 + $0x118] sm:$0xff]
    %v601 = vld [vmem:[%s564 + $0x120] sm:$0xff]
    %v602 = vld [vmem:[%s564 + $0x128] sm:$0xff]
    %v603 = vld [vmem:[%s564 + $0x130] sm:$0xff]
    %v604 = vld [vmem:[%s564 + $0x138] sm:$0xff]
    %v605 = vld [vmem:[%s564 + $0x140] sm:$0xff]
    %v606 = vld [vmem:[%s564 + $0x148] sm:$0xff]
    %v607 = vld [vmem:[%s564 + $0x150] sm:$0xff]
    %v608 = vld [vmem:[%s564 + $0x158] sm:$0xff]
    %v609 = vld [vmem:[%s564 + $0x160] sm:$0xff]
    %v610 = vld [vmem:[%s564 + $0x168] sm:$0xff]
    %v611 = vld [vmem:[%s564 + $0x170] sm:$0xff]
    %v612 = vld [vmem:[%s564 + $0x178] sm:$0xff]
    %v613 = vld [vmem:[%s564 + $0x180] sm:$0xff]
    %v614 = vld [vmem:[%s564 + $0x188] sm:$0xff]
    %v615 = vld [vmem:[%s564 + $0x190] sm:$0xff]
    %v616 = vld [vmem:[%s564 + $0x198] sm:$0xff]
    %v617 = vld [vmem:[%s564 + $0x1a0] sm:$0xff]
    %v618 = vld [vmem:[%s564 + $0x1a8] sm:$0xff]
    %v619 = vld [vmem:[%s564 + $0x1b0] sm:$0xff]
    %v620 = vld [vmem:[%s564 + $0x1b8] sm:$0xff]
    %v621 = vld [vmem:[%s564 + $0x1c0] sm:$0xff]
    %v622 = vld [vmem:[%s564 + $0x1c8] sm:$0xff]
    %v623 = vld [vmem:[%s564 + $0x1d0] sm:$0xff]
    %v624 = vld [vmem:[%s564 + $0x1d8] sm:$0xff]
    %v625 = vld [vmem:[%s564 + $0x1e0] sm:$0xff]
    %v626 = vld [vmem:[%s564 + $0x1e8] sm:$0xff]
    %v627 = vld [vmem:[%s564 + $0x1f0] sm:$0xff]
    %v628 = vld [vmem:[%s564 + $0x1f8] sm:$0xff]
    %v629 = vld [vmem:[%s564 + $0x200] sm:$0xff]
    %v630 = vld [vmem:[%s564 + $0x208] sm:$0xff]
    %v631 = vld [vmem:[%s564 + $0x210] sm:$0xff]
    %v632 = vld [vmem:[%s564 + $0x218] sm:$0xff]
    %v633 = vld [vmem:[%s564 + $0x220] sm:$0xff]
    %v634 = vld [vmem:[%s564 + $0x228] sm:$0xff]
    %v635 = vld [vmem:[%s564 + $0x230] sm:$0xff]
    %v636 = vld [vmem:[%s564 + $0x238] sm:$0xff]
    %v637 = vld [vmem:[%s564 + $0x240] sm:$0xff]
    %v638 = vld [vmem:[%s564 + $0x248] sm:$0xff]
    %v639 = vld [vmem:[%s564 + $0x250] sm:$0xff]
    %v640 = vld [vmem:[%s564 + $0x258] sm:$0xff]
    %v641 = vld [vmem:[%s564 + $0x260] sm:$0xff]
    %v642 = vld [vmem:[%s564 + $0x268] sm:$0xff]
    %v643 = vld [vmem:[%s564 + $0x270] sm:$0xff]
    %v644 = vld [vmem:[%s564 + $0x278] sm:$0xff]
    %v645 = vld [vmem:[%s564 + $0x280] sm:$0xff]
    %v646 = vld [vmem:[%s564 + $0x288] sm:$0xff]
    %v647 = vld [vmem:[%s564 + $0x290] sm:$0xff]
    %v648 = vld [vmem:[%s564 + $0x298] sm:$0xff]
    %v649 = vld [vmem:[%s564 + $0x2a0] sm:$0xff]
    %v650 = vld [vmem:[%s564 + $0x2a8] sm:$0xff]
    %v651 = vld [vmem:[%s564 + $0x2b0] sm:$0xff]
    %v652 = vld [vmem:[%s564 + $0x2b8] sm:$0xff]
    %v653 = vld [vmem:[%s564 + $0x2c0] sm:$0xff]
    %v654 = vld [vmem:[%s564 + $0x2c8] sm:$0xff]
    %v655 = vld [vmem:[%s564 + $0x2d0] sm:$0xff]
    %v656 = vld [vmem:[%s564 + $0x2d8] sm:$0xff]
    %v657 = vld [vmem:[%s564 + $0x2e0] sm:$0xff]
    %v658 = vld [vmem:[%s564 + $0x2e8] sm:$0xff]
    %v659 = vld [vmem:[%s564 + $0x2f0] sm:$0xff]
    %v660 = vld [vmem:[%s564 + $0x2f8] sm:$0xff]
    %v661 = vld [vmem:[%s564 + $0x300] sm:$0xff]
    %v662 = vld [vmem:[%s564 + $0x308] sm:$0xff]
    %v663 = vld [vmem:[%s564 + $0x310] sm:$0xff]
    %v664 = vld [vmem:[%s564 + $0x318] sm:$0xff]
    %v665 = vld [vmem:[%s564 + $0x320] sm:$0xff]
    %v666 = vld [vmem:[%s564 + $0x328] sm:$0xff]
    %v667 = vld [vmem:[%s564 + $0x330] sm:$0xff]
    %v668 = vld [vmem:[%s564 + $0x338] sm:$0xff]
    %v669 = vld [vmem:[%s564 + $0x340] sm:$0xff]
    %v670 = vld [vmem:[%s564 + $0x348] sm:$0xff]
    %v671 = vld [vmem:[%s564 + $0x350] sm:$0xff]
    %v672 = vld [vmem:[%s564 + $0x358] sm:$0xff]
    %v673 = vld [vmem:[%s564 + $0x360] sm:$0xff]
    %v674 = vld [vmem:[%s564 + $0x368] sm:$0xff]
    %v675 = vld [vmem:[%s564 + $0x370] sm:$0xff]
    %v676 = vld [vmem:[%s564 + $0x378] sm:$0xff]
    %v677 = vld [vmem:[%s564 + $0x380] sm:$0xff]
    %v678 = vld [vmem:[%s564 + $0x388] sm:$0xff]
    %v679 = vld [vmem:[%s564 + $0x390] sm:$0xff]
    %v680 = vld [vmem:[%s564 + $0x398] sm:$0xff]
    %v681 = vld [vmem:[%s564 + $0x3a0] sm:$0xff]
    %v682 = vld [vmem:[%s564 + $0x3a8] sm:$0xff]
    %v683 = vld [vmem:[%s564 + $0x3b0] sm:$0xff]
    %v684 = vld [vmem:[%s564 + $0x3b8] sm:$0xff]
    %v685 = vld [vmem:[%s564 + $0x3c0] sm:$0xff]
    %v686 = vld [vmem:[%s564 + $0x3c8] sm:$0xff]
    %v687 = vld [vmem:[%s564 + $0x3d0] sm:$0xff]
    %v688 = vld [vmem:[%s564 + $0x3d8] sm:$0xff]
    %v689 = vld [vmem:[%s564 + $0x3e0] sm:$0xff]
    %v690 = vld [vmem:[%s564 + $0x3e8] sm:$0xff]
    %v691 = vld [vmem:[%s564 + $0x3f0] sm:$0xff]
    %v692 = vld [vmem:[%s564 + $0x3f8] sm:$0xff]
    %s693 = scalar_lea.vmem %s4, 16
    %v694 = vld [vmem:[%s693] sm:$0x1]
    %v695 = vld [vmem:[%s693 + $0x1] sm:$0x1]
    %v696 = vld [vmem:[%s693 + $0x2] sm:$0x1]
    %v697 = vld [vmem:[%s693 + $0x3] sm:$0x1]
    %v698 = vld [vmem:[%s693 + $0x4] sm:$0x1]
    %v699 = vld [vmem:[%s693 + $0x5] sm:$0x1]
    %v700 = vld [vmem:[%s693 + $0x6] sm:$0x1]
    %v701 = vld [vmem:[%s693 + $0x7] sm:$0x1]
    %v702 = vld [vmem:[%s693 + $0x8] sm:$0x1]
    %v703 = vld [vmem:[%s693 + $0x9] sm:$0x1]
    %v704 = vld [vmem:[%s693 + $0xa] sm:$0x1]
    %v705 = vld [vmem:[%s693 + $0xb] sm:$0x1]
    %v706 = vld [vmem:[%s693 + $0xc] sm:$0x1]
    %v707 = vld [vmem:[%s693 + $0xd] sm:$0x1]
    %v708 = vld [vmem:[%s693 + $0xe] sm:$0x1]
    %v709 = vld [vmem:[%s693 + $0xf] sm:$0x1]
    %v726 = vperm.slane %v694, 0
    %v727 = vperm.slane %v695, 0
    %v728 = vperm.slane %v696, 0
    %v729 = vperm.slane %v697, 0
    %v730 = vperm.slane %v698, 0
    %v731 = vperm.slane %v699, 0
    %v732 = vperm.slane %v700, 0
    %v733 = vperm.slane %v701, 0
    %v734 = vperm.slane %v702, 0
    %v735 = vperm.slane %v703, 0
    %v736 = vperm.slane %v704, 0
    %v737 = vperm.slane %v705, 0
    %v738 = vperm.slane %v706, 0
    %v739 = vperm.slane %v707, 0
    %v740 = vperm.slane %v708, 0
    %v741 = vperm.slane %v709, 0
    %758 = vmatpush.msra.mxu0 %v580
    %759 = vmatpush.msra.mxu0 %v579
    %760 = vmatpush.msra.mxu0 %v578
    %761 = vmatpush.msra.mxu0 %v577
    %762 = vmatpush.msra.mxu0 %v576
    %763 = vmatpush.msra.mxu0 %v575
    %764 = vmatpush.msra.mxu0 %v574
    %765 = vmatpush.msra.mxu0 %v573
    %766 = vmatpush.msra.mxu0 %v572
    %767 = vmatpush.msra.mxu0 %v571
    %768 = vmatpush.msra.mxu0 %v570
    %769 = vmatpush.msra.mxu0 %v569
    %770 = vmatpush.msra.mxu0 %v568
    %771 = vmatpush.msra.mxu0 %v567
    %772 = vmatpush.msra.mxu0 %v566
    %773 = vmatpush.msra.mxu0 %v565
    %774 = vmatmul.f32.gmra.mxu0 %v48
    %v775 = vpop.f32.mrf.mxu0
    %v776 = vadd.f32 %v726, %v775
    %777 = vdwg.mxu0
    %778 = vmatpush.msra.mxu0 %v596
    %779 = vmatpush.msra.mxu0 %v595
    %780 = vmatpush.msra.mxu0 %v594
    %781 = vmatpush.msra.mxu0 %v593
    %782 = vmatpush.msra.mxu0 %v592
    %783 = vmatpush.msra.mxu0 %v591
    %784 = vmatpush.msra.mxu0 %v590
    %785 = vmatpush.msra.mxu0 %v589
    %786 = vmatpush.msra.mxu0 %v588
    %787 = vmatpush.msra.mxu0 %v587
    %788 = vmatpush.msra.mxu0 %v586
    %789 = vmatpush.msra.mxu0 %v585
    %790 = vmatpush.msra.mxu0 %v584
    %791 = vmatpush.msra.mxu0 %v583
    %792 = vmatpush.msra.mxu0 %v582
    %793 = vmatpush.msra.mxu0 %v581
    %794 = vmatmul.f32.gmra.mxu0 %v48
    %v795 = vpop.f32.mrf.mxu0
    %v796 = vadd.f32 %v727, %v795
    %797 = vdwg.mxu0
    %798 = vmatpush.msra.mxu0 %v612
    %799 = vmatpush.msra.mxu0 %v611
    %800 = vmatpush.msra.mxu0 %v610
    %801 = vmatpush.msra.mxu0 %v609
    %802 = vmatpush.msra.mxu0 %v608
    %803 = vmatpush.msra.mxu0 %v607
    %804 = vmatpush.msra.mxu0 %v606
    %805 = vmatpush.msra.mxu0 %v605
    %806 = vmatpush.msra.mxu0 %v604
    %807 = vmatpush.msra.mxu0 %v603
    %808 = vmatpush.msra.mxu0 %v602
    %809 = vmatpush.msra.mxu0 %v601
    %810 = vmatpush.msra.mxu0 %v600
    %811 = vmatpush.msra.mxu0 %v599
    %812 = vmatpush.msra.mxu0 %v598
    %813 = vmatpush.msra.mxu0 %v597
    %814 = vmatmul.f32.gmra.mxu0 %v48
    %v815 = vpop.f32.mrf.mxu0
    %v816 = vadd.f32 %v728, %v815
    %817 = vdwg.mxu0
    %818 = vmatpush.msra.mxu0 %v628
    %819 = vmatpush.msra.mxu0 %v627
    %820 = vmatpush.msra.mxu0 %v626
    %821 = vmatpush.msra.mxu0 %v625
    %822 = vmatpush.msra.mxu0 %v624
    %823 = vmatpush.msra.mxu0 %v623
    %824 = vmatpush.msra.mxu0 %v622
    %825 = vmatpush.msra.mxu0 %v621
    %826 = vmatpush.msra.mxu0 %v620
    %827 = vmatpush.msra.mxu0 %v619
    %828 = vmatpush.msra.mxu0 %v618
    %829 = vmatpush.msra.mxu0 %v617
    %830 = vmatpush.msra.mxu0 %v616
    %831 = vmatpush.msra.mxu0 %v615
    %832 = vmatpush.msra.mxu0 %v614
    %833 = vmatpush.msra.mxu0 %v613
    %834 = vmatmul.f32.gmra.mxu0 %v48
    %v835 = vpop.f32.mrf.mxu0
    %v836 = vadd.f32 %v729, %v835
    %837 = vdwg.mxu0
    %838 = vmatpush.msra.mxu0 %v644
    %839 = vmatpush.msra.mxu0 %v643
    %840 = vmatpush.msra.mxu0 %v642
    %841 = vmatpush.msra.mxu0 %v641
    %842 = vmatpush.msra.mxu0 %v640
    %843 = vmatpush.msra.mxu0 %v639
    %844 = vmatpush.msra.mxu0 %v638
    %845 = vmatpush.msra.mxu0 %v637
    %846 = vmatpush.msra.mxu0 %v636
    %847 = vmatpush.msra.mxu0 %v635
    %848 = vmatpush.msra.mxu0 %v634
    %849 = vmatpush.msra.mxu0 %v633
    %850 = vmatpush.msra.mxu0 %v632
    %851 = vmatpush.msra.mxu0 %v631
    %852 = vmatpush.msra.mxu0 %v630
    %853 = vmatpush.msra.mxu0 %v629
    %854 = vmatmul.f32.gmra.mxu0 %v48
    %v855 = vpop.f32.mrf.mxu0
    %v856 = vadd.f32 %v730, %v855
    %857 = vdwg.mxu0
    %858 = vmatpush.msra.mxu0 %v660
    %859 = vmatpush.msra.mxu0 %v659
    %860 = vmatpush.msra.mxu0 %v658
    %861 = vmatpush.msra.mxu0 %v657
    %862 = vmatpush.msra.mxu0 %v656
    %863 = vmatpush.msra.mxu0 %v655
    %864 = vmatpush.msra.mxu0 %v654
    %865 = vmatpush.msra.mxu0 %v653
    %866 = vmatpush.msra.mxu0 %v652
    %867 = vmatpush.msra.mxu0 %v651
    %868 = vmatpush.msra.mxu0 %v650
    %869 = vmatpush.msra.mxu0 %v649
    %870 = vmatpush.msra.mxu0 %v648
    %871 = vmatpush.msra.mxu0 %v647
    %872 = vmatpush.msra.mxu0 %v646
    %873 = vmatpush.msra.mxu0 %v645
    %874 = vmatmul.f32.gmra.mxu0 %v48
    %v875 = vpop.f32.mrf.mxu0
    %v876 = vadd.f32 %v731, %v875
    %877 = vdwg.mxu0
    %878 = vmatpush.msra.mxu0 %v676
    %879 = vmatpush.msra.mxu0 %v675
    %880 = vmatpush.msra.mxu0 %v674
    %881 = vmatpush.msra.mxu0 %v673
    %882 = vmatpush.msra.mxu0 %v672
    %883 = vmatpush.msra.mxu0 %v671
    %884 = vmatpush.msra.mxu0 %v670
    %885 = vmatpush.msra.mxu0 %v669
    %886 = vmatpush.msra.mxu0 %v668
    %887 = vmatpush.msra.mxu0 %v667
    %888 = vmatpush.msra.mxu0 %v666
    %889 = vmatpush.msra.mxu0 %v665
    %890 = vmatpush.msra.mxu0 %v664
    %891 = vmatpush.msra.mxu0 %v663
    %892 = vmatpush.msra.mxu0 %v662
    %893 = vmatpush.msra.mxu0 %v661
    %894 = vmatmul.f32.gmra.mxu0 %v48
    %v895 = vpop.f32.mrf.mxu0
    %v896 = vadd.f32 %v732, %v895
    %897 = vdwg.mxu0
    %898 = vmatpush.msra.mxu0 %v692
    %899 = vmatpush.msra.mxu0 %v691
    %900 = vmatpush.msra.mxu0 %v690
    %901 = vmatpush.msra.mxu0 %v689
    %902 = vmatpush.msra.mxu0 %v688
    %903 = vmatpush.msra.mxu0 %v687
    %904 = vmatpush.msra.mxu0 %v686
    %905 = vmatpush.msra.mxu0 %v685
    %906 = vmatpush.msra.mxu0 %v684
    %907 = vmatpush.msra.mxu0 %v683
    %908 = vmatpush.msra.mxu0 %v682
    %909 = vmatpush.msra.mxu0 %v681
    %910 = vmatpush.msra.mxu0 %v680
    %911 = vmatpush.msra.mxu0 %v679
    %912 = vmatpush.msra.mxu0 %v678
    %913 = vmatpush.msra.mxu0 %v677
    %914 = vmatmul.f32.gmra.mxu0 %v48
    %v915 = vpop.f32.mrf.mxu0
    %v916 = vadd.f32 %v733, %v915
    %917 = vdwg.mxu0
    %918 = vmatpush.msra.mxu0 %v580
    %919 = vmatpush.msra.mxu0 %v579
    %920 = vmatpush.msra.mxu0 %v578
    %921 = vmatpush.msra.mxu0 %v577
    %922 = vmatpush.msra.mxu0 %v576
    %923 = vmatpush.msra.mxu0 %v575
    %924 = vmatpush.msra.mxu0 %v574
    %925 = vmatpush.msra.mxu0 %v573
    %926 = vmatpush.msra.mxu0 %v572
    %927 = vmatpush.msra.mxu0 %v571
    %928 = vmatpush.msra.mxu0 %v570
    %929 = vmatpush.msra.mxu0 %v569
    %930 = vmatpush.msra.mxu0 %v568
    %931 = vmatpush.msra.mxu0 %v567
    %932 = vmatpush.msra.mxu0 %v566
    %933 = vmatpush.msra.mxu0 %v565
    %934 = vmatmul.f32.gmra.mxu0 %v49
    %v935 = vpop.f32.mrf.mxu0
    %v936 = vadd.f32 %v734, %v935
    %937 = vdwg.mxu0
    %938 = vmatpush.msra.mxu0 %v596
    %939 = vmatpush.msra.mxu0 %v595
    %940 = vmatpush.msra.mxu0 %v594
    %941 = vmatpush.msra.mxu0 %v593
    %942 = vmatpush.msra.mxu0 %v592
    %943 = vmatpush.msra.mxu0 %v591
    %944 = vmatpush.msra.mxu0 %v590
    %945 = vmatpush.msra.mxu0 %v589
    %946 = vmatpush.msra.mxu0 %v588
    %947 = vmatpush.msra.mxu0 %v587
    %948 = vmatpush.msra.mxu0 %v586
    %949 = vmatpush.msra.mxu0 %v585
    %950 = vmatpush.msra.mxu0 %v584
    %951 = vmatpush.msra.mxu0 %v583
    %952 = vmatpush.msra.mxu0 %v582
    %953 = vmatpush.msra.mxu0 %v581
    %954 = vmatmul.f32.gmra.mxu0 %v49
    %v955 = vpop.f32.mrf.mxu0
    %v956 = vadd.f32 %v735, %v955
    %957 = vdwg.mxu0
    %958 = vmatpush.msra.mxu0 %v612
    %959 = vmatpush.msra.mxu0 %v611
    %960 = vmatpush.msra.mxu0 %v610
    %961 = vmatpush.msra.mxu0 %v609
    %962 = vmatpush.msra.mxu0 %v608
    %963 = vmatpush.msra.mxu0 %v607
    %964 = vmatpush.msra.mxu0 %v606
    %965 = vmatpush.msra.mxu0 %v605
    %966 = vmatpush.msra.mxu0 %v604
    %967 = vmatpush.msra.mxu0 %v603
    %968 = vmatpush.msra.mxu0 %v602
    %969 = vmatpush.msra.mxu0 %v601
    %970 = vmatpush.msra.mxu0 %v600
    %971 = vmatpush.msra.mxu0 %v599
    %972 = vmatpush.msra.mxu0 %v598
    %973 = vmatpush.msra.mxu0 %v597
    %974 = vmatmul.f32.gmra.mxu0 %v49
    %v975 = vpop.f32.mrf.mxu0
    %v976 = vadd.f32 %v736, %v975
    %977 = vdwg.mxu0
    %978 = vmatpush.msra.mxu0 %v628
    %979 = vmatpush.msra.mxu0 %v627
    %980 = vmatpush.msra.mxu0 %v626
    %981 = vmatpush.msra.mxu0 %v625
    %982 = vmatpush.msra.mxu0 %v624
    %983 = vmatpush.msra.mxu0 %v623
    %984 = vmatpush.msra.mxu0 %v622
    %985 = vmatpush.msra.mxu0 %v621
    %986 = vmatpush.msra.mxu0 %v620
    %987 = vmatpush.msra.mxu0 %v619
    %988 = vmatpush.msra.mxu0 %v618
    %989 = vmatpush.msra.mxu0 %v617
    %990 = vmatpush.msra.mxu0 %v616
    %991 = vmatpush.msra.mxu0 %v615
    %992 = vmatpush.msra.mxu0 %v614
    %993 = vmatpush.msra.mxu0 %v613
    %994 = vmatmul.f32.gmra.mxu0 %v49
    %v995 = vpop.f32.mrf.mxu0
    %v996 = vadd.f32 %v737, %v995
    %997 = vdwg.mxu0
    %998 = vmatpush.msra.mxu0 %v644
    %999 = vmatpush.msra.mxu0 %v643
    %1000 = vmatpush.msra.mxu0 %v642
    %1001 = vmatpush.msra.mxu0 %v641
    %1002 = vmatpush.msra.mxu0 %v640
    %1003 = vmatpush.msra.mxu0 %v639
    %1004 = vmatpush.msra.mxu0 %v638
    %1005 = vmatpush.msra.mxu0 %v637
    %1006 = vmatpush.msra.mxu0 %v636
    %1007 = vmatpush.msra.mxu0 %v635
    %1008 = vmatpush.msra.mxu0 %v634
    %1009 = vmatpush.msra.mxu0 %v633
    %1010 = vmatpush.msra.mxu0 %v632
    %1011 = vmatpush.msra.mxu0 %v631
    %1012 = vmatpush.msra.mxu0 %v630
    %1013 = vmatpush.msra.mxu0 %v629
    %1014 = vmatmul.f32.gmra.mxu0 %v49
    %v1015 = vpop.f32.mrf.mxu0
    %v1016 = vadd.f32 %v738, %v1015
    %1017 = vdwg.mxu0
    %1018 = vmatpush.msra.mxu0 %v660
    %1019 = vmatpush.msra.mxu0 %v659
    %1020 = vmatpush.msra.mxu0 %v658
    %1021 = vmatpush.msra.mxu0 %v657
    %1022 = vmatpush.msra.mxu0 %v656
    %1023 = vmatpush.msra.mxu0 %v655
    %1024 = vmatpush.msra.mxu0 %v654
    %1025 = vmatpush.msra.mxu0 %v653
    %1026 = vmatpush.msra.mxu0 %v652
    %1027 = vmatpush.msra.mxu0 %v651
    %1028 = vmatpush.msra.mxu0 %v650
    %1029 = vmatpush.msra.mxu0 %v649
    %1030 = vmatpush.msra.mxu0 %v648
    %1031 = vmatpush.msra.mxu0 %v647
    %1032 = vmatpush.msra.mxu0 %v646
    %1033 = vmatpush.msra.mxu0 %v645
    %1034 = vmatmul.f32.gmra.mxu0 %v49
    %v1035 = vpop.f32.mrf.mxu0
    %v1036 = vadd.f32 %v739, %v1035
    %1037 = vdwg.mxu0
    %1038 = vmatpush.msra.mxu0 %v676
    %1039 = vmatpush.msra.mxu0 %v675
    %1040 = vmatpush.msra.mxu0 %v674
    %1041 = vmatpush.msra.mxu0 %v673
    %1042 = vmatpush.msra.mxu0 %v672
    %1043 = vmatpush.msra.mxu0 %v671
    %1044 = vmatpush.msra.mxu0 %v670
    %1045 = vmatpush.msra.mxu0 %v669
    %1046 = vmatpush.msra.mxu0 %v668
    %1047 = vmatpush.msra.mxu0 %v667
    %1048 = vmatpush.msra.mxu0 %v666
    %1049 = vmatpush.msra.mxu0 %v665
    %1050 = vmatpush.msra.mxu0 %v664
    %1051 = vmatpush.msra.mxu0 %v663
    %1052 = vmatpush.msra.mxu0 %v662
    %1053 = vmatpush.msra.mxu0 %v661
    %1054 = vmatmul.f32.gmra.mxu0 %v49
    %v1055 = vpop.f32.mrf.mxu0
    %v1056 = vadd.f32 %v740, %v1055
    %1057 = vdwg.mxu0
    %1058 = vmatpush.msra.mxu0 %v692
    %1059 = vmatpush.msra.mxu0 %v691
    %1060 = vmatpush.msra.mxu0 %v690
    %1061 = vmatpush.msra.mxu0 %v689
    %1062 = vmatpush.msra.mxu0 %v688
    %1063 = vmatpush.msra.mxu0 %v687
    %1064 = vmatpush.msra.mxu0 %v686
    %1065 = vmatpush.msra.mxu0 %v685
    %1066 = vmatpush.msra.mxu0 %v684
    %1067 = vmatpush.msra.mxu0 %v683
    %1068 = vmatpush.msra.mxu0 %v682
    %1069 = vmatpush.msra.mxu0 %v681
    %1070 = vmatpush.msra.mxu0 %v680
    %1071 = vmatpush.msra.mxu0 %v679
    %1072 = vmatpush.msra.mxu0 %v678
    %1073 = vmatpush.msra.mxu0 %v677
    %1074 = vmatmul.f32.gmra.mxu0 %v49
    %v1075 = vpop.f32.mrf.mxu0
    %v1076 = vadd.f32 %v741, %v1075
    %1077 = vdwg.mxu0
    %s1078 = scalar_lea.vmem %s2, 2048
    %v1079 = vld [vmem:[%s1078] sm:$0xff]
    %v1080 = vld [vmem:[%s1078 + $0x8] sm:$0xff]
    %v1081 = vld [vmem:[%s1078 + $0x10] sm:$0xff]
    %v1082 = vld [vmem:[%s1078 + $0x18] sm:$0xff]
    %v1083 = vld [vmem:[%s1078 + $0x20] sm:$0xff]
    %v1084 = vld [vmem:[%s1078 + $0x28] sm:$0xff]
    %v1085 = vld [vmem:[%s1078 + $0x30] sm:$0xff]
    %v1086 = vld [vmem:[%s1078 + $0x38] sm:$0xff]
    %v1087 = vld [vmem:[%s1078 + $0x40] sm:$0xff]
    %v1088 = vld [vmem:[%s1078 + $0x48] sm:$0xff]
    %v1089 = vld [vmem:[%s1078 + $0x50] sm:$0xff]
    %v1090 = vld [vmem:[%s1078 + $0x58] sm:$0xff]
    %v1091 = vld [vmem:[%s1078 + $0x60] sm:$0xff]
    %v1092 = vld [vmem:[%s1078 + $0x68] sm:$0xff]
    %v1093 = vld [vmem:[%s1078 + $0x70] sm:$0xff]
    %v1094 = vld [vmem:[%s1078 + $0x78] sm:$0xff]
    %v1095 = vld [vmem:[%s1078 + $0x80] sm:$0xff]
    %v1096 = vld [vmem:[%s1078 + $0x88] sm:$0xff]
    %v1097 = vld [vmem:[%s1078 + $0x90] sm:$0xff]
    %v1098 = vld [vmem:[%s1078 + $0x98] sm:$0xff]
    %v1099 = vld [vmem:[%s1078 + $0xa0] sm:$0xff]
    %v1100 = vld [vmem:[%s1078 + $0xa8] sm:$0xff]
    %v1101 = vld [vmem:[%s1078 + $0xb0] sm:$0xff]
    %v1102 = vld [vmem:[%s1078 + $0xb8] sm:$0xff]
    %v1103 = vld [vmem:[%s1078 + $0xc0] sm:$0xff]
    %v1104 = vld [vmem:[%s1078 + $0xc8] sm:$0xff]
    %v1105 = vld [vmem:[%s1078 + $0xd0] sm:$0xff]
    %v1106 = vld [vmem:[%s1078 + $0xd8] sm:$0xff]
    %v1107 = vld [vmem:[%s1078 + $0xe0] sm:$0xff]
    %v1108 = vld [vmem:[%s1078 + $0xe8] sm:$0xff]
    %v1109 = vld [vmem:[%s1078 + $0xf0] sm:$0xff]
    %v1110 = vld [vmem:[%s1078 + $0xf8] sm:$0xff]
    %v1111 = vld [vmem:[%s1078 + $0x100] sm:$0xff]
    %v1112 = vld [vmem:[%s1078 + $0x108] sm:$0xff]
    %v1113 = vld [vmem:[%s1078 + $0x110] sm:$0xff]
    %v1114 = vld [vmem:[%s1078 + $0x118] sm:$0xff]
    %v1115 = vld [vmem:[%s1078 + $0x120] sm:$0xff]
    %v1116 = vld [vmem:[%s1078 + $0x128] sm:$0xff]
    %v1117 = vld [vmem:[%s1078 + $0x130] sm:$0xff]
    %v1118 = vld [vmem:[%s1078 + $0x138] sm:$0xff]
    %v1119 = vld [vmem:[%s1078 + $0x140] sm:$0xff]
    %v1120 = vld [vmem:[%s1078 + $0x148] sm:$0xff]
    %v1121 = vld [vmem:[%s1078 + $0x150] sm:$0xff]
    %v1122 = vld [vmem:[%s1078 + $0x158] sm:$0xff]
    %v1123 = vld [vmem:[%s1078 + $0x160] sm:$0xff]
    %v1124 = vld [vmem:[%s1078 + $0x168] sm:$0xff]
    %v1125 = vld [vmem:[%s1078 + $0x170] sm:$0xff]
    %v1126 = vld [vmem:[%s1078 + $0x178] sm:$0xff]
    %v1127 = vld [vmem:[%s1078 + $0x180] sm:$0xff]
    %v1128 = vld [vmem:[%s1078 + $0x188] sm:$0xff]
    %v1129 = vld [vmem:[%s1078 + $0x190] sm:$0xff]
    %v1130 = vld [vmem:[%s1078 + $0x198] sm:$0xff]
    %v1131 = vld [vmem:[%s1078 + $0x1a0] sm:$0xff]
    %v1132 = vld [vmem:[%s1078 + $0x1a8] sm:$0xff]
    %v1133 = vld [vmem:[%s1078 + $0x1b0] sm:$0xff]
    %v1134 = vld [vmem:[%s1078 + $0x1b8] sm:$0xff]
    %v1135 = vld [vmem:[%s1078 + $0x1c0] sm:$0xff]
    %v1136 = vld [vmem:[%s1078 + $0x1c8] sm:$0xff]
    %v1137 = vld [vmem:[%s1078 + $0x1d0] sm:$0xff]
    %v1138 = vld [vmem:[%s1078 + $0x1d8] sm:$0xff]
    %v1139 = vld [vmem:[%s1078 + $0x1e0] sm:$0xff]
    %v1140 = vld [vmem:[%s1078 + $0x1e8] sm:$0xff]
    %v1141 = vld [vmem:[%s1078 + $0x1f0] sm:$0xff]
    %v1142 = vld [vmem:[%s1078 + $0x1f8] sm:$0xff]
    %v1143 = vld [vmem:[%s1078 + $0x200] sm:$0xff]
    %v1144 = vld [vmem:[%s1078 + $0x208] sm:$0xff]
    %v1145 = vld [vmem:[%s1078 + $0x210] sm:$0xff]
    %v1146 = vld [vmem:[%s1078 + $0x218] sm:$0xff]
    %v1147 = vld [vmem:[%s1078 + $0x220] sm:$0xff]
    %v1148 = vld [vmem:[%s1078 + $0x228] sm:$0xff]
    %v1149 = vld [vmem:[%s1078 + $0x230] sm:$0xff]
    %v1150 = vld [vmem:[%s1078 + $0x238] sm:$0xff]
    %v1151 = vld [vmem:[%s1078 + $0x240] sm:$0xff]
    %v1152 = vld [vmem:[%s1078 + $0x248] sm:$0xff]
    %v1153 = vld [vmem:[%s1078 + $0x250] sm:$0xff]
    %v1154 = vld [vmem:[%s1078 + $0x258] sm:$0xff]
    %v1155 = vld [vmem:[%s1078 + $0x260] sm:$0xff]
    %v1156 = vld [vmem:[%s1078 + $0x268] sm:$0xff]
    %v1157 = vld [vmem:[%s1078 + $0x270] sm:$0xff]
    %v1158 = vld [vmem:[%s1078 + $0x278] sm:$0xff]
    %v1159 = vld [vmem:[%s1078 + $0x280] sm:$0xff]
    %v1160 = vld [vmem:[%s1078 + $0x288] sm:$0xff]
    %v1161 = vld [vmem:[%s1078 + $0x290] sm:$0xff]
    %v1162 = vld [vmem:[%s1078 + $0x298] sm:$0xff]
    %v1163 = vld [vmem:[%s1078 + $0x2a0] sm:$0xff]
    %v1164 = vld [vmem:[%s1078 + $0x2a8] sm:$0xff]
    %v1165 = vld [vmem:[%s1078 + $0x2b0] sm:$0xff]
    %v1166 = vld [vmem:[%s1078 + $0x2b8] sm:$0xff]
    %v1167 = vld [vmem:[%s1078 + $0x2c0] sm:$0xff]
    %v1168 = vld [vmem:[%s1078 + $0x2c8] sm:$0xff]
    %v1169 = vld [vmem:[%s1078 + $0x2d0] sm:$0xff]
    %v1170 = vld [vmem:[%s1078 + $0x2d8] sm:$0xff]
    %v1171 = vld [vmem:[%s1078 + $0x2e0] sm:$0xff]
    %v1172 = vld [vmem:[%s1078 + $0x2e8] sm:$0xff]
    %v1173 = vld [vmem:[%s1078 + $0x2f0] sm:$0xff]
    %v1174 = vld [vmem:[%s1078 + $0x2f8] sm:$0xff]
    %v1175 = vld [vmem:[%s1078 + $0x300] sm:$0xff]
    %v1176 = vld [vmem:[%s1078 + $0x308] sm:$0xff]
    %v1177 = vld [vmem:[%s1078 + $0x310] sm:$0xff]
    %v1178 = vld [vmem:[%s1078 + $0x318] sm:$0xff]
    %v1179 = vld [vmem:[%s1078 + $0x320] sm:$0xff]
    %v1180 = vld [vmem:[%s1078 + $0x328] sm:$0xff]
    %v1181 = vld [vmem:[%s1078 + $0x330] sm:$0xff]
    %v1182 = vld [vmem:[%s1078 + $0x338] sm:$0xff]
    %v1183 = vld [vmem:[%s1078 + $0x340] sm:$0xff]
    %v1184 = vld [vmem:[%s1078 + $0x348] sm:$0xff]
    %v1185 = vld [vmem:[%s1078 + $0x350] sm:$0xff]
    %v1186 = vld [vmem:[%s1078 + $0x358] sm:$0xff]
    %v1187 = vld [vmem:[%s1078 + $0x360] sm:$0xff]
    %v1188 = vld [vmem:[%s1078 + $0x368] sm:$0xff]
    %v1189 = vld [vmem:[%s1078 + $0x370] sm:$0xff]
    %v1190 = vld [vmem:[%s1078 + $0x378] sm:$0xff]
    %v1191 = vld [vmem:[%s1078 + $0x380] sm:$0xff]
    %v1192 = vld [vmem:[%s1078 + $0x388] sm:$0xff]
    %v1193 = vld [vmem:[%s1078 + $0x390] sm:$0xff]
    %v1194 = vld [vmem:[%s1078 + $0x398] sm:$0xff]
    %v1195 = vld [vmem:[%s1078 + $0x3a0] sm:$0xff]
    %v1196 = vld [vmem:[%s1078 + $0x3a8] sm:$0xff]
    %v1197 = vld [vmem:[%s1078 + $0x3b0] sm:$0xff]
    %v1198 = vld [vmem:[%s1078 + $0x3b8] sm:$0xff]
    %v1199 = vld [vmem:[%s1078 + $0x3c0] sm:$0xff]
    %v1200 = vld [vmem:[%s1078 + $0x3c8] sm:$0xff]
    %v1201 = vld [vmem:[%s1078 + $0x3d0] sm:$0xff]
    %v1202 = vld [vmem:[%s1078 + $0x3d8] sm:$0xff]
    %v1203 = vld [vmem:[%s1078 + $0x3e0] sm:$0xff]
    %v1204 = vld [vmem:[%s1078 + $0x3e8] sm:$0xff]
    %v1205 = vld [vmem:[%s1078 + $0x3f0] sm:$0xff]
    %v1206 = vld [vmem:[%s1078 + $0x3f8] sm:$0xff]
    %s1207 = scalar_lea.vmem %s4, 32
    %v1208 = vld [vmem:[%s1207] sm:$0x1]
    %v1209 = vld [vmem:[%s1207 + $0x1] sm:$0x1]
    %v1210 = vld [vmem:[%s1207 + $0x2] sm:$0x1]
    %v1211 = vld [vmem:[%s1207 + $0x3] sm:$0x1]
    %v1212 = vld [vmem:[%s1207 + $0x4] sm:$0x1]
    %v1213 = vld [vmem:[%s1207 + $0x5] sm:$0x1]
    %v1214 = vld [vmem:[%s1207 + $0x6] sm:$0x1]
    %v1215 = vld [vmem:[%s1207 + $0x7] sm:$0x1]
    %v1216 = vld [vmem:[%s1207 + $0x8] sm:$0x1]
    %v1217 = vld [vmem:[%s1207 + $0x9] sm:$0x1]
    %v1218 = vld [vmem:[%s1207 + $0xa] sm:$0x1]
    %v1219 = vld [vmem:[%s1207 + $0xb] sm:$0x1]
    %v1220 = vld [vmem:[%s1207 + $0xc] sm:$0x1]
    %v1221 = vld [vmem:[%s1207 + $0xd] sm:$0x1]
    %v1222 = vld [vmem:[%s1207 + $0xe] sm:$0x1]
    %v1223 = vld [vmem:[%s1207 + $0xf] sm:$0x1]
    %v1240 = vperm.slane %v1208, 0
    %v1241 = vperm.slane %v1209, 0
    %v1242 = vperm.slane %v1210, 0
    %v1243 = vperm.slane %v1211, 0
    %v1244 = vperm.slane %v1212, 0
    %v1245 = vperm.slane %v1213, 0
    %v1246 = vperm.slane %v1214, 0
    %v1247 = vperm.slane %v1215, 0
    %v1248 = vperm.slane %v1216, 0
    %v1249 = vperm.slane %v1217, 0
    %v1250 = vperm.slane %v1218, 0
    %v1251 = vperm.slane %v1219, 0
    %v1252 = vperm.slane %v1220, 0
    %v1253 = vperm.slane %v1221, 0
    %v1254 = vperm.slane %v1222, 0
    %v1255 = vperm.slane %v1223, 0
    %1272 = vmatpush.msra.mxu0 %v1094
    %1273 = vmatpush.msra.mxu0 %v1093
    %1274 = vmatpush.msra.mxu0 %v1092
    %1275 = vmatpush.msra.mxu0 %v1091
    %1276 = vmatpush.msra.mxu0 %v1090
    %1277 = vmatpush.msra.mxu0 %v1089
    %1278 = vmatpush.msra.mxu0 %v1088
    %1279 = vmatpush.msra.mxu0 %v1087
    %1280 = vmatpush.msra.mxu0 %v1086
    %1281 = vmatpush.msra.mxu0 %v1085
    %1282 = vmatpush.msra.mxu0 %v1084
    %1283 = vmatpush.msra.mxu0 %v1083
    %1284 = vmatpush.msra.mxu0 %v1082
    %1285 = vmatpush.msra.mxu0 %v1081
    %1286 = vmatpush.msra.mxu0 %v1080
    %1287 = vmatpush.msra.mxu0 %v1079
    %1288 = vmatmul.f32.gmra.mxu0 %v48
    %v1289 = vpop.f32.mrf.mxu0
    %v1290 = vadd.f32 %v1240, %v1289
    %1291 = vdwg.mxu0
    %1292 = vmatpush.msra.mxu0 %v1110
    %1293 = vmatpush.msra.mxu0 %v1109
    %1294 = vmatpush.msra.mxu0 %v1108
    %1295 = vmatpush.msra.mxu0 %v1107
    %1296 = vmatpush.msra.mxu0 %v1106
    %1297 = vmatpush.msra.mxu0 %v1105
    %1298 = vmatpush.msra.mxu0 %v1104
    %1299 = vmatpush.msra.mxu0 %v1103
    %1300 = vmatpush.msra.mxu0 %v1102
    %1301 = vmatpush.msra.mxu0 %v1101
    %1302 = vmatpush.msra.mxu0 %v1100
    %1303 = vmatpush.msra.mxu0 %v1099
    %1304 = vmatpush.msra.mxu0 %v1098
    %1305 = vmatpush.msra.mxu0 %v1097
    %1306 = vmatpush.msra.mxu0 %v1096
    %1307 = vmatpush.msra.mxu0 %v1095
    %1308 = vmatmul.f32.gmra.mxu0 %v48
    %v1309 = vpop.f32.mrf.mxu0
    %v1310 = vadd.f32 %v1241, %v1309
    %1311 = vdwg.mxu0
    %1312 = vmatpush.msra.mxu0 %v1126
    %1313 = vmatpush.msra.mxu0 %v1125
    %1314 = vmatpush.msra.mxu0 %v1124
    %1315 = vmatpush.msra.mxu0 %v1123
    %1316 = vmatpush.msra.mxu0 %v1122
    %1317 = vmatpush.msra.mxu0 %v1121
    %1318 = vmatpush.msra.mxu0 %v1120
    %1319 = vmatpush.msra.mxu0 %v1119
    %1320 = vmatpush.msra.mxu0 %v1118
    %1321 = vmatpush.msra.mxu0 %v1117
    %1322 = vmatpush.msra.mxu0 %v1116
    %1323 = vmatpush.msra.mxu0 %v1115
    %1324 = vmatpush.msra.mxu0 %v1114
    %1325 = vmatpush.msra.mxu0 %v1113
    %1326 = vmatpush.msra.mxu0 %v1112
    %1327 = vmatpush.msra.mxu0 %v1111
    %1328 = vmatmul.f32.gmra.mxu0 %v48
    %v1329 = vpop.f32.mrf.mxu0
    %v1330 = vadd.f32 %v1242, %v1329
    %1331 = vdwg.mxu0
    %1332 = vmatpush.msra.mxu0 %v1142
    %1333 = vmatpush.msra.mxu0 %v1141
    %1334 = vmatpush.msra.mxu0 %v1140
    %1335 = vmatpush.msra.mxu0 %v1139
    %1336 = vmatpush.msra.mxu0 %v1138
    %1337 = vmatpush.msra.mxu0 %v1137
    %1338 = vmatpush.msra.mxu0 %v1136
    %1339 = vmatpush.msra.mxu0 %v1135
    %1340 = vmatpush.msra.mxu0 %v1134
    %1341 = vmatpush.msra.mxu0 %v1133
    %1342 = vmatpush.msra.mxu0 %v1132
    %1343 = vmatpush.msra.mxu0 %v1131
    %1344 = vmatpush.msra.mxu0 %v1130
    %1345 = vmatpush.msra.mxu0 %v1129
    %1346 = vmatpush.msra.mxu0 %v1128
    %1347 = vmatpush.msra.mxu0 %v1127
    %1348 = vmatmul.f32.gmra.mxu0 %v48
    %v1349 = vpop.f32.mrf.mxu0
    %v1350 = vadd.f32 %v1243, %v1349
    %1351 = vdwg.mxu0
    %1352 = vmatpush.msra.mxu0 %v1158
    %1353 = vmatpush.msra.mxu0 %v1157
    %1354 = vmatpush.msra.mxu0 %v1156
    %1355 = vmatpush.msra.mxu0 %v1155
    %1356 = vmatpush.msra.mxu0 %v1154
    %1357 = vmatpush.msra.mxu0 %v1153
    %1358 = vmatpush.msra.mxu0 %v1152
    %1359 = vmatpush.msra.mxu0 %v1151
    %1360 = vmatpush.msra.mxu0 %v1150
    %1361 = vmatpush.msra.mxu0 %v1149
    %1362 = vmatpush.msra.mxu0 %v1148
    %1363 = vmatpush.msra.mxu0 %v1147
    %1364 = vmatpush.msra.mxu0 %v1146
    %1365 = vmatpush.msra.mxu0 %v1145
    %1366 = vmatpush.msra.mxu0 %v1144
    %1367 = vmatpush.msra.mxu0 %v1143
    %1368 = vmatmul.f32.gmra.mxu0 %v48
    %v1369 = vpop.f32.mrf.mxu0
    %v1370 = vadd.f32 %v1244, %v1369
    %1371 = vdwg.mxu0
    %1372 = vmatpush.msra.mxu0 %v1174
    %1373 = vmatpush.msra.mxu0 %v1173
    %1374 = vmatpush.msra.mxu0 %v1172
    %1375 = vmatpush.msra.mxu0 %v1171
    %1376 = vmatpush.msra.mxu0 %v1170
    %1377 = vmatpush.msra.mxu0 %v1169
    %1378 = vmatpush.msra.mxu0 %v1168
    %1379 = vmatpush.msra.mxu0 %v1167
    %1380 = vmatpush.msra.mxu0 %v1166
    %1381 = vmatpush.msra.mxu0 %v1165
    %1382 = vmatpush.msra.mxu0 %v1164
    %1383 = vmatpush.msra.mxu0 %v1163
    %1384 = vmatpush.msra.mxu0 %v1162
    %1385 = vmatpush.msra.mxu0 %v1161
    %1386 = vmatpush.msra.mxu0 %v1160
    %1387 = vmatpush.msra.mxu0 %v1159
    %1388 = vmatmul.f32.gmra.mxu0 %v48
    %v1389 = vpop.f32.mrf.mxu0
    %v1390 = vadd.f32 %v1245, %v1389
    %1391 = vdwg.mxu0
    %1392 = vmatpush.msra.mxu0 %v1190
    %1393 = vmatpush.msra.mxu0 %v1189
    %1394 = vmatpush.msra.mxu0 %v1188
    %1395 = vmatpush.msra.mxu0 %v1187
    %1396 = vmatpush.msra.mxu0 %v1186
    %1397 = vmatpush.msra.mxu0 %v1185
    %1398 = vmatpush.msra.mxu0 %v1184
    %1399 = vmatpush.msra.mxu0 %v1183
    %1400 = vmatpush.msra.mxu0 %v1182
    %1401 = vmatpush.msra.mxu0 %v1181
    %1402 = vmatpush.msra.mxu0 %v1180
    %1403 = vmatpush.msra.mxu0 %v1179
    %1404 = vmatpush.msra.mxu0 %v1178
    %1405 = vmatpush.msra.mxu0 %v1177
    %1406 = vmatpush.msra.mxu0 %v1176
    %1407 = vmatpush.msra.mxu0 %v1175
    %1408 = vmatmul.f32.gmra.mxu0 %v48
    %v1409 = vpop.f32.mrf.mxu0
    %v1410 = vadd.f32 %v1246, %v1409
    %1411 = vdwg.mxu0
    %1412 = vmatpush.msra.mxu0 %v1206
    %1413 = vmatpush.msra.mxu0 %v1205
    %1414 = vmatpush.msra.mxu0 %v1204
    %1415 = vmatpush.msra.mxu0 %v1203
    %1416 = vmatpush.msra.mxu0 %v1202
    %1417 = vmatpush.msra.mxu0 %v1201
    %1418 = vmatpush.msra.mxu0 %v1200
    %1419 = vmatpush.msra.mxu0 %v1199
    %1420 = vmatpush.msra.mxu0 %v1198
    %1421 = vmatpush.msra.mxu0 %v1197
    %1422 = vmatpush.msra.mxu0 %v1196
    %1423 = vmatpush.msra.mxu0 %v1195
    %1424 = vmatpush.msra.mxu0 %v1194
    %1425 = vmatpush.msra.mxu0 %v1193
    %1426 = vmatpush.msra.mxu0 %v1192
    %1427 = vmatpush.msra.mxu0 %v1191
    %1428 = vmatmul.f32.gmra.mxu0 %v48
    %v1429 = vpop.f32.mrf.mxu0
    %v1430 = vadd.f32 %v1247, %v1429
    %1431 = vdwg.mxu0
    %1432 = vmatpush.msra.mxu0 %v1094
    %1433 = vmatpush.msra.mxu0 %v1093
    %1434 = vmatpush.msra.mxu0 %v1092
    %1435 = vmatpush.msra.mxu0 %v1091
    %1436 = vmatpush.msra.mxu0 %v1090
    %1437 = vmatpush.msra.mxu0 %v1089
    %1438 = vmatpush.msra.mxu0 %v1088
    %1439 = vmatpush.msra.mxu0 %v1087
    %1440 = vmatpush.msra.mxu0 %v1086
    %1441 = vmatpush.msra.mxu0 %v1085
    %1442 = vmatpush.msra.mxu0 %v1084
    %1443 = vmatpush.msra.mxu0 %v1083
    %1444 = vmatpush.msra.mxu0 %v1082
    %1445 = vmatpush.msra.mxu0 %v1081
    %1446 = vmatpush.msra.mxu0 %v1080
    %1447 = vmatpush.msra.mxu0 %v1079
    %1448 = vmatmul.f32.gmra.mxu0 %v49
    %v1449 = vpop.f32.mrf.mxu0
    %v1450 = vadd.f32 %v1248, %v1449
    %1451 = vdwg.mxu0
    %1452 = vmatpush.msra.mxu0 %v1110
    %1453 = vmatpush.msra.mxu0 %v1109
    %1454 = vmatpush.msra.mxu0 %v1108
    %1455 = vmatpush.msra.mxu0 %v1107
    %1456 = vmatpush.msra.mxu0 %v1106
    %1457 = vmatpush.msra.mxu0 %v1105
    %1458 = vmatpush.msra.mxu0 %v1104
    %1459 = vmatpush.msra.mxu0 %v1103
    %1460 = vmatpush.msra.mxu0 %v1102
    %1461 = vmatpush.msra.mxu0 %v1101
    %1462 = vmatpush.msra.mxu0 %v1100
    %1463 = vmatpush.msra.mxu0 %v1099
    %1464 = vmatpush.msra.mxu0 %v1098
    %1465 = vmatpush.msra.mxu0 %v1097
    %1466 = vmatpush.msra.mxu0 %v1096
    %1467 = vmatpush.msra.mxu0 %v1095
    %1468 = vmatmul.f32.gmra.mxu0 %v49
    %v1469 = vpop.f32.mrf.mxu0
    %v1470 = vadd.f32 %v1249, %v1469
    %1471 = vdwg.mxu0
    %1472 = vmatpush.msra.mxu0 %v1126
    %1473 = vmatpush.msra.mxu0 %v1125
    %1474 = vmatpush.msra.mxu0 %v1124
    %1475 = vmatpush.msra.mxu0 %v1123
    %1476 = vmatpush.msra.mxu0 %v1122
    %1477 = vmatpush.msra.mxu0 %v1121
    %1478 = vmatpush.msra.mxu0 %v1120
    %1479 = vmatpush.msra.mxu0 %v1119
    %1480 = vmatpush.msra.mxu0 %v1118
    %1481 = vmatpush.msra.mxu0 %v1117
    %1482 = vmatpush.msra.mxu0 %v1116
    %1483 = vmatpush.msra.mxu0 %v1115
    %1484 = vmatpush.msra.mxu0 %v1114
    %1485 = vmatpush.msra.mxu0 %v1113
    %1486 = vmatpush.msra.mxu0 %v1112
    %1487 = vmatpush.msra.mxu0 %v1111
    %1488 = vmatmul.f32.gmra.mxu0 %v49
    %v1489 = vpop.f32.mrf.mxu0
    %v1490 = vadd.f32 %v1250, %v1489
    %1491 = vdwg.mxu0
    %1492 = vmatpush.msra.mxu0 %v1142
    %1493 = vmatpush.msra.mxu0 %v1141
    %1494 = vmatpush.msra.mxu0 %v1140
    %1495 = vmatpush.msra.mxu0 %v1139
    %1496 = vmatpush.msra.mxu0 %v1138
    %1497 = vmatpush.msra.mxu0 %v1137
    %1498 = vmatpush.msra.mxu0 %v1136
    %1499 = vmatpush.msra.mxu0 %v1135
    %1500 = vmatpush.msra.mxu0 %v1134
    %1501 = vmatpush.msra.mxu0 %v1133
    %1502 = vmatpush.msra.mxu0 %v1132
    %1503 = vmatpush.msra.mxu0 %v1131
    %1504 = vmatpush.msra.mxu0 %v1130
    %1505 = vmatpush.msra.mxu0 %v1129
    %1506 = vmatpush.msra.mxu0 %v1128
    %1507 = vmatpush.msra.mxu0 %v1127
    %1508 = vmatmul.f32.gmra.mxu0 %v49
    %v1509 = vpop.f32.mrf.mxu0
    %v1510 = vadd.f32 %v1251, %v1509
    %1511 = vdwg.mxu0
    %1512 = vmatpush.msra.mxu0 %v1158
    %1513 = vmatpush.msra.mxu0 %v1157
    %1514 = vmatpush.msra.mxu0 %v1156
    %1515 = vmatpush.msra.mxu0 %v1155
    %1516 = vmatpush.msra.mxu0 %v1154
    %1517 = vmatpush.msra.mxu0 %v1153
    %1518 = vmatpush.msra.mxu0 %v1152
    %1519 = vmatpush.msra.mxu0 %v1151
    %1520 = vmatpush.msra.mxu0 %v1150
    %1521 = vmatpush.msra.mxu0 %v1149
    %1522 = vmatpush.msra.mxu0 %v1148
    %1523 = vmatpush.msra.mxu0 %v1147
    %1524 = vmatpush.msra.mxu0 %v1146
    %1525 = vmatpush.msra.mxu0 %v1145
    %1526 = vmatpush.msra.mxu0 %v1144
    %1527 = vmatpush.msra.mxu0 %v1143
    %1528 = vmatmul.f32.gmra.mxu0 %v49
    %v1529 = vpop.f32.mrf.mxu0
    %v1530 = vadd.f32 %v1252, %v1529
    %1531 = vdwg.mxu0
    %1532 = vmatpush.msra.mxu0 %v1174
    %1533 = vmatpush.msra.mxu0 %v1173
    %1534 = vmatpush.msra.mxu0 %v1172
    %1535 = vmatpush.msra.mxu0 %v1171
    %1536 = vmatpush.msra.mxu0 %v1170
    %1537 = vmatpush.msra.mxu0 %v1169
    %1538 = vmatpush.msra.mxu0 %v1168
    %1539 = vmatpush.msra.mxu0 %v1167
    %1540 = vmatpush.msra.mxu0 %v1166
    %1541 = vmatpush.msra.mxu0 %v1165
    %1542 = vmatpush.msra.mxu0 %v1164
    %1543 = vmatpush.msra.mxu0 %v1163
    %1544 = vmatpush.msra.mxu0 %v1162
    %1545 = vmatpush.msra.mxu0 %v1161
    %1546 = vmatpush.msra.mxu0 %v1160
    %1547 = vmatpush.msra.mxu0 %v1159
    %1548 = vmatmul.f32.gmra.mxu0 %v49
    %v1549 = vpop.f32.mrf.mxu0
    %v1550 = vadd.f32 %v1253, %v1549
    %1551 = vdwg.mxu0
    %1552 = vmatpush.msra.mxu0 %v1190
    %1553 = vmatpush.msra.mxu0 %v1189
    %1554 = vmatpush.msra.mxu0 %v1188
    %1555 = vmatpush.msra.mxu0 %v1187
    %1556 = vmatpush.msra.mxu0 %v1186
    %1557 = vmatpush.msra.mxu0 %v1185
    %1558 = vmatpush.msra.mxu0 %v1184
    %1559 = vmatpush.msra.mxu0 %v1183
    %1560 = vmatpush.msra.mxu0 %v1182
    %1561 = vmatpush.msra.mxu0 %v1181
    %1562 = vmatpush.msra.mxu0 %v1180
    %1563 = vmatpush.msra.mxu0 %v1179
    %1564 = vmatpush.msra.mxu0 %v1178
    %1565 = vmatpush.msra.mxu0 %v1177
    %1566 = vmatpush.msra.mxu0 %v1176
    %1567 = vmatpush.msra.mxu0 %v1175
    %1568 = vmatmul.f32.gmra.mxu0 %v49
    %v1569 = vpop.f32.mrf.mxu0
    %v1570 = vadd.f32 %v1254, %v1569
    %1571 = vdwg.mxu0
    %1572 = vmatpush.msra.mxu0 %v1206
    %1573 = vmatpush.msra.mxu0 %v1205
    %1574 = vmatpush.msra.mxu0 %v1204
    %1575 = vmatpush.msra.mxu0 %v1203
    %1576 = vmatpush.msra.mxu0 %v1202
    %1577 = vmatpush.msra.mxu0 %v1201
    %1578 = vmatpush.msra.mxu0 %v1200
    %1579 = vmatpush.msra.mxu0 %v1199
    %1580 = vmatpush.msra.mxu0 %v1198
    %1581 = vmatpush.msra.mxu0 %v1197
    %1582 = vmatpush.msra.mxu0 %v1196
    %1583 = vmatpush.msra.mxu0 %v1195
    %1584 = vmatpush.msra.mxu0 %v1194
    %1585 = vmatpush.msra.mxu0 %v1193
    %1586 = vmatpush.msra.mxu0 %v1192
    %1587 = vmatpush.msra.mxu0 %v1191
    %1588 = vmatmul.f32.gmra.mxu0 %v49
    %v1589 = vpop.f32.mrf.mxu0
    %v1590 = vadd.f32 %v1255, %v1589
    %1591 = vdwg.mxu0
    %vm1592 = vcmask 130048
    %v1594 = vsel %vm1592, %v262, 0
    %v1597 = vsel %vm1592, %v776, 0
    %1599 = vmatpush.xpose.msra.mxu0 0.0
    %1600 = vmatpush.xpose.msra.mxu0 0.0
    %1601 = vmatpush.xpose.msra.mxu0 0.0
    %1602 = vmatpush.xpose.msra.mxu0 0.0
    %1603 = vmatpush.xpose.msra.mxu0 0.0
    %1604 = vmatpush.xpose.msra.mxu0 0.0
    %1605 = vmatpush.xpose.msra.mxu0 0.0
    %1606 = vmatpush.xpose.msra.mxu0 0.0
    %1607 = vmatpush.xpose.msra.mxu0 0.0
    %1608 = vmatpush.xpose.msra.mxu0 0.0
    %1609 = vmatpush.xpose.msra.mxu0 0.0
    %1610 = vmatpush.xpose.msra.mxu0 0.0
    %1611 = vmatpush.xpose.msra.mxu0 0.0
    %1612 = vmatpush.xpose.msra.mxu0 0.0
    %1613 = vmatpush.xpose.msra.mxu0 0.0
    %1614 = vmatpush.xpose.msra.mxu0 %v1597
    %1615 = vmatmul.f32.gmra.mxu0 %v1594
    %v1616 = vpop.f32.mrf.mxu0
    %v1617 = vadd.f32 0.0, %v1616
    %1618 = vdwg.mxu0
    %v1620 = vsel %vm1592, %v282, 0
    %v1623 = vsel %vm1592, %v796, 0
    %1625 = vmatpush.xpose.msra.mxu0 0.0
    %1626 = vmatpush.xpose.msra.mxu0 0.0
    %1627 = vmatpush.xpose.msra.mxu0 0.0
    %1628 = vmatpush.xpose.msra.mxu0 0.0
    %1629 = vmatpush.xpose.msra.mxu0 0.0
    %1630 = vmatpush.xpose.msra.mxu0 0.0
    %1631 = vmatpush.xpose.msra.mxu0 0.0
    %1632 = vmatpush.xpose.msra.mxu0 0.0
    %1633 = vmatpush.xpose.msra.mxu0 0.0
    %1634 = vmatpush.xpose.msra.mxu0 0.0
    %1635 = vmatpush.xpose.msra.mxu0 0.0
    %1636 = vmatpush.xpose.msra.mxu0 0.0
    %1637 = vmatpush.xpose.msra.mxu0 0.0
    %1638 = vmatpush.xpose.msra.mxu0 0.0
    %1639 = vmatpush.xpose.msra.mxu0 0.0
    %1640 = vmatpush.xpose.msra.mxu0 %v1623
    %1641 = vmatmul.f32.gmra.mxu0 %v1620
    %v1642 = vpop.f32.mrf.mxu0
    %v1643 = vadd.f32 0.0, %v1642
    %1644 = vdwg.mxu0
    %v1646 = vsel %vm1592, %v302, 0
    %v1649 = vsel %vm1592, %v816, 0
    %1651 = vmatpush.xpose.msra.mxu0 0.0
    %1652 = vmatpush.xpose.msra.mxu0 0.0
    %1653 = vmatpush.xpose.msra.mxu0 0.0
    %1654 = vmatpush.xpose.msra.mxu0 0.0
    %1655 = vmatpush.xpose.msra.mxu0 0.0
    %1656 = vmatpush.xpose.msra.mxu0 0.0
    %1657 = vmatpush.xpose.msra.mxu0 0.0
    %1658 = vmatpush.xpose.msra.mxu0 0.0
    %1659 = vmatpush.xpose.msra.mxu0 0.0
    %1660 = vmatpush.xpose.msra.mxu0 0.0
    %1661 = vmatpush.xpose.msra.mxu0 0.0
    %1662 = vmatpush.xpose.msra.mxu0 0.0
    %1663 = vmatpush.xpose.msra.mxu0 0.0
    %1664 = vmatpush.xpose.msra.mxu0 0.0
    %1665 = vmatpush.xpose.msra.mxu0 0.0
    %1666 = vmatpush.xpose.msra.mxu0 %v1649
    %1667 = vmatmul.f32.gmra.mxu0 %v1646
    %v1668 = vpop.f32.mrf.mxu0
    %v1669 = vadd.f32 0.0, %v1668
    %1670 = vdwg.mxu0
    %v1672 = vsel %vm1592, %v322, 0
    %v1675 = vsel %vm1592, %v836, 0
    %1677 = vmatpush.xpose.msra.mxu0 0.0
    %1678 = vmatpush.xpose.msra.mxu0 0.0
    %1679 = vmatpush.xpose.msra.mxu0 0.0
    %1680 = vmatpush.xpose.msra.mxu0 0.0
    %1681 = vmatpush.xpose.msra.mxu0 0.0
    %1682 = vmatpush.xpose.msra.mxu0 0.0
    %1683 = vmatpush.xpose.msra.mxu0 0.0
    %1684 = vmatpush.xpose.msra.mxu0 0.0
    %1685 = vmatpush.xpose.msra.mxu0 0.0
    %1686 = vmatpush.xpose.msra.mxu0 0.0
    %1687 = vmatpush.xpose.msra.mxu0 0.0
    %1688 = vmatpush.xpose.msra.mxu0 0.0
    %1689 = vmatpush.xpose.msra.mxu0 0.0
    %1690 = vmatpush.xpose.msra.mxu0 0.0
    %1691 = vmatpush.xpose.msra.mxu0 0.0
    %1692 = vmatpush.xpose.msra.mxu0 %v1675
    %1693 = vmatmul.f32.gmra.mxu0 %v1672
    %v1694 = vpop.f32.mrf.mxu0
    %v1695 = vadd.f32 0.0, %v1694
    %1696 = vdwg.mxu0
    %v1698 = vsel %vm1592, %v342, 0
    %v1701 = vsel %vm1592, %v856, 0
    %1703 = vmatpush.xpose.msra.mxu0 0.0
    %1704 = vmatpush.xpose.msra.mxu0 0.0
    %1705 = vmatpush.xpose.msra.mxu0 0.0
    %1706 = vmatpush.xpose.msra.mxu0 0.0
    %1707 = vmatpush.xpose.msra.mxu0 0.0
    %1708 = vmatpush.xpose.msra.mxu0 0.0
    %1709 = vmatpush.xpose.msra.mxu0 0.0
    %1710 = vmatpush.xpose.msra.mxu0 0.0
    %1711 = vmatpush.xpose.msra.mxu0 0.0
    %1712 = vmatpush.xpose.msra.mxu0 0.0
    %1713 = vmatpush.xpose.msra.mxu0 0.0
    %1714 = vmatpush.xpose.msra.mxu0 0.0
    %1715 = vmatpush.xpose.msra.mxu0 0.0
    %1716 = vmatpush.xpose.msra.mxu0 0.0
    %1717 = vmatpush.xpose.msra.mxu0 0.0
    %1718 = vmatpush.xpose.msra.mxu0 %v1701
    %1719 = vmatmul.f32.gmra.mxu0 %v1698
    %v1720 = vpop.f32.mrf.mxu0
    %v1721 = vadd.f32 0.0, %v1720
    %1722 = vdwg.mxu0
    %v1724 = vsel %vm1592, %v362, 0
    %v1727 = vsel %vm1592, %v876, 0
    %1729 = vmatpush.xpose.msra.mxu0 0.0
    %1730 = vmatpush.xpose.msra.mxu0 0.0
    %1731 = vmatpush.xpose.msra.mxu0 0.0
    %1732 = vmatpush.xpose.msra.mxu0 0.0
    %1733 = vmatpush.xpose.msra.mxu0 0.0
    %1734 = vmatpush.xpose.msra.mxu0 0.0
    %1735 = vmatpush.xpose.msra.mxu0 0.0
    %1736 = vmatpush.xpose.msra.mxu0 0.0
    %1737 = vmatpush.xpose.msra.mxu0 0.0
    %1738 = vmatpush.xpose.msra.mxu0 0.0
    %1739 = vmatpush.xpose.msra.mxu0 0.0
    %1740 = vmatpush.xpose.msra.mxu0 0.0
    %1741 = vmatpush.xpose.msra.mxu0 0.0
    %1742 = vmatpush.xpose.msra.mxu0 0.0
    %1743 = vmatpush.xpose.msra.mxu0 0.0
    %1744 = vmatpush.xpose.msra.mxu0 %v1727
    %1745 = vmatmul.f32.gmra.mxu0 %v1724
    %v1746 = vpop.f32.mrf.mxu0
    %v1747 = vadd.f32 0.0, %v1746
    %1748 = vdwg.mxu0
    %v1750 = vsel %vm1592, %v382, 0
    %v1753 = vsel %vm1592, %v896, 0
    %1755 = vmatpush.xpose.msra.mxu0 0.0
    %1756 = vmatpush.xpose.msra.mxu0 0.0
    %1757 = vmatpush.xpose.msra.mxu0 0.0
    %1758 = vmatpush.xpose.msra.mxu0 0.0
    %1759 = vmatpush.xpose.msra.mxu0 0.0
    %1760 = vmatpush.xpose.msra.mxu0 0.0
    %1761 = vmatpush.xpose.msra.mxu0 0.0
    %1762 = vmatpush.xpose.msra.mxu0 0.0
    %1763 = vmatpush.xpose.msra.mxu0 0.0
    %1764 = vmatpush.xpose.msra.mxu0 0.0
    %1765 = vmatpush.xpose.msra.mxu0 0.0
    %1766 = vmatpush.xpose.msra.mxu0 0.0
    %1767 = vmatpush.xpose.msra.mxu0 0.0
    %1768 = vmatpush.xpose.msra.mxu0 0.0
    %1769 = vmatpush.xpose.msra.mxu0 0.0
    %1770 = vmatpush.xpose.msra.mxu0 %v1753
    %1771 = vmatmul.f32.gmra.mxu0 %v1750
    %v1772 = vpop.f32.mrf.mxu0
    %v1773 = vadd.f32 0.0, %v1772
    %1774 = vdwg.mxu0
    %v1776 = vsel %vm1592, %v402, 0
    %v1779 = vsel %vm1592, %v916, 0
    %1781 = vmatpush.xpose.msra.mxu0 0.0
    %1782 = vmatpush.xpose.msra.mxu0 0.0
    %1783 = vmatpush.xpose.msra.mxu0 0.0
    %1784 = vmatpush.xpose.msra.mxu0 0.0
    %1785 = vmatpush.xpose.msra.mxu0 0.0
    %1786 = vmatpush.xpose.msra.mxu0 0.0
    %1787 = vmatpush.xpose.msra.mxu0 0.0
    %1788 = vmatpush.xpose.msra.mxu0 0.0
    %1789 = vmatpush.xpose.msra.mxu0 0.0
    %1790 = vmatpush.xpose.msra.mxu0 0.0
    %1791 = vmatpush.xpose.msra.mxu0 0.0
    %1792 = vmatpush.xpose.msra.mxu0 0.0
    %1793 = vmatpush.xpose.msra.mxu0 0.0
    %1794 = vmatpush.xpose.msra.mxu0 0.0
    %1795 = vmatpush.xpose.msra.mxu0 0.0
    %1796 = vmatpush.xpose.msra.mxu0 %v1779
    %1797 = vmatmul.f32.gmra.mxu0 %v1776
    %v1798 = vpop.f32.mrf.mxu0
    %v1799 = vadd.f32 0.0, %v1798
    %1800 = vdwg.mxu0
    %v1802 = vsel %vm1592, %v422, 0
    %v1805 = vsel %vm1592, %v936, 0
    %1807 = vmatpush.xpose.msra.mxu0 0.0
    %1808 = vmatpush.xpose.msra.mxu0 0.0
    %1809 = vmatpush.xpose.msra.mxu0 0.0
    %1810 = vmatpush.xpose.msra.mxu0 0.0
    %1811 = vmatpush.xpose.msra.mxu0 0.0
    %1812 = vmatpush.xpose.msra.mxu0 0.0
    %1813 = vmatpush.xpose.msra.mxu0 0.0
    %1814 = vmatpush.xpose.msra.mxu0 0.0
    %1815 = vmatpush.xpose.msra.mxu0 0.0
    %1816 = vmatpush.xpose.msra.mxu0 0.0
    %1817 = vmatpush.xpose.msra.mxu0 0.0
    %1818 = vmatpush.xpose.msra.mxu0 0.0
    %1819 = vmatpush.xpose.msra.mxu0 0.0
    %1820 = vmatpush.xpose.msra.mxu0 0.0
    %1821 = vmatpush.xpose.msra.mxu0 0.0
    %1822 = vmatpush.xpose.msra.mxu0 %v1805
    %1823 = vmatmul.f32.gmra.mxu0 %v1802
    %v1824 = vpop.f32.mrf.mxu0
    %v1825 = vadd.f32 0.0, %v1824
    %1826 = vdwg.mxu0
    %v1828 = vsel %vm1592, %v442, 0
    %v1831 = vsel %vm1592, %v956, 0
    %1833 = vmatpush.xpose.msra.mxu0 0.0
    %1834 = vmatpush.xpose.msra.mxu0 0.0
    %1835 = vmatpush.xpose.msra.mxu0 0.0
    %1836 = vmatpush.xpose.msra.mxu0 0.0
    %1837 = vmatpush.xpose.msra.mxu0 0.0
    %1838 = vmatpush.xpose.msra.mxu0 0.0
    %1839 = vmatpush.xpose.msra.mxu0 0.0
    %1840 = vmatpush.xpose.msra.mxu0 0.0
    %1841 = vmatpush.xpose.msra.mxu0 0.0
    %1842 = vmatpush.xpose.msra.mxu0 0.0
    %1843 = vmatpush.xpose.msra.mxu0 0.0
    %1844 = vmatpush.xpose.msra.mxu0 0.0
    %1845 = vmatpush.xpose.msra.mxu0 0.0
    %1846 = vmatpush.xpose.msra.mxu0 0.0
    %1847 = vmatpush.xpose.msra.mxu0 0.0
    %1848 = vmatpush.xpose.msra.mxu0 %v1831
    %1849 = vmatmul.f32.gmra.mxu0 %v1828
    %v1850 = vpop.f32.mrf.mxu0
    %v1851 = vadd.f32 0.0, %v1850
    %1852 = vdwg.mxu0
    %v1854 = vsel %vm1592, %v462, 0
    %v1857 = vsel %vm1592, %v976, 0
    %1859 = vmatpush.xpose.msra.mxu0 0.0
    %1860 = vmatpush.xpose.msra.mxu0 0.0
    %1861 = vmatpush.xpose.msra.mxu0 0.0
    %1862 = vmatpush.xpose.msra.mxu0 0.0
    %1863 = vmatpush.xpose.msra.mxu0 0.0
    %1864 = vmatpush.xpose.msra.mxu0 0.0
    %1865 = vmatpush.xpose.msra.mxu0 0.0
    %1866 = vmatpush.xpose.msra.mxu0 0.0
    %1867 = vmatpush.xpose.msra.mxu0 0.0
    %1868 = vmatpush.xpose.msra.mxu0 0.0
    %1869 = vmatpush.xpose.msra.mxu0 0.0
    %1870 = vmatpush.xpose.msra.mxu0 0.0
    %1871 = vmatpush.xpose.msra.mxu0 0.0
    %1872 = vmatpush.xpose.msra.mxu0 0.0
    %1873 = vmatpush.xpose.msra.mxu0 0.0
    %1874 = vmatpush.xpose.msra.mxu0 %v1857
    %1875 = vmatmul.f32.gmra.mxu0 %v1854
    %v1876 = vpop.f32.mrf.mxu0
    %v1877 = vadd.f32 0.0, %v1876
    %1878 = vdwg.mxu0
    %v1880 = vsel %vm1592, %v482, 0
    %v1883 = vsel %vm1592, %v996, 0
    %1885 = vmatpush.xpose.msra.mxu0 0.0
    %1886 = vmatpush.xpose.msra.mxu0 0.0
    %1887 = vmatpush.xpose.msra.mxu0 0.0
    %1888 = vmatpush.xpose.msra.mxu0 0.0
    %1889 = vmatpush.xpose.msra.mxu0 0.0
    %1890 = vmatpush.xpose.msra.mxu0 0.0
    %1891 = vmatpush.xpose.msra.mxu0 0.0
    %1892 = vmatpush.xpose.msra.mxu0 0.0
    %1893 = vmatpush.xpose.msra.mxu0 0.0
    %1894 = vmatpush.xpose.msra.mxu0 0.0
    %1895 = vmatpush.xpose.msra.mxu0 0.0
    %1896 = vmatpush.xpose.msra.mxu0 0.0
    %1897 = vmatpush.xpose.msra.mxu0 0.0
    %1898 = vmatpush.xpose.msra.mxu0 0.0
    %1899 = vmatpush.xpose.msra.mxu0 0.0
    %1900 = vmatpush.xpose.msra.mxu0 %v1883
    %1901 = vmatmul.f32.gmra.mxu0 %v1880
    %v1902 = vpop.f32.mrf.mxu0
    %v1903 = vadd.f32 0.0, %v1902
    %1904 = vdwg.mxu0
    %v1906 = vsel %vm1592, %v502, 0
    %v1909 = vsel %vm1592, %v1016, 0
    %1911 = vmatpush.xpose.msra.mxu0 0.0
    %1912 = vmatpush.xpose.msra.mxu0 0.0
    %1913 = vmatpush.xpose.msra.mxu0 0.0
    %1914 = vmatpush.xpose.msra.mxu0 0.0
    %1915 = vmatpush.xpose.msra.mxu0 0.0
    %1916 = vmatpush.xpose.msra.mxu0 0.0
    %1917 = vmatpush.xpose.msra.mxu0 0.0
    %1918 = vmatpush.xpose.msra.mxu0 0.0
    %1919 = vmatpush.xpose.msra.mxu0 0.0
    %1920 = vmatpush.xpose.msra.mxu0 0.0
    %1921 = vmatpush.xpose.msra.mxu0 0.0
    %1922 = vmatpush.xpose.msra.mxu0 0.0
    %1923 = vmatpush.xpose.msra.mxu0 0.0
    %1924 = vmatpush.xpose.msra.mxu0 0.0
    %1925 = vmatpush.xpose.msra.mxu0 0.0
    %1926 = vmatpush.xpose.msra.mxu0 %v1909
    %1927 = vmatmul.f32.gmra.mxu0 %v1906
    %v1928 = vpop.f32.mrf.mxu0
    %v1929 = vadd.f32 0.0, %v1928
    %1930 = vdwg.mxu0
    %v1932 = vsel %vm1592, %v522, 0
    %v1935 = vsel %vm1592, %v1036, 0
    %1937 = vmatpush.xpose.msra.mxu0 0.0
    %1938 = vmatpush.xpose.msra.mxu0 0.0
    %1939 = vmatpush.xpose.msra.mxu0 0.0
    %1940 = vmatpush.xpose.msra.mxu0 0.0
    %1941 = vmatpush.xpose.msra.mxu0 0.0
    %1942 = vmatpush.xpose.msra.mxu0 0.0
    %1943 = vmatpush.xpose.msra.mxu0 0.0
    %1944 = vmatpush.xpose.msra.mxu0 0.0
    %1945 = vmatpush.xpose.msra.mxu0 0.0
    %1946 = vmatpush.xpose.msra.mxu0 0.0
    %1947 = vmatpush.xpose.msra.mxu0 0.0
    %1948 = vmatpush.xpose.msra.mxu0 0.0
    %1949 = vmatpush.xpose.msra.mxu0 0.0
    %1950 = vmatpush.xpose.msra.mxu0 0.0
    %1951 = vmatpush.xpose.msra.mxu0 0.0
    %1952 = vmatpush.xpose.msra.mxu0 %v1935
    %1953 = vmatmul.f32.gmra.mxu0 %v1932
    %v1954 = vpop.f32.mrf.mxu0
    %v1955 = vadd.f32 0.0, %v1954
    %1956 = vdwg.mxu0
    %v1958 = vsel %vm1592, %v542, 0
    %v1961 = vsel %vm1592, %v1056, 0
    %1963 = vmatpush.xpose.msra.mxu0 0.0
    %1964 = vmatpush.xpose.msra.mxu0 0.0
    %1965 = vmatpush.xpose.msra.mxu0 0.0
    %1966 = vmatpush.xpose.msra.mxu0 0.0
    %1967 = vmatpush.xpose.msra.mxu0 0.0
    %1968 = vmatpush.xpose.msra.mxu0 0.0
    %1969 = vmatpush.xpose.msra.mxu0 0.0
    %1970 = vmatpush.xpose.msra.mxu0 0.0
    %1971 = vmatpush.xpose.msra.mxu0 0.0
    %1972 = vmatpush.xpose.msra.mxu0 0.0
    %1973 = vmatpush.xpose.msra.mxu0 0.0
    %1974 = vmatpush.xpose.msra.mxu0 0.0
    %1975 = vmatpush.xpose.msra.mxu0 0.0
    %1976 = vmatpush.xpose.msra.mxu0 0.0
    %1977 = vmatpush.xpose.msra.mxu0 0.0
    %1978 = vmatpush.xpose.msra.mxu0 %v1961
    %1979 = vmatmul.f32.gmra.mxu0 %v1958
    %v1980 = vpop.f32.mrf.mxu0
    %v1981 = vadd.f32 0.0, %v1980
    %1982 = vdwg.mxu0
    %v1984 = vsel %vm1592, %v562, 0
    %v1987 = vsel %vm1592, %v1076, 0
    %1989 = vmatpush.xpose.msra.mxu0 0.0
    %1990 = vmatpush.xpose.msra.mxu0 0.0
    %1991 = vmatpush.xpose.msra.mxu0 0.0
    %1992 = vmatpush.xpose.msra.mxu0 0.0
    %1993 = vmatpush.xpose.msra.mxu0 0.0
    %1994 = vmatpush.xpose.msra.mxu0 0.0
    %1995 = vmatpush.xpose.msra.mxu0 0.0
    %1996 = vmatpush.xpose.msra.mxu0 0.0
    %1997 = vmatpush.xpose.msra.mxu0 0.0
    %1998 = vmatpush.xpose.msra.mxu0 0.0
    %1999 = vmatpush.xpose.msra.mxu0 0.0
    %2000 = vmatpush.xpose.msra.mxu0 0.0
    %2001 = vmatpush.xpose.msra.mxu0 0.0
    %2002 = vmatpush.xpose.msra.mxu0 0.0
    %2003 = vmatpush.xpose.msra.mxu0 0.0
    %2004 = vmatpush.xpose.msra.mxu0 %v1987
    %2005 = vmatmul.f32.gmra.mxu0 %v1984
    %v2006 = vpop.f32.mrf.mxu0
    %v2007 = vadd.f32 0.0, %v2006
    %2008 = vdwg.mxu0
    %v2009 = vmul.f32 %v1617, 0.25
    %v2010 = vmul.f32 %v1643, 0.25
    %v2011 = vmul.f32 %v1669, 0.25
    %v2012 = vmul.f32 %v1695, 0.25
    %v2013 = vmul.f32 %v1721, 0.25
    %v2014 = vmul.f32 %v1747, 0.25
    %v2015 = vmul.f32 %v1773, 0.25
    %v2016 = vmul.f32 %v1799, 0.25
    %v2017 = vmul.f32 %v1825, 0.25
    %v2018 = vmul.f32 %v1851, 0.25
    %v2019 = vmul.f32 %v1877, 0.25
    %v2020 = vmul.f32 %v1903, 0.25
    %v2021 = vmul.f32 %v1929, 0.25
    %v2022 = vmul.f32 %v1955, 0.25
    %v2023 = vmul.f32 %v1981, 0.25
    %v2024 = vmul.f32 %v2007, 0.25
    %vm2025 = vcmask 64512
    %v2026 = vsel %vm2025, %v2009, -inf
    %2027 = vmax.xlane.f32.xlu0 %v2026
    %v2028 = vpop.xlane.xlu0 %2027
    %v2029 = vsel %vm2025, %v2010, -inf
    %2030 = vmax.xlane.f32.xlu0 %v2029
    %v2031 = vpop.xlane.xlu0 %2030
    %v2032 = vsel %vm2025, %v2011, -inf
    %2033 = vmax.xlane.f32.xlu0 %v2032
    %v2034 = vpop.xlane.xlu0 %2033
    %v2035 = vsel %vm2025, %v2012, -inf
    %2036 = vmax.xlane.f32.xlu0 %v2035
    %v2037 = vpop.xlane.xlu0 %2036
    %v2038 = vsel %vm2025, %v2013, -inf
    %2039 = vmax.xlane.f32.xlu0 %v2038
    %v2040 = vpop.xlane.xlu0 %2039
    %v2041 = vsel %vm2025, %v2014, -inf
    %2042 = vmax.xlane.f32.xlu0 %v2041
    %v2043 = vpop.xlane.xlu0 %2042
    %v2044 = vsel %vm2025, %v2015, -inf
    %2045 = vmax.xlane.f32.xlu0 %v2044
    %v2046 = vpop.xlane.xlu0 %2045
    %v2047 = vsel %vm2025, %v2016, -inf
    %2048 = vmax.xlane.f32.xlu0 %v2047
    %v2049 = vpop.xlane.xlu0 %2048
    %v2050 = vsel %vm2025, %v2017, -inf
    %2051 = vmax.xlane.f32.xlu0 %v2050
    %v2052 = vpop.xlane.xlu0 %2051
    %v2053 = vsel %vm2025, %v2018, -inf
    %2054 = vmax.xlane.f32.xlu0 %v2053
    %v2055 = vpop.xlane.xlu0 %2054
    %v2056 = vsel %vm2025, %v2019, -inf
    %2057 = vmax.xlane.f32.xlu0 %v2056
    %v2058 = vpop.xlane.xlu0 %2057
    %v2059 = vsel %vm2025, %v2020, -inf
    %2060 = vmax.xlane.f32.xlu0 %v2059
    %v2061 = vpop.xlane.xlu0 %2060
    %v2062 = vsel %vm2025, %v2021, -inf
    %2063 = vmax.xlane.f32.xlu0 %v2062
    %v2064 = vpop.xlane.xlu0 %2063
    %v2065 = vsel %vm2025, %v2022, -inf
    %2066 = vmax.xlane.f32.xlu0 %v2065
    %v2067 = vpop.xlane.xlu0 %2066
    %v2068 = vsel %vm2025, %v2023, -inf
    %2069 = vmax.xlane.f32.xlu0 %v2068
    %v2070 = vpop.xlane.xlu0 %2069
    %v2071 = vsel %vm2025, %v2024, -inf
    %2072 = vmax.xlane.f32.xlu0 %v2071
    %v2073 = vpop.xlane.xlu0 %2072
    %v2074 = vsub.f32 %v2009, %v2028
    %v2075 = vsub.f32 %v2010, %v2031
    %v2076 = vsub.f32 %v2011, %v2034
    %v2077 = vsub.f32 %v2012, %v2037
    %v2078 = vsub.f32 %v2013, %v2040
    %v2079 = vsub.f32 %v2014, %v2043
    %v2080 = vsub.f32 %v2015, %v2046
    %v2081 = vsub.f32 %v2016, %v2049
    %v2082 = vsub.f32 %v2017, %v2052
    %v2083 = vsub.f32 %v2018, %v2055
    %v2084 = vsub.f32 %v2019, %v2058
    %v2085 = vsub.f32 %v2020, %v2061
    %v2086 = vsub.f32 %v2021, %v2064
    %v2087 = vsub.f32 %v2022, %v2067
    %v2088 = vsub.f32 %v2023, %v2070
    %v2089 = vsub.f32 %v2024, %v2073
    %v2090 = vmul.f32 %v2074, 1.442695
    %v2091 = vpow.pop %v2090
    %v2092 = vmul.f32 %v2075, 1.442695
    %v2093 = vpow.pop %v2092
    %v2094 = vmul.f32 %v2076, 1.442695
    %v2095 = vpow.pop %v2094
    %v2096 = vmul.f32 %v2077, 1.442695
    %v2097 = vpow.pop %v2096
    %v2098 = vmul.f32 %v2078, 1.442695
    %v2099 = vpow.pop %v2098
    %v2100 = vmul.f32 %v2079, 1.442695
    %v2101 = vpow.pop %v2100
    %v2102 = vmul.f32 %v2080, 1.442695
    %v2103 = vpow.pop %v2102
    %v2104 = vmul.f32 %v2081, 1.442695
    %v2105 = vpow.pop %v2104
    %v2106 = vmul.f32 %v2082, 1.442695
    %v2107 = vpow.pop %v2106
    %v2108 = vmul.f32 %v2083, 1.442695
    %v2109 = vpow.pop %v2108
    %v2110 = vmul.f32 %v2084, 1.442695
    %v2111 = vpow.pop %v2110
    %v2112 = vmul.f32 %v2085, 1.442695
    %v2113 = vpow.pop %v2112
    %v2114 = vmul.f32 %v2086, 1.442695
    %v2115 = vpow.pop %v2114
    %v2116 = vmul.f32 %v2087, 1.442695
    %v2117 = vpow.pop %v2116
    %v2118 = vmul.f32 %v2088, 1.442695
    %v2119 = vpow.pop %v2118
    %v2120 = vmul.f32 %v2089, 1.442695
    %v2121 = vpow.pop %v2120
    %v2122 = vsel %vm2025, %v2091, 0.0
    %2123 = vadd.xlane.f32.xlu0 %v2122
    %v2124 = vpop.xlane.xlu0 %2123
    %v2125 = vsel %vm2025, %v2093, 0.0
    %2126 = vadd.xlane.f32.xlu0 %v2125
    %v2127 = vpop.xlane.xlu0 %2126
    %v2128 = vsel %vm2025, %v2095, 0.0
    %2129 = vadd.xlane.f32.xlu0 %v2128
    %v2130 = vpop.xlane.xlu0 %2129
    %v2131 = vsel %vm2025, %v2097, 0.0
    %2132 = vadd.xlane.f32.xlu0 %v2131
    %v2133 = vpop.xlane.xlu0 %2132
    %v2134 = vsel %vm2025, %v2099, 0.0
    %2135 = vadd.xlane.f32.xlu0 %v2134
    %v2136 = vpop.xlane.xlu0 %2135
    %v2137 = vsel %vm2025, %v2101, 0.0
    %2138 = vadd.xlane.f32.xlu0 %v2137
    %v2139 = vpop.xlane.xlu0 %2138
    %v2140 = vsel %vm2025, %v2103, 0.0
    %2141 = vadd.xlane.f32.xlu0 %v2140
    %v2142 = vpop.xlane.xlu0 %2141
    %v2143 = vsel %vm2025, %v2105, 0.0
    %2144 = vadd.xlane.f32.xlu0 %v2143
    %v2145 = vpop.xlane.xlu0 %2144
    %v2146 = vsel %vm2025, %v2107, 0.0
    %2147 = vadd.xlane.f32.xlu0 %v2146
    %v2148 = vpop.xlane.xlu0 %2147
    %v2149 = vsel %vm2025, %v2109, 0.0
    %2150 = vadd.xlane.f32.xlu0 %v2149
    %v2151 = vpop.xlane.xlu0 %2150
    %v2152 = vsel %vm2025, %v2111, 0.0
    %2153 = vadd.xlane.f32.xlu0 %v2152
    %v2154 = vpop.xlane.xlu0 %2153
    %v2155 = vsel %vm2025, %v2113, 0.0
    %2156 = vadd.xlane.f32.xlu0 %v2155
    %v2157 = vpop.xlane.xlu0 %2156
    %v2158 = vsel %vm2025, %v2115, 0.0
    %2159 = vadd.xlane.f32.xlu0 %v2158
    %v2160 = vpop.xlane.xlu0 %2159
    %v2161 = vsel %vm2025, %v2117, 0.0
    %2162 = vadd.xlane.f32.xlu0 %v2161
    %v2163 = vpop.xlane.xlu0 %2162
    %v2164 = vsel %vm2025, %v2119, 0.0
    %2165 = vadd.xlane.f32.xlu0 %v2164
    %v2166 = vpop.xlane.xlu0 %2165
    %v2167 = vsel %vm2025, %v2121, 0.0
    %2168 = vadd.xlane.f32.xlu0 %v2167
    %v2169 = vpop.xlane.xlu0 %2168
    %v2170 = vrcp.pop %v2124
    %v2171 = vrcp.pop %v2127
    %v2172 = vrcp.pop %v2130
    %v2173 = vrcp.pop %v2133
    %v2174 = vrcp.pop %v2136
    %v2175 = vrcp.pop %v2139
    %v2176 = vrcp.pop %v2142
    %v2177 = vrcp.pop %v2145
    %v2178 = vrcp.pop %v2148
    %v2179 = vrcp.pop %v2151
    %v2180 = vrcp.pop %v2154
    %v2181 = vrcp.pop %v2157
    %v2182 = vrcp.pop %v2160
    %v2183 = vrcp.pop %v2163
    %v2184 = vrcp.pop %v2166
    %v2185 = vrcp.pop %v2169
    %v2186 = vmul.f32 %v2091, %v2170
    %v2187 = vmul.f32 %v2093, %v2171
    %v2188 = vmul.f32 %v2095, %v2172
    %v2189 = vmul.f32 %v2097, %v2173
    %v2190 = vmul.f32 %v2099, %v2174
    %v2191 = vmul.f32 %v2101, %v2175
    %v2192 = vmul.f32 %v2103, %v2176
    %v2193 = vmul.f32 %v2105, %v2177
    %v2194 = vmul.f32 %v2107, %v2178
    %v2195 = vmul.f32 %v2109, %v2179
    %v2196 = vmul.f32 %v2111, %v2180
    %v2197 = vmul.f32 %v2113, %v2181
    %v2198 = vmul.f32 %v2115, %v2182
    %v2199 = vmul.f32 %v2117, %v2183
    %v2200 = vmul.f32 %v2119, %v2184
    %v2201 = vmul.f32 %v2121, %v2185
    %v2203 = vsel %vm2025, %v2186, 0
    %2205 = vmatpush.msra.mxu0 0.0
    %2206 = vmatpush.msra.mxu0 0.0
    %2207 = vmatpush.msra.mxu0 0.0
    %2208 = vmatpush.msra.mxu0 0.0
    %2209 = vmatpush.msra.mxu0 0.0
    %2210 = vmatpush.msra.mxu0 0.0
    %2211 = vmatpush.msra.mxu0 0.0
    %2212 = vmatpush.msra.mxu0 0.0
    %2213 = vmatpush.msra.mxu0 0.0
    %2214 = vmatpush.msra.mxu0 0.0
    %2215 = vmatpush.msra.mxu0 0.0
    %2216 = vmatpush.msra.mxu0 0.0
    %2217 = vmatpush.msra.mxu0 0.0
    %2218 = vmatpush.msra.mxu0 0.0
    %2219 = vmatpush.msra.mxu0 0.0
    %2220 = vmatpush.msra.mxu0 %v1290
    %2221 = vmatmul.f32.gmra.mxu0 %v2203
    %v2222 = vpop.f32.mrf.mxu0
    %v2223 = vadd.f32 0.0, %v2222
    %2224 = vdwg.mxu0
    %v2226 = vsel %vm2025, %v2187, 0
    %2228 = vmatpush.msra.mxu0 0.0
    %2229 = vmatpush.msra.mxu0 0.0
    %2230 = vmatpush.msra.mxu0 0.0
    %2231 = vmatpush.msra.mxu0 0.0
    %2232 = vmatpush.msra.mxu0 0.0
    %2233 = vmatpush.msra.mxu0 0.0
    %2234 = vmatpush.msra.mxu0 0.0
    %2235 = vmatpush.msra.mxu0 0.0
    %2236 = vmatpush.msra.mxu0 0.0
    %2237 = vmatpush.msra.mxu0 0.0
    %2238 = vmatpush.msra.mxu0 0.0
    %2239 = vmatpush.msra.mxu0 0.0
    %2240 = vmatpush.msra.mxu0 0.0
    %2241 = vmatpush.msra.mxu0 0.0
    %2242 = vmatpush.msra.mxu0 0.0
    %2243 = vmatpush.msra.mxu0 %v1310
    %2244 = vmatmul.f32.gmra.mxu0 %v2226
    %v2245 = vpop.f32.mrf.mxu0
    %v2246 = vadd.f32 0.0, %v2245
    %2247 = vdwg.mxu0
    %v2249 = vsel %vm2025, %v2188, 0
    %2251 = vmatpush.msra.mxu0 0.0
    %2252 = vmatpush.msra.mxu0 0.0
    %2253 = vmatpush.msra.mxu0 0.0
    %2254 = vmatpush.msra.mxu0 0.0
    %2255 = vmatpush.msra.mxu0 0.0
    %2256 = vmatpush.msra.mxu0 0.0
    %2257 = vmatpush.msra.mxu0 0.0
    %2258 = vmatpush.msra.mxu0 0.0
    %2259 = vmatpush.msra.mxu0 0.0
    %2260 = vmatpush.msra.mxu0 0.0
    %2261 = vmatpush.msra.mxu0 0.0
    %2262 = vmatpush.msra.mxu0 0.0
    %2263 = vmatpush.msra.mxu0 0.0
    %2264 = vmatpush.msra.mxu0 0.0
    %2265 = vmatpush.msra.mxu0 0.0
    %2266 = vmatpush.msra.mxu0 %v1330
    %2267 = vmatmul.f32.gmra.mxu0 %v2249
    %v2268 = vpop.f32.mrf.mxu0
    %v2269 = vadd.f32 0.0, %v2268
    %2270 = vdwg.mxu0
    %v2272 = vsel %vm2025, %v2189, 0
    %2274 = vmatpush.msra.mxu0 0.0
    %2275 = vmatpush.msra.mxu0 0.0
    %2276 = vmatpush.msra.mxu0 0.0
    %2277 = vmatpush.msra.mxu0 0.0
    %2278 = vmatpush.msra.mxu0 0.0
    %2279 = vmatpush.msra.mxu0 0.0
    %2280 = vmatpush.msra.mxu0 0.0
    %2281 = vmatpush.msra.mxu0 0.0
    %2282 = vmatpush.msra.mxu0 0.0
    %2283 = vmatpush.msra.mxu0 0.0
    %2284 = vmatpush.msra.mxu0 0.0
    %2285 = vmatpush.msra.mxu0 0.0
    %2286 = vmatpush.msra.mxu0 0.0
    %2287 = vmatpush.msra.mxu0 0.0
    %2288 = vmatpush.msra.mxu0 0.0
    %2289 = vmatpush.msra.mxu0 %v1350
    %2290 = vmatmul.f32.gmra.mxu0 %v2272
    %v2291 = vpop.f32.mrf.mxu0
    %v2292 = vadd.f32 0.0, %v2291
    %2293 = vdwg.mxu0
    %v2295 = vsel %vm2025, %v2190, 0
    %2297 = vmatpush.msra.mxu0 0.0
    %2298 = vmatpush.msra.mxu0 0.0
    %2299 = vmatpush.msra.mxu0 0.0
    %2300 = vmatpush.msra.mxu0 0.0
    %2301 = vmatpush.msra.mxu0 0.0
    %2302 = vmatpush.msra.mxu0 0.0
    %2303 = vmatpush.msra.mxu0 0.0
    %2304 = vmatpush.msra.mxu0 0.0
    %2305 = vmatpush.msra.mxu0 0.0
    %2306 = vmatpush.msra.mxu0 0.0
    %2307 = vmatpush.msra.mxu0 0.0
    %2308 = vmatpush.msra.mxu0 0.0
    %2309 = vmatpush.msra.mxu0 0.0
    %2310 = vmatpush.msra.mxu0 0.0
    %2311 = vmatpush.msra.mxu0 0.0
    %2312 = vmatpush.msra.mxu0 %v1370
    %2313 = vmatmul.f32.gmra.mxu0 %v2295
    %v2314 = vpop.f32.mrf.mxu0
    %v2315 = vadd.f32 0.0, %v2314
    %2316 = vdwg.mxu0
    %v2318 = vsel %vm2025, %v2191, 0
    %2320 = vmatpush.msra.mxu0 0.0
    %2321 = vmatpush.msra.mxu0 0.0
    %2322 = vmatpush.msra.mxu0 0.0
    %2323 = vmatpush.msra.mxu0 0.0
    %2324 = vmatpush.msra.mxu0 0.0
    %2325 = vmatpush.msra.mxu0 0.0
    %2326 = vmatpush.msra.mxu0 0.0
    %2327 = vmatpush.msra.mxu0 0.0
    %2328 = vmatpush.msra.mxu0 0.0
    %2329 = vmatpush.msra.mxu0 0.0
    %2330 = vmatpush.msra.mxu0 0.0
    %2331 = vmatpush.msra.mxu0 0.0
    %2332 = vmatpush.msra.mxu0 0.0
    %2333 = vmatpush.msra.mxu0 0.0
    %2334 = vmatpush.msra.mxu0 0.0
    %2335 = vmatpush.msra.mxu0 %v1390
    %2336 = vmatmul.f32.gmra.mxu0 %v2318
    %v2337 = vpop.f32.mrf.mxu0
    %v2338 = vadd.f32 0.0, %v2337
    %2339 = vdwg.mxu0
    %v2341 = vsel %vm2025, %v2192, 0
    %2343 = vmatpush.msra.mxu0 0.0
    %2344 = vmatpush.msra.mxu0 0.0
    %2345 = vmatpush.msra.mxu0 0.0
    %2346 = vmatpush.msra.mxu0 0.0
    %2347 = vmatpush.msra.mxu0 0.0
    %2348 = vmatpush.msra.mxu0 0.0
    %2349 = vmatpush.msra.mxu0 0.0
    %2350 = vmatpush.msra.mxu0 0.0
    %2351 = vmatpush.msra.mxu0 0.0
    %2352 = vmatpush.msra.mxu0 0.0
    %2353 = vmatpush.msra.mxu0 0.0
    %2354 = vmatpush.msra.mxu0 0.0
    %2355 = vmatpush.msra.mxu0 0.0
    %2356 = vmatpush.msra.mxu0 0.0
    %2357 = vmatpush.msra.mxu0 0.0
    %2358 = vmatpush.msra.mxu0 %v1410
    %2359 = vmatmul.f32.gmra.mxu0 %v2341
    %v2360 = vpop.f32.mrf.mxu0
    %v2361 = vadd.f32 0.0, %v2360
    %2362 = vdwg.mxu0
    %v2364 = vsel %vm2025, %v2193, 0
    %2366 = vmatpush.msra.mxu0 0.0
    %2367 = vmatpush.msra.mxu0 0.0
    %2368 = vmatpush.msra.mxu0 0.0
    %2369 = vmatpush.msra.mxu0 0.0
    %2370 = vmatpush.msra.mxu0 0.0
    %2371 = vmatpush.msra.mxu0 0.0
    %2372 = vmatpush.msra.mxu0 0.0
    %2373 = vmatpush.msra.mxu0 0.0
    %2374 = vmatpush.msra.mxu0 0.0
    %2375 = vmatpush.msra.mxu0 0.0
    %2376 = vmatpush.msra.mxu0 0.0
    %2377 = vmatpush.msra.mxu0 0.0
    %2378 = vmatpush.msra.mxu0 0.0
    %2379 = vmatpush.msra.mxu0 0.0
    %2380 = vmatpush.msra.mxu0 0.0
    %2381 = vmatpush.msra.mxu0 %v1430
    %2382 = vmatmul.f32.gmra.mxu0 %v2364
    %v2383 = vpop.f32.mrf.mxu0
    %v2384 = vadd.f32 0.0, %v2383
    %2385 = vdwg.mxu0
    %v2387 = vsel %vm2025, %v2194, 0
    %2389 = vmatpush.msra.mxu0 0.0
    %2390 = vmatpush.msra.mxu0 0.0
    %2391 = vmatpush.msra.mxu0 0.0
    %2392 = vmatpush.msra.mxu0 0.0
    %2393 = vmatpush.msra.mxu0 0.0
    %2394 = vmatpush.msra.mxu0 0.0
    %2395 = vmatpush.msra.mxu0 0.0
    %2396 = vmatpush.msra.mxu0 0.0
    %2397 = vmatpush.msra.mxu0 0.0
    %2398 = vmatpush.msra.mxu0 0.0
    %2399 = vmatpush.msra.mxu0 0.0
    %2400 = vmatpush.msra.mxu0 0.0
    %2401 = vmatpush.msra.mxu0 0.0
    %2402 = vmatpush.msra.mxu0 0.0
    %2403 = vmatpush.msra.mxu0 0.0
    %2404 = vmatpush.msra.mxu0 %v1450
    %2405 = vmatmul.f32.gmra.mxu0 %v2387
    %v2406 = vpop.f32.mrf.mxu0
    %v2407 = vadd.f32 0.0, %v2406
    %2408 = vdwg.mxu0
    %v2410 = vsel %vm2025, %v2195, 0
    %2412 = vmatpush.msra.mxu0 0.0
    %2413 = vmatpush.msra.mxu0 0.0
    %2414 = vmatpush.msra.mxu0 0.0
    %2415 = vmatpush.msra.mxu0 0.0
    %2416 = vmatpush.msra.mxu0 0.0
    %2417 = vmatpush.msra.mxu0 0.0
    %2418 = vmatpush.msra.mxu0 0.0
    %2419 = vmatpush.msra.mxu0 0.0
    %2420 = vmatpush.msra.mxu0 0.0
    %2421 = vmatpush.msra.mxu0 0.0
    %2422 = vmatpush.msra.mxu0 0.0
    %2423 = vmatpush.msra.mxu0 0.0
    %2424 = vmatpush.msra.mxu0 0.0
    %2425 = vmatpush.msra.mxu0 0.0
    %2426 = vmatpush.msra.mxu0 0.0
    %2427 = vmatpush.msra.mxu0 %v1470
    %2428 = vmatmul.f32.gmra.mxu0 %v2410
    %v2429 = vpop.f32.mrf.mxu0
    %v2430 = vadd.f32 0.0, %v2429
    %2431 = vdwg.mxu0
    %v2433 = vsel %vm2025, %v2196, 0
    %2435 = vmatpush.msra.mxu0 0.0
    %2436 = vmatpush.msra.mxu0 0.0
    %2437 = vmatpush.msra.mxu0 0.0
    %2438 = vmatpush.msra.mxu0 0.0
    %2439 = vmatpush.msra.mxu0 0.0
    %2440 = vmatpush.msra.mxu0 0.0
    %2441 = vmatpush.msra.mxu0 0.0
    %2442 = vmatpush.msra.mxu0 0.0
    %2443 = vmatpush.msra.mxu0 0.0
    %2444 = vmatpush.msra.mxu0 0.0
    %2445 = vmatpush.msra.mxu0 0.0
    %2446 = vmatpush.msra.mxu0 0.0
    %2447 = vmatpush.msra.mxu0 0.0
    %2448 = vmatpush.msra.mxu0 0.0
    %2449 = vmatpush.msra.mxu0 0.0
    %2450 = vmatpush.msra.mxu0 %v1490
    %2451 = vmatmul.f32.gmra.mxu0 %v2433
    %v2452 = vpop.f32.mrf.mxu0
    %v2453 = vadd.f32 0.0, %v2452
    %2454 = vdwg.mxu0
    %v2456 = vsel %vm2025, %v2197, 0
    %2458 = vmatpush.msra.mxu0 0.0
    %2459 = vmatpush.msra.mxu0 0.0
    %2460 = vmatpush.msra.mxu0 0.0
    %2461 = vmatpush.msra.mxu0 0.0
    %2462 = vmatpush.msra.mxu0 0.0
    %2463 = vmatpush.msra.mxu0 0.0
    %2464 = vmatpush.msra.mxu0 0.0
    %2465 = vmatpush.msra.mxu0 0.0
    %2466 = vmatpush.msra.mxu0 0.0
    %2467 = vmatpush.msra.mxu0 0.0
    %2468 = vmatpush.msra.mxu0 0.0
    %2469 = vmatpush.msra.mxu0 0.0
    %2470 = vmatpush.msra.mxu0 0.0
    %2471 = vmatpush.msra.mxu0 0.0
    %2472 = vmatpush.msra.mxu0 0.0
    %2473 = vmatpush.msra.mxu0 %v1510
    %2474 = vmatmul.f32.gmra.mxu0 %v2456
    %v2475 = vpop.f32.mrf.mxu0
    %v2476 = vadd.f32 0.0, %v2475
    %2477 = vdwg.mxu0
    %v2479 = vsel %vm2025, %v2198, 0
    %2481 = vmatpush.msra.mxu0 0.0
    %2482 = vmatpush.msra.mxu0 0.0
    %2483 = vmatpush.msra.mxu0 0.0
    %2484 = vmatpush.msra.mxu0 0.0
    %2485 = vmatpush.msra.mxu0 0.0
    %2486 = vmatpush.msra.mxu0 0.0
    %2487 = vmatpush.msra.mxu0 0.0
    %2488 = vmatpush.msra.mxu0 0.0
    %2489 = vmatpush.msra.mxu0 0.0
    %2490 = vmatpush.msra.mxu0 0.0
    %2491 = vmatpush.msra.mxu0 0.0
    %2492 = vmatpush.msra.mxu0 0.0
    %2493 = vmatpush.msra.mxu0 0.0
    %2494 = vmatpush.msra.mxu0 0.0
    %2495 = vmatpush.msra.mxu0 0.0
    %2496 = vmatpush.msra.mxu0 %v1530
    %2497 = vmatmul.f32.gmra.mxu0 %v2479
    %v2498 = vpop.f32.mrf.mxu0
    %v2499 = vadd.f32 0.0, %v2498
    %2500 = vdwg.mxu0
    %v2502 = vsel %vm2025, %v2199, 0
    %2504 = vmatpush.msra.mxu0 0.0
    %2505 = vmatpush.msra.mxu0 0.0
    %2506 = vmatpush.msra.mxu0 0.0
    %2507 = vmatpush.msra.mxu0 0.0
    %2508 = vmatpush.msra.mxu0 0.0
    %2509 = vmatpush.msra.mxu0 0.0
    %2510 = vmatpush.msra.mxu0 0.0
    %2511 = vmatpush.msra.mxu0 0.0
    %2512 = vmatpush.msra.mxu0 0.0
    %2513 = vmatpush.msra.mxu0 0.0
    %2514 = vmatpush.msra.mxu0 0.0
    %2515 = vmatpush.msra.mxu0 0.0
    %2516 = vmatpush.msra.mxu0 0.0
    %2517 = vmatpush.msra.mxu0 0.0
    %2518 = vmatpush.msra.mxu0 0.0
    %2519 = vmatpush.msra.mxu0 %v1550
    %2520 = vmatmul.f32.gmra.mxu0 %v2502
    %v2521 = vpop.f32.mrf.mxu0
    %v2522 = vadd.f32 0.0, %v2521
    %2523 = vdwg.mxu0
    %v2525 = vsel %vm2025, %v2200, 0
    %2527 = vmatpush.msra.mxu0 0.0
    %2528 = vmatpush.msra.mxu0 0.0
    %2529 = vmatpush.msra.mxu0 0.0
    %2530 = vmatpush.msra.mxu0 0.0
    %2531 = vmatpush.msra.mxu0 0.0
    %2532 = vmatpush.msra.mxu0 0.0
    %2533 = vmatpush.msra.mxu0 0.0
    %2534 = vmatpush.msra.mxu0 0.0
    %2535 = vmatpush.msra.mxu0 0.0
    %2536 = vmatpush.msra.mxu0 0.0
    %2537 = vmatpush.msra.mxu0 0.0
    %2538 = vmatpush.msra.mxu0 0.0
    %2539 = vmatpush.msra.mxu0 0.0
    %2540 = vmatpush.msra.mxu0 0.0
    %2541 = vmatpush.msra.mxu0 0.0
    %2542 = vmatpush.msra.mxu0 %v1570
    %2543 = vmatmul.f32.gmra.mxu0 %v2525
    %v2544 = vpop.f32.mrf.mxu0
    %v2545 = vadd.f32 0.0, %v2544
    %2546 = vdwg.mxu0
    %v2548 = vsel %vm2025, %v2201, 0
    %2550 = vmatpush.msra.mxu0 0.0
    %2551 = vmatpush.msra.mxu0 0.0
    %2552 = vmatpush.msra.mxu0 0.0
    %2553 = vmatpush.msra.mxu0 0.0
    %2554 = vmatpush.msra.mxu0 0.0
    %2555 = vmatpush.msra.mxu0 0.0
    %2556 = vmatpush.msra.mxu0 0.0
    %2557 = vmatpush.msra.mxu0 0.0
    %2558 = vmatpush.msra.mxu0 0.0
    %2559 = vmatpush.msra.mxu0 0.0
    %2560 = vmatpush.msra.mxu0 0.0
    %2561 = vmatpush.msra.mxu0 0.0
    %2562 = vmatpush.msra.mxu0 0.0
    %2563 = vmatpush.msra.mxu0 0.0
    %2564 = vmatpush.msra.mxu0 0.0
    %2565 = vmatpush.msra.mxu0 %v1590
    %2566 = vmatmul.f32.gmra.mxu0 %v2548
    %v2567 = vpop.f32.mrf.mxu0
    %v2568 = vadd.f32 0.0, %v2567
    %2569 = vdwg.mxu0
    %v2570 = vld [vmem:[%s3] sm:$0xff]
    %v2571 = vld [vmem:[%s3 + $0x8] sm:$0xff]
    %v2572 = vld [vmem:[%s3 + $0x10] sm:$0xff]
    %v2573 = vld [vmem:[%s3 + $0x18] sm:$0xff]
    %v2574 = vld [vmem:[%s3 + $0x20] sm:$0xff]
    %v2575 = vld [vmem:[%s3 + $0x28] sm:$0xff]
    %v2576 = vld [vmem:[%s3 + $0x30] sm:$0xff]
    %v2577 = vld [vmem:[%s3 + $0x38] sm:$0xff]
    %v2578 = vld [vmem:[%s3 + $0x40] sm:$0xff]
    %v2579 = vld [vmem:[%s3 + $0x48] sm:$0xff]
    %v2580 = vld [vmem:[%s3 + $0x50] sm:$0xff]
    %v2581 = vld [vmem:[%s3 + $0x58] sm:$0xff]
    %v2582 = vld [vmem:[%s3 + $0x60] sm:$0xff]
    %v2583 = vld [vmem:[%s3 + $0x68] sm:$0xff]
    %v2584 = vld [vmem:[%s3 + $0x70] sm:$0xff]
    %v2585 = vld [vmem:[%s3 + $0x78] sm:$0xff]
    %v2587 = vsel %vm1592, %v2223, 0
    %2589 = vmatpush.msra.mxu0 0.0
    %2590 = vmatpush.msra.mxu0 0.0
    %2591 = vmatpush.msra.mxu0 0.0
    %2592 = vmatpush.msra.mxu0 0.0
    %2593 = vmatpush.msra.mxu0 0.0
    %2594 = vmatpush.msra.mxu0 0.0
    %2595 = vmatpush.msra.mxu0 0.0
    %2596 = vmatpush.msra.mxu0 0.0
    %2597 = vmatpush.msra.mxu0 0.0
    %2598 = vmatpush.msra.mxu0 0.0
    %2599 = vmatpush.msra.mxu0 0.0
    %2600 = vmatpush.msra.mxu0 0.0
    %2601 = vmatpush.msra.mxu0 0.0
    %2602 = vmatpush.msra.mxu0 0.0
    %2603 = vmatpush.msra.mxu0 %v2571
    %2604 = vmatpush.msra.mxu0 %v2570
    %2605 = vmatmul.f32.gmra.mxu0 %v2587
    %v2606 = vpop.f32.mrf.mxu0
    %v2607 = vadd.f32 0.0, %v2606
    %2608 = vdwg.mxu0
    %v2610 = vsel %vm1592, %v2246, 0
    %2612 = vmatpush.msra.mxu0 0.0
    %2613 = vmatpush.msra.mxu0 0.0
    %2614 = vmatpush.msra.mxu0 0.0
    %2615 = vmatpush.msra.mxu0 0.0
    %2616 = vmatpush.msra.mxu0 0.0
    %2617 = vmatpush.msra.mxu0 0.0
    %2618 = vmatpush.msra.mxu0 0.0
    %2619 = vmatpush.msra.mxu0 0.0
    %2620 = vmatpush.msra.mxu0 0.0
    %2621 = vmatpush.msra.mxu0 0.0
    %2622 = vmatpush.msra.mxu0 0.0
    %2623 = vmatpush.msra.mxu0 0.0
    %2624 = vmatpush.msra.mxu0 0.0
    %2625 = vmatpush.msra.mxu0 0.0
    %2626 = vmatpush.msra.mxu0 %v2573
    %2627 = vmatpush.msra.mxu0 %v2572
    %2628 = vmatmul.f32.gmra.mxu0 %v2610
    %v2629 = vpop.f32.mrf.mxu0
    %v2630 = vadd.f32 0.0, %v2629
    %2631 = vdwg.mxu0
    %v2633 = vsel %vm1592, %v2269, 0
    %2635 = vmatpush.msra.mxu0 0.0
    %2636 = vmatpush.msra.mxu0 0.0
    %2637 = vmatpush.msra.mxu0 0.0
    %2638 = vmatpush.msra.mxu0 0.0
    %2639 = vmatpush.msra.mxu0 0.0
    %2640 = vmatpush.msra.mxu0 0.0
    %2641 = vmatpush.msra.mxu0 0.0
    %2642 = vmatpush.msra.mxu0 0.0
    %2643 = vmatpush.msra.mxu0 0.0
    %2644 = vmatpush.msra.mxu0 0.0
    %2645 = vmatpush.msra.mxu0 0.0
    %2646 = vmatpush.msra.mxu0 0.0
    %2647 = vmatpush.msra.mxu0 0.0
    %2648 = vmatpush.msra.mxu0 0.0
    %2649 = vmatpush.msra.mxu0 %v2575
    %2650 = vmatpush.msra.mxu0 %v2574
    %2651 = vmatmul.f32.gmra.mxu0 %v2633
    %v2652 = vpop.f32.mrf.mxu0
    %v2653 = vadd.f32 0.0, %v2652
    %2654 = vdwg.mxu0
    %v2656 = vsel %vm1592, %v2292, 0
    %2658 = vmatpush.msra.mxu0 0.0
    %2659 = vmatpush.msra.mxu0 0.0
    %2660 = vmatpush.msra.mxu0 0.0
    %2661 = vmatpush.msra.mxu0 0.0
    %2662 = vmatpush.msra.mxu0 0.0
    %2663 = vmatpush.msra.mxu0 0.0
    %2664 = vmatpush.msra.mxu0 0.0
    %2665 = vmatpush.msra.mxu0 0.0
    %2666 = vmatpush.msra.mxu0 0.0
    %2667 = vmatpush.msra.mxu0 0.0
    %2668 = vmatpush.msra.mxu0 0.0
    %2669 = vmatpush.msra.mxu0 0.0
    %2670 = vmatpush.msra.mxu0 0.0
    %2671 = vmatpush.msra.mxu0 0.0
    %2672 = vmatpush.msra.mxu0 %v2577
    %2673 = vmatpush.msra.mxu0 %v2576
    %2674 = vmatmul.f32.gmra.mxu0 %v2656
    %v2675 = vpop.f32.mrf.mxu0
    %v2676 = vadd.f32 0.0, %v2675
    %2677 = vdwg.mxu0
    %v2679 = vsel %vm1592, %v2315, 0
    %2681 = vmatpush.msra.mxu0 0.0
    %2682 = vmatpush.msra.mxu0 0.0
    %2683 = vmatpush.msra.mxu0 0.0
    %2684 = vmatpush.msra.mxu0 0.0
    %2685 = vmatpush.msra.mxu0 0.0
    %2686 = vmatpush.msra.mxu0 0.0
    %2687 = vmatpush.msra.mxu0 0.0
    %2688 = vmatpush.msra.mxu0 0.0
    %2689 = vmatpush.msra.mxu0 0.0
    %2690 = vmatpush.msra.mxu0 0.0
    %2691 = vmatpush.msra.mxu0 0.0
    %2692 = vmatpush.msra.mxu0 0.0
    %2693 = vmatpush.msra.mxu0 0.0
    %2694 = vmatpush.msra.mxu0 0.0
    %2695 = vmatpush.msra.mxu0 %v2579
    %2696 = vmatpush.msra.mxu0 %v2578
    %2697 = vmatmul.f32.gmra.mxu0 %v2679
    %v2698 = vpop.f32.mrf.mxu0
    %v2699 = vadd.f32 0.0, %v2698
    %2700 = vdwg.mxu0
    %v2702 = vsel %vm1592, %v2338, 0
    %2704 = vmatpush.msra.mxu0 0.0
    %2705 = vmatpush.msra.mxu0 0.0
    %2706 = vmatpush.msra.mxu0 0.0
    %2707 = vmatpush.msra.mxu0 0.0
    %2708 = vmatpush.msra.mxu0 0.0
    %2709 = vmatpush.msra.mxu0 0.0
    %2710 = vmatpush.msra.mxu0 0.0
    %2711 = vmatpush.msra.mxu0 0.0
    %2712 = vmatpush.msra.mxu0 0.0
    %2713 = vmatpush.msra.mxu0 0.0
    %2714 = vmatpush.msra.mxu0 0.0
    %2715 = vmatpush.msra.mxu0 0.0
    %2716 = vmatpush.msra.mxu0 0.0
    %2717 = vmatpush.msra.mxu0 0.0
    %2718 = vmatpush.msra.mxu0 %v2581
    %2719 = vmatpush.msra.mxu0 %v2580
    %2720 = vmatmul.f32.gmra.mxu0 %v2702
    %v2721 = vpop.f32.mrf.mxu0
    %v2722 = vadd.f32 0.0, %v2721
    %2723 = vdwg.mxu0
    %v2725 = vsel %vm1592, %v2361, 0
    %2727 = vmatpush.msra.mxu0 0.0
    %2728 = vmatpush.msra.mxu0 0.0
    %2729 = vmatpush.msra.mxu0 0.0
    %2730 = vmatpush.msra.mxu0 0.0
    %2731 = vmatpush.msra.mxu0 0.0
    %2732 = vmatpush.msra.mxu0 0.0
    %2733 = vmatpush.msra.mxu0 0.0
    %2734 = vmatpush.msra.mxu0 0.0
    %2735 = vmatpush.msra.mxu0 0.0
    %2736 = vmatpush.msra.mxu0 0.0
    %2737 = vmatpush.msra.mxu0 0.0
    %2738 = vmatpush.msra.mxu0 0.0
    %2739 = vmatpush.msra.mxu0 0.0
    %2740 = vmatpush.msra.mxu0 0.0
    %2741 = vmatpush.msra.mxu0 %v2583
    %2742 = vmatpush.msra.mxu0 %v2582
    %2743 = vmatmul.f32.gmra.mxu0 %v2725
    %v2744 = vpop.f32.mrf.mxu0
    %v2745 = vadd.f32 0.0, %v2744
    %2746 = vdwg.mxu0
    %v2748 = vsel %vm1592, %v2384, 0
    %2750 = vmatpush.msra.mxu0 0.0
    %2751 = vmatpush.msra.mxu0 0.0
    %2752 = vmatpush.msra.mxu0 0.0
    %2753 = vmatpush.msra.mxu0 0.0
    %2754 = vmatpush.msra.mxu0 0.0
    %2755 = vmatpush.msra.mxu0 0.0
    %2756 = vmatpush.msra.mxu0 0.0
    %2757 = vmatpush.msra.mxu0 0.0
    %2758 = vmatpush.msra.mxu0 0.0
    %2759 = vmatpush.msra.mxu0 0.0
    %2760 = vmatpush.msra.mxu0 0.0
    %2761 = vmatpush.msra.mxu0 0.0
    %2762 = vmatpush.msra.mxu0 0.0
    %2763 = vmatpush.msra.mxu0 0.0
    %2764 = vmatpush.msra.mxu0 %v2585
    %2765 = vmatpush.msra.mxu0 %v2584
    %2766 = vmatmul.f32.gmra.mxu0 %v2748
    %v2767 = vpop.f32.mrf.mxu0
    %v2768 = vadd.f32 0.0, %v2767
    %2769 = vdwg.mxu0
    %v2771 = vsel %vm1592, %v2407, 0
    %2773 = vmatpush.msra.mxu0 0.0
    %2774 = vmatpush.msra.mxu0 0.0
    %2775 = vmatpush.msra.mxu0 0.0
    %2776 = vmatpush.msra.mxu0 0.0
    %2777 = vmatpush.msra.mxu0 0.0
    %2778 = vmatpush.msra.mxu0 0.0
    %2779 = vmatpush.msra.mxu0 0.0
    %2780 = vmatpush.msra.mxu0 0.0
    %2781 = vmatpush.msra.mxu0 0.0
    %2782 = vmatpush.msra.mxu0 0.0
    %2783 = vmatpush.msra.mxu0 0.0
    %2784 = vmatpush.msra.mxu0 0.0
    %2785 = vmatpush.msra.mxu0 0.0
    %2786 = vmatpush.msra.mxu0 0.0
    %2787 = vmatpush.msra.mxu0 %v2571
    %2788 = vmatpush.msra.mxu0 %v2570
    %2789 = vmatmul.f32.gmra.mxu0 %v2771
    %v2790 = vpop.f32.mrf.mxu0
    %v2791 = vadd.f32 0.0, %v2790
    %2792 = vdwg.mxu0
    %v2794 = vsel %vm1592, %v2430, 0
    %2796 = vmatpush.msra.mxu0 0.0
    %2797 = vmatpush.msra.mxu0 0.0
    %2798 = vmatpush.msra.mxu0 0.0
    %2799 = vmatpush.msra.mxu0 0.0
    %2800 = vmatpush.msra.mxu0 0.0
    %2801 = vmatpush.msra.mxu0 0.0
    %2802 = vmatpush.msra.mxu0 0.0
    %2803 = vmatpush.msra.mxu0 0.0
    %2804 = vmatpush.msra.mxu0 0.0
    %2805 = vmatpush.msra.mxu0 0.0
    %2806 = vmatpush.msra.mxu0 0.0
    %2807 = vmatpush.msra.mxu0 0.0
    %2808 = vmatpush.msra.mxu0 0.0
    %2809 = vmatpush.msra.mxu0 0.0
    %2810 = vmatpush.msra.mxu0 %v2573
    %2811 = vmatpush.msra.mxu0 %v2572
    %2812 = vmatmul.f32.gmra.mxu0 %v2794
    %v2813 = vpop.f32.mrf.mxu0
    %v2814 = vadd.f32 0.0, %v2813
    %2815 = vdwg.mxu0
    %v2817 = vsel %vm1592, %v2453, 0
    %2819 = vmatpush.msra.mxu0 0.0
    %2820 = vmatpush.msra.mxu0 0.0
    %2821 = vmatpush.msra.mxu0 0.0
    %2822 = vmatpush.msra.mxu0 0.0
    %2823 = vmatpush.msra.mxu0 0.0
    %2824 = vmatpush.msra.mxu0 0.0
    %2825 = vmatpush.msra.mxu0 0.0
    %2826 = vmatpush.msra.mxu0 0.0
    %2827 = vmatpush.msra.mxu0 0.0
    %2828 = vmatpush.msra.mxu0 0.0
    %2829 = vmatpush.msra.mxu0 0.0
    %2830 = vmatpush.msra.mxu0 0.0
    %2831 = vmatpush.msra.mxu0 0.0
    %2832 = vmatpush.msra.mxu0 0.0
    %2833 = vmatpush.msra.mxu0 %v2575
    %2834 = vmatpush.msra.mxu0 %v2574
    %2835 = vmatmul.f32.gmra.mxu0 %v2817
    %v2836 = vpop.f32.mrf.mxu0
    %v2837 = vadd.f32 0.0, %v2836
    %2838 = vdwg.mxu0
    %v2840 = vsel %vm1592, %v2476, 0
    %2842 = vmatpush.msra.mxu0 0.0
    %2843 = vmatpush.msra.mxu0 0.0
    %2844 = vmatpush.msra.mxu0 0.0
    %2845 = vmatpush.msra.mxu0 0.0
    %2846 = vmatpush.msra.mxu0 0.0
    %2847 = vmatpush.msra.mxu0 0.0
    %2848 = vmatpush.msra.mxu0 0.0
    %2849 = vmatpush.msra.mxu0 0.0
    %2850 = vmatpush.msra.mxu0 0.0
    %2851 = vmatpush.msra.mxu0 0.0
    %2852 = vmatpush.msra.mxu0 0.0
    %2853 = vmatpush.msra.mxu0 0.0
    %2854 = vmatpush.msra.mxu0 0.0
    %2855 = vmatpush.msra.mxu0 0.0
    %2856 = vmatpush.msra.mxu0 %v2577
    %2857 = vmatpush.msra.mxu0 %v2576
    %2858 = vmatmul.f32.gmra.mxu0 %v2840
    %v2859 = vpop.f32.mrf.mxu0
    %v2860 = vadd.f32 0.0, %v2859
    %2861 = vdwg.mxu0
    %v2863 = vsel %vm1592, %v2499, 0
    %2865 = vmatpush.msra.mxu0 0.0
    %2866 = vmatpush.msra.mxu0 0.0
    %2867 = vmatpush.msra.mxu0 0.0
    %2868 = vmatpush.msra.mxu0 0.0
    %2869 = vmatpush.msra.mxu0 0.0
    %2870 = vmatpush.msra.mxu0 0.0
    %2871 = vmatpush.msra.mxu0 0.0
    %2872 = vmatpush.msra.mxu0 0.0
    %2873 = vmatpush.msra.mxu0 0.0
    %2874 = vmatpush.msra.mxu0 0.0
    %2875 = vmatpush.msra.mxu0 0.0
    %2876 = vmatpush.msra.mxu0 0.0
    %2877 = vmatpush.msra.mxu0 0.0
    %2878 = vmatpush.msra.mxu0 0.0
    %2879 = vmatpush.msra.mxu0 %v2579
    %2880 = vmatpush.msra.mxu0 %v2578
    %2881 = vmatmul.f32.gmra.mxu0 %v2863
    %v2882 = vpop.f32.mrf.mxu0
    %v2883 = vadd.f32 0.0, %v2882
    %2884 = vdwg.mxu0
    %v2886 = vsel %vm1592, %v2522, 0
    %2888 = vmatpush.msra.mxu0 0.0
    %2889 = vmatpush.msra.mxu0 0.0
    %2890 = vmatpush.msra.mxu0 0.0
    %2891 = vmatpush.msra.mxu0 0.0
    %2892 = vmatpush.msra.mxu0 0.0
    %2893 = vmatpush.msra.mxu0 0.0
    %2894 = vmatpush.msra.mxu0 0.0
    %2895 = vmatpush.msra.mxu0 0.0
    %2896 = vmatpush.msra.mxu0 0.0
    %2897 = vmatpush.msra.mxu0 0.0
    %2898 = vmatpush.msra.mxu0 0.0
    %2899 = vmatpush.msra.mxu0 0.0
    %2900 = vmatpush.msra.mxu0 0.0
    %2901 = vmatpush.msra.mxu0 0.0
    %2902 = vmatpush.msra.mxu0 %v2581
    %2903 = vmatpush.msra.mxu0 %v2580
    %2904 = vmatmul.f32.gmra.mxu0 %v2886
    %v2905 = vpop.f32.mrf.mxu0
    %v2906 = vadd.f32 0.0, %v2905
    %2907 = vdwg.mxu0
    %v2909 = vsel %vm1592, %v2545, 0
    %2911 = vmatpush.msra.mxu0 0.0
    %2912 = vmatpush.msra.mxu0 0.0
    %2913 = vmatpush.msra.mxu0 0.0
    %2914 = vmatpush.msra.mxu0 0.0
    %2915 = vmatpush.msra.mxu0 0.0
    %2916 = vmatpush.msra.mxu0 0.0
    %2917 = vmatpush.msra.mxu0 0.0
    %2918 = vmatpush.msra.mxu0 0.0
    %2919 = vmatpush.msra.mxu0 0.0
    %2920 = vmatpush.msra.mxu0 0.0
    %2921 = vmatpush.msra.mxu0 0.0
    %2922 = vmatpush.msra.mxu0 0.0
    %2923 = vmatpush.msra.mxu0 0.0
    %2924 = vmatpush.msra.mxu0 0.0
    %2925 = vmatpush.msra.mxu0 %v2583
    %2926 = vmatpush.msra.mxu0 %v2582
    %2927 = vmatmul.f32.gmra.mxu0 %v2909
    %v2928 = vpop.f32.mrf.mxu0
    %v2929 = vadd.f32 0.0, %v2928
    %2930 = vdwg.mxu0
    %v2932 = vsel %vm1592, %v2568, 0
    %2934 = vmatpush.msra.mxu0 0.0
    %2935 = vmatpush.msra.mxu0 0.0
    %2936 = vmatpush.msra.mxu0 0.0
    %2937 = vmatpush.msra.mxu0 0.0
    %2938 = vmatpush.msra.mxu0 0.0
    %2939 = vmatpush.msra.mxu0 0.0
    %2940 = vmatpush.msra.mxu0 0.0
    %2941 = vmatpush.msra.mxu0 0.0
    %2942 = vmatpush.msra.mxu0 0.0
    %2943 = vmatpush.msra.mxu0 0.0
    %2944 = vmatpush.msra.mxu0 0.0
    %2945 = vmatpush.msra.mxu0 0.0
    %2946 = vmatpush.msra.mxu0 0.0
    %2947 = vmatpush.msra.mxu0 0.0
    %2948 = vmatpush.msra.mxu0 %v2585
    %2949 = vmatpush.msra.mxu0 %v2584
    %2950 = vmatmul.f32.gmra.mxu0 %v2932
    %v2951 = vpop.f32.mrf.mxu0
    %v2952 = vadd.f32 0.0, %v2951
    %2953 = vdwg.mxu0
    %v2954 = vadd.f32 %v2607, %v2630
    %v2955 = vadd.f32 %v2954, %v2653
    %v2956 = vadd.f32 %v2955, %v2676
    %v2957 = vadd.f32 %v2956, %v2699
    %v2958 = vadd.f32 %v2957, %v2722
    %v2959 = vadd.f32 %v2958, %v2745
    %v2960 = vadd.f32 %v2959, %v2768
    %v2961 = vadd.f32 %v2791, %v2814
    %v2962 = vadd.f32 %v2961, %v2837
    %v2963 = vadd.f32 %v2962, %v2860
    %v2964 = vadd.f32 %v2963, %v2883
    %v2965 = vadd.f32 %v2964, %v2906
    %v2966 = vadd.f32 %v2965, %v2929
    %v2967 = vadd.f32 %v2966, %v2952
    %v2968 = vld [vmem:[%s5] sm:$0x1]
    %v2970 = vperm.slane %v2968, 0
    %v2972 = vadd.f32 %v2960, %v2970
    %v2973 = vadd.f32 %v2967, %v2970
    %v2974 = vadd.f32 %v2972, %v48
    %v2975 = vadd.f32 %v2973, %v49
    %s2976 = scalar_lea.vmem %s5, 1
    %v2977 = vld [vmem:[%s2976] sm:$0x1]
    %s2978 = scalar_lea.vmem %s5, 2
    %v2979 = vld [vmem:[%s2978] sm:$0x1]
    %2980 = vadd.xlane.f32.xlu0 %v2974
    %v2981 = vpop.xlane.xlu0 %2980
    %2982 = vadd.xlane.f32.xlu0 %v2975
    %v2983 = vpop.xlane.xlu0 %2982
    %v2984 = vrcp.pop 128.0
    %v2985 = vmul.f32 128.0, %v2984
    %v2986 = vsub.f32 1.0, %v2985
    %v2987 = vmul.f32 %v2984, %v2986
    %v2988 = vadd.f32 %v2984, %v2987
    %vm2989 = vweird.f32 %v2984
    %v2990 = vsel %vm2989, %v2984, %v2988
    %v2991 = vmul.f32 %v2981, %v2990
    %v2992 = vmul.f32 %v2983, %v2990
    %v2993 = vsub.f32 %v2974, %v2991
    %v2994 = vsub.f32 %v2975, %v2992
    %v2995 = vmul.f32 %v2993, %v2993
    %v2996 = vmul.f32 %v2994, %v2994
    %2997 = vadd.xlane.f32.xlu0 %v2995
    %v2998 = vpop.xlane.xlu0 %2997
    %2999 = vadd.xlane.f32.xlu0 %v2996
    %v3000 = vpop.xlane.xlu0 %2999
    %v3001 = vmul.f32 %v2998, %v2990
    %v3002 = vmul.f32 %v3000, %v2990
    %v3003 = vadd.f32 %v3001, 1e-05
    %v3004 = vadd.f32 %v3002, 1e-05
    %v3005 = vrsqrt.pop %v3003
    %v3006 = vmul.f32 %v3005, %v3003
    %v3007 = vmul.f32 %v3006, %v3005
    %v3008 = vmul.f32 0.5, %v3007
    %v3009 = vsub.f32 1.5, %v3008
    %v3010 = vmul.f32 %v3005, %v3009
    %vm3011 = vweird.f32 %v3003
    %vm3012 = vweird.f32 %v3005
    %vm3013 = vmor %vm3011, %vm3012
    %v3014 = vsel %vm3013, %v3005, %v3010
    %v3015 = vrsqrt.pop %v3004
    %v3016 = vmul.f32 %v3015, %v3004
    %v3017 = vmul.f32 %v3016, %v3015
    %v3018 = vmul.f32 0.5, %v3017
    %v3019 = vsub.f32 1.5, %v3018
    %v3020 = vmul.f32 %v3015, %v3019
    %vm3021 = vweird.f32 %v3004
    %vm3022 = vweird.f32 %v3015
    %vm3023 = vmor %vm3021, %vm3022
    %v3024 = vsel %vm3023, %v3015, %v3020
    %v3025 = vmul.f32 %v2993, %v3014
    %v3026 = vmul.f32 %v2994, %v3024
    %v3028 = vperm.slane %v2977, 0
    %v3030 = vmul.f32 %v3025, %v3028
    %v3031 = vmul.f32 %v3026, %v3028
    %v3033 = vperm.slane %v2979, 0
    %v3035 = vadd.f32 %v3030, %v3033
    %v3036 = vadd.f32 %v3031, %v3033
    %v3037 = vld [vmem:[%s6] sm:$0xff]
    %v3038 = vld [vmem:[%s6 + $0x8] sm:$0xff]
    %v3039 = vld [vmem:[%s6 + $0x10] sm:$0xff]
    %v3040 = vld [vmem:[%s6 + $0x18] sm:$0xff]
    %v3041 = vld [vmem:[%s6 + $0x20] sm:$0xff]
    %v3042 = vld [vmem:[%s6 + $0x28] sm:$0xff]
    %v3043 = vld [vmem:[%s6 + $0x30] sm:$0xff]
    %v3044 = vld [vmem:[%s6 + $0x38] sm:$0xff]
    %v3045 = vld [vmem:[%s6 + $0x40] sm:$0xff]
    %v3046 = vld [vmem:[%s6 + $0x48] sm:$0xff]
    %v3047 = vld [vmem:[%s6 + $0x50] sm:$0xff]
    %v3048 = vld [vmem:[%s6 + $0x58] sm:$0xff]
    %v3049 = vld [vmem:[%s6 + $0x60] sm:$0xff]
    %v3050 = vld [vmem:[%s6 + $0x68] sm:$0xff]
    %v3051 = vld [vmem:[%s6 + $0x70] sm:$0xff]
    %v3052 = vld [vmem:[%s6 + $0x78] sm:$0xff]
    %v3053 = vld [vmem:[%s6 + $0x80] sm:$0xff]
    %v3054 = vld [vmem:[%s6 + $0x88] sm:$0xff]
    %v3055 = vld [vmem:[%s6 + $0x90] sm:$0xff]
    %v3056 = vld [vmem:[%s6 + $0x98] sm:$0xff]
    %v3057 = vld [vmem:[%s6 + $0xa0] sm:$0xff]
    %v3058 = vld [vmem:[%s6 + $0xa8] sm:$0xff]
    %v3059 = vld [vmem:[%s6 + $0xb0] sm:$0xff]
    %v3060 = vld [vmem:[%s6 + $0xb8] sm:$0xff]
    %v3061 = vld [vmem:[%s6 + $0xc0] sm:$0xff]
    %v3062 = vld [vmem:[%s6 + $0xc8] sm:$0xff]
    %v3063 = vld [vmem:[%s6 + $0xd0] sm:$0xff]
    %v3064 = vld [vmem:[%s6 + $0xd8] sm:$0xff]
    %v3065 = vld [vmem:[%s6 + $0xe0] sm:$0xff]
    %v3066 = vld [vmem:[%s6 + $0xe8] sm:$0xff]
    %v3067 = vld [vmem:[%s6 + $0xf0] sm:$0xff]
    %v3068 = vld [vmem:[%s6 + $0xf8] sm:$0xff]
    %v3069 = vld [vmem:[%s6 + $0x100] sm:$0xff]
    %v3070 = vld [vmem:[%s6 + $0x108] sm:$0xff]
    %v3071 = vld [vmem:[%s6 + $0x110] sm:$0xff]
    %v3072 = vld [vmem:[%s6 + $0x118] sm:$0xff]
    %v3073 = vld [vmem:[%s6 + $0x120] sm:$0xff]
    %v3074 = vld [vmem:[%s6 + $0x128] sm:$0xff]
    %v3075 = vld [vmem:[%s6 + $0x130] sm:$0xff]
    %v3076 = vld [vmem:[%s6 + $0x138] sm:$0xff]
    %v3077 = vld [vmem:[%s6 + $0x140] sm:$0xff]
    %v3078 = vld [vmem:[%s6 + $0x148] sm:$0xff]
    %v3079 = vld [vmem:[%s6 + $0x150] sm:$0xff]
    %v3080 = vld [vmem:[%s6 + $0x158] sm:$0xff]
    %v3081 = vld [vmem:[%s6 + $0x160] sm:$0xff]
    %v3082 = vld [vmem:[%s6 + $0x168] sm:$0xff]
    %v3083 = vld [vmem:[%s6 + $0x170] sm:$0xff]
    %v3084 = vld [vmem:[%s6 + $0x178] sm:$0xff]
    %v3085 = vld [vmem:[%s6 + $0x180] sm:$0xff]
    %v3086 = vld [vmem:[%s6 + $0x188] sm:$0xff]
    %v3087 = vld [vmem:[%s6 + $0x190] sm:$0xff]
    %v3088 = vld [vmem:[%s6 + $0x198] sm:$0xff]
    %v3089 = vld [vmem:[%s6 + $0x1a0] sm:$0xff]
    %v3090 = vld [vmem:[%s6 + $0x1a8] sm:$0xff]
    %v3091 = vld [vmem:[%s6 + $0x1b0] sm:$0xff]
    %v3092 = vld [vmem:[%s6 + $0x1b8] sm:$0xff]
    %v3093 = vld [vmem:[%s6 + $0x1c0] sm:$0xff]
    %v3094 = vld [vmem:[%s6 + $0x1c8] sm:$0xff]
    %v3095 = vld [vmem:[%s6 + $0x1d0] sm:$0xff]
    %v3096 = vld [vmem:[%s6 + $0x1d8] sm:$0xff]
    %v3097 = vld [vmem:[%s6 + $0x1e0] sm:$0xff]
    %v3098 = vld [vmem:[%s6 + $0x1e8] sm:$0xff]
    %v3099 = vld [vmem:[%s6 + $0x1f0] sm:$0xff]
    %v3100 = vld [vmem:[%s6 + $0x1f8] sm:$0xff]
    %v3101 = vld [vmem:[%s6 + $0x200] sm:$0xff]
    %v3102 = vld [vmem:[%s6 + $0x208] sm:$0xff]
    %v3103 = vld [vmem:[%s6 + $0x210] sm:$0xff]
    %v3104 = vld [vmem:[%s6 + $0x218] sm:$0xff]
    %v3105 = vld [vmem:[%s6 + $0x220] sm:$0xff]
    %v3106 = vld [vmem:[%s6 + $0x228] sm:$0xff]
    %v3107 = vld [vmem:[%s6 + $0x230] sm:$0xff]
    %v3108 = vld [vmem:[%s6 + $0x238] sm:$0xff]
    %v3109 = vld [vmem:[%s6 + $0x240] sm:$0xff]
    %v3110 = vld [vmem:[%s6 + $0x248] sm:$0xff]
    %v3111 = vld [vmem:[%s6 + $0x250] sm:$0xff]
    %v3112 = vld [vmem:[%s6 + $0x258] sm:$0xff]
    %v3113 = vld [vmem:[%s6 + $0x260] sm:$0xff]
    %v3114 = vld [vmem:[%s6 + $0x268] sm:$0xff]
    %v3115 = vld [vmem:[%s6 + $0x270] sm:$0xff]
    %v3116 = vld [vmem:[%s6 + $0x278] sm:$0xff]
    %v3117 = vld [vmem:[%s6 + $0x280] sm:$0xff]
    %v3118 = vld [vmem:[%s6 + $0x288] sm:$0xff]
    %v3119 = vld [vmem:[%s6 + $0x290] sm:$0xff]
    %v3120 = vld [vmem:[%s6 + $0x298] sm:$0xff]
    %v3121 = vld [vmem:[%s6 + $0x2a0] sm:$0xff]
    %v3122 = vld [vmem:[%s6 + $0x2a8] sm:$0xff]
    %v3123 = vld [vmem:[%s6 + $0x2b0] sm:$0xff]
    %v3124 = vld [vmem:[%s6 + $0x2b8] sm:$0xff]
    %v3125 = vld [vmem:[%s6 + $0x2c0] sm:$0xff]
    %v3126 = vld [vmem:[%s6 + $0x2c8] sm:$0xff]
    %v3127 = vld [vmem:[%s6 + $0x2d0] sm:$0xff]
    %v3128 = vld [vmem:[%s6 + $0x2d8] sm:$0xff]
    %v3129 = vld [vmem:[%s6 + $0x2e0] sm:$0xff]
    %v3130 = vld [vmem:[%s6 + $0x2e8] sm:$0xff]
    %v3131 = vld [vmem:[%s6 + $0x2f0] sm:$0xff]
    %v3132 = vld [vmem:[%s6 + $0x2f8] sm:$0xff]
    %v3133 = vld [vmem:[%s6 + $0x300] sm:$0xff]
    %v3134 = vld [vmem:[%s6 + $0x308] sm:$0xff]
    %v3135 = vld [vmem:[%s6 + $0x310] sm:$0xff]
    %v3136 = vld [vmem:[%s6 + $0x318] sm:$0xff]
    %v3137 = vld [vmem:[%s6 + $0x320] sm:$0xff]
    %v3138 = vld [vmem:[%s6 + $0x328] sm:$0xff]
    %v3139 = vld [vmem:[%s6 + $0x330] sm:$0xff]
    %v3140 = vld [vmem:[%s6 + $0x338] sm:$0xff]
    %v3141 = vld [vmem:[%s6 + $0x340] sm:$0xff]
    %v3142 = vld [vmem:[%s6 + $0x348] sm:$0xff]
    %v3143 = vld [vmem:[%s6 + $0x350] sm:$0xff]
    %v3144 = vld [vmem:[%s6 + $0x358] sm:$0xff]
    %v3145 = vld [vmem:[%s6 + $0x360] sm:$0xff]
    %v3146 = vld [vmem:[%s6 + $0x368] sm:$0xff]
    %v3147 = vld [vmem:[%s6 + $0x370] sm:$0xff]
    %v3148 = vld [vmem:[%s6 + $0x378] sm:$0xff]
    %v3149 = vld [vmem:[%s6 + $0x380] sm:$0xff]
    %v3150 = vld [vmem:[%s6 + $0x388] sm:$0xff]
    %v3151 = vld [vmem:[%s6 + $0x390] sm:$0xff]
    %v3152 = vld [vmem:[%s6 + $0x398] sm:$0xff]
    %v3153 = vld [vmem:[%s6 + $0x3a0] sm:$0xff]
    %v3154 = vld [vmem:[%s6 + $0x3a8] sm:$0xff]
    %v3155 = vld [vmem:[%s6 + $0x3b0] sm:$0xff]
    %v3156 = vld [vmem:[%s6 + $0x3b8] sm:$0xff]
    %v3157 = vld [vmem:[%s6 + $0x3c0] sm:$0xff]
    %v3158 = vld [vmem:[%s6 + $0x3c8] sm:$0xff]
    %v3159 = vld [vmem:[%s6 + $0x3d0] sm:$0xff]
    %v3160 = vld [vmem:[%s6 + $0x3d8] sm:$0xff]
    %v3161 = vld [vmem:[%s6 + $0x3e0] sm:$0xff]
    %v3162 = vld [vmem:[%s6 + $0x3e8] sm:$0xff]
    %v3163 = vld [vmem:[%s6 + $0x3f0] sm:$0xff]
    %v3164 = vld [vmem:[%s6 + $0x3f8] sm:$0xff]
    %v3165 = vld [vmem:[%s8] sm:$0x1]
    %v3166 = vld [vmem:[%s8 + $0x1] sm:$0x1]
    %v3167 = vld [vmem:[%s8 + $0x2] sm:$0x1]
    %v3168 = vld [vmem:[%s8 + $0x3] sm:$0x1]
    %v3169 = vld [vmem:[%s8 + $0x4] sm:$0x1]
    %v3170 = vld [vmem:[%s8 + $0x5] sm:$0x1]
    %v3171 = vld [vmem:[%s8 + $0x6] sm:$0x1]
    %v3172 = vld [vmem:[%s8 + $0x7] sm:$0x1]
    %v3173 = vld [vmem:[%s8 + $0x8] sm:$0x1]
    %v3174 = vld [vmem:[%s8 + $0x9] sm:$0x1]
    %v3175 = vld [vmem:[%s8 + $0xa] sm:$0x1]
    %v3176 = vld [vmem:[%s8 + $0xb] sm:$0x1]
    %v3177 = vld [vmem:[%s8 + $0xc] sm:$0x1]
    %v3178 = vld [vmem:[%s8 + $0xd] sm:$0x1]
    %v3179 = vld [vmem:[%s8 + $0xe] sm:$0x1]
    %v3180 = vld [vmem:[%s8 + $0xf] sm:$0x1]
    %v3197 = vperm.slane %v3165, 0
    %v3198 = vperm.slane %v3166, 0
    %v3199 = vperm.slane %v3167, 0
    %v3200 = vperm.slane %v3168, 0
    %v3201 = vperm.slane %v3169, 0
    %v3202 = vperm.slane %v3170, 0
    %v3203 = vperm.slane %v3171, 0
    %v3204 = vperm.slane %v3172, 0
    %v3205 = vperm.slane %v3173, 0
    %v3206 = vperm.slane %v3174, 0
    %v3207 = vperm.slane %v3175, 0
    %v3208 = vperm.slane %v3176, 0
    %v3209 = vperm.slane %v3177, 0
    %v3210 = vperm.slane %v3178, 0
    %v3211 = vperm.slane %v3179, 0
    %v3212 = vperm.slane %v3180, 0
    %3229 = vmatpush.msra.mxu0 %v3052
    %3230 = vmatpush.msra.mxu0 %v3051
    %3231 = vmatpush.msra.mxu0 %v3050
    %3232 = vmatpush.msra.mxu0 %v3049
    %3233 = vmatpush.msra.mxu0 %v3048
    %3234 = vmatpush.msra.mxu0 %v3047
    %3235 = vmatpush.msra.mxu0 %v3046
    %3236 = vmatpush.msra.mxu0 %v3045
    %3237 = vmatpush.msra.mxu0 %v3044
    %3238 = vmatpush.msra.mxu0 %v3043
    %3239 = vmatpush.msra.mxu0 %v3042
    %3240 = vmatpush.msra.mxu0 %v3041
    %3241 = vmatpush.msra.mxu0 %v3040
    %3242 = vmatpush.msra.mxu0 %v3039
    %3243 = vmatpush.msra.mxu0 %v3038
    %3244 = vmatpush.msra.mxu0 %v3037
    %3245 = vmatmul.f32.gmra.mxu0 %v50
    %v3246 = vpop.f32.mrf.mxu0
    %v3247 = vadd.f32 %v3197, %v3246
    %3248 = vdwg.mxu0
    %3249 = vmatpush.msra.mxu0 %v3068
    %3250 = vmatpush.msra.mxu0 %v3067
    %3251 = vmatpush.msra.mxu0 %v3066
    %3252 = vmatpush.msra.mxu0 %v3065
    %3253 = vmatpush.msra.mxu0 %v3064
    %3254 = vmatpush.msra.mxu0 %v3063
    %3255 = vmatpush.msra.mxu0 %v3062
    %3256 = vmatpush.msra.mxu0 %v3061
    %3257 = vmatpush.msra.mxu0 %v3060
    %3258 = vmatpush.msra.mxu0 %v3059
    %3259 = vmatpush.msra.mxu0 %v3058
    %3260 = vmatpush.msra.mxu0 %v3057
    %3261 = vmatpush.msra.mxu0 %v3056
    %3262 = vmatpush.msra.mxu0 %v3055
    %3263 = vmatpush.msra.mxu0 %v3054
    %3264 = vmatpush.msra.mxu0 %v3053
    %3265 = vmatmul.f32.gmra.mxu0 %v50
    %v3266 = vpop.f32.mrf.mxu0
    %v3267 = vadd.f32 %v3198, %v3266
    %3268 = vdwg.mxu0
    %3269 = vmatpush.msra.mxu0 %v3084
    %3270 = vmatpush.msra.mxu0 %v3083
    %3271 = vmatpush.msra.mxu0 %v3082
    %3272 = vmatpush.msra.mxu0 %v3081
    %3273 = vmatpush.msra.mxu0 %v3080
    %3274 = vmatpush.msra.mxu0 %v3079
    %3275 = vmatpush.msra.mxu0 %v3078
    %3276 = vmatpush.msra.mxu0 %v3077
    %3277 = vmatpush.msra.mxu0 %v3076
    %3278 = vmatpush.msra.mxu0 %v3075
    %3279 = vmatpush.msra.mxu0 %v3074
    %3280 = vmatpush.msra.mxu0 %v3073
    %3281 = vmatpush.msra.mxu0 %v3072
    %3282 = vmatpush.msra.mxu0 %v3071
    %3283 = vmatpush.msra.mxu0 %v3070
    %3284 = vmatpush.msra.mxu0 %v3069
    %3285 = vmatmul.f32.gmra.mxu0 %v50
    %v3286 = vpop.f32.mrf.mxu0
    %v3287 = vadd.f32 %v3199, %v3286
    %3288 = vdwg.mxu0
    %3289 = vmatpush.msra.mxu0 %v3100
    %3290 = vmatpush.msra.mxu0 %v3099
    %3291 = vmatpush.msra.mxu0 %v3098
    %3292 = vmatpush.msra.mxu0 %v3097
    %3293 = vmatpush.msra.mxu0 %v3096
    %3294 = vmatpush.msra.mxu0 %v3095
    %3295 = vmatpush.msra.mxu0 %v3094
    %3296 = vmatpush.msra.mxu0 %v3093
    %3297 = vmatpush.msra.mxu0 %v3092
    %3298 = vmatpush.msra.mxu0 %v3091
    %3299 = vmatpush.msra.mxu0 %v3090
    %3300 = vmatpush.msra.mxu0 %v3089
    %3301 = vmatpush.msra.mxu0 %v3088
    %3302 = vmatpush.msra.mxu0 %v3087
    %3303 = vmatpush.msra.mxu0 %v3086
    %3304 = vmatpush.msra.mxu0 %v3085
    %3305 = vmatmul.f32.gmra.mxu0 %v50
    %v3306 = vpop.f32.mrf.mxu0
    %v3307 = vadd.f32 %v3200, %v3306
    %3308 = vdwg.mxu0
    %3309 = vmatpush.msra.mxu0 %v3116
    %3310 = vmatpush.msra.mxu0 %v3115
    %3311 = vmatpush.msra.mxu0 %v3114
    %3312 = vmatpush.msra.mxu0 %v3113
    %3313 = vmatpush.msra.mxu0 %v3112
    %3314 = vmatpush.msra.mxu0 %v3111
    %3315 = vmatpush.msra.mxu0 %v3110
    %3316 = vmatpush.msra.mxu0 %v3109
    %3317 = vmatpush.msra.mxu0 %v3108
    %3318 = vmatpush.msra.mxu0 %v3107
    %3319 = vmatpush.msra.mxu0 %v3106
    %3320 = vmatpush.msra.mxu0 %v3105
    %3321 = vmatpush.msra.mxu0 %v3104
    %3322 = vmatpush.msra.mxu0 %v3103
    %3323 = vmatpush.msra.mxu0 %v3102
    %3324 = vmatpush.msra.mxu0 %v3101
    %3325 = vmatmul.f32.gmra.mxu0 %v50
    %v3326 = vpop.f32.mrf.mxu0
    %v3327 = vadd.f32 %v3201, %v3326
    %3328 = vdwg.mxu0
    %3329 = vmatpush.msra.mxu0 %v3132
    %3330 = vmatpush.msra.mxu0 %v3131
    %3331 = vmatpush.msra.mxu0 %v3130
    %3332 = vmatpush.msra.mxu0 %v3129
    %3333 = vmatpush.msra.mxu0 %v3128
    %3334 = vmatpush.msra.mxu0 %v3127
    %3335 = vmatpush.msra.mxu0 %v3126
    %3336 = vmatpush.msra.mxu0 %v3125
    %3337 = vmatpush.msra.mxu0 %v3124
    %3338 = vmatpush.msra.mxu0 %v3123
    %3339 = vmatpush.msra.mxu0 %v3122
    %3340 = vmatpush.msra.mxu0 %v3121
    %3341 = vmatpush.msra.mxu0 %v3120
    %3342 = vmatpush.msra.mxu0 %v3119
    %3343 = vmatpush.msra.mxu0 %v3118
    %3344 = vmatpush.msra.mxu0 %v3117
    %3345 = vmatmul.f32.gmra.mxu0 %v50
    %v3346 = vpop.f32.mrf.mxu0
    %v3347 = vadd.f32 %v3202, %v3346
    %3348 = vdwg.mxu0
    %3349 = vmatpush.msra.mxu0 %v3148
    %3350 = vmatpush.msra.mxu0 %v3147
    %3351 = vmatpush.msra.mxu0 %v3146
    %3352 = vmatpush.msra.mxu0 %v3145
    %3353 = vmatpush.msra.mxu0 %v3144
    %3354 = vmatpush.msra.mxu0 %v3143
    %3355 = vmatpush.msra.mxu0 %v3142
    %3356 = vmatpush.msra.mxu0 %v3141
    %3357 = vmatpush.msra.mxu0 %v3140
    %3358 = vmatpush.msra.mxu0 %v3139
    %3359 = vmatpush.msra.mxu0 %v3138
    %3360 = vmatpush.msra.mxu0 %v3137
    %3361 = vmatpush.msra.mxu0 %v3136
    %3362 = vmatpush.msra.mxu0 %v3135
    %3363 = vmatpush.msra.mxu0 %v3134
    %3364 = vmatpush.msra.mxu0 %v3133
    %3365 = vmatmul.f32.gmra.mxu0 %v50
    %v3366 = vpop.f32.mrf.mxu0
    %v3367 = vadd.f32 %v3203, %v3366
    %3368 = vdwg.mxu0
    %3369 = vmatpush.msra.mxu0 %v3164
    %3370 = vmatpush.msra.mxu0 %v3163
    %3371 = vmatpush.msra.mxu0 %v3162
    %3372 = vmatpush.msra.mxu0 %v3161
    %3373 = vmatpush.msra.mxu0 %v3160
    %3374 = vmatpush.msra.mxu0 %v3159
    %3375 = vmatpush.msra.mxu0 %v3158
    %3376 = vmatpush.msra.mxu0 %v3157
    %3377 = vmatpush.msra.mxu0 %v3156
    %3378 = vmatpush.msra.mxu0 %v3155
    %3379 = vmatpush.msra.mxu0 %v3154
    %3380 = vmatpush.msra.mxu0 %v3153
    %3381 = vmatpush.msra.mxu0 %v3152
    %3382 = vmatpush.msra.mxu0 %v3151
    %3383 = vmatpush.msra.mxu0 %v3150
    %3384 = vmatpush.msra.mxu0 %v3149
    %3385 = vmatmul.f32.gmra.mxu0 %v50
    %v3386 = vpop.f32.mrf.mxu0
    %v3387 = vadd.f32 %v3204, %v3386
    %3388 = vdwg.mxu0
    %3389 = vmatpush.msra.mxu0 %v3052
    %3390 = vmatpush.msra.mxu0 %v3051
    %3391 = vmatpush.msra.mxu0 %v3050
    %3392 = vmatpush.msra.mxu0 %v3049
    %3393 = vmatpush.msra.mxu0 %v3048
    %3394 = vmatpush.msra.mxu0 %v3047
    %3395 = vmatpush.msra.mxu0 %v3046
    %3396 = vmatpush.msra.mxu0 %v3045
    %3397 = vmatpush.msra.mxu0 %v3044
    %3398 = vmatpush.msra.mxu0 %v3043
    %3399 = vmatpush.msra.mxu0 %v3042
    %3400 = vmatpush.msra.mxu0 %v3041
    %3401 = vmatpush.msra.mxu0 %v3040
    %3402 = vmatpush.msra.mxu0 %v3039
    %3403 = vmatpush.msra.mxu0 %v3038
    %3404 = vmatpush.msra.mxu0 %v3037
    %3405 = vmatmul.f32.gmra.mxu0 %v51
    %v3406 = vpop.f32.mrf.mxu0
    %v3407 = vadd.f32 %v3205, %v3406
    %3408 = vdwg.mxu0
    %3409 = vmatpush.msra.mxu0 %v3068
    %3410 = vmatpush.msra.mxu0 %v3067
    %3411 = vmatpush.msra.mxu0 %v3066
    %3412 = vmatpush.msra.mxu0 %v3065
    %3413 = vmatpush.msra.mxu0 %v3064
    %3414 = vmatpush.msra.mxu0 %v3063
    %3415 = vmatpush.msra.mxu0 %v3062
    %3416 = vmatpush.msra.mxu0 %v3061
    %3417 = vmatpush.msra.mxu0 %v3060
    %3418 = vmatpush.msra.mxu0 %v3059
    %3419 = vmatpush.msra.mxu0 %v3058
    %3420 = vmatpush.msra.mxu0 %v3057
    %3421 = vmatpush.msra.mxu0 %v3056
    %3422 = vmatpush.msra.mxu0 %v3055
    %3423 = vmatpush.msra.mxu0 %v3054
    %3424 = vmatpush.msra.mxu0 %v3053
    %3425 = vmatmul.f32.gmra.mxu0 %v51
    %v3426 = vpop.f32.mrf.mxu0
    %v3427 = vadd.f32 %v3206, %v3426
    %3428 = vdwg.mxu0
    %3429 = vmatpush.msra.mxu0 %v3084
    %3430 = vmatpush.msra.mxu0 %v3083
    %3431 = vmatpush.msra.mxu0 %v3082
    %3432 = vmatpush.msra.mxu0 %v3081
    %3433 = vmatpush.msra.mxu0 %v3080
    %3434 = vmatpush.msra.mxu0 %v3079
    %3435 = vmatpush.msra.mxu0 %v3078
    %3436 = vmatpush.msra.mxu0 %v3077
    %3437 = vmatpush.msra.mxu0 %v3076
    %3438 = vmatpush.msra.mxu0 %v3075
    %3439 = vmatpush.msra.mxu0 %v3074
    %3440 = vmatpush.msra.mxu0 %v3073
    %3441 = vmatpush.msra.mxu0 %v3072
    %3442 = vmatpush.msra.mxu0 %v3071
    %3443 = vmatpush.msra.mxu0 %v3070
    %3444 = vmatpush.msra.mxu0 %v3069
    %3445 = vmatmul.f32.gmra.mxu0 %v51
    %v3446 = vpop.f32.mrf.mxu0
    %v3447 = vadd.f32 %v3207, %v3446
    %3448 = vdwg.mxu0
    %3449 = vmatpush.msra.mxu0 %v3100
    %3450 = vmatpush.msra.mxu0 %v3099
    %3451 = vmatpush.msra.mxu0 %v3098
    %3452 = vmatpush.msra.mxu0 %v3097
    %3453 = vmatpush.msra.mxu0 %v3096
    %3454 = vmatpush.msra.mxu0 %v3095
    %3455 = vmatpush.msra.mxu0 %v3094
    %3456 = vmatpush.msra.mxu0 %v3093
    %3457 = vmatpush.msra.mxu0 %v3092
    %3458 = vmatpush.msra.mxu0 %v3091
    %3459 = vmatpush.msra.mxu0 %v3090
    %3460 = vmatpush.msra.mxu0 %v3089
    %3461 = vmatpush.msra.mxu0 %v3088
    %3462 = vmatpush.msra.mxu0 %v3087
    %3463 = vmatpush.msra.mxu0 %v3086
    %3464 = vmatpush.msra.mxu0 %v3085
    %3465 = vmatmul.f32.gmra.mxu0 %v51
    %v3466 = vpop.f32.mrf.mxu0
    %v3467 = vadd.f32 %v3208, %v3466
    %3468 = vdwg.mxu0
    %3469 = vmatpush.msra.mxu0 %v3116
    %3470 = vmatpush.msra.mxu0 %v3115
    %3471 = vmatpush.msra.mxu0 %v3114
    %3472 = vmatpush.msra.mxu0 %v3113
    %3473 = vmatpush.msra.mxu0 %v3112
    %3474 = vmatpush.msra.mxu0 %v3111
    %3475 = vmatpush.msra.mxu0 %v3110
    %3476 = vmatpush.msra.mxu0 %v3109
    %3477 = vmatpush.msra.mxu0 %v3108
    %3478 = vmatpush.msra.mxu0 %v3107
    %3479 = vmatpush.msra.mxu0 %v3106
    %3480 = vmatpush.msra.mxu0 %v3105
    %3481 = vmatpush.msra.mxu0 %v3104
    %3482 = vmatpush.msra.mxu0 %v3103
    %3483 = vmatpush.msra.mxu0 %v3102
    %3484 = vmatpush.msra.mxu0 %v3101
    %3485 = vmatmul.f32.gmra.mxu0 %v51
    %v3486 = vpop.f32.mrf.mxu0
    %v3487 = vadd.f32 %v3209, %v3486
    %3488 = vdwg.mxu0
    %3489 = vmatpush.msra.mxu0 %v3132
    %3490 = vmatpush.msra.mxu0 %v3131
    %3491 = vmatpush.msra.mxu0 %v3130
    %3492 = vmatpush.msra.mxu0 %v3129
    %3493 = vmatpush.msra.mxu0 %v3128
    %3494 = vmatpush.msra.mxu0 %v3127
    %3495 = vmatpush.msra.mxu0 %v3126
    %3496 = vmatpush.msra.mxu0 %v3125
    %3497 = vmatpush.msra.mxu0 %v3124
    %3498 = vmatpush.msra.mxu0 %v3123
    %3499 = vmatpush.msra.mxu0 %v3122
    %3500 = vmatpush.msra.mxu0 %v3121
    %3501 = vmatpush.msra.mxu0 %v3120
    %3502 = vmatpush.msra.mxu0 %v3119
    %3503 = vmatpush.msra.mxu0 %v3118
    %3504 = vmatpush.msra.mxu0 %v3117
    %3505 = vmatmul.f32.gmra.mxu0 %v51
    %v3506 = vpop.f32.mrf.mxu0
    %v3507 = vadd.f32 %v3210, %v3506
    %3508 = vdwg.mxu0
    %3509 = vmatpush.msra.mxu0 %v3148
    %3510 = vmatpush.msra.mxu0 %v3147
    %3511 = vmatpush.msra.mxu0 %v3146
    %3512 = vmatpush.msra.mxu0 %v3145
    %3513 = vmatpush.msra.mxu0 %v3144
    %3514 = vmatpush.msra.mxu0 %v3143
    %3515 = vmatpush.msra.mxu0 %v3142
    %3516 = vmatpush.msra.mxu0 %v3141
    %3517 = vmatpush.msra.mxu0 %v3140
    %3518 = vmatpush.msra.mxu0 %v3139
    %3519 = vmatpush.msra.mxu0 %v3138
    %3520 = vmatpush.msra.mxu0 %v3137
    %3521 = vmatpush.msra.mxu0 %v3136
    %3522 = vmatpush.msra.mxu0 %v3135
    %3523 = vmatpush.msra.mxu0 %v3134
    %3524 = vmatpush.msra.mxu0 %v3133
    %3525 = vmatmul.f32.gmra.mxu0 %v51
    %v3526 = vpop.f32.mrf.mxu0
    %v3527 = vadd.f32 %v3211, %v3526
    %3528 = vdwg.mxu0
    %3529 = vmatpush.msra.mxu0 %v3164
    %3530 = vmatpush.msra.mxu0 %v3163
    %3531 = vmatpush.msra.mxu0 %v3162
    %3532 = vmatpush.msra.mxu0 %v3161
    %3533 = vmatpush.msra.mxu0 %v3160
    %3534 = vmatpush.msra.mxu0 %v3159
    %3535 = vmatpush.msra.mxu0 %v3158
    %3536 = vmatpush.msra.mxu0 %v3157
    %3537 = vmatpush.msra.mxu0 %v3156
    %3538 = vmatpush.msra.mxu0 %v3155
    %3539 = vmatpush.msra.mxu0 %v3154
    %3540 = vmatpush.msra.mxu0 %v3153
    %3541 = vmatpush.msra.mxu0 %v3152
    %3542 = vmatpush.msra.mxu0 %v3151
    %3543 = vmatpush.msra.mxu0 %v3150
    %3544 = vmatpush.msra.mxu0 %v3149
    %3545 = vmatmul.f32.gmra.mxu0 %v51
    %v3546 = vpop.f32.mrf.mxu0
    %v3547 = vadd.f32 %v3212, %v3546
    %3548 = vdwg.mxu0
    %s3549 = scalar_lea.vmem %s6, 1024
    %v3550 = vld [vmem:[%s3549] sm:$0xff]
    %v3551 = vld [vmem:[%s3549 + $0x8] sm:$0xff]
    %v3552 = vld [vmem:[%s3549 + $0x10] sm:$0xff]
    %v3553 = vld [vmem:[%s3549 + $0x18] sm:$0xff]
    %v3554 = vld [vmem:[%s3549 + $0x20] sm:$0xff]
    %v3555 = vld [vmem:[%s3549 + $0x28] sm:$0xff]
    %v3556 = vld [vmem:[%s3549 + $0x30] sm:$0xff]
    %v3557 = vld [vmem:[%s3549 + $0x38] sm:$0xff]
    %v3558 = vld [vmem:[%s3549 + $0x40] sm:$0xff]
    %v3559 = vld [vmem:[%s3549 + $0x48] sm:$0xff]
    %v3560 = vld [vmem:[%s3549 + $0x50] sm:$0xff]
    %v3561 = vld [vmem:[%s3549 + $0x58] sm:$0xff]
    %v3562 = vld [vmem:[%s3549 + $0x60] sm:$0xff]
    %v3563 = vld [vmem:[%s3549 + $0x68] sm:$0xff]
    %v3564 = vld [vmem:[%s3549 + $0x70] sm:$0xff]
    %v3565 = vld [vmem:[%s3549 + $0x78] sm:$0xff]
    %v3566 = vld [vmem:[%s3549 + $0x80] sm:$0xff]
    %v3567 = vld [vmem:[%s3549 + $0x88] sm:$0xff]
    %v3568 = vld [vmem:[%s3549 + $0x90] sm:$0xff]
    %v3569 = vld [vmem:[%s3549 + $0x98] sm:$0xff]
    %v3570 = vld [vmem:[%s3549 + $0xa0] sm:$0xff]
    %v3571 = vld [vmem:[%s3549 + $0xa8] sm:$0xff]
    %v3572 = vld [vmem:[%s3549 + $0xb0] sm:$0xff]
    %v3573 = vld [vmem:[%s3549 + $0xb8] sm:$0xff]
    %v3574 = vld [vmem:[%s3549 + $0xc0] sm:$0xff]
    %v3575 = vld [vmem:[%s3549 + $0xc8] sm:$0xff]
    %v3576 = vld [vmem:[%s3549 + $0xd0] sm:$0xff]
    %v3577 = vld [vmem:[%s3549 + $0xd8] sm:$0xff]
    %v3578 = vld [vmem:[%s3549 + $0xe0] sm:$0xff]
    %v3579 = vld [vmem:[%s3549 + $0xe8] sm:$0xff]
    %v3580 = vld [vmem:[%s3549 + $0xf0] sm:$0xff]
    %v3581 = vld [vmem:[%s3549 + $0xf8] sm:$0xff]
    %v3582 = vld [vmem:[%s3549 + $0x100] sm:$0xff]
    %v3583 = vld [vmem:[%s3549 + $0x108] sm:$0xff]
    %v3584 = vld [vmem:[%s3549 + $0x110] sm:$0xff]
    %v3585 = vld [vmem:[%s3549 + $0x118] sm:$0xff]
    %v3586 = vld [vmem:[%s3549 + $0x120] sm:$0xff]
    %v3587 = vld [vmem:[%s3549 + $0x128] sm:$0xff]
    %v3588 = vld [vmem:[%s3549 + $0x130] sm:$0xff]
    %v3589 = vld [vmem:[%s3549 + $0x138] sm:$0xff]
    %v3590 = vld [vmem:[%s3549 + $0x140] sm:$0xff]
    %v3591 = vld [vmem:[%s3549 + $0x148] sm:$0xff]
    %v3592 = vld [vmem:[%s3549 + $0x150] sm:$0xff]
    %v3593 = vld [vmem:[%s3549 + $0x158] sm:$0xff]
    %v3594 = vld [vmem:[%s3549 + $0x160] sm:$0xff]
    %v3595 = vld [vmem:[%s3549 + $0x168] sm:$0xff]
    %v3596 = vld [vmem:[%s3549 + $0x170] sm:$0xff]
    %v3597 = vld [vmem:[%s3549 + $0x178] sm:$0xff]
    %v3598 = vld [vmem:[%s3549 + $0x180] sm:$0xff]
    %v3599 = vld [vmem:[%s3549 + $0x188] sm:$0xff]
    %v3600 = vld [vmem:[%s3549 + $0x190] sm:$0xff]
    %v3601 = vld [vmem:[%s3549 + $0x198] sm:$0xff]
    %v3602 = vld [vmem:[%s3549 + $0x1a0] sm:$0xff]
    %v3603 = vld [vmem:[%s3549 + $0x1a8] sm:$0xff]
    %v3604 = vld [vmem:[%s3549 + $0x1b0] sm:$0xff]
    %v3605 = vld [vmem:[%s3549 + $0x1b8] sm:$0xff]
    %v3606 = vld [vmem:[%s3549 + $0x1c0] sm:$0xff]
    %v3607 = vld [vmem:[%s3549 + $0x1c8] sm:$0xff]
    %v3608 = vld [vmem:[%s3549 + $0x1d0] sm:$0xff]
    %v3609 = vld [vmem:[%s3549 + $0x1d8] sm:$0xff]
    %v3610 = vld [vmem:[%s3549 + $0x1e0] sm:$0xff]
    %v3611 = vld [vmem:[%s3549 + $0x1e8] sm:$0xff]
    %v3612 = vld [vmem:[%s3549 + $0x1f0] sm:$0xff]
    %v3613 = vld [vmem:[%s3549 + $0x1f8] sm:$0xff]
    %v3614 = vld [vmem:[%s3549 + $0x200] sm:$0xff]
    %v3615 = vld [vmem:[%s3549 + $0x208] sm:$0xff]
    %v3616 = vld [vmem:[%s3549 + $0x210] sm:$0xff]
    %v3617 = vld [vmem:[%s3549 + $0x218] sm:$0xff]
    %v3618 = vld [vmem:[%s3549 + $0x220] sm:$0xff]
    %v3619 = vld [vmem:[%s3549 + $0x228] sm:$0xff]
    %v3620 = vld [vmem:[%s3549 + $0x230] sm:$0xff]
    %v3621 = vld [vmem:[%s3549 + $0x238] sm:$0xff]
    %v3622 = vld [vmem:[%s3549 + $0x240] sm:$0xff]
    %v3623 = vld [vmem:[%s3549 + $0x248] sm:$0xff]
    %v3624 = vld [vmem:[%s3549 + $0x250] sm:$0xff]
    %v3625 = vld [vmem:[%s3549 + $0x258] sm:$0xff]
    %v3626 = vld [vmem:[%s3549 + $0x260] sm:$0xff]
    %v3627 = vld [vmem:[%s3549 + $0x268] sm:$0xff]
    %v3628 = vld [vmem:[%s3549 + $0x270] sm:$0xff]
    %v3629 = vld [vmem:[%s3549 + $0x278] sm:$0xff]
    %v3630 = vld [vmem:[%s3549 + $0x280] sm:$0xff]
    %v3631 = vld [vmem:[%s3549 + $0x288] sm:$0xff]
    %v3632 = vld [vmem:[%s3549 + $0x290] sm:$0xff]
    %v3633 = vld [vmem:[%s3549 + $0x298] sm:$0xff]
    %v3634 = vld [vmem:[%s3549 + $0x2a0] sm:$0xff]
    %v3635 = vld [vmem:[%s3549 + $0x2a8] sm:$0xff]
    %v3636 = vld [vmem:[%s3549 + $0x2b0] sm:$0xff]
    %v3637 = vld [vmem:[%s3549 + $0x2b8] sm:$0xff]
    %v3638 = vld [vmem:[%s3549 + $0x2c0] sm:$0xff]
    %v3639 = vld [vmem:[%s3549 + $0x2c8] sm:$0xff]
    %v3640 = vld [vmem:[%s3549 + $0x2d0] sm:$0xff]
    %v3641 = vld [vmem:[%s3549 + $0x2d8] sm:$0xff]
    %v3642 = vld [vmem:[%s3549 + $0x2e0] sm:$0xff]
    %v3643 = vld [vmem:[%s3549 + $0x2e8] sm:$0xff]
    %v3644 = vld [vmem:[%s3549 + $0x2f0] sm:$0xff]
    %v3645 = vld [vmem:[%s3549 + $0x2f8] sm:$0xff]
    %v3646 = vld [vmem:[%s3549 + $0x300] sm:$0xff]
    %v3647 = vld [vmem:[%s3549 + $0x308] sm:$0xff]
    %v3648 = vld [vmem:[%s3549 + $0x310] sm:$0xff]
    %v3649 = vld [vmem:[%s3549 + $0x318] sm:$0xff]
    %v3650 = vld [vmem:[%s3549 + $0x320] sm:$0xff]
    %v3651 = vld [vmem:[%s3549 + $0x328] sm:$0xff]
    %v3652 = vld [vmem:[%s3549 + $0x330] sm:$0xff]
    %v3653 = vld [vmem:[%s3549 + $0x338] sm:$0xff]
    %v3654 = vld [vmem:[%s3549 + $0x340] sm:$0xff]
    %v3655 = vld [vmem:[%s3549 + $0x348] sm:$0xff]
    %v3656 = vld [vmem:[%s3549 + $0x350] sm:$0xff]
    %v3657 = vld [vmem:[%s3549 + $0x358] sm:$0xff]
    %v3658 = vld [vmem:[%s3549 + $0x360] sm:$0xff]
    %v3659 = vld [vmem:[%s3549 + $0x368] sm:$0xff]
    %v3660 = vld [vmem:[%s3549 + $0x370] sm:$0xff]
    %v3661 = vld [vmem:[%s3549 + $0x378] sm:$0xff]
    %v3662 = vld [vmem:[%s3549 + $0x380] sm:$0xff]
    %v3663 = vld [vmem:[%s3549 + $0x388] sm:$0xff]
    %v3664 = vld [vmem:[%s3549 + $0x390] sm:$0xff]
    %v3665 = vld [vmem:[%s3549 + $0x398] sm:$0xff]
    %v3666 = vld [vmem:[%s3549 + $0x3a0] sm:$0xff]
    %v3667 = vld [vmem:[%s3549 + $0x3a8] sm:$0xff]
    %v3668 = vld [vmem:[%s3549 + $0x3b0] sm:$0xff]
    %v3669 = vld [vmem:[%s3549 + $0x3b8] sm:$0xff]
    %v3670 = vld [vmem:[%s3549 + $0x3c0] sm:$0xff]
    %v3671 = vld [vmem:[%s3549 + $0x3c8] sm:$0xff]
    %v3672 = vld [vmem:[%s3549 + $0x3d0] sm:$0xff]
    %v3673 = vld [vmem:[%s3549 + $0x3d8] sm:$0xff]
    %v3674 = vld [vmem:[%s3549 + $0x3e0] sm:$0xff]
    %v3675 = vld [vmem:[%s3549 + $0x3e8] sm:$0xff]
    %v3676 = vld [vmem:[%s3549 + $0x3f0] sm:$0xff]
    %v3677 = vld [vmem:[%s3549 + $0x3f8] sm:$0xff]
    %s3678 = scalar_lea.vmem %s8, 16
    %v3679 = vld [vmem:[%s3678] sm:$0x1]
    %v3680 = vld [vmem:[%s3678 + $0x1] sm:$0x1]
    %v3681 = vld [vmem:[%s3678 + $0x2] sm:$0x1]
    %v3682 = vld [vmem:[%s3678 + $0x3] sm:$0x1]
    %v3683 = vld [vmem:[%s3678 + $0x4] sm:$0x1]
    %v3684 = vld [vmem:[%s3678 + $0x5] sm:$0x1]
    %v3685 = vld [vmem:[%s3678 + $0x6] sm:$0x1]
    %v3686 = vld [vmem:[%s3678 + $0x7] sm:$0x1]
    %v3687 = vld [vmem:[%s3678 + $0x8] sm:$0x1]
    %v3688 = vld [vmem:[%s3678 + $0x9] sm:$0x1]
    %v3689 = vld [vmem:[%s3678 + $0xa] sm:$0x1]
    %v3690 = vld [vmem:[%s3678 + $0xb] sm:$0x1]
    %v3691 = vld [vmem:[%s3678 + $0xc] sm:$0x1]
    %v3692 = vld [vmem:[%s3678 + $0xd] sm:$0x1]
    %v3693 = vld [vmem:[%s3678 + $0xe] sm:$0x1]
    %v3694 = vld [vmem:[%s3678 + $0xf] sm:$0x1]
    %v3711 = vperm.slane %v3679, 0
    %v3712 = vperm.slane %v3680, 0
    %v3713 = vperm.slane %v3681, 0
    %v3714 = vperm.slane %v3682, 0
    %v3715 = vperm.slane %v3683, 0
    %v3716 = vperm.slane %v3684, 0
    %v3717 = vperm.slane %v3685, 0
    %v3718 = vperm.slane %v3686, 0
    %v3719 = vperm.slane %v3687, 0
    %v3720 = vperm.slane %v3688, 0
    %v3721 = vperm.slane %v3689, 0
    %v3722 = vperm.slane %v3690, 0
    %v3723 = vperm.slane %v3691, 0
    %v3724 = vperm.slane %v3692, 0
    %v3725 = vperm.slane %v3693, 0
    %v3726 = vperm.slane %v3694, 0
    %3743 = vmatpush.msra.mxu0 %v3565
    %3744 = vmatpush.msra.mxu0 %v3564
    %3745 = vmatpush.msra.mxu0 %v3563
    %3746 = vmatpush.msra.mxu0 %v3562
    %3747 = vmatpush.msra.mxu0 %v3561
    %3748 = vmatpush.msra.mxu0 %v3560
    %3749 = vmatpush.msra.mxu0 %v3559
    %3750 = vmatpush.msra.mxu0 %v3558
    %3751 = vmatpush.msra.mxu0 %v3557
    %3752 = vmatpush.msra.mxu0 %v3556
    %3753 = vmatpush.msra.mxu0 %v3555
    %3754 = vmatpush.msra.mxu0 %v3554
    %3755 = vmatpush.msra.mxu0 %v3553
    %3756 = vmatpush.msra.mxu0 %v3552
    %3757 = vmatpush.msra.mxu0 %v3551
    %3758 = vmatpush.msra.mxu0 %v3550
    %3759 = vmatmul.f32.gmra.mxu0 %v50
    %v3760 = vpop.f32.mrf.mxu0
    %v3761 = vadd.f32 %v3711, %v3760
    %3762 = vdwg.mxu0
    %3763 = vmatpush.msra.mxu0 %v3581
    %3764 = vmatpush.msra.mxu0 %v3580
    %3765 = vmatpush.msra.mxu0 %v3579
    %3766 = vmatpush.msra.mxu0 %v3578
    %3767 = vmatpush.msra.mxu0 %v3577
    %3768 = vmatpush.msra.mxu0 %v3576
    %3769 = vmatpush.msra.mxu0 %v3575
    %3770 = vmatpush.msra.mxu0 %v3574
    %3771 = vmatpush.msra.mxu0 %v3573
    %3772 = vmatpush.msra.mxu0 %v3572
    %3773 = vmatpush.msra.mxu0 %v3571
    %3774 = vmatpush.msra.mxu0 %v3570
    %3775 = vmatpush.msra.mxu0 %v3569
    %3776 = vmatpush.msra.mxu0 %v3568
    %3777 = vmatpush.msra.mxu0 %v3567
    %3778 = vmatpush.msra.mxu0 %v3566
    %3779 = vmatmul.f32.gmra.mxu0 %v50
    %v3780 = vpop.f32.mrf.mxu0
    %v3781 = vadd.f32 %v3712, %v3780
    %3782 = vdwg.mxu0
    %3783 = vmatpush.msra.mxu0 %v3597
    %3784 = vmatpush.msra.mxu0 %v3596
    %3785 = vmatpush.msra.mxu0 %v3595
    %3786 = vmatpush.msra.mxu0 %v3594
    %3787 = vmatpush.msra.mxu0 %v3593
    %3788 = vmatpush.msra.mxu0 %v3592
    %3789 = vmatpush.msra.mxu0 %v3591
    %3790 = vmatpush.msra.mxu0 %v3590
    %3791 = vmatpush.msra.mxu0 %v3589
    %3792 = vmatpush.msra.mxu0 %v3588
    %3793 = vmatpush.msra.mxu0 %v3587
    %3794 = vmatpush.msra.mxu0 %v3586
    %3795 = vmatpush.msra.mxu0 %v3585
    %3796 = vmatpush.msra.mxu0 %v3584
    %3797 = vmatpush.msra.mxu0 %v3583
    %3798 = vmatpush.msra.mxu0 %v3582
    %3799 = vmatmul.f32.gmra.mxu0 %v50
    %v3800 = vpop.f32.mrf.mxu0
    %v3801 = vadd.f32 %v3713, %v3800
    %3802 = vdwg.mxu0
    %3803 = vmatpush.msra.mxu0 %v3613
    %3804 = vmatpush.msra.mxu0 %v3612
    %3805 = vmatpush.msra.mxu0 %v3611
    %3806 = vmatpush.msra.mxu0 %v3610
    %3807 = vmatpush.msra.mxu0 %v3609
    %3808 = vmatpush.msra.mxu0 %v3608
    %3809 = vmatpush.msra.mxu0 %v3607
    %3810 = vmatpush.msra.mxu0 %v3606
    %3811 = vmatpush.msra.mxu0 %v3605
    %3812 = vmatpush.msra.mxu0 %v3604
    %3813 = vmatpush.msra.mxu0 %v3603
    %3814 = vmatpush.msra.mxu0 %v3602
    %3815 = vmatpush.msra.mxu0 %v3601
    %3816 = vmatpush.msra.mxu0 %v3600
    %3817 = vmatpush.msra.mxu0 %v3599
    %3818 = vmatpush.msra.mxu0 %v3598
    %3819 = vmatmul.f32.gmra.mxu0 %v50
    %v3820 = vpop.f32.mrf.mxu0
    %v3821 = vadd.f32 %v3714, %v3820
    %3822 = vdwg.mxu0
    %3823 = vmatpush.msra.mxu0 %v3629
    %3824 = vmatpush.msra.mxu0 %v3628
    %3825 = vmatpush.msra.mxu0 %v3627
    %3826 = vmatpush.msra.mxu0 %v3626
    %3827 = vmatpush.msra.mxu0 %v3625
    %3828 = vmatpush.msra.mxu0 %v3624
    %3829 = vmatpush.msra.mxu0 %v3623
    %3830 = vmatpush.msra.mxu0 %v3622
    %3831 = vmatpush.msra.mxu0 %v3621
    %3832 = vmatpush.msra.mxu0 %v3620
    %3833 = vmatpush.msra.mxu0 %v3619
    %3834 = vmatpush.msra.mxu0 %v3618
    %3835 = vmatpush.msra.mxu0 %v3617
    %3836 = vmatpush.msra.mxu0 %v3616
    %3837 = vmatpush.msra.mxu0 %v3615
    %3838 = vmatpush.msra.mxu0 %v3614
    %3839 = vmatmul.f32.gmra.mxu0 %v50
    %v3840 = vpop.f32.mrf.mxu0
    %v3841 = vadd.f32 %v3715, %v3840
    %3842 = vdwg.mxu0
    %3843 = vmatpush.msra.mxu0 %v3645
    %3844 = vmatpush.msra.mxu0 %v3644
    %3845 = vmatpush.msra.mxu0 %v3643
    %3846 = vmatpush.msra.mxu0 %v3642
    %3847 = vmatpush.msra.mxu0 %v3641
    %3848 = vmatpush.msra.mxu0 %v3640
    %3849 = vmatpush.msra.mxu0 %v3639
    %3850 = vmatpush.msra.mxu0 %v3638
    %3851 = vmatpush.msra.mxu0 %v3637
    %3852 = vmatpush.msra.mxu0 %v3636
    %3853 = vmatpush.msra.mxu0 %v3635
    %3854 = vmatpush.msra.mxu0 %v3634
    %3855 = vmatpush.msra.mxu0 %v3633
    %3856 = vmatpush.msra.mxu0 %v3632
    %3857 = vmatpush.msra.mxu0 %v3631
    %3858 = vmatpush.msra.mxu0 %v3630
    %3859 = vmatmul.f32.gmra.mxu0 %v50
    %v3860 = vpop.f32.mrf.mxu0
    %v3861 = vadd.f32 %v3716, %v3860
    %3862 = vdwg.mxu0
    %3863 = vmatpush.msra.mxu0 %v3661
    %3864 = vmatpush.msra.mxu0 %v3660
    %3865 = vmatpush.msra.mxu0 %v3659
    %3866 = vmatpush.msra.mxu0 %v3658
    %3867 = vmatpush.msra.mxu0 %v3657
    %3868 = vmatpush.msra.mxu0 %v3656
    %3869 = vmatpush.msra.mxu0 %v3655
    %3870 = vmatpush.msra.mxu0 %v3654
    %3871 = vmatpush.msra.mxu0 %v3653
    %3872 = vmatpush.msra.mxu0 %v3652
    %3873 = vmatpush.msra.mxu0 %v3651
    %3874 = vmatpush.msra.mxu0 %v3650
    %3875 = vmatpush.msra.mxu0 %v3649
    %3876 = vmatpush.msra.mxu0 %v3648
    %3877 = vmatpush.msra.mxu0 %v3647
    %3878 = vmatpush.msra.mxu0 %v3646
    %3879 = vmatmul.f32.gmra.mxu0 %v50
    %v3880 = vpop.f32.mrf.mxu0
    %v3881 = vadd.f32 %v3717, %v3880
    %3882 = vdwg.mxu0
    %3883 = vmatpush.msra.mxu0 %v3677
    %3884 = vmatpush.msra.mxu0 %v3676
    %3885 = vmatpush.msra.mxu0 %v3675
    %3886 = vmatpush.msra.mxu0 %v3674
    %3887 = vmatpush.msra.mxu0 %v3673
    %3888 = vmatpush.msra.mxu0 %v3672
    %3889 = vmatpush.msra.mxu0 %v3671
    %3890 = vmatpush.msra.mxu0 %v3670
    %3891 = vmatpush.msra.mxu0 %v3669
    %3892 = vmatpush.msra.mxu0 %v3668
    %3893 = vmatpush.msra.mxu0 %v3667
    %3894 = vmatpush.msra.mxu0 %v3666
    %3895 = vmatpush.msra.mxu0 %v3665
    %3896 = vmatpush.msra.mxu0 %v3664
    %3897 = vmatpush.msra.mxu0 %v3663
    %3898 = vmatpush.msra.mxu0 %v3662
    %3899 = vmatmul.f32.gmra.mxu0 %v50
    %v3900 = vpop.f32.mrf.mxu0
    %v3901 = vadd.f32 %v3718, %v3900
    %3902 = vdwg.mxu0
    %3903 = vmatpush.msra.mxu0 %v3565
    %3904 = vmatpush.msra.mxu0 %v3564
    %3905 = vmatpush.msra.mxu0 %v3563
    %3906 = vmatpush.msra.mxu0 %v3562
    %3907 = vmatpush.msra.mxu0 %v3561
    %3908 = vmatpush.msra.mxu0 %v3560
    %3909 = vmatpush.msra.mxu0 %v3559
    %3910 = vmatpush.msra.mxu0 %v3558
    %3911 = vmatpush.msra.mxu0 %v3557
    %3912 = vmatpush.msra.mxu0 %v3556
    %3913 = vmatpush.msra.mxu0 %v3555
    %3914 = vmatpush.msra.mxu0 %v3554
    %3915 = vmatpush.msra.mxu0 %v3553
    %3916 = vmatpush.msra.mxu0 %v3552
    %3917 = vmatpush.msra.mxu0 %v3551
    %3918 = vmatpush.msra.mxu0 %v3550
    %3919 = vmatmul.f32.gmra.mxu0 %v51
    %v3920 = vpop.f32.mrf.mxu0
    %v3921 = vadd.f32 %v3719, %v3920
    %3922 = vdwg.mxu0
    %3923 = vmatpush.msra.mxu0 %v3581
    %3924 = vmatpush.msra.mxu0 %v3580
    %3925 = vmatpush.msra.mxu0 %v3579
    %3926 = vmatpush.msra.mxu0 %v3578
    %3927 = vmatpush.msra.mxu0 %v3577
    %3928 = vmatpush.msra.mxu0 %v3576
    %3929 = vmatpush.msra.mxu0 %v3575
    %3930 = vmatpush.msra.mxu0 %v3574
    %3931 = vmatpush.msra.mxu0 %v3573
    %3932 = vmatpush.msra.mxu0 %v3572
    %3933 = vmatpush.msra.mxu0 %v3571
    %3934 = vmatpush.msra.mxu0 %v3570
    %3935 = vmatpush.msra.mxu0 %v3569
    %3936 = vmatpush.msra.mxu0 %v3568
    %3937 = vmatpush.msra.mxu0 %v3567
    %3938 = vmatpush.msra.mxu0 %v3566
    %3939 = vmatmul.f32.gmra.mxu0 %v51
    %v3940 = vpop.f32.mrf.mxu0
    %v3941 = vadd.f32 %v3720, %v3940
    %3942 = vdwg.mxu0
    %3943 = vmatpush.msra.mxu0 %v3597
    %3944 = vmatpush.msra.mxu0 %v3596
    %3945 = vmatpush.msra.mxu0 %v3595
    %3946 = vmatpush.msra.mxu0 %v3594
    %3947 = vmatpush.msra.mxu0 %v3593
    %3948 = vmatpush.msra.mxu0 %v3592
    %3949 = vmatpush.msra.mxu0 %v3591
    %3950 = vmatpush.msra.mxu0 %v3590
    %3951 = vmatpush.msra.mxu0 %v3589
    %3952 = vmatpush.msra.mxu0 %v3588
    %3953 = vmatpush.msra.mxu0 %v3587
    %3954 = vmatpush.msra.mxu0 %v3586
    %3955 = vmatpush.msra.mxu0 %v3585
    %3956 = vmatpush.msra.mxu0 %v3584
    %3957 = vmatpush.msra.mxu0 %v3583
    %3958 = vmatpush.msra.mxu0 %v3582
    %3959 = vmatmul.f32.gmra.mxu0 %v51
    %v3960 = vpop.f32.mrf.mxu0
    %v3961 = vadd.f32 %v3721, %v3960
    %3962 = vdwg.mxu0
    %3963 = vmatpush.msra.mxu0 %v3613
    %3964 = vmatpush.msra.mxu0 %v3612
    %3965 = vmatpush.msra.mxu0 %v3611
    %3966 = vmatpush.msra.mxu0 %v3610
    %3967 = vmatpush.msra.mxu0 %v3609
    %3968 = vmatpush.msra.mxu0 %v3608
    %3969 = vmatpush.msra.mxu0 %v3607
    %3970 = vmatpush.msra.mxu0 %v3606
    %3971 = vmatpush.msra.mxu0 %v3605
    %3972 = vmatpush.msra.mxu0 %v3604
    %3973 = vmatpush.msra.mxu0 %v3603
    %3974 = vmatpush.msra.mxu0 %v3602
    %3975 = vmatpush.msra.mxu0 %v3601
    %3976 = vmatpush.msra.mxu0 %v3600
    %3977 = vmatpush.msra.mxu0 %v3599
    %3978 = vmatpush.msra.mxu0 %v3598
    %3979 = vmatmul.f32.gmra.mxu0 %v51
    %v3980 = vpop.f32.mrf.mxu0
    %v3981 = vadd.f32 %v3722, %v3980
    %3982 = vdwg.mxu0
    %3983 = vmatpush.msra.mxu0 %v3629
    %3984 = vmatpush.msra.mxu0 %v3628
    %3985 = vmatpush.msra.mxu0 %v3627
    %3986 = vmatpush.msra.mxu0 %v3626
    %3987 = vmatpush.msra.mxu0 %v3625
    %3988 = vmatpush.msra.mxu0 %v3624
    %3989 = vmatpush.msra.mxu0 %v3623
    %3990 = vmatpush.msra.mxu0 %v3622
    %3991 = vmatpush.msra.mxu0 %v3621
    %3992 = vmatpush.msra.mxu0 %v3620
    %3993 = vmatpush.msra.mxu0 %v3619
    %3994 = vmatpush.msra.mxu0 %v3618
    %3995 = vmatpush.msra.mxu0 %v3617
    %3996 = vmatpush.msra.mxu0 %v3616
    %3997 = vmatpush.msra.mxu0 %v3615
    %3998 = vmatpush.msra.mxu0 %v3614
    %3999 = vmatmul.f32.gmra.mxu0 %v51
    %v4000 = vpop.f32.mrf.mxu0
    %v4001 = vadd.f32 %v3723, %v4000
    %4002 = vdwg.mxu0
    %4003 = vmatpush.msra.mxu0 %v3645
    %4004 = vmatpush.msra.mxu0 %v3644
    %4005 = vmatpush.msra.mxu0 %v3643
    %4006 = vmatpush.msra.mxu0 %v3642
    %4007 = vmatpush.msra.mxu0 %v3641
    %4008 = vmatpush.msra.mxu0 %v3640
    %4009 = vmatpush.msra.mxu0 %v3639
    %4010 = vmatpush.msra.mxu0 %v3638
    %4011 = vmatpush.msra.mxu0 %v3637
    %4012 = vmatpush.msra.mxu0 %v3636
    %4013 = vmatpush.msra.mxu0 %v3635
    %4014 = vmatpush.msra.mxu0 %v3634
    %4015 = vmatpush.msra.mxu0 %v3633
    %4016 = vmatpush.msra.mxu0 %v3632
    %4017 = vmatpush.msra.mxu0 %v3631
    %4018 = vmatpush.msra.mxu0 %v3630
    %4019 = vmatmul.f32.gmra.mxu0 %v51
    %v4020 = vpop.f32.mrf.mxu0
    %v4021 = vadd.f32 %v3724, %v4020
    %4022 = vdwg.mxu0
    %4023 = vmatpush.msra.mxu0 %v3661
    %4024 = vmatpush.msra.mxu0 %v3660
    %4025 = vmatpush.msra.mxu0 %v3659
    %4026 = vmatpush.msra.mxu0 %v3658
    %4027 = vmatpush.msra.mxu0 %v3657
    %4028 = vmatpush.msra.mxu0 %v3656
    %4029 = vmatpush.msra.mxu0 %v3655
    %4030 = vmatpush.msra.mxu0 %v3654
    %4031 = vmatpush.msra.mxu0 %v3653
    %4032 = vmatpush.msra.mxu0 %v3652
    %4033 = vmatpush.msra.mxu0 %v3651
    %4034 = vmatpush.msra.mxu0 %v3650
    %4035 = vmatpush.msra.mxu0 %v3649
    %4036 = vmatpush.msra.mxu0 %v3648
    %4037 = vmatpush.msra.mxu0 %v3647
    %4038 = vmatpush.msra.mxu0 %v3646
    %4039 = vmatmul.f32.gmra.mxu0 %v51
    %v4040 = vpop.f32.mrf.mxu0
    %v4041 = vadd.f32 %v3725, %v4040
    %4042 = vdwg.mxu0
    %4043 = vmatpush.msra.mxu0 %v3677
    %4044 = vmatpush.msra.mxu0 %v3676
    %4045 = vmatpush.msra.mxu0 %v3675
    %4046 = vmatpush.msra.mxu0 %v3674
    %4047 = vmatpush.msra.mxu0 %v3673
    %4048 = vmatpush.msra.mxu0 %v3672
    %4049 = vmatpush.msra.mxu0 %v3671
    %4050 = vmatpush.msra.mxu0 %v3670
    %4051 = vmatpush.msra.mxu0 %v3669
    %4052 = vmatpush.msra.mxu0 %v3668
    %4053 = vmatpush.msra.mxu0 %v3667
    %4054 = vmatpush.msra.mxu0 %v3666
    %4055 = vmatpush.msra.mxu0 %v3665
    %4056 = vmatpush.msra.mxu0 %v3664
    %4057 = vmatpush.msra.mxu0 %v3663
    %4058 = vmatpush.msra.mxu0 %v3662
    %4059 = vmatmul.f32.gmra.mxu0 %v51
    %v4060 = vpop.f32.mrf.mxu0
    %v4061 = vadd.f32 %v3726, %v4060
    %4062 = vdwg.mxu0
    %s4063 = scalar_lea.vmem %s6, 2048
    %v4064 = vld [vmem:[%s4063] sm:$0xff]
    %v4065 = vld [vmem:[%s4063 + $0x8] sm:$0xff]
    %v4066 = vld [vmem:[%s4063 + $0x10] sm:$0xff]
    %v4067 = vld [vmem:[%s4063 + $0x18] sm:$0xff]
    %v4068 = vld [vmem:[%s4063 + $0x20] sm:$0xff]
    %v4069 = vld [vmem:[%s4063 + $0x28] sm:$0xff]
    %v4070 = vld [vmem:[%s4063 + $0x30] sm:$0xff]
    %v4071 = vld [vmem:[%s4063 + $0x38] sm:$0xff]
    %v4072 = vld [vmem:[%s4063 + $0x40] sm:$0xff]
    %v4073 = vld [vmem:[%s4063 + $0x48] sm:$0xff]
    %v4074 = vld [vmem:[%s4063 + $0x50] sm:$0xff]
    %v4075 = vld [vmem:[%s4063 + $0x58] sm:$0xff]
    %v4076 = vld [vmem:[%s4063 + $0x60] sm:$0xff]
    %v4077 = vld [vmem:[%s4063 + $0x68] sm:$0xff]
    %v4078 = vld [vmem:[%s4063 + $0x70] sm:$0xff]
    %v4079 = vld [vmem:[%s4063 + $0x78] sm:$0xff]
    %v4080 = vld [vmem:[%s4063 + $0x80] sm:$0xff]
    %v4081 = vld [vmem:[%s4063 + $0x88] sm:$0xff]
    %v4082 = vld [vmem:[%s4063 + $0x90] sm:$0xff]
    %v4083 = vld [vmem:[%s4063 + $0x98] sm:$0xff]
    %v4084 = vld [vmem:[%s4063 + $0xa0] sm:$0xff]
    %v4085 = vld [vmem:[%s4063 + $0xa8] sm:$0xff]
    %v4086 = vld [vmem:[%s4063 + $0xb0] sm:$0xff]
    %v4087 = vld [vmem:[%s4063 + $0xb8] sm:$0xff]
    %v4088 = vld [vmem:[%s4063 + $0xc0] sm:$0xff]
    %v4089 = vld [vmem:[%s4063 + $0xc8] sm:$0xff]
    %v4090 = vld [vmem:[%s4063 + $0xd0] sm:$0xff]
    %v4091 = vld [vmem:[%s4063 + $0xd8] sm:$0xff]
    %v4092 = vld [vmem:[%s4063 + $0xe0] sm:$0xff]
    %v4093 = vld [vmem:[%s4063 + $0xe8] sm:$0xff]
    %v4094 = vld [vmem:[%s4063 + $0xf0] sm:$0xff]
    %v4095 = vld [vmem:[%s4063 + $0xf8] sm:$0xff]
    %v4096 = vld [vmem:[%s4063 + $0x100] sm:$0xff]
    %v4097 = vld [vmem:[%s4063 + $0x108] sm:$0xff]
    %v4098 = vld [vmem:[%s4063 + $0x110] sm:$0xff]
    %v4099 = vld [vmem:[%s4063 + $0x118] sm:$0xff]
    %v4100 = vld [vmem:[%s4063 + $0x120] sm:$0xff]
    %v4101 = vld [vmem:[%s4063 + $0x128] sm:$0xff]
    %v4102 = vld [vmem:[%s4063 + $0x130] sm:$0xff]
    %v4103 = vld [vmem:[%s4063 + $0x138] sm:$0xff]
    %v4104 = vld [vmem:[%s4063 + $0x140] sm:$0xff]
    %v4105 = vld [vmem:[%s4063 + $0x148] sm:$0xff]
    %v4106 = vld [vmem:[%s4063 + $0x150] sm:$0xff]
    %v4107 = vld [vmem:[%s4063 + $0x158] sm:$0xff]
    %v4108 = vld [vmem:[%s4063 + $0x160] sm:$0xff]
    %v4109 = vld [vmem:[%s4063 + $0x168] sm:$0xff]
    %v4110 = vld [vmem:[%s4063 + $0x170] sm:$0xff]
    %v4111 = vld [vmem:[%s4063 + $0x178] sm:$0xff]
    %v4112 = vld [vmem:[%s4063 + $0x180] sm:$0xff]
    %v4113 = vld [vmem:[%s4063 + $0x188] sm:$0xff]
    %v4114 = vld [vmem:[%s4063 + $0x190] sm:$0xff]
    %v4115 = vld [vmem:[%s4063 + $0x198] sm:$0xff]
    %v4116 = vld [vmem:[%s4063 + $0x1a0] sm:$0xff]
    %v4117 = vld [vmem:[%s4063 + $0x1a8] sm:$0xff]
    %v4118 = vld [vmem:[%s4063 + $0x1b0] sm:$0xff]
    %v4119 = vld [vmem:[%s4063 + $0x1b8] sm:$0xff]
    %v4120 = vld [vmem:[%s4063 + $0x1c0] sm:$0xff]
    %v4121 = vld [vmem:[%s4063 + $0x1c8] sm:$0xff]
    %v4122 = vld [vmem:[%s4063 + $0x1d0] sm:$0xff]
    %v4123 = vld [vmem:[%s4063 + $0x1d8] sm:$0xff]
    %v4124 = vld [vmem:[%s4063 + $0x1e0] sm:$0xff]
    %v4125 = vld [vmem:[%s4063 + $0x1e8] sm:$0xff]
    %v4126 = vld [vmem:[%s4063 + $0x1f0] sm:$0xff]
    %v4127 = vld [vmem:[%s4063 + $0x1f8] sm:$0xff]
    %v4128 = vld [vmem:[%s4063 + $0x200] sm:$0xff]
    %v4129 = vld [vmem:[%s4063 + $0x208] sm:$0xff]
    %v4130 = vld [vmem:[%s4063 + $0x210] sm:$0xff]
    %v4131 = vld [vmem:[%s4063 + $0x218] sm:$0xff]
    %v4132 = vld [vmem:[%s4063 + $0x220] sm:$0xff]
    %v4133 = vld [vmem:[%s4063 + $0x228] sm:$0xff]
    %v4134 = vld [vmem:[%s4063 + $0x230] sm:$0xff]
    %v4135 = vld [vmem:[%s4063 + $0x238] sm:$0xff]
    %v4136 = vld [vmem:[%s4063 + $0x240] sm:$0xff]
    %v4137 = vld [vmem:[%s4063 + $0x248] sm:$0xff]
    %v4138 = vld [vmem:[%s4063 + $0x250] sm:$0xff]
    %v4139 = vld [vmem:[%s4063 + $0x258] sm:$0xff]
    %v4140 = vld [vmem:[%s4063 + $0x260] sm:$0xff]
    %v4141 = vld [vmem:[%s4063 + $0x268] sm:$0xff]
    %v4142 = vld [vmem:[%s4063 + $0x270] sm:$0xff]
    %v4143 = vld [vmem:[%s4063 + $0x278] sm:$0xff]
    %v4144 = vld [vmem:[%s4063 + $0x280] sm:$0xff]
    %v4145 = vld [vmem:[%s4063 + $0x288] sm:$0xff]
    %v4146 = vld [vmem:[%s4063 + $0x290] sm:$0xff]
    %v4147 = vld [vmem:[%s4063 + $0x298] sm:$0xff]
    %v4148 = vld [vmem:[%s4063 + $0x2a0] sm:$0xff]
    %v4149 = vld [vmem:[%s4063 + $0x2a8] sm:$0xff]
    %v4150 = vld [vmem:[%s4063 + $0x2b0] sm:$0xff]
    %v4151 = vld [vmem:[%s4063 + $0x2b8] sm:$0xff]
    %v4152 = vld [vmem:[%s4063 + $0x2c0] sm:$0xff]
    %v4153 = vld [vmem:[%s4063 + $0x2c8] sm:$0xff]
    %v4154 = vld [vmem:[%s4063 + $0x2d0] sm:$0xff]
    %v4155 = vld [vmem:[%s4063 + $0x2d8] sm:$0xff]
    %v4156 = vld [vmem:[%s4063 + $0x2e0] sm:$0xff]
    %v4157 = vld [vmem:[%s4063 + $0x2e8] sm:$0xff]
    %v4158 = vld [vmem:[%s4063 + $0x2f0] sm:$0xff]
    %v4159 = vld [vmem:[%s4063 + $0x2f8] sm:$0xff]
    %v4160 = vld [vmem:[%s4063 + $0x300] sm:$0xff]
    %v4161 = vld [vmem:[%s4063 + $0x308] sm:$0xff]
    %v4162 = vld [vmem:[%s4063 + $0x310] sm:$0xff]
    %v4163 = vld [vmem:[%s4063 + $0x318] sm:$0xff]
    %v4164 = vld [vmem:[%s4063 + $0x320] sm:$0xff]
    %v4165 = vld [vmem:[%s4063 + $0x328] sm:$0xff]
    %v4166 = vld [vmem:[%s4063 + $0x330] sm:$0xff]
    %v4167 = vld [vmem:[%s4063 + $0x338] sm:$0xff]
    %v4168 = vld [vmem:[%s4063 + $0x340] sm:$0xff]
    %v4169 = vld [vmem:[%s4063 + $0x348] sm:$0xff]
    %v4170 = vld [vmem:[%s4063 + $0x350] sm:$0xff]
    %v4171 = vld [vmem:[%s4063 + $0x358] sm:$0xff]
    %v4172 = vld [vmem:[%s4063 + $0x360] sm:$0xff]
    %v4173 = vld [vmem:[%s4063 + $0x368] sm:$0xff]
    %v4174 = vld [vmem:[%s4063 + $0x370] sm:$0xff]
    %v4175 = vld [vmem:[%s4063 + $0x378] sm:$0xff]
    %v4176 = vld [vmem:[%s4063 + $0x380] sm:$0xff]
    %v4177 = vld [vmem:[%s4063 + $0x388] sm:$0xff]
    %v4178 = vld [vmem:[%s4063 + $0x390] sm:$0xff]
    %v4179 = vld [vmem:[%s4063 + $0x398] sm:$0xff]
    %v4180 = vld [vmem:[%s4063 + $0x3a0] sm:$0xff]
    %v4181 = vld [vmem:[%s4063 + $0x3a8] sm:$0xff]
    %v4182 = vld [vmem:[%s4063 + $0x3b0] sm:$0xff]
    %v4183 = vld [vmem:[%s4063 + $0x3b8] sm:$0xff]
    %v4184 = vld [vmem:[%s4063 + $0x3c0] sm:$0xff]
    %v4185 = vld [vmem:[%s4063 + $0x3c8] sm:$0xff]
    %v4186 = vld [vmem:[%s4063 + $0x3d0] sm:$0xff]
    %v4187 = vld [vmem:[%s4063 + $0x3d8] sm:$0xff]
    %v4188 = vld [vmem:[%s4063 + $0x3e0] sm:$0xff]
    %v4189 = vld [vmem:[%s4063 + $0x3e8] sm:$0xff]
    %v4190 = vld [vmem:[%s4063 + $0x3f0] sm:$0xff]
    %v4191 = vld [vmem:[%s4063 + $0x3f8] sm:$0xff]
    %s4192 = scalar_lea.vmem %s8, 32
    %v4193 = vld [vmem:[%s4192] sm:$0x1]
    %v4194 = vld [vmem:[%s4192 + $0x1] sm:$0x1]
    %v4195 = vld [vmem:[%s4192 + $0x2] sm:$0x1]
    %v4196 = vld [vmem:[%s4192 + $0x3] sm:$0x1]
    %v4197 = vld [vmem:[%s4192 + $0x4] sm:$0x1]
    %v4198 = vld [vmem:[%s4192 + $0x5] sm:$0x1]
    %v4199 = vld [vmem:[%s4192 + $0x6] sm:$0x1]
    %v4200 = vld [vmem:[%s4192 + $0x7] sm:$0x1]
    %v4201 = vld [vmem:[%s4192 + $0x8] sm:$0x1]
    %v4202 = vld [vmem:[%s4192 + $0x9] sm:$0x1]
    %v4203 = vld [vmem:[%s4192 + $0xa] sm:$0x1]
    %v4204 = vld [vmem:[%s4192 + $0xb] sm:$0x1]
    %v4205 = vld [vmem:[%s4192 + $0xc] sm:$0x1]
    %v4206 = vld [vmem:[%s4192 + $0xd] sm:$0x1]
    %v4207 = vld [vmem:[%s4192 + $0xe] sm:$0x1]
    %v4208 = vld [vmem:[%s4192 + $0xf] sm:$0x1]
    %v4225 = vperm.slane %v4193, 0
    %v4226 = vperm.slane %v4194, 0
    %v4227 = vperm.slane %v4195, 0
    %v4228 = vperm.slane %v4196, 0
    %v4229 = vperm.slane %v4197, 0
    %v4230 = vperm.slane %v4198, 0
    %v4231 = vperm.slane %v4199, 0
    %v4232 = vperm.slane %v4200, 0
    %v4233 = vperm.slane %v4201, 0
    %v4234 = vperm.slane %v4202, 0
    %v4235 = vperm.slane %v4203, 0
    %v4236 = vperm.slane %v4204, 0
    %v4237 = vperm.slane %v4205, 0
    %v4238 = vperm.slane %v4206, 0
    %v4239 = vperm.slane %v4207, 0
    %v4240 = vperm.slane %v4208, 0
    %4257 = vmatpush.msra.mxu0 %v4079
    %4258 = vmatpush.msra.mxu0 %v4078
    %4259 = vmatpush.msra.mxu0 %v4077
    %4260 = vmatpush.msra.mxu0 %v4076
    %4261 = vmatpush.msra.mxu0 %v4075
    %4262 = vmatpush.msra.mxu0 %v4074
    %4263 = vmatpush.msra.mxu0 %v4073
    %4264 = vmatpush.msra.mxu0 %v4072
    %4265 = vmatpush.msra.mxu0 %v4071
    %4266 = vmatpush.msra.mxu0 %v4070
    %4267 = vmatpush.msra.mxu0 %v4069
    %4268 = vmatpush.msra.mxu0 %v4068
    %4269 = vmatpush.msra.mxu0 %v4067
    %4270 = vmatpush.msra.mxu0 %v4066
    %4271 = vmatpush.msra.mxu0 %v4065
    %4272 = vmatpush.msra.mxu0 %v4064
    %4273 = vmatmul.f32.gmra.mxu0 %v50
    %v4274 = vpop.f32.mrf.mxu0
    %v4275 = vadd.f32 %v4225, %v4274
    %4276 = vdwg.mxu0
    %4277 = vmatpush.msra.mxu0 %v4095
    %4278 = vmatpush.msra.mxu0 %v4094
    %4279 = vmatpush.msra.mxu0 %v4093
    %4280 = vmatpush.msra.mxu0 %v4092
    %4281 = vmatpush.msra.mxu0 %v4091
    %4282 = vmatpush.msra.mxu0 %v4090
    %4283 = vmatpush.msra.mxu0 %v4089
    %4284 = vmatpush.msra.mxu0 %v4088
    %4285 = vmatpush.msra.mxu0 %v4087
    %4286 = vmatpush.msra.mxu0 %v4086
    %4287 = vmatpush.msra.mxu0 %v4085
    %4288 = vmatpush.msra.mxu0 %v4084
    %4289 = vmatpush.msra.mxu0 %v4083
    %4290 = vmatpush.msra.mxu0 %v4082
    %4291 = vmatpush.msra.mxu0 %v4081
    %4292 = vmatpush.msra.mxu0 %v4080
    %4293 = vmatmul.f32.gmra.mxu0 %v50
    %v4294 = vpop.f32.mrf.mxu0
    %v4295 = vadd.f32 %v4226, %v4294
    %4296 = vdwg.mxu0
    %4297 = vmatpush.msra.mxu0 %v4111
    %4298 = vmatpush.msra.mxu0 %v4110
    %4299 = vmatpush.msra.mxu0 %v4109
    %4300 = vmatpush.msra.mxu0 %v4108
    %4301 = vmatpush.msra.mxu0 %v4107
    %4302 = vmatpush.msra.mxu0 %v4106
    %4303 = vmatpush.msra.mxu0 %v4105
    %4304 = vmatpush.msra.mxu0 %v4104
    %4305 = vmatpush.msra.mxu0 %v4103
    %4306 = vmatpush.msra.mxu0 %v4102
    %4307 = vmatpush.msra.mxu0 %v4101
    %4308 = vmatpush.msra.mxu0 %v4100
    %4309 = vmatpush.msra.mxu0 %v4099
    %4310 = vmatpush.msra.mxu0 %v4098
    %4311 = vmatpush.msra.mxu0 %v4097
    %4312 = vmatpush.msra.mxu0 %v4096
    %4313 = vmatmul.f32.gmra.mxu0 %v50
    %v4314 = vpop.f32.mrf.mxu0
    %v4315 = vadd.f32 %v4227, %v4314
    %4316 = vdwg.mxu0
    %4317 = vmatpush.msra.mxu0 %v4127
    %4318 = vmatpush.msra.mxu0 %v4126
    %4319 = vmatpush.msra.mxu0 %v4125
    %4320 = vmatpush.msra.mxu0 %v4124
    %4321 = vmatpush.msra.mxu0 %v4123
    %4322 = vmatpush.msra.mxu0 %v4122
    %4323 = vmatpush.msra.mxu0 %v4121
    %4324 = vmatpush.msra.mxu0 %v4120
    %4325 = vmatpush.msra.mxu0 %v4119
    %4326 = vmatpush.msra.mxu0 %v4118
    %4327 = vmatpush.msra.mxu0 %v4117
    %4328 = vmatpush.msra.mxu0 %v4116
    %4329 = vmatpush.msra.mxu0 %v4115
    %4330 = vmatpush.msra.mxu0 %v4114
    %4331 = vmatpush.msra.mxu0 %v4113
    %4332 = vmatpush.msra.mxu0 %v4112
    %4333 = vmatmul.f32.gmra.mxu0 %v50
    %v4334 = vpop.f32.mrf.mxu0
    %v4335 = vadd.f32 %v4228, %v4334
    %4336 = vdwg.mxu0
    %4337 = vmatpush.msra.mxu0 %v4143
    %4338 = vmatpush.msra.mxu0 %v4142
    %4339 = vmatpush.msra.mxu0 %v4141
    %4340 = vmatpush.msra.mxu0 %v4140
    %4341 = vmatpush.msra.mxu0 %v4139
    %4342 = vmatpush.msra.mxu0 %v4138
    %4343 = vmatpush.msra.mxu0 %v4137
    %4344 = vmatpush.msra.mxu0 %v4136
    %4345 = vmatpush.msra.mxu0 %v4135
    %4346 = vmatpush.msra.mxu0 %v4134
    %4347 = vmatpush.msra.mxu0 %v4133
    %4348 = vmatpush.msra.mxu0 %v4132
    %4349 = vmatpush.msra.mxu0 %v4131
    %4350 = vmatpush.msra.mxu0 %v4130
    %4351 = vmatpush.msra.mxu0 %v4129
    %4352 = vmatpush.msra.mxu0 %v4128
    %4353 = vmatmul.f32.gmra.mxu0 %v50
    %v4354 = vpop.f32.mrf.mxu0
    %v4355 = vadd.f32 %v4229, %v4354
    %4356 = vdwg.mxu0
    %4357 = vmatpush.msra.mxu0 %v4159
    %4358 = vmatpush.msra.mxu0 %v4158
    %4359 = vmatpush.msra.mxu0 %v4157
    %4360 = vmatpush.msra.mxu0 %v4156
    %4361 = vmatpush.msra.mxu0 %v4155
    %4362 = vmatpush.msra.mxu0 %v4154
    %4363 = vmatpush.msra.mxu0 %v4153
    %4364 = vmatpush.msra.mxu0 %v4152
    %4365 = vmatpush.msra.mxu0 %v4151
    %4366 = vmatpush.msra.mxu0 %v4150
    %4367 = vmatpush.msra.mxu0 %v4149
    %4368 = vmatpush.msra.mxu0 %v4148
    %4369 = vmatpush.msra.mxu0 %v4147
    %4370 = vmatpush.msra.mxu0 %v4146
    %4371 = vmatpush.msra.mxu0 %v4145
    %4372 = vmatpush.msra.mxu0 %v4144
    %4373 = vmatmul.f32.gmra.mxu0 %v50
    %v4374 = vpop.f32.mrf.mxu0
    %v4375 = vadd.f32 %v4230, %v4374
    %4376 = vdwg.mxu0
    %4377 = vmatpush.msra.mxu0 %v4175
    %4378 = vmatpush.msra.mxu0 %v4174
    %4379 = vmatpush.msra.mxu0 %v4173
    %4380 = vmatpush.msra.mxu0 %v4172
    %4381 = vmatpush.msra.mxu0 %v4171
    %4382 = vmatpush.msra.mxu0 %v4170
    %4383 = vmatpush.msra.mxu0 %v4169
    %4384 = vmatpush.msra.mxu0 %v4168
    %4385 = vmatpush.msra.mxu0 %v4167
    %4386 = vmatpush.msra.mxu0 %v4166
    %4387 = vmatpush.msra.mxu0 %v4165
    %4388 = vmatpush.msra.mxu0 %v4164
    %4389 = vmatpush.msra.mxu0 %v4163
    %4390 = vmatpush.msra.mxu0 %v4162
    %4391 = vmatpush.msra.mxu0 %v4161
    %4392 = vmatpush.msra.mxu0 %v4160
    %4393 = vmatmul.f32.gmra.mxu0 %v50
    %v4394 = vpop.f32.mrf.mxu0
    %v4395 = vadd.f32 %v4231, %v4394
    %4396 = vdwg.mxu0
    %4397 = vmatpush.msra.mxu0 %v4191
    %4398 = vmatpush.msra.mxu0 %v4190
    %4399 = vmatpush.msra.mxu0 %v4189
    %4400 = vmatpush.msra.mxu0 %v4188
    %4401 = vmatpush.msra.mxu0 %v4187
    %4402 = vmatpush.msra.mxu0 %v4186
    %4403 = vmatpush.msra.mxu0 %v4185
    %4404 = vmatpush.msra.mxu0 %v4184
    %4405 = vmatpush.msra.mxu0 %v4183
    %4406 = vmatpush.msra.mxu0 %v4182
    %4407 = vmatpush.msra.mxu0 %v4181
    %4408 = vmatpush.msra.mxu0 %v4180
    %4409 = vmatpush.msra.mxu0 %v4179
    %4410 = vmatpush.msra.mxu0 %v4178
    %4411 = vmatpush.msra.mxu0 %v4177
    %4412 = vmatpush.msra.mxu0 %v4176
    %4413 = vmatmul.f32.gmra.mxu0 %v50
    %v4414 = vpop.f32.mrf.mxu0
    %v4415 = vadd.f32 %v4232, %v4414
    %4416 = vdwg.mxu0
    %4417 = vmatpush.msra.mxu0 %v4079
    %4418 = vmatpush.msra.mxu0 %v4078
    %4419 = vmatpush.msra.mxu0 %v4077
    %4420 = vmatpush.msra.mxu0 %v4076
    %4421 = vmatpush.msra.mxu0 %v4075
    %4422 = vmatpush.msra.mxu0 %v4074
    %4423 = vmatpush.msra.mxu0 %v4073
    %4424 = vmatpush.msra.mxu0 %v4072
    %4425 = vmatpush.msra.mxu0 %v4071
    %4426 = vmatpush.msra.mxu0 %v4070
    %4427 = vmatpush.msra.mxu0 %v4069
    %4428 = vmatpush.msra.mxu0 %v4068
    %4429 = vmatpush.msra.mxu0 %v4067
    %4430 = vmatpush.msra.mxu0 %v4066
    %4431 = vmatpush.msra.mxu0 %v4065
    %4432 = vmatpush.msra.mxu0 %v4064
    %4433 = vmatmul.f32.gmra.mxu0 %v51
    %v4434 = vpop.f32.mrf.mxu0
    %v4435 = vadd.f32 %v4233, %v4434
    %4436 = vdwg.mxu0
    %4437 = vmatpush.msra.mxu0 %v4095
    %4438 = vmatpush.msra.mxu0 %v4094
    %4439 = vmatpush.msra.mxu0 %v4093
    %4440 = vmatpush.msra.mxu0 %v4092
    %4441 = vmatpush.msra.mxu0 %v4091
    %4442 = vmatpush.msra.mxu0 %v4090
    %4443 = vmatpush.msra.mxu0 %v4089
    %4444 = vmatpush.msra.mxu0 %v4088
    %4445 = vmatpush.msra.mxu0 %v4087
    %4446 = vmatpush.msra.mxu0 %v4086
    %4447 = vmatpush.msra.mxu0 %v4085
    %4448 = vmatpush.msra.mxu0 %v4084
    %4449 = vmatpush.msra.mxu0 %v4083
    %4450 = vmatpush.msra.mxu0 %v4082
    %4451 = vmatpush.msra.mxu0 %v4081
    %4452 = vmatpush.msra.mxu0 %v4080
    %4453 = vmatmul.f32.gmra.mxu0 %v51
    %v4454 = vpop.f32.mrf.mxu0
    %v4455 = vadd.f32 %v4234, %v4454
    %4456 = vdwg.mxu0
    %4457 = vmatpush.msra.mxu0 %v4111
    %4458 = vmatpush.msra.mxu0 %v4110
    %4459 = vmatpush.msra.mxu0 %v4109
    %4460 = vmatpush.msra.mxu0 %v4108
    %4461 = vmatpush.msra.mxu0 %v4107
    %4462 = vmatpush.msra.mxu0 %v4106
    %4463 = vmatpush.msra.mxu0 %v4105
    %4464 = vmatpush.msra.mxu0 %v4104
    %4465 = vmatpush.msra.mxu0 %v4103
    %4466 = vmatpush.msra.mxu0 %v4102
    %4467 = vmatpush.msra.mxu0 %v4101
    %4468 = vmatpush.msra.mxu0 %v4100
    %4469 = vmatpush.msra.mxu0 %v4099
    %4470 = vmatpush.msra.mxu0 %v4098
    %4471 = vmatpush.msra.mxu0 %v4097
    %4472 = vmatpush.msra.mxu0 %v4096
    %4473 = vmatmul.f32.gmra.mxu0 %v51
    %v4474 = vpop.f32.mrf.mxu0
    %v4475 = vadd.f32 %v4235, %v4474
    %4476 = vdwg.mxu0
    %4477 = vmatpush.msra.mxu0 %v4127
    %4478 = vmatpush.msra.mxu0 %v4126
    %4479 = vmatpush.msra.mxu0 %v4125
    %4480 = vmatpush.msra.mxu0 %v4124
    %4481 = vmatpush.msra.mxu0 %v4123
    %4482 = vmatpush.msra.mxu0 %v4122
    %4483 = vmatpush.msra.mxu0 %v4121
    %4484 = vmatpush.msra.mxu0 %v4120
    %4485 = vmatpush.msra.mxu0 %v4119
    %4486 = vmatpush.msra.mxu0 %v4118
    %4487 = vmatpush.msra.mxu0 %v4117
    %4488 = vmatpush.msra.mxu0 %v4116
    %4489 = vmatpush.msra.mxu0 %v4115
    %4490 = vmatpush.msra.mxu0 %v4114
    %4491 = vmatpush.msra.mxu0 %v4113
    %4492 = vmatpush.msra.mxu0 %v4112
    %4493 = vmatmul.f32.gmra.mxu0 %v51
    %v4494 = vpop.f32.mrf.mxu0
    %v4495 = vadd.f32 %v4236, %v4494
    %4496 = vdwg.mxu0
    %4497 = vmatpush.msra.mxu0 %v4143
    %4498 = vmatpush.msra.mxu0 %v4142
    %4499 = vmatpush.msra.mxu0 %v4141
    %4500 = vmatpush.msra.mxu0 %v4140
    %4501 = vmatpush.msra.mxu0 %v4139
    %4502 = vmatpush.msra.mxu0 %v4138
    %4503 = vmatpush.msra.mxu0 %v4137
    %4504 = vmatpush.msra.mxu0 %v4136
    %4505 = vmatpush.msra.mxu0 %v4135
    %4506 = vmatpush.msra.mxu0 %v4134
    %4507 = vmatpush.msra.mxu0 %v4133
    %4508 = vmatpush.msra.mxu0 %v4132
    %4509 = vmatpush.msra.mxu0 %v4131
    %4510 = vmatpush.msra.mxu0 %v4130
    %4511 = vmatpush.msra.mxu0 %v4129
    %4512 = vmatpush.msra.mxu0 %v4128
    %4513 = vmatmul.f32.gmra.mxu0 %v51
    %v4514 = vpop.f32.mrf.mxu0
    %v4515 = vadd.f32 %v4237, %v4514
    %4516 = vdwg.mxu0
    %4517 = vmatpush.msra.mxu0 %v4159
    %4518 = vmatpush.msra.mxu0 %v4158
    %4519 = vmatpush.msra.mxu0 %v4157
    %4520 = vmatpush.msra.mxu0 %v4156
    %4521 = vmatpush.msra.mxu0 %v4155
    %4522 = vmatpush.msra.mxu0 %v4154
    %4523 = vmatpush.msra.mxu0 %v4153
    %4524 = vmatpush.msra.mxu0 %v4152
    %4525 = vmatpush.msra.mxu0 %v4151
    %4526 = vmatpush.msra.mxu0 %v4150
    %4527 = vmatpush.msra.mxu0 %v4149
    %4528 = vmatpush.msra.mxu0 %v4148
    %4529 = vmatpush.msra.mxu0 %v4147
    %4530 = vmatpush.msra.mxu0 %v4146
    %4531 = vmatpush.msra.mxu0 %v4145
    %4532 = vmatpush.msra.mxu0 %v4144
    %4533 = vmatmul.f32.gmra.mxu0 %v51
    %v4534 = vpop.f32.mrf.mxu0
    %v4535 = vadd.f32 %v4238, %v4534
    %4536 = vdwg.mxu0
    %4537 = vmatpush.msra.mxu0 %v4175
    %4538 = vmatpush.msra.mxu0 %v4174
    %4539 = vmatpush.msra.mxu0 %v4173
    %4540 = vmatpush.msra.mxu0 %v4172
    %4541 = vmatpush.msra.mxu0 %v4171
    %4542 = vmatpush.msra.mxu0 %v4170
    %4543 = vmatpush.msra.mxu0 %v4169
    %4544 = vmatpush.msra.mxu0 %v4168
    %4545 = vmatpush.msra.mxu0 %v4167
    %4546 = vmatpush.msra.mxu0 %v4166
    %4547 = vmatpush.msra.mxu0 %v4165
    %4548 = vmatpush.msra.mxu0 %v4164
    %4549 = vmatpush.msra.mxu0 %v4163
    %4550 = vmatpush.msra.mxu0 %v4162
    %4551 = vmatpush.msra.mxu0 %v4161
    %4552 = vmatpush.msra.mxu0 %v4160
    %4553 = vmatmul.f32.gmra.mxu0 %v51
    %v4554 = vpop.f32.mrf.mxu0
    %v4555 = vadd.f32 %v4239, %v4554
    %4556 = vdwg.mxu0
    %4557 = vmatpush.msra.mxu0 %v4191
    %4558 = vmatpush.msra.mxu0 %v4190
    %4559 = vmatpush.msra.mxu0 %v4189
    %4560 = vmatpush.msra.mxu0 %v4188
    %4561 = vmatpush.msra.mxu0 %v4187
    %4562 = vmatpush.msra.mxu0 %v4186
    %4563 = vmatpush.msra.mxu0 %v4185
    %4564 = vmatpush.msra.mxu0 %v4184
    %4565 = vmatpush.msra.mxu0 %v4183
    %4566 = vmatpush.msra.mxu0 %v4182
    %4567 = vmatpush.msra.mxu0 %v4181
    %4568 = vmatpush.msra.mxu0 %v4180
    %4569 = vmatpush.msra.mxu0 %v4179
    %4570 = vmatpush.msra.mxu0 %v4178
    %4571 = vmatpush.msra.mxu0 %v4177
    %4572 = vmatpush.msra.mxu0 %v4176
    %4573 = vmatmul.f32.gmra.mxu0 %v51
    %v4574 = vpop.f32.mrf.mxu0
    %v4575 = vadd.f32 %v4240, %v4574
    %4576 = vdwg.mxu0
    %v4578 = vsel %vm1592, %v3247, 0
    %v4581 = vsel %vm1592, %v3761, 0
    %4583 = vmatpush.xpose.msra.mxu0 0.0
    %4584 = vmatpush.xpose.msra.mxu0 0.0
    %4585 = vmatpush.xpose.msra.mxu0 0.0
    %4586 = vmatpush.xpose.msra.mxu0 0.0
    %4587 = vmatpush.xpose.msra.mxu0 0.0
    %4588 = vmatpush.xpose.msra.mxu0 0.0
    %4589 = vmatpush.xpose.msra.mxu0 0.0
    %4590 = vmatpush.xpose.msra.mxu0 0.0
    %4591 = vmatpush.xpose.msra.mxu0 0.0
    %4592 = vmatpush.xpose.msra.mxu0 0.0
    %4593 = vmatpush.xpose.msra.mxu0 0.0
    %4594 = vmatpush.xpose.msra.mxu0 0.0
    %4595 = vmatpush.xpose.msra.mxu0 0.0
    %4596 = vmatpush.xpose.msra.mxu0 0.0
    %4597 = vmatpush.xpose.msra.mxu0 0.0
    %4598 = vmatpush.xpose.msra.mxu0 %v4581
    %4599 = vmatmul.f32.gmra.mxu0 %v4578
    %v4600 = vpop.f32.mrf.mxu0
    %v4601 = vadd.f32 0.0, %v4600
    %4602 = vdwg.mxu0
    %v4604 = vsel %vm1592, %v3267, 0
    %v4607 = vsel %vm1592, %v3781, 0
    %4609 = vmatpush.xpose.msra.mxu0 0.0
    %4610 = vmatpush.xpose.msra.mxu0 0.0
    %4611 = vmatpush.xpose.msra.mxu0 0.0
    %4612 = vmatpush.xpose.msra.mxu0 0.0
    %4613 = vmatpush.xpose.msra.mxu0 0.0
    %4614 = vmatpush.xpose.msra.mxu0 0.0
    %4615 = vmatpush.xpose.msra.mxu0 0.0
    %4616 = vmatpush.xpose.msra.mxu0 0.0
    %4617 = vmatpush.xpose.msra.mxu0 0.0
    %4618 = vmatpush.xpose.msra.mxu0 0.0
    %4619 = vmatpush.xpose.msra.mxu0 0.0
    %4620 = vmatpush.xpose.msra.mxu0 0.0
    %4621 = vmatpush.xpose.msra.mxu0 0.0
    %4622 = vmatpush.xpose.msra.mxu0 0.0
    %4623 = vmatpush.xpose.msra.mxu0 0.0
    %4624 = vmatpush.xpose.msra.mxu0 %v4607
    %4625 = vmatmul.f32.gmra.mxu0 %v4604
    %v4626 = vpop.f32.mrf.mxu0
    %v4627 = vadd.f32 0.0, %v4626
    %4628 = vdwg.mxu0
    %v4630 = vsel %vm1592, %v3287, 0
    %v4633 = vsel %vm1592, %v3801, 0
    %4635 = vmatpush.xpose.msra.mxu0 0.0
    %4636 = vmatpush.xpose.msra.mxu0 0.0
    %4637 = vmatpush.xpose.msra.mxu0 0.0
    %4638 = vmatpush.xpose.msra.mxu0 0.0
    %4639 = vmatpush.xpose.msra.mxu0 0.0
    %4640 = vmatpush.xpose.msra.mxu0 0.0
    %4641 = vmatpush.xpose.msra.mxu0 0.0
    %4642 = vmatpush.xpose.msra.mxu0 0.0
    %4643 = vmatpush.xpose.msra.mxu0 0.0
    %4644 = vmatpush.xpose.msra.mxu0 0.0
    %4645 = vmatpush.xpose.msra.mxu0 0.0
    %4646 = vmatpush.xpose.msra.mxu0 0.0
    %4647 = vmatpush.xpose.msra.mxu0 0.0
    %4648 = vmatpush.xpose.msra.mxu0 0.0
    %4649 = vmatpush.xpose.msra.mxu0 0.0
    %4650 = vmatpush.xpose.msra.mxu0 %v4633
    %4651 = vmatmul.f32.gmra.mxu0 %v4630
    %v4652 = vpop.f32.mrf.mxu0
    %v4653 = vadd.f32 0.0, %v4652
    %4654 = vdwg.mxu0
    %v4656 = vsel %vm1592, %v3307, 0
    %v4659 = vsel %vm1592, %v3821, 0
    %4661 = vmatpush.xpose.msra.mxu0 0.0
    %4662 = vmatpush.xpose.msra.mxu0 0.0
    %4663 = vmatpush.xpose.msra.mxu0 0.0
    %4664 = vmatpush.xpose.msra.mxu0 0.0
    %4665 = vmatpush.xpose.msra.mxu0 0.0
    %4666 = vmatpush.xpose.msra.mxu0 0.0
    %4667 = vmatpush.xpose.msra.mxu0 0.0
    %4668 = vmatpush.xpose.msra.mxu0 0.0
    %4669 = vmatpush.xpose.msra.mxu0 0.0
    %4670 = vmatpush.xpose.msra.mxu0 0.0
    %4671 = vmatpush.xpose.msra.mxu0 0.0
    %4672 = vmatpush.xpose.msra.mxu0 0.0
    %4673 = vmatpush.xpose.msra.mxu0 0.0
    %4674 = vmatpush.xpose.msra.mxu0 0.0
    %4675 = vmatpush.xpose.msra.mxu0 0.0
    %4676 = vmatpush.xpose.msra.mxu0 %v4659
    %4677 = vmatmul.f32.gmra.mxu0 %v4656
    %v4678 = vpop.f32.mrf.mxu0
    %v4679 = vadd.f32 0.0, %v4678
    %4680 = vdwg.mxu0
    %v4682 = vsel %vm1592, %v3327, 0
    %v4685 = vsel %vm1592, %v3841, 0
    %4687 = vmatpush.xpose.msra.mxu0 0.0
    %4688 = vmatpush.xpose.msra.mxu0 0.0
    %4689 = vmatpush.xpose.msra.mxu0 0.0
    %4690 = vmatpush.xpose.msra.mxu0 0.0
    %4691 = vmatpush.xpose.msra.mxu0 0.0
    %4692 = vmatpush.xpose.msra.mxu0 0.0
    %4693 = vmatpush.xpose.msra.mxu0 0.0
    %4694 = vmatpush.xpose.msra.mxu0 0.0
    %4695 = vmatpush.xpose.msra.mxu0 0.0
    %4696 = vmatpush.xpose.msra.mxu0 0.0
    %4697 = vmatpush.xpose.msra.mxu0 0.0
    %4698 = vmatpush.xpose.msra.mxu0 0.0
    %4699 = vmatpush.xpose.msra.mxu0 0.0
    %4700 = vmatpush.xpose.msra.mxu0 0.0
    %4701 = vmatpush.xpose.msra.mxu0 0.0
    %4702 = vmatpush.xpose.msra.mxu0 %v4685
    %4703 = vmatmul.f32.gmra.mxu0 %v4682
    %v4704 = vpop.f32.mrf.mxu0
    %v4705 = vadd.f32 0.0, %v4704
    %4706 = vdwg.mxu0
    %v4708 = vsel %vm1592, %v3347, 0
    %v4711 = vsel %vm1592, %v3861, 0
    %4713 = vmatpush.xpose.msra.mxu0 0.0
    %4714 = vmatpush.xpose.msra.mxu0 0.0
    %4715 = vmatpush.xpose.msra.mxu0 0.0
    %4716 = vmatpush.xpose.msra.mxu0 0.0
    %4717 = vmatpush.xpose.msra.mxu0 0.0
    %4718 = vmatpush.xpose.msra.mxu0 0.0
    %4719 = vmatpush.xpose.msra.mxu0 0.0
    %4720 = vmatpush.xpose.msra.mxu0 0.0
    %4721 = vmatpush.xpose.msra.mxu0 0.0
    %4722 = vmatpush.xpose.msra.mxu0 0.0
    %4723 = vmatpush.xpose.msra.mxu0 0.0
    %4724 = vmatpush.xpose.msra.mxu0 0.0
    %4725 = vmatpush.xpose.msra.mxu0 0.0
    %4726 = vmatpush.xpose.msra.mxu0 0.0
    %4727 = vmatpush.xpose.msra.mxu0 0.0
    %4728 = vmatpush.xpose.msra.mxu0 %v4711
    %4729 = vmatmul.f32.gmra.mxu0 %v4708
    %v4730 = vpop.f32.mrf.mxu0
    %v4731 = vadd.f32 0.0, %v4730
    %4732 = vdwg.mxu0
    %v4734 = vsel %vm1592, %v3367, 0
    %v4737 = vsel %vm1592, %v3881, 0
    %4739 = vmatpush.xpose.msra.mxu0 0.0
    %4740 = vmatpush.xpose.msra.mxu0 0.0
    %4741 = vmatpush.xpose.msra.mxu0 0.0
    %4742 = vmatpush.xpose.msra.mxu0 0.0
    %4743 = vmatpush.xpose.msra.mxu0 0.0
    %4744 = vmatpush.xpose.msra.mxu0 0.0
    %4745 = vmatpush.xpose.msra.mxu0 0.0
    %4746 = vmatpush.xpose.msra.mxu0 0.0
    %4747 = vmatpush.xpose.msra.mxu0 0.0
    %4748 = vmatpush.xpose.msra.mxu0 0.0
    %4749 = vmatpush.xpose.msra.mxu0 0.0
    %4750 = vmatpush.xpose.msra.mxu0 0.0
    %4751 = vmatpush.xpose.msra.mxu0 0.0
    %4752 = vmatpush.xpose.msra.mxu0 0.0
    %4753 = vmatpush.xpose.msra.mxu0 0.0
    %4754 = vmatpush.xpose.msra.mxu0 %v4737
    %4755 = vmatmul.f32.gmra.mxu0 %v4734
    %v4756 = vpop.f32.mrf.mxu0
    %v4757 = vadd.f32 0.0, %v4756
    %4758 = vdwg.mxu0
    %v4760 = vsel %vm1592, %v3387, 0
    %v4763 = vsel %vm1592, %v3901, 0
    %4765 = vmatpush.xpose.msra.mxu0 0.0
    %4766 = vmatpush.xpose.msra.mxu0 0.0
    %4767 = vmatpush.xpose.msra.mxu0 0.0
    %4768 = vmatpush.xpose.msra.mxu0 0.0
    %4769 = vmatpush.xpose.msra.mxu0 0.0
    %4770 = vmatpush.xpose.msra.mxu0 0.0
    %4771 = vmatpush.xpose.msra.mxu0 0.0
    %4772 = vmatpush.xpose.msra.mxu0 0.0
    %4773 = vmatpush.xpose.msra.mxu0 0.0
    %4774 = vmatpush.xpose.msra.mxu0 0.0
    %4775 = vmatpush.xpose.msra.mxu0 0.0
    %4776 = vmatpush.xpose.msra.mxu0 0.0
    %4777 = vmatpush.xpose.msra.mxu0 0.0
    %4778 = vmatpush.xpose.msra.mxu0 0.0
    %4779 = vmatpush.xpose.msra.mxu0 0.0
    %4780 = vmatpush.xpose.msra.mxu0 %v4763
    %4781 = vmatmul.f32.gmra.mxu0 %v4760
    %v4782 = vpop.f32.mrf.mxu0
    %v4783 = vadd.f32 0.0, %v4782
    %4784 = vdwg.mxu0
    %v4786 = vsel %vm1592, %v3407, 0
    %v4789 = vsel %vm1592, %v3921, 0
    %4791 = vmatpush.xpose.msra.mxu0 0.0
    %4792 = vmatpush.xpose.msra.mxu0 0.0
    %4793 = vmatpush.xpose.msra.mxu0 0.0
    %4794 = vmatpush.xpose.msra.mxu0 0.0
    %4795 = vmatpush.xpose.msra.mxu0 0.0
    %4796 = vmatpush.xpose.msra.mxu0 0.0
    %4797 = vmatpush.xpose.msra.mxu0 0.0
    %4798 = vmatpush.xpose.msra.mxu0 0.0
    %4799 = vmatpush.xpose.msra.mxu0 0.0
    %4800 = vmatpush.xpose.msra.mxu0 0.0
    %4801 = vmatpush.xpose.msra.mxu0 0.0
    %4802 = vmatpush.xpose.msra.mxu0 0.0
    %4803 = vmatpush.xpose.msra.mxu0 0.0
    %4804 = vmatpush.xpose.msra.mxu0 0.0
    %4805 = vmatpush.xpose.msra.mxu0 0.0
    %4806 = vmatpush.xpose.msra.mxu0 %v4789
    %4807 = vmatmul.f32.gmra.mxu0 %v4786
    %v4808 = vpop.f32.mrf.mxu0
    %v4809 = vadd.f32 0.0, %v4808
    %4810 = vdwg.mxu0
    %v4812 = vsel %vm1592, %v3427, 0
    %v4815 = vsel %vm1592, %v3941, 0
    %4817 = vmatpush.xpose.msra.mxu0 0.0
    %4818 = vmatpush.xpose.msra.mxu0 0.0
    %4819 = vmatpush.xpose.msra.mxu0 0.0
    %4820 = vmatpush.xpose.msra.mxu0 0.0
    %4821 = vmatpush.xpose.msra.mxu0 0.0
    %4822 = vmatpush.xpose.msra.mxu0 0.0
    %4823 = vmatpush.xpose.msra.mxu0 0.0
    %4824 = vmatpush.xpose.msra.mxu0 0.0
    %4825 = vmatpush.xpose.msra.mxu0 0.0
    %4826 = vmatpush.xpose.msra.mxu0 0.0
    %4827 = vmatpush.xpose.msra.mxu0 0.0
    %4828 = vmatpush.xpose.msra.mxu0 0.0
    %4829 = vmatpush.xpose.msra.mxu0 0.0
    %4830 = vmatpush.xpose.msra.mxu0 0.0
    %4831 = vmatpush.xpose.msra.mxu0 0.0
    %4832 = vmatpush.xpose.msra.mxu0 %v4815
    %4833 = vmatmul.f32.gmra.mxu0 %v4812
    %v4834 = vpop.f32.mrf.mxu0
    %v4835 = vadd.f32 0.0, %v4834
    %4836 = vdwg.mxu0
    %v4838 = vsel %vm1592, %v3447, 0
    %v4841 = vsel %vm1592, %v3961, 0
    %4843 = vmatpush.xpose.msra.mxu0 0.0
    %4844 = vmatpush.xpose.msra.mxu0 0.0
    %4845 = vmatpush.xpose.msra.mxu0 0.0
    %4846 = vmatpush.xpose.msra.mxu0 0.0
    %4847 = vmatpush.xpose.msra.mxu0 0.0
    %4848 = vmatpush.xpose.msra.mxu0 0.0
    %4849 = vmatpush.xpose.msra.mxu0 0.0
    %4850 = vmatpush.xpose.msra.mxu0 0.0
    %4851 = vmatpush.xpose.msra.mxu0 0.0
    %4852 = vmatpush.xpose.msra.mxu0 0.0
    %4853 = vmatpush.xpose.msra.mxu0 0.0
    %4854 = vmatpush.xpose.msra.mxu0 0.0
    %4855 = vmatpush.xpose.msra.mxu0 0.0
    %4856 = vmatpush.xpose.msra.mxu0 0.0
    %4857 = vmatpush.xpose.msra.mxu0 0.0
    %4858 = vmatpush.xpose.msra.mxu0 %v4841
    %4859 = vmatmul.f32.gmra.mxu0 %v4838
    %v4860 = vpop.f32.mrf.mxu0
    %v4861 = vadd.f32 0.0, %v4860
    %4862 = vdwg.mxu0
    %v4864 = vsel %vm1592, %v3467, 0
    %v4867 = vsel %vm1592, %v3981, 0
    %4869 = vmatpush.xpose.msra.mxu0 0.0
    %4870 = vmatpush.xpose.msra.mxu0 0.0
    %4871 = vmatpush.xpose.msra.mxu0 0.0
    %4872 = vmatpush.xpose.msra.mxu0 0.0
    %4873 = vmatpush.xpose.msra.mxu0 0.0
    %4874 = vmatpush.xpose.msra.mxu0 0.0
    %4875 = vmatpush.xpose.msra.mxu0 0.0
    %4876 = vmatpush.xpose.msra.mxu0 0.0
    %4877 = vmatpush.xpose.msra.mxu0 0.0
    %4878 = vmatpush.xpose.msra.mxu0 0.0
    %4879 = vmatpush.xpose.msra.mxu0 0.0
    %4880 = vmatpush.xpose.msra.mxu0 0.0
    %4881 = vmatpush.xpose.msra.mxu0 0.0
    %4882 = vmatpush.xpose.msra.mxu0 0.0
    %4883 = vmatpush.xpose.msra.mxu0 0.0
    %4884 = vmatpush.xpose.msra.mxu0 %v4867
    %4885 = vmatmul.f32.gmra.mxu0 %v4864
    %v4886 = vpop.f32.mrf.mxu0
    %v4887 = vadd.f32 0.0, %v4886
    %4888 = vdwg.mxu0
    %v4890 = vsel %vm1592, %v3487, 0
    %v4893 = vsel %vm1592, %v4001, 0
    %4895 = vmatpush.xpose.msra.mxu0 0.0
    %4896 = vmatpush.xpose.msra.mxu0 0.0
    %4897 = vmatpush.xpose.msra.mxu0 0.0
    %4898 = vmatpush.xpose.msra.mxu0 0.0
    %4899 = vmatpush.xpose.msra.mxu0 0.0
    %4900 = vmatpush.xpose.msra.mxu0 0.0
    %4901 = vmatpush.xpose.msra.mxu0 0.0
    %4902 = vmatpush.xpose.msra.mxu0 0.0
    %4903 = vmatpush.xpose.msra.mxu0 0.0
    %4904 = vmatpush.xpose.msra.mxu0 0.0
    %4905 = vmatpush.xpose.msra.mxu0 0.0
    %4906 = vmatpush.xpose.msra.mxu0 0.0
    %4907 = vmatpush.xpose.msra.mxu0 0.0
    %4908 = vmatpush.xpose.msra.mxu0 0.0
    %4909 = vmatpush.xpose.msra.mxu0 0.0
    %4910 = vmatpush.xpose.msra.mxu0 %v4893
    %4911 = vmatmul.f32.gmra.mxu0 %v4890
    %v4912 = vpop.f32.mrf.mxu0
    %v4913 = vadd.f32 0.0, %v4912
    %4914 = vdwg.mxu0
    %v4916 = vsel %vm1592, %v3507, 0
    %v4919 = vsel %vm1592, %v4021, 0
    %4921 = vmatpush.xpose.msra.mxu0 0.0
    %4922 = vmatpush.xpose.msra.mxu0 0.0
    %4923 = vmatpush.xpose.msra.mxu0 0.0
    %4924 = vmatpush.xpose.msra.mxu0 0.0
    %4925 = vmatpush.xpose.msra.mxu0 0.0
    %4926 = vmatpush.xpose.msra.mxu0 0.0
    %4927 = vmatpush.xpose.msra.mxu0 0.0
    %4928 = vmatpush.xpose.msra.mxu0 0.0
    %4929 = vmatpush.xpose.msra.mxu0 0.0
    %4930 = vmatpush.xpose.msra.mxu0 0.0
    %4931 = vmatpush.xpose.msra.mxu0 0.0
    %4932 = vmatpush.xpose.msra.mxu0 0.0
    %4933 = vmatpush.xpose.msra.mxu0 0.0
    %4934 = vmatpush.xpose.msra.mxu0 0.0
    %4935 = vmatpush.xpose.msra.mxu0 0.0
    %4936 = vmatpush.xpose.msra.mxu0 %v4919
    %4937 = vmatmul.f32.gmra.mxu0 %v4916
    %v4938 = vpop.f32.mrf.mxu0
    %v4939 = vadd.f32 0.0, %v4938
    %4940 = vdwg.mxu0
    %v4942 = vsel %vm1592, %v3527, 0
    %v4945 = vsel %vm1592, %v4041, 0
    %4947 = vmatpush.xpose.msra.mxu0 0.0
    %4948 = vmatpush.xpose.msra.mxu0 0.0
    %4949 = vmatpush.xpose.msra.mxu0 0.0
    %4950 = vmatpush.xpose.msra.mxu0 0.0
    %4951 = vmatpush.xpose.msra.mxu0 0.0
    %4952 = vmatpush.xpose.msra.mxu0 0.0
    %4953 = vmatpush.xpose.msra.mxu0 0.0
    %4954 = vmatpush.xpose.msra.mxu0 0.0
    %4955 = vmatpush.xpose.msra.mxu0 0.0
    %4956 = vmatpush.xpose.msra.mxu0 0.0
    %4957 = vmatpush.xpose.msra.mxu0 0.0
    %4958 = vmatpush.xpose.msra.mxu0 0.0
    %4959 = vmatpush.xpose.msra.mxu0 0.0
    %4960 = vmatpush.xpose.msra.mxu0 0.0
    %4961 = vmatpush.xpose.msra.mxu0 0.0
    %4962 = vmatpush.xpose.msra.mxu0 %v4945
    %4963 = vmatmul.f32.gmra.mxu0 %v4942
    %v4964 = vpop.f32.mrf.mxu0
    %v4965 = vadd.f32 0.0, %v4964
    %4966 = vdwg.mxu0
    %v4968 = vsel %vm1592, %v3547, 0
    %v4971 = vsel %vm1592, %v4061, 0
    %4973 = vmatpush.xpose.msra.mxu0 0.0
    %4974 = vmatpush.xpose.msra.mxu0 0.0
    %4975 = vmatpush.xpose.msra.mxu0 0.0
    %4976 = vmatpush.xpose.msra.mxu0 0.0
    %4977 = vmatpush.xpose.msra.mxu0 0.0
    %4978 = vmatpush.xpose.msra.mxu0 0.0
    %4979 = vmatpush.xpose.msra.mxu0 0.0
    %4980 = vmatpush.xpose.msra.mxu0 0.0
    %4981 = vmatpush.xpose.msra.mxu0 0.0
    %4982 = vmatpush.xpose.msra.mxu0 0.0
    %4983 = vmatpush.xpose.msra.mxu0 0.0
    %4984 = vmatpush.xpose.msra.mxu0 0.0
    %4985 = vmatpush.xpose.msra.mxu0 0.0
    %4986 = vmatpush.xpose.msra.mxu0 0.0
    %4987 = vmatpush.xpose.msra.mxu0 0.0
    %4988 = vmatpush.xpose.msra.mxu0 %v4971
    %4989 = vmatmul.f32.gmra.mxu0 %v4968
    %v4990 = vpop.f32.mrf.mxu0
    %v4991 = vadd.f32 0.0, %v4990
    %4992 = vdwg.mxu0
    %v4993 = vmul.f32 %v4601, 0.25
    %v4994 = vmul.f32 %v4627, 0.25
    %v4995 = vmul.f32 %v4653, 0.25
    %v4996 = vmul.f32 %v4679, 0.25
    %v4997 = vmul.f32 %v4705, 0.25
    %v4998 = vmul.f32 %v4731, 0.25
    %v4999 = vmul.f32 %v4757, 0.25
    %v5000 = vmul.f32 %v4783, 0.25
    %v5001 = vmul.f32 %v4809, 0.25
    %v5002 = vmul.f32 %v4835, 0.25
    %v5003 = vmul.f32 %v4861, 0.25
    %v5004 = vmul.f32 %v4887, 0.25
    %v5005 = vmul.f32 %v4913, 0.25
    %v5006 = vmul.f32 %v4939, 0.25
    %v5007 = vmul.f32 %v4965, 0.25
    %v5008 = vmul.f32 %v4991, 0.25
    %v5009 = vsel %vm2025, %v4993, -inf
    %5010 = vmax.xlane.f32.xlu0 %v5009
    %v5011 = vpop.xlane.xlu0 %5010
    %v5012 = vsel %vm2025, %v4994, -inf
    %5013 = vmax.xlane.f32.xlu0 %v5012
    %v5014 = vpop.xlane.xlu0 %5013
    %v5015 = vsel %vm2025, %v4995, -inf
    %5016 = vmax.xlane.f32.xlu0 %v5015
    %v5017 = vpop.xlane.xlu0 %5016
    %v5018 = vsel %vm2025, %v4996, -inf
    %5019 = vmax.xlane.f32.xlu0 %v5018
    %v5020 = vpop.xlane.xlu0 %5019
    %v5021 = vsel %vm2025, %v4997, -inf
    %5022 = vmax.xlane.f32.xlu0 %v5021
    %v5023 = vpop.xlane.xlu0 %5022
    %v5024 = vsel %vm2025, %v4998, -inf
    %5025 = vmax.xlane.f32.xlu0 %v5024
    %v5026 = vpop.xlane.xlu0 %5025
    %v5027 = vsel %vm2025, %v4999, -inf
    %5028 = vmax.xlane.f32.xlu0 %v5027
    %v5029 = vpop.xlane.xlu0 %5028
    %v5030 = vsel %vm2025, %v5000, -inf
    %5031 = vmax.xlane.f32.xlu0 %v5030
    %v5032 = vpop.xlane.xlu0 %5031
    %v5033 = vsel %vm2025, %v5001, -inf
    %5034 = vmax.xlane.f32.xlu0 %v5033
    %v5035 = vpop.xlane.xlu0 %5034
    %v5036 = vsel %vm2025, %v5002, -inf
    %5037 = vmax.xlane.f32.xlu0 %v5036
    %v5038 = vpop.xlane.xlu0 %5037
    %v5039 = vsel %vm2025, %v5003, -inf
    %5040 = vmax.xlane.f32.xlu0 %v5039
    %v5041 = vpop.xlane.xlu0 %5040
    %v5042 = vsel %vm2025, %v5004, -inf
    %5043 = vmax.xlane.f32.xlu0 %v5042
    %v5044 = vpop.xlane.xlu0 %5043
    %v5045 = vsel %vm2025, %v5005, -inf
    %5046 = vmax.xlane.f32.xlu0 %v5045
    %v5047 = vpop.xlane.xlu0 %5046
    %v5048 = vsel %vm2025, %v5006, -inf
    %5049 = vmax.xlane.f32.xlu0 %v5048
    %v5050 = vpop.xlane.xlu0 %5049
    %v5051 = vsel %vm2025, %v5007, -inf
    %5052 = vmax.xlane.f32.xlu0 %v5051
    %v5053 = vpop.xlane.xlu0 %5052
    %v5054 = vsel %vm2025, %v5008, -inf
    %5055 = vmax.xlane.f32.xlu0 %v5054
    %v5056 = vpop.xlane.xlu0 %5055
    %v5057 = vsub.f32 %v4993, %v5011
    %v5058 = vsub.f32 %v4994, %v5014
    %v5059 = vsub.f32 %v4995, %v5017
    %v5060 = vsub.f32 %v4996, %v5020
    %v5061 = vsub.f32 %v4997, %v5023
    %v5062 = vsub.f32 %v4998, %v5026
    %v5063 = vsub.f32 %v4999, %v5029
    %v5064 = vsub.f32 %v5000, %v5032
    %v5065 = vsub.f32 %v5001, %v5035
    %v5066 = vsub.f32 %v5002, %v5038
    %v5067 = vsub.f32 %v5003, %v5041
    %v5068 = vsub.f32 %v5004, %v5044
    %v5069 = vsub.f32 %v5005, %v5047
    %v5070 = vsub.f32 %v5006, %v5050
    %v5071 = vsub.f32 %v5007, %v5053
    %v5072 = vsub.f32 %v5008, %v5056
    %v5073 = vmul.f32 %v5057, 1.442695
    %v5074 = vpow.pop %v5073
    %v5075 = vmul.f32 %v5058, 1.442695
    %v5076 = vpow.pop %v5075
    %v5077 = vmul.f32 %v5059, 1.442695
    %v5078 = vpow.pop %v5077
    %v5079 = vmul.f32 %v5060, 1.442695
    %v5080 = vpow.pop %v5079
    %v5081 = vmul.f32 %v5061, 1.442695
    %v5082 = vpow.pop %v5081
    %v5083 = vmul.f32 %v5062, 1.442695
    %v5084 = vpow.pop %v5083
    %v5085 = vmul.f32 %v5063, 1.442695
    %v5086 = vpow.pop %v5085
    %v5087 = vmul.f32 %v5064, 1.442695
    %v5088 = vpow.pop %v5087
    %v5089 = vmul.f32 %v5065, 1.442695
    %v5090 = vpow.pop %v5089
    %v5091 = vmul.f32 %v5066, 1.442695
    %v5092 = vpow.pop %v5091
    %v5093 = vmul.f32 %v5067, 1.442695
    %v5094 = vpow.pop %v5093
    %v5095 = vmul.f32 %v5068, 1.442695
    %v5096 = vpow.pop %v5095
    %v5097 = vmul.f32 %v5069, 1.442695
    %v5098 = vpow.pop %v5097
    %v5099 = vmul.f32 %v5070, 1.442695
    %v5100 = vpow.pop %v5099
    %v5101 = vmul.f32 %v5071, 1.442695
    %v5102 = vpow.pop %v5101
    %v5103 = vmul.f32 %v5072, 1.442695
    %v5104 = vpow.pop %v5103
    %v5105 = vsel %vm2025, %v5074, 0.0
    %5106 = vadd.xlane.f32.xlu0 %v5105
    %v5107 = vpop.xlane.xlu0 %5106
    %v5108 = vsel %vm2025, %v5076, 0.0
    %5109 = vadd.xlane.f32.xlu0 %v5108
    %v5110 = vpop.xlane.xlu0 %5109
    %v5111 = vsel %vm2025, %v5078, 0.0
    %5112 = vadd.xlane.f32.xlu0 %v5111
    %v5113 = vpop.xlane.xlu0 %5112
    %v5114 = vsel %vm2025, %v5080, 0.0
    %5115 = vadd.xlane.f32.xlu0 %v5114
    %v5116 = vpop.xlane.xlu0 %5115
    %v5117 = vsel %vm2025, %v5082, 0.0
    %5118 = vadd.xlane.f32.xlu0 %v5117
    %v5119 = vpop.xlane.xlu0 %5118
    %v5120 = vsel %vm2025, %v5084, 0.0
    %5121 = vadd.xlane.f32.xlu0 %v5120
    %v5122 = vpop.xlane.xlu0 %5121
    %v5123 = vsel %vm2025, %v5086, 0.0
    %5124 = vadd.xlane.f32.xlu0 %v5123
    %v5125 = vpop.xlane.xlu0 %5124
    %v5126 = vsel %vm2025, %v5088, 0.0
    %5127 = vadd.xlane.f32.xlu0 %v5126
    %v5128 = vpop.xlane.xlu0 %5127
    %v5129 = vsel %vm2025, %v5090, 0.0
    %5130 = vadd.xlane.f32.xlu0 %v5129
    %v5131 = vpop.xlane.xlu0 %5130
    %v5132 = vsel %vm2025, %v5092, 0.0
    %5133 = vadd.xlane.f32.xlu0 %v5132
    %v5134 = vpop.xlane.xlu0 %5133
    %v5135 = vsel %vm2025, %v5094, 0.0
    %5136 = vadd.xlane.f32.xlu0 %v5135
    %v5137 = vpop.xlane.xlu0 %5136
    %v5138 = vsel %vm2025, %v5096, 0.0
    %5139 = vadd.xlane.f32.xlu0 %v5138
    %v5140 = vpop.xlane.xlu0 %5139
    %v5141 = vsel %vm2025, %v5098, 0.0
    %5142 = vadd.xlane.f32.xlu0 %v5141
    %v5143 = vpop.xlane.xlu0 %5142
    %v5144 = vsel %vm2025, %v5100, 0.0
    %5145 = vadd.xlane.f32.xlu0 %v5144
    %v5146 = vpop.xlane.xlu0 %5145
    %v5147 = vsel %vm2025, %v5102, 0.0
    %5148 = vadd.xlane.f32.xlu0 %v5147
    %v5149 = vpop.xlane.xlu0 %5148
    %v5150 = vsel %vm2025, %v5104, 0.0
    %5151 = vadd.xlane.f32.xlu0 %v5150
    %v5152 = vpop.xlane.xlu0 %5151
    %v5153 = vrcp.pop %v5107
    %v5154 = vrcp.pop %v5110
    %v5155 = vrcp.pop %v5113
    %v5156 = vrcp.pop %v5116
    %v5157 = vrcp.pop %v5119
    %v5158 = vrcp.pop %v5122
    %v5159 = vrcp.pop %v5125
    %v5160 = vrcp.pop %v5128
    %v5161 = vrcp.pop %v5131
    %v5162 = vrcp.pop %v5134
    %v5163 = vrcp.pop %v5137
    %v5164 = vrcp.pop %v5140
    %v5165 = vrcp.pop %v5143
    %v5166 = vrcp.pop %v5146
    %v5167 = vrcp.pop %v5149
    %v5168 = vrcp.pop %v5152
    %v5169 = vmul.f32 %v5074, %v5153
    %v5170 = vmul.f32 %v5076, %v5154
    %v5171 = vmul.f32 %v5078, %v5155
    %v5172 = vmul.f32 %v5080, %v5156
    %v5173 = vmul.f32 %v5082, %v5157
    %v5174 = vmul.f32 %v5084, %v5158
    %v5175 = vmul.f32 %v5086, %v5159
    %v5176 = vmul.f32 %v5088, %v5160
    %v5177 = vmul.f32 %v5090, %v5161
    %v5178 = vmul.f32 %v5092, %v5162
    %v5179 = vmul.f32 %v5094, %v5163
    %v5180 = vmul.f32 %v5096, %v5164
    %v5181 = vmul.f32 %v5098, %v5165
    %v5182 = vmul.f32 %v5100, %v5166
    %v5183 = vmul.f32 %v5102, %v5167
    %v5184 = vmul.f32 %v5104, %v5168
    %v5186 = vsel %vm2025, %v5169, 0
    %5188 = vmatpush.msra.mxu0 0.0
    %5189 = vmatpush.msra.mxu0 0.0
    %5190 = vmatpush.msra.mxu0 0.0
    %5191 = vmatpush.msra.mxu0 0.0
    %5192 = vmatpush.msra.mxu0 0.0
    %5193 = vmatpush.msra.mxu0 0.0
    %5194 = vmatpush.msra.mxu0 0.0
    %5195 = vmatpush.msra.mxu0 0.0
    %5196 = vmatpush.msra.mxu0 0.0
    %5197 = vmatpush.msra.mxu0 0.0
    %5198 = vmatpush.msra.mxu0 0.0
    %5199 = vmatpush.msra.mxu0 0.0
    %5200 = vmatpush.msra.mxu0 0.0
    %5201 = vmatpush.msra.mxu0 0.0
    %5202 = vmatpush.msra.mxu0 0.0
    %5203 = vmatpush.msra.mxu0 %v4275
    %5204 = vmatmul.f32.gmra.mxu0 %v5186
    %v5205 = vpop.f32.mrf.mxu0
    %v5206 = vadd.f32 0.0, %v5205
    %5207 = vdwg.mxu0
    %v5209 = vsel %vm2025, %v5170, 0
    %5211 = vmatpush.msra.mxu0 0.0
    %5212 = vmatpush.msra.mxu0 0.0
    %5213 = vmatpush.msra.mxu0 0.0
    %5214 = vmatpush.msra.mxu0 0.0
    %5215 = vmatpush.msra.mxu0 0.0
    %5216 = vmatpush.msra.mxu0 0.0
    %5217 = vmatpush.msra.mxu0 0.0
    %5218 = vmatpush.msra.mxu0 0.0
    %5219 = vmatpush.msra.mxu0 0.0
    %5220 = vmatpush.msra.mxu0 0.0
    %5221 = vmatpush.msra.mxu0 0.0
    %5222 = vmatpush.msra.mxu0 0.0
    %5223 = vmatpush.msra.mxu0 0.0
    %5224 = vmatpush.msra.mxu0 0.0
    %5225 = vmatpush.msra.mxu0 0.0
    %5226 = vmatpush.msra.mxu0 %v4295
    %5227 = vmatmul.f32.gmra.mxu0 %v5209
    %v5228 = vpop.f32.mrf.mxu0
    %v5229 = vadd.f32 0.0, %v5228
    %5230 = vdwg.mxu0
    %v5232 = vsel %vm2025, %v5171, 0
    %5234 = vmatpush.msra.mxu0 0.0
    %5235 = vmatpush.msra.mxu0 0.0
    %5236 = vmatpush.msra.mxu0 0.0
    %5237 = vmatpush.msra.mxu0 0.0
    %5238 = vmatpush.msra.mxu0 0.0
    %5239 = vmatpush.msra.mxu0 0.0
    %5240 = vmatpush.msra.mxu0 0.0
    %5241 = vmatpush.msra.mxu0 0.0
    %5242 = vmatpush.msra.mxu0 0.0
    %5243 = vmatpush.msra.mxu0 0.0
    %5244 = vmatpush.msra.mxu0 0.0
    %5245 = vmatpush.msra.mxu0 0.0
    %5246 = vmatpush.msra.mxu0 0.0
    %5247 = vmatpush.msra.mxu0 0.0
    %5248 = vmatpush.msra.mxu0 0.0
    %5249 = vmatpush.msra.mxu0 %v4315
    %5250 = vmatmul.f32.gmra.mxu0 %v5232
    %v5251 = vpop.f32.mrf.mxu0
    %v5252 = vadd.f32 0.0, %v5251
    %5253 = vdwg.mxu0
    %v5255 = vsel %vm2025, %v5172, 0
    %5257 = vmatpush.msra.mxu0 0.0
    %5258 = vmatpush.msra.mxu0 0.0
    %5259 = vmatpush.msra.mxu0 0.0
    %5260 = vmatpush.msra.mxu0 0.0
    %5261 = vmatpush.msra.mxu0 0.0
    %5262 = vmatpush.msra.mxu0 0.0
    %5263 = vmatpush.msra.mxu0 0.0
    %5264 = vmatpush.msra.mxu0 0.0
    %5265 = vmatpush.msra.mxu0 0.0
    %5266 = vmatpush.msra.mxu0 0.0
    %5267 = vmatpush.msra.mxu0 0.0
    %5268 = vmatpush.msra.mxu0 0.0
    %5269 = vmatpush.msra.mxu0 0.0
    %5270 = vmatpush.msra.mxu0 0.0
    %5271 = vmatpush.msra.mxu0 0.0
    %5272 = vmatpush.msra.mxu0 %v4335
    %5273 = vmatmul.f32.gmra.mxu0 %v5255
    %v5274 = vpop.f32.mrf.mxu0
    %v5275 = vadd.f32 0.0, %v5274
    %5276 = vdwg.mxu0
    %v5278 = vsel %vm2025, %v5173, 0
    %5280 = vmatpush.msra.mxu0 0.0
    %5281 = vmatpush.msra.mxu0 0.0
    %5282 = vmatpush.msra.mxu0 0.0
    %5283 = vmatpush.msra.mxu0 0.0
    %5284 = vmatpush.msra.mxu0 0.0
    %5285 = vmatpush.msra.mxu0 0.0
    %5286 = vmatpush.msra.mxu0 0.0
    %5287 = vmatpush.msra.mxu0 0.0
    %5288 = vmatpush.msra.mxu0 0.0
    %5289 = vmatpush.msra.mxu0 0.0
    %5290 = vmatpush.msra.mxu0 0.0
    %5291 = vmatpush.msra.mxu0 0.0
    %5292 = vmatpush.msra.mxu0 0.0
    %5293 = vmatpush.msra.mxu0 0.0
    %5294 = vmatpush.msra.mxu0 0.0
    %5295 = vmatpush.msra.mxu0 %v4355
    %5296 = vmatmul.f32.gmra.mxu0 %v5278
    %v5297 = vpop.f32.mrf.mxu0
    %v5298 = vadd.f32 0.0, %v5297
    %5299 = vdwg.mxu0
    %v5301 = vsel %vm2025, %v5174, 0
    %5303 = vmatpush.msra.mxu0 0.0
    %5304 = vmatpush.msra.mxu0 0.0
    %5305 = vmatpush.msra.mxu0 0.0
    %5306 = vmatpush.msra.mxu0 0.0
    %5307 = vmatpush.msra.mxu0 0.0
    %5308 = vmatpush.msra.mxu0 0.0
    %5309 = vmatpush.msra.mxu0 0.0
    %5310 = vmatpush.msra.mxu0 0.0
    %5311 = vmatpush.msra.mxu0 0.0
    %5312 = vmatpush.msra.mxu0 0.0
    %5313 = vmatpush.msra.mxu0 0.0
    %5314 = vmatpush.msra.mxu0 0.0
    %5315 = vmatpush.msra.mxu0 0.0
    %5316 = vmatpush.msra.mxu0 0.0
    %5317 = vmatpush.msra.mxu0 0.0
    %5318 = vmatpush.msra.mxu0 %v4375
    %5319 = vmatmul.f32.gmra.mxu0 %v5301
    %v5320 = vpop.f32.mrf.mxu0
    %v5321 = vadd.f32 0.0, %v5320
    %5322 = vdwg.mxu0
    %v5324 = vsel %vm2025, %v5175, 0
    %5326 = vmatpush.msra.mxu0 0.0
    %5327 = vmatpush.msra.mxu0 0.0
    %5328 = vmatpush.msra.mxu0 0.0
    %5329 = vmatpush.msra.mxu0 0.0
    %5330 = vmatpush.msra.mxu0 0.0
    %5331 = vmatpush.msra.mxu0 0.0
    %5332 = vmatpush.msra.mxu0 0.0
    %5333 = vmatpush.msra.mxu0 0.0
    %5334 = vmatpush.msra.mxu0 0.0
    %5335 = vmatpush.msra.mxu0 0.0
    %5336 = vmatpush.msra.mxu0 0.0
    %5337 = vmatpush.msra.mxu0 0.0
    %5338 = vmatpush.msra.mxu0 0.0
    %5339 = vmatpush.msra.mxu0 0.0
    %5340 = vmatpush.msra.mxu0 0.0
    %5341 = vmatpush.msra.mxu0 %v4395
    %5342 = vmatmul.f32.gmra.mxu0 %v5324
    %v5343 = vpop.f32.mrf.mxu0
    %v5344 = vadd.f32 0.0, %v5343
    %5345 = vdwg.mxu0
    %v5347 = vsel %vm2025, %v5176, 0
    %5349 = vmatpush.msra.mxu0 0.0
    %5350 = vmatpush.msra.mxu0 0.0
    %5351 = vmatpush.msra.mxu0 0.0
    %5352 = vmatpush.msra.mxu0 0.0
    %5353 = vmatpush.msra.mxu0 0.0
    %5354 = vmatpush.msra.mxu0 0.0
    %5355 = vmatpush.msra.mxu0 0.0
    %5356 = vmatpush.msra.mxu0 0.0
    %5357 = vmatpush.msra.mxu0 0.0
    %5358 = vmatpush.msra.mxu0 0.0
    %5359 = vmatpush.msra.mxu0 0.0
    %5360 = vmatpush.msra.mxu0 0.0
    %5361 = vmatpush.msra.mxu0 0.0
    %5362 = vmatpush.msra.mxu0 0.0
    %5363 = vmatpush.msra.mxu0 0.0
    %5364 = vmatpush.msra.mxu0 %v4415
    %5365 = vmatmul.f32.gmra.mxu0 %v5347
    %v5366 = vpop.f32.mrf.mxu0
    %v5367 = vadd.f32 0.0, %v5366
    %5368 = vdwg.mxu0
    %v5370 = vsel %vm2025, %v5177, 0
    %5372 = vmatpush.msra.mxu0 0.0
    %5373 = vmatpush.msra.mxu0 0.0
    %5374 = vmatpush.msra.mxu0 0.0
    %5375 = vmatpush.msra.mxu0 0.0
    %5376 = vmatpush.msra.mxu0 0.0
    %5377 = vmatpush.msra.mxu0 0.0
    %5378 = vmatpush.msra.mxu0 0.0
    %5379 = vmatpush.msra.mxu0 0.0
    %5380 = vmatpush.msra.mxu0 0.0
    %5381 = vmatpush.msra.mxu0 0.0
    %5382 = vmatpush.msra.mxu0 0.0
    %5383 = vmatpush.msra.mxu0 0.0
    %5384 = vmatpush.msra.mxu0 0.0
    %5385 = vmatpush.msra.mxu0 0.0
    %5386 = vmatpush.msra.mxu0 0.0
    %5387 = vmatpush.msra.mxu0 %v4435
    %5388 = vmatmul.f32.gmra.mxu0 %v5370
    %v5389 = vpop.f32.mrf.mxu0
    %v5390 = vadd.f32 0.0, %v5389
    %5391 = vdwg.mxu0
    %v5393 = vsel %vm2025, %v5178, 0
    %5395 = vmatpush.msra.mxu0 0.0
    %5396 = vmatpush.msra.mxu0 0.0
    %5397 = vmatpush.msra.mxu0 0.0
    %5398 = vmatpush.msra.mxu0 0.0
    %5399 = vmatpush.msra.mxu0 0.0
    %5400 = vmatpush.msra.mxu0 0.0
    %5401 = vmatpush.msra.mxu0 0.0
    %5402 = vmatpush.msra.mxu0 0.0
    %5403 = vmatpush.msra.mxu0 0.0
    %5404 = vmatpush.msra.mxu0 0.0
    %5405 = vmatpush.msra.mxu0 0.0
    %5406 = vmatpush.msra.mxu0 0.0
    %5407 = vmatpush.msra.mxu0 0.0
    %5408 = vmatpush.msra.mxu0 0.0
    %5409 = vmatpush.msra.mxu0 0.0
    %5410 = vmatpush.msra.mxu0 %v4455
    %5411 = vmatmul.f32.gmra.mxu0 %v5393
    %v5412 = vpop.f32.mrf.mxu0
    %v5413 = vadd.f32 0.0, %v5412
    %5414 = vdwg.mxu0
    %v5416 = vsel %vm2025, %v5179, 0
    %5418 = vmatpush.msra.mxu0 0.0
    %5419 = vmatpush.msra.mxu0 0.0
    %5420 = vmatpush.msra.mxu0 0.0
    %5421 = vmatpush.msra.mxu0 0.0
    %5422 = vmatpush.msra.mxu0 0.0
    %5423 = vmatpush.msra.mxu0 0.0
    %5424 = vmatpush.msra.mxu0 0.0
    %5425 = vmatpush.msra.mxu0 0.0
    %5426 = vmatpush.msra.mxu0 0.0
    %5427 = vmatpush.msra.mxu0 0.0
    %5428 = vmatpush.msra.mxu0 0.0
    %5429 = vmatpush.msra.mxu0 0.0
    %5430 = vmatpush.msra.mxu0 0.0
    %5431 = vmatpush.msra.mxu0 0.0
    %5432 = vmatpush.msra.mxu0 0.0
    %5433 = vmatpush.msra.mxu0 %v4475
    %5434 = vmatmul.f32.gmra.mxu0 %v5416
    %v5435 = vpop.f32.mrf.mxu0
    %v5436 = vadd.f32 0.0, %v5435
    %5437 = vdwg.mxu0
    %v5439 = vsel %vm2025, %v5180, 0
    %5441 = vmatpush.msra.mxu0 0.0
    %5442 = vmatpush.msra.mxu0 0.0
    %5443 = vmatpush.msra.mxu0 0.0
    %5444 = vmatpush.msra.mxu0 0.0
    %5445 = vmatpush.msra.mxu0 0.0
    %5446 = vmatpush.msra.mxu0 0.0
    %5447 = vmatpush.msra.mxu0 0.0
    %5448 = vmatpush.msra.mxu0 0.0
    %5449 = vmatpush.msra.mxu0 0.0
    %5450 = vmatpush.msra.mxu0 0.0
    %5451 = vmatpush.msra.mxu0 0.0
    %5452 = vmatpush.msra.mxu0 0.0
    %5453 = vmatpush.msra.mxu0 0.0
    %5454 = vmatpush.msra.mxu0 0.0
    %5455 = vmatpush.msra.mxu0 0.0
    %5456 = vmatpush.msra.mxu0 %v4495
    %5457 = vmatmul.f32.gmra.mxu0 %v5439
    %v5458 = vpop.f32.mrf.mxu0
    %v5459 = vadd.f32 0.0, %v5458
    %5460 = vdwg.mxu0
    %v5462 = vsel %vm2025, %v5181, 0
    %5464 = vmatpush.msra.mxu0 0.0
    %5465 = vmatpush.msra.mxu0 0.0
    %5466 = vmatpush.msra.mxu0 0.0
    %5467 = vmatpush.msra.mxu0 0.0
    %5468 = vmatpush.msra.mxu0 0.0
    %5469 = vmatpush.msra.mxu0 0.0
    %5470 = vmatpush.msra.mxu0 0.0
    %5471 = vmatpush.msra.mxu0 0.0
    %5472 = vmatpush.msra.mxu0 0.0
    %5473 = vmatpush.msra.mxu0 0.0
    %5474 = vmatpush.msra.mxu0 0.0
    %5475 = vmatpush.msra.mxu0 0.0
    %5476 = vmatpush.msra.mxu0 0.0
    %5477 = vmatpush.msra.mxu0 0.0
    %5478 = vmatpush.msra.mxu0 0.0
    %5479 = vmatpush.msra.mxu0 %v4515
    %5480 = vmatmul.f32.gmra.mxu0 %v5462
    %v5481 = vpop.f32.mrf.mxu0
    %v5482 = vadd.f32 0.0, %v5481
    %5483 = vdwg.mxu0
    %v5485 = vsel %vm2025, %v5182, 0
    %5487 = vmatpush.msra.mxu0 0.0
    %5488 = vmatpush.msra.mxu0 0.0
    %5489 = vmatpush.msra.mxu0 0.0
    %5490 = vmatpush.msra.mxu0 0.0
    %5491 = vmatpush.msra.mxu0 0.0
    %5492 = vmatpush.msra.mxu0 0.0
    %5493 = vmatpush.msra.mxu0 0.0
    %5494 = vmatpush.msra.mxu0 0.0
    %5495 = vmatpush.msra.mxu0 0.0
    %5496 = vmatpush.msra.mxu0 0.0
    %5497 = vmatpush.msra.mxu0 0.0
    %5498 = vmatpush.msra.mxu0 0.0
    %5499 = vmatpush.msra.mxu0 0.0
    %5500 = vmatpush.msra.mxu0 0.0
    %5501 = vmatpush.msra.mxu0 0.0
    %5502 = vmatpush.msra.mxu0 %v4535
    %5503 = vmatmul.f32.gmra.mxu0 %v5485
    %v5504 = vpop.f32.mrf.mxu0
    %v5505 = vadd.f32 0.0, %v5504
    %5506 = vdwg.mxu0
    %v5508 = vsel %vm2025, %v5183, 0
    %5510 = vmatpush.msra.mxu0 0.0
    %5511 = vmatpush.msra.mxu0 0.0
    %5512 = vmatpush.msra.mxu0 0.0
    %5513 = vmatpush.msra.mxu0 0.0
    %5514 = vmatpush.msra.mxu0 0.0
    %5515 = vmatpush.msra.mxu0 0.0
    %5516 = vmatpush.msra.mxu0 0.0
    %5517 = vmatpush.msra.mxu0 0.0
    %5518 = vmatpush.msra.mxu0 0.0
    %5519 = vmatpush.msra.mxu0 0.0
    %5520 = vmatpush.msra.mxu0 0.0
    %5521 = vmatpush.msra.mxu0 0.0
    %5522 = vmatpush.msra.mxu0 0.0
    %5523 = vmatpush.msra.mxu0 0.0
    %5524 = vmatpush.msra.mxu0 0.0
    %5525 = vmatpush.msra.mxu0 %v4555
    %5526 = vmatmul.f32.gmra.mxu0 %v5508
    %v5527 = vpop.f32.mrf.mxu0
    %v5528 = vadd.f32 0.0, %v5527
    %5529 = vdwg.mxu0
    %v5531 = vsel %vm2025, %v5184, 0
    %5533 = vmatpush.msra.mxu0 0.0
    %5534 = vmatpush.msra.mxu0 0.0
    %5535 = vmatpush.msra.mxu0 0.0
    %5536 = vmatpush.msra.mxu0 0.0
    %5537 = vmatpush.msra.mxu0 0.0
    %5538 = vmatpush.msra.mxu0 0.0
    %5539 = vmatpush.msra.mxu0 0.0
    %5540 = vmatpush.msra.mxu0 0.0
    %5541 = vmatpush.msra.mxu0 0.0
    %5542 = vmatpush.msra.mxu0 0.0
    %5543 = vmatpush.msra.mxu0 0.0
    %5544 = vmatpush.msra.mxu0 0.0
    %5545 = vmatpush.msra.mxu0 0.0
    %5546 = vmatpush.msra.mxu0 0.0
    %5547 = vmatpush.msra.mxu0 0.0
    %5548 = vmatpush.msra.mxu0 %v4575
    %5549 = vmatmul.f32.gmra.mxu0 %v5531
    %v5550 = vpop.f32.mrf.mxu0
    %v5551 = vadd.f32 0.0, %v5550
    %5552 = vdwg.mxu0
    %v5553 = vld [vmem:[%s7] sm:$0xff]
    %v5554 = vld [vmem:[%s7 + $0x8] sm:$0xff]
    %v5555 = vld [vmem:[%s7 + $0x10] sm:$0xff]
    %v5556 = vld [vmem:[%s7 + $0x18] sm:$0xff]
    %v5557 = vld [vmem:[%s7 + $0x20] sm:$0xff]
    %v5558 = vld [vmem:[%s7 + $0x28] sm:$0xff]
    %v5559 = vld [vmem:[%s7 + $0x30] sm:$0xff]
    %v5560 = vld [vmem:[%s7 + $0x38] sm:$0xff]
    %v5561 = vld [vmem:[%s7 + $0x40] sm:$0xff]
    %v5562 = vld [vmem:[%s7 + $0x48] sm:$0xff]
    %v5563 = vld [vmem:[%s7 + $0x50] sm:$0xff]
    %v5564 = vld [vmem:[%s7 + $0x58] sm:$0xff]
    %v5565 = vld [vmem:[%s7 + $0x60] sm:$0xff]
    %v5566 = vld [vmem:[%s7 + $0x68] sm:$0xff]
    %v5567 = vld [vmem:[%s7 + $0x70] sm:$0xff]
    %v5568 = vld [vmem:[%s7 + $0x78] sm:$0xff]
    %v5570 = vsel %vm1592, %v5206, 0
    %5572 = vmatpush.msra.mxu0 0.0
    %5573 = vmatpush.msra.mxu0 0.0
    %5574 = vmatpush.msra.mxu0 0.0
    %5575 = vmatpush.msra.mxu0 0.0
    %5576 = vmatpush.msra.mxu0 0.0
    %5577 = vmatpush.msra.mxu0 0.0
    %5578 = vmatpush.msra.mxu0 0.0
    %5579 = vmatpush.msra.mxu0 0.0
    %5580 = vmatpush.msra.mxu0 0.0
    %5581 = vmatpush.msra.mxu0 0.0
    %5582 = vmatpush.msra.mxu0 0.0
    %5583 = vmatpush.msra.mxu0 0.0
    %5584 = vmatpush.msra.mxu0 0.0
    %5585 = vmatpush.msra.mxu0 0.0
    %5586 = vmatpush.msra.mxu0 %v5554
    %5587 = vmatpush.msra.mxu0 %v5553
    %5588 = vmatmul.f32.gmra.mxu0 %v5570
    %v5589 = vpop.f32.mrf.mxu0
    %v5590 = vadd.f32 0.0, %v5589
    %5591 = vdwg.mxu0
    %v5593 = vsel %vm1592, %v5229, 0
    %5595 = vmatpush.msra.mxu0 0.0
    %5596 = vmatpush.msra.mxu0 0.0
    %5597 = vmatpush.msra.mxu0 0.0
    %5598 = vmatpush.msra.mxu0 0.0
    %5599 = vmatpush.msra.mxu0 0.0
    %5600 = vmatpush.msra.mxu0 0.0
    %5601 = vmatpush.msra.mxu0 0.0
    %5602 = vmatpush.msra.mxu0 0.0
    %5603 = vmatpush.msra.mxu0 0.0
    %5604 = vmatpush.msra.mxu0 0.0
    %5605 = vmatpush.msra.mxu0 0.0
    %5606 = vmatpush.msra.mxu0 0.0
    %5607 = vmatpush.msra.mxu0 0.0
    %5608 = vmatpush.msra.mxu0 0.0
    %5609 = vmatpush.msra.mxu0 %v5556
    %5610 = vmatpush.msra.mxu0 %v5555
    %5611 = vmatmul.f32.gmra.mxu0 %v5593
    %v5612 = vpop.f32.mrf.mxu0
    %v5613 = vadd.f32 0.0, %v5612
    %5614 = vdwg.mxu0
    %v5616 = vsel %vm1592, %v5252, 0
    %5618 = vmatpush.msra.mxu0 0.0
    %5619 = vmatpush.msra.mxu0 0.0
    %5620 = vmatpush.msra.mxu0 0.0
    %5621 = vmatpush.msra.mxu0 0.0
    %5622 = vmatpush.msra.mxu0 0.0
    %5623 = vmatpush.msra.mxu0 0.0
    %5624 = vmatpush.msra.mxu0 0.0
    %5625 = vmatpush.msra.mxu0 0.0
    %5626 = vmatpush.msra.mxu0 0.0
    %5627 = vmatpush.msra.mxu0 0.0
    %5628 = vmatpush.msra.mxu0 0.0
    %5629 = vmatpush.msra.mxu0 0.0
    %5630 = vmatpush.msra.mxu0 0.0
    %5631 = vmatpush.msra.mxu0 0.0
    %5632 = vmatpush.msra.mxu0 %v5558
    %5633 = vmatpush.msra.mxu0 %v5557
    %5634 = vmatmul.f32.gmra.mxu0 %v5616
    %v5635 = vpop.f32.mrf.mxu0
    %v5636 = vadd.f32 0.0, %v5635
    %5637 = vdwg.mxu0
    %v5639 = vsel %vm1592, %v5275, 0
    %5641 = vmatpush.msra.mxu0 0.0
    %5642 = vmatpush.msra.mxu0 0.0
    %5643 = vmatpush.msra.mxu0 0.0
    %5644 = vmatpush.msra.mxu0 0.0
    %5645 = vmatpush.msra.mxu0 0.0
    %5646 = vmatpush.msra.mxu0 0.0
    %5647 = vmatpush.msra.mxu0 0.0
    %5648 = vmatpush.msra.mxu0 0.0
    %5649 = vmatpush.msra.mxu0 0.0
    %5650 = vmatpush.msra.mxu0 0.0
    %5651 = vmatpush.msra.mxu0 0.0
    %5652 = vmatpush.msra.mxu0 0.0
    %5653 = vmatpush.msra.mxu0 0.0
    %5654 = vmatpush.msra.mxu0 0.0
    %5655 = vmatpush.msra.mxu0 %v5560
    %5656 = vmatpush.msra.mxu0 %v5559
    %5657 = vmatmul.f32.gmra.mxu0 %v5639
    %v5658 = vpop.f32.mrf.mxu0
    %v5659 = vadd.f32 0.0, %v5658
    %5660 = vdwg.mxu0
    %v5662 = vsel %vm1592, %v5298, 0
    %5664 = vmatpush.msra.mxu0 0.0
    %5665 = vmatpush.msra.mxu0 0.0
    %5666 = vmatpush.msra.mxu0 0.0
    %5667 = vmatpush.msra.mxu0 0.0
    %5668 = vmatpush.msra.mxu0 0.0
    %5669 = vmatpush.msra.mxu0 0.0
    %5670 = vmatpush.msra.mxu0 0.0
    %5671 = vmatpush.msra.mxu0 0.0
    %5672 = vmatpush.msra.mxu0 0.0
    %5673 = vmatpush.msra.mxu0 0.0
    %5674 = vmatpush.msra.mxu0 0.0
    %5675 = vmatpush.msra.mxu0 0.0
    %5676 = vmatpush.msra.mxu0 0.0
    %5677 = vmatpush.msra.mxu0 0.0
    %5678 = vmatpush.msra.mxu0 %v5562
    %5679 = vmatpush.msra.mxu0 %v5561
    %5680 = vmatmul.f32.gmra.mxu0 %v5662
    %v5681 = vpop.f32.mrf.mxu0
    %v5682 = vadd.f32 0.0, %v5681
    %5683 = vdwg.mxu0
    %v5685 = vsel %vm1592, %v5321, 0
    %5687 = vmatpush.msra.mxu0 0.0
    %5688 = vmatpush.msra.mxu0 0.0
    %5689 = vmatpush.msra.mxu0 0.0
    %5690 = vmatpush.msra.mxu0 0.0
    %5691 = vmatpush.msra.mxu0 0.0
    %5692 = vmatpush.msra.mxu0 0.0
    %5693 = vmatpush.msra.mxu0 0.0
    %5694 = vmatpush.msra.mxu0 0.0
    %5695 = vmatpush.msra.mxu0 0.0
    %5696 = vmatpush.msra.mxu0 0.0
    %5697 = vmatpush.msra.mxu0 0.0
    %5698 = vmatpush.msra.mxu0 0.0
    %5699 = vmatpush.msra.mxu0 0.0
    %5700 = vmatpush.msra.mxu0 0.0
    %5701 = vmatpush.msra.mxu0 %v5564
    %5702 = vmatpush.msra.mxu0 %v5563
    %5703 = vmatmul.f32.gmra.mxu0 %v5685
    %v5704 = vpop.f32.mrf.mxu0
    %v5705 = vadd.f32 0.0, %v5704
    %5706 = vdwg.mxu0
    %v5708 = vsel %vm1592, %v5344, 0
    %5710 = vmatpush.msra.mxu0 0.0
    %5711 = vmatpush.msra.mxu0 0.0
    %5712 = vmatpush.msra.mxu0 0.0
    %5713 = vmatpush.msra.mxu0 0.0
    %5714 = vmatpush.msra.mxu0 0.0
    %5715 = vmatpush.msra.mxu0 0.0
    %5716 = vmatpush.msra.mxu0 0.0
    %5717 = vmatpush.msra.mxu0 0.0
    %5718 = vmatpush.msra.mxu0 0.0
    %5719 = vmatpush.msra.mxu0 0.0
    %5720 = vmatpush.msra.mxu0 0.0
    %5721 = vmatpush.msra.mxu0 0.0
    %5722 = vmatpush.msra.mxu0 0.0
    %5723 = vmatpush.msra.mxu0 0.0
    %5724 = vmatpush.msra.mxu0 %v5566
    %5725 = vmatpush.msra.mxu0 %v5565
    %5726 = vmatmul.f32.gmra.mxu0 %v5708
    %v5727 = vpop.f32.mrf.mxu0
    %v5728 = vadd.f32 0.0, %v5727
    %5729 = vdwg.mxu0
    %v5731 = vsel %vm1592, %v5367, 0
    %5733 = vmatpush.msra.mxu0 0.0
    %5734 = vmatpush.msra.mxu0 0.0
    %5735 = vmatpush.msra.mxu0 0.0
    %5736 = vmatpush.msra.mxu0 0.0
    %5737 = vmatpush.msra.mxu0 0.0
    %5738 = vmatpush.msra.mxu0 0.0
    %5739 = vmatpush.msra.mxu0 0.0
    %5740 = vmatpush.msra.mxu0 0.0
    %5741 = vmatpush.msra.mxu0 0.0
    %5742 = vmatpush.msra.mxu0 0.0
    %5743 = vmatpush.msra.mxu0 0.0
    %5744 = vmatpush.msra.mxu0 0.0
    %5745 = vmatpush.msra.mxu0 0.0
    %5746 = vmatpush.msra.mxu0 0.0
    %5747 = vmatpush.msra.mxu0 %v5568
    %5748 = vmatpush.msra.mxu0 %v5567
    %5749 = vmatmul.f32.gmra.mxu0 %v5731
    %v5750 = vpop.f32.mrf.mxu0
    %v5751 = vadd.f32 0.0, %v5750
    %5752 = vdwg.mxu0
    %v5754 = vsel %vm1592, %v5390, 0
    %5756 = vmatpush.msra.mxu0 0.0
    %5757 = vmatpush.msra.mxu0 0.0
    %5758 = vmatpush.msra.mxu0 0.0
    %5759 = vmatpush.msra.mxu0 0.0
    %5760 = vmatpush.msra.mxu0 0.0
    %5761 = vmatpush.msra.mxu0 0.0
    %5762 = vmatpush.msra.mxu0 0.0
    %5763 = vmatpush.msra.mxu0 0.0
    %5764 = vmatpush.msra.mxu0 0.0
    %5765 = vmatpush.msra.mxu0 0.0
    %5766 = vmatpush.msra.mxu0 0.0
    %5767 = vmatpush.msra.mxu0 0.0
    %5768 = vmatpush.msra.mxu0 0.0
    %5769 = vmatpush.msra.mxu0 0.0
    %5770 = vmatpush.msra.mxu0 %v5554
    %5771 = vmatpush.msra.mxu0 %v5553
    %5772 = vmatmul.f32.gmra.mxu0 %v5754
    %v5773 = vpop.f32.mrf.mxu0
    %v5774 = vadd.f32 0.0, %v5773
    %5775 = vdwg.mxu0
    %v5777 = vsel %vm1592, %v5413, 0
    %5779 = vmatpush.msra.mxu0 0.0
    %5780 = vmatpush.msra.mxu0 0.0
    %5781 = vmatpush.msra.mxu0 0.0
    %5782 = vmatpush.msra.mxu0 0.0
    %5783 = vmatpush.msra.mxu0 0.0
    %5784 = vmatpush.msra.mxu0 0.0
    %5785 = vmatpush.msra.mxu0 0.0
    %5786 = vmatpush.msra.mxu0 0.0
    %5787 = vmatpush.msra.mxu0 0.0
    %5788 = vmatpush.msra.mxu0 0.0
    %5789 = vmatpush.msra.mxu0 0.0
    %5790 = vmatpush.msra.mxu0 0.0
    %5791 = vmatpush.msra.mxu0 0.0
    %5792 = vmatpush.msra.mxu0 0.0
    %5793 = vmatpush.msra.mxu0 %v5556
    %5794 = vmatpush.msra.mxu0 %v5555
    %5795 = vmatmul.f32.gmra.mxu0 %v5777
    %v5796 = vpop.f32.mrf.mxu0
    %v5797 = vadd.f32 0.0, %v5796
    %5798 = vdwg.mxu0
    %v5800 = vsel %vm1592, %v5436, 0
    %5802 = vmatpush.msra.mxu0 0.0
    %5803 = vmatpush.msra.mxu0 0.0
    %5804 = vmatpush.msra.mxu0 0.0
    %5805 = vmatpush.msra.mxu0 0.0
    %5806 = vmatpush.msra.mxu0 0.0
    %5807 = vmatpush.msra.mxu0 0.0
    %5808 = vmatpush.msra.mxu0 0.0
    %5809 = vmatpush.msra.mxu0 0.0
    %5810 = vmatpush.msra.mxu0 0.0
    %5811 = vmatpush.msra.mxu0 0.0
    %5812 = vmatpush.msra.mxu0 0.0
    %5813 = vmatpush.msra.mxu0 0.0
    %5814 = vmatpush.msra.mxu0 0.0
    %5815 = vmatpush.msra.mxu0 0.0
    %5816 = vmatpush.msra.mxu0 %v5558
    %5817 = vmatpush.msra.mxu0 %v5557
    %5818 = vmatmul.f32.gmra.mxu0 %v5800
    %v5819 = vpop.f32.mrf.mxu0
    %v5820 = vadd.f32 0.0, %v5819
    %5821 = vdwg.mxu0
    %v5823 = vsel %vm1592, %v5459, 0
    %5825 = vmatpush.msra.mxu0 0.0
    %5826 = vmatpush.msra.mxu0 0.0
    %5827 = vmatpush.msra.mxu0 0.0
    %5828 = vmatpush.msra.mxu0 0.0
    %5829 = vmatpush.msra.mxu0 0.0
    %5830 = vmatpush.msra.mxu0 0.0
    %5831 = vmatpush.msra.mxu0 0.0
    %5832 = vmatpush.msra.mxu0 0.0
    %5833 = vmatpush.msra.mxu0 0.0
    %5834 = vmatpush.msra.mxu0 0.0
    %5835 = vmatpush.msra.mxu0 0.0
    %5836 = vmatpush.msra.mxu0 0.0
    %5837 = vmatpush.msra.mxu0 0.0
    %5838 = vmatpush.msra.mxu0 0.0
    %5839 = vmatpush.msra.mxu0 %v5560
    %5840 = vmatpush.msra.mxu0 %v5559
    %5841 = vmatmul.f32.gmra.mxu0 %v5823
    %v5842 = vpop.f32.mrf.mxu0
    %v5843 = vadd.f32 0.0, %v5842
    %5844 = vdwg.mxu0
    %v5846 = vsel %vm1592, %v5482, 0
    %5848 = vmatpush.msra.mxu0 0.0
    %5849 = vmatpush.msra.mxu0 0.0
    %5850 = vmatpush.msra.mxu0 0.0
    %5851 = vmatpush.msra.mxu0 0.0
    %5852 = vmatpush.msra.mxu0 0.0
    %5853 = vmatpush.msra.mxu0 0.0
    %5854 = vmatpush.msra.mxu0 0.0
    %5855 = vmatpush.msra.mxu0 0.0
    %5856 = vmatpush.msra.mxu0 0.0
    %5857 = vmatpush.msra.mxu0 0.0
    %5858 = vmatpush.msra.mxu0 0.0
    %5859 = vmatpush.msra.mxu0 0.0
    %5860 = vmatpush.msra.mxu0 0.0
    %5861 = vmatpush.msra.mxu0 0.0
    %5862 = vmatpush.msra.mxu0 %v5562
    %5863 = vmatpush.msra.mxu0 %v5561
    %5864 = vmatmul.f32.gmra.mxu0 %v5846
    %v5865 = vpop.f32.mrf.mxu0
    %v5866 = vadd.f32 0.0, %v5865
    %5867 = vdwg.mxu0
    %v5869 = vsel %vm1592, %v5505, 0
    %5871 = vmatpush.msra.mxu0 0.0
    %5872 = vmatpush.msra.mxu0 0.0
    %5873 = vmatpush.msra.mxu0 0.0
    %5874 = vmatpush.msra.mxu0 0.0
    %5875 = vmatpush.msra.mxu0 0.0
    %5876 = vmatpush.msra.mxu0 0.0
    %5877 = vmatpush.msra.mxu0 0.0
    %5878 = vmatpush.msra.mxu0 0.0
    %5879 = vmatpush.msra.mxu0 0.0
    %5880 = vmatpush.msra.mxu0 0.0
    %5881 = vmatpush.msra.mxu0 0.0
    %5882 = vmatpush.msra.mxu0 0.0
    %5883 = vmatpush.msra.mxu0 0.0
    %5884 = vmatpush.msra.mxu0 0.0
    %5885 = vmatpush.msra.mxu0 %v5564
    %5886 = vmatpush.msra.mxu0 %v5563
    %5887 = vmatmul.f32.gmra.mxu0 %v5869
    %v5888 = vpop.f32.mrf.mxu0
    %v5889 = vadd.f32 0.0, %v5888
    %5890 = vdwg.mxu0
    %v5892 = vsel %vm1592, %v5528, 0
    %5894 = vmatpush.msra.mxu0 0.0
    %5895 = vmatpush.msra.mxu0 0.0
    %5896 = vmatpush.msra.mxu0 0.0
    %5897 = vmatpush.msra.mxu0 0.0
    %5898 = vmatpush.msra.mxu0 0.0
    %5899 = vmatpush.msra.mxu0 0.0
    %5900 = vmatpush.msra.mxu0 0.0
    %5901 = vmatpush.msra.mxu0 0.0
    %5902 = vmatpush.msra.mxu0 0.0
    %5903 = vmatpush.msra.mxu0 0.0
    %5904 = vmatpush.msra.mxu0 0.0
    %5905 = vmatpush.msra.mxu0 0.0
    %5906 = vmatpush.msra.mxu0 0.0
    %5907 = vmatpush.msra.mxu0 0.0
    %5908 = vmatpush.msra.mxu0 %v5566
    %5909 = vmatpush.msra.mxu0 %v5565
    %5910 = vmatmul.f32.gmra.mxu0 %v5892
    %v5911 = vpop.f32.mrf.mxu0
    %v5912 = vadd.f32 0.0, %v5911
    %5913 = vdwg.mxu0
    %v5915 = vsel %vm1592, %v5551, 0
    %5917 = vmatpush.msra.mxu0 0.0
    %5918 = vmatpush.msra.mxu0 0.0
    %5919 = vmatpush.msra.mxu0 0.0
    %5920 = vmatpush.msra.mxu0 0.0
    %5921 = vmatpush.msra.mxu0 0.0
    %5922 = vmatpush.msra.mxu0 0.0
    %5923 = vmatpush.msra.mxu0 0.0
    %5924 = vmatpush.msra.mxu0 0.0
    %5925 = vmatpush.msra.mxu0 0.0
    %5926 = vmatpush.msra.mxu0 0.0
    %5927 = vmatpush.msra.mxu0 0.0
    %5928 = vmatpush.msra.mxu0 0.0
    %5929 = vmatpush.msra.mxu0 0.0
    %5930 = vmatpush.msra.mxu0 0.0
    %5931 = vmatpush.msra.mxu0 %v5568
    %5932 = vmatpush.msra.mxu0 %v5567
    %5933 = vmatmul.f32.gmra.mxu0 %v5915
    %v5934 = vpop.f32.mrf.mxu0
    %v5935 = vadd.f32 0.0, %v5934
    %5936 = vdwg.mxu0
    %v5937 = vadd.f32 %v5590, %v5613
    %v5938 = vadd.f32 %v5937, %v5636
    %v5939 = vadd.f32 %v5938, %v5659
    %v5940 = vadd.f32 %v5939, %v5682
    %v5941 = vadd.f32 %v5940, %v5705
    %v5942 = vadd.f32 %v5941, %v5728
    %v5943 = vadd.f32 %v5942, %v5751
    %v5944 = vadd.f32 %v5774, %v5797
    %v5945 = vadd.f32 %v5944, %v5820
    %v5946 = vadd.f32 %v5945, %v5843
    %v5947 = vadd.f32 %v5946, %v5866
    %v5948 = vadd.f32 %v5947, %v5889
    %v5949 = vadd.f32 %v5948, %v5912
    %v5950 = vadd.f32 %v5949, %v5935
    %v5951 = vld [vmem:[%s9] sm:$0x1]
    %v5953 = vperm.slane %v5951, 0
    %v5955 = vadd.f32 %v5943, %v5953
    %v5956 = vadd.f32 %v5950, %v5953
    %v5957 = vadd.f32 %v5955, %v3035
    %v5958 = vadd.f32 %v5956, %v3036
    %s5959 = scalar_lea.vmem %s9, 1
    %v5960 = vld [vmem:[%s5959] sm:$0x1]
    %s5961 = scalar_lea.vmem %s9, 2
    %v5962 = vld [vmem:[%s5961] sm:$0x1]
    %5963 = vadd.xlane.f32.xlu0 %v5957
    %v5964 = vpop.xlane.xlu0 %5963
    %5965 = vadd.xlane.f32.xlu0 %v5958
    %v5966 = vpop.xlane.xlu0 %5965
    %v5967 = vmul.f32 %v5964, %v2990
    %v5968 = vmul.f32 %v5966, %v2990
    %v5969 = vsub.f32 %v5957, %v5967
    %v5970 = vsub.f32 %v5958, %v5968
    %v5971 = vmul.f32 %v5969, %v5969
    %v5972 = vmul.f32 %v5970, %v5970
    %5973 = vadd.xlane.f32.xlu0 %v5971
    %v5974 = vpop.xlane.xlu0 %5973
    %5975 = vadd.xlane.f32.xlu0 %v5972
    %v5976 = vpop.xlane.xlu0 %5975
    %v5977 = vmul.f32 %v5974, %v2990
    %v5978 = vmul.f32 %v5976, %v2990
    %v5979 = vadd.f32 %v5977, 1e-05
    %v5980 = vadd.f32 %v5978, 1e-05
    %v5981 = vrsqrt.pop %v5979
    %v5982 = vmul.f32 %v5981, %v5979
    %v5983 = vmul.f32 %v5982, %v5981
    %v5984 = vmul.f32 0.5, %v5983
    %v5985 = vsub.f32 1.5, %v5984
    %v5986 = vmul.f32 %v5981, %v5985
    %vm5987 = vweird.f32 %v5979
    %vm5988 = vweird.f32 %v5981
    %vm5989 = vmor %vm5987, %vm5988
    %v5990 = vsel %vm5989, %v5981, %v5986
    %v5991 = vrsqrt.pop %v5980
    %v5992 = vmul.f32 %v5991, %v5980
    %v5993 = vmul.f32 %v5992, %v5991
    %v5994 = vmul.f32 0.5, %v5993
    %v5995 = vsub.f32 1.5, %v5994
    %v5996 = vmul.f32 %v5991, %v5995
    %vm5997 = vweird.f32 %v5980
    %vm5998 = vweird.f32 %v5991
    %vm5999 = vmor %vm5997, %vm5998
    %v6000 = vsel %vm5999, %v5991, %v5996
    %v6001 = vmul.f32 %v5969, %v5990
    %v6002 = vmul.f32 %v5970, %v6000
    %v6004 = vperm.slane %v5960, 0
    %v6006 = vmul.f32 %v6001, %v6004
    %v6007 = vmul.f32 %v6002, %v6004
    %v6009 = vperm.slane %v5962, 0
    %v6011 = vadd.f32 %v6006, %v6009
    %v6012 = vadd.f32 %v6007, %v6009
    %v6013 = vld [vmem:[%s10] sm:$0xff]
    %v6014 = vld [vmem:[%s10 + $0x8] sm:$0xff]
    %v6015 = vld [vmem:[%s10 + $0x10] sm:$0xff]
    %v6016 = vld [vmem:[%s10 + $0x18] sm:$0xff]
    %v6017 = vld [vmem:[%s10 + $0x20] sm:$0xff]
    %v6018 = vld [vmem:[%s10 + $0x28] sm:$0xff]
    %v6019 = vld [vmem:[%s10 + $0x30] sm:$0xff]
    %v6020 = vld [vmem:[%s10 + $0x38] sm:$0xff]
    %v6021 = vld [vmem:[%s10 + $0x40] sm:$0xff]
    %v6022 = vld [vmem:[%s10 + $0x48] sm:$0xff]
    %v6023 = vld [vmem:[%s10 + $0x50] sm:$0xff]
    %v6024 = vld [vmem:[%s10 + $0x58] sm:$0xff]
    %v6025 = vld [vmem:[%s10 + $0x60] sm:$0xff]
    %v6026 = vld [vmem:[%s10 + $0x68] sm:$0xff]
    %v6027 = vld [vmem:[%s10 + $0x70] sm:$0xff]
    %v6028 = vld [vmem:[%s10 + $0x78] sm:$0xff]
    %v6029 = vld [vmem:[%s10 + $0x80] sm:$0xff]
    %v6030 = vld [vmem:[%s10 + $0x88] sm:$0xff]
    %v6031 = vld [vmem:[%s10 + $0x90] sm:$0xff]
    %v6032 = vld [vmem:[%s10 + $0x98] sm:$0xff]
    %v6033 = vld [vmem:[%s10 + $0xa0] sm:$0xff]
    %v6034 = vld [vmem:[%s10 + $0xa8] sm:$0xff]
    %v6035 = vld [vmem:[%s10 + $0xb0] sm:$0xff]
    %v6036 = vld [vmem:[%s10 + $0xb8] sm:$0xff]
    %v6037 = vld [vmem:[%s10 + $0xc0] sm:$0xff]
    %v6038 = vld [vmem:[%s10 + $0xc8] sm:$0xff]
    %v6039 = vld [vmem:[%s10 + $0xd0] sm:$0xff]
    %v6040 = vld [vmem:[%s10 + $0xd8] sm:$0xff]
    %v6041 = vld [vmem:[%s10 + $0xe0] sm:$0xff]
    %v6042 = vld [vmem:[%s10 + $0xe8] sm:$0xff]
    %v6043 = vld [vmem:[%s10 + $0xf0] sm:$0xff]
    %v6044 = vld [vmem:[%s10 + $0xf8] sm:$0xff]
    %v6045 = vld [vmem:[%s11] sm:$0x3]
    %v6047 = vperm.slane %v6045, 0
    %v6048 = vperm.slane %v6045, 1
    %6051 = vmatpush.msra.mxu0 %v6043
    %6052 = vmatpush.msra.mxu0 %v6041
    %6053 = vmatpush.msra.mxu0 %v6039
    %6054 = vmatpush.msra.mxu0 %v6037
    %6055 = vmatpush.msra.mxu0 %v6035
    %6056 = vmatpush.msra.mxu0 %v6033
    %6057 = vmatpush.msra.mxu0 %v6031
    %6058 = vmatpush.msra.mxu0 %v6029
    %6059 = vmatpush.msra.mxu0 %v6027
    %6060 = vmatpush.msra.mxu0 %v6025
    %6061 = vmatpush.msra.mxu0 %v6023
    %6062 = vmatpush.msra.mxu0 %v6021
    %6063 = vmatpush.msra.mxu0 %v6019
    %6064 = vmatpush.msra.mxu0 %v6017
    %6065 = vmatpush.msra.mxu0 %v6015
    %6066 = vmatpush.msra.mxu0 %v6013
    %6067 = vmatmul.f32.gmra.mxu0 %v6011
    %v6068 = vpop.f32.mrf.mxu0
    %v6069 = vadd.f32 %v6047, %v6068
    %6070 = vmatmul.f32.gmra.mxu0 %v6012
    %v6071 = vpop.f32.mrf.mxu0
    %v6072 = vadd.f32 %v6047, %v6071
    %6073 = vdwg.mxu0
    %6074 = vmatpush.msra.mxu0 %v6044
    %6075 = vmatpush.msra.mxu0 %v6042
    %6076 = vmatpush.msra.mxu0 %v6040
    %6077 = vmatpush.msra.mxu0 %v6038
    %6078 = vmatpush.msra.mxu0 %v6036
    %6079 = vmatpush.msra.mxu0 %v6034
    %6080 = vmatpush.msra.mxu0 %v6032
    %6081 = vmatpush.msra.mxu0 %v6030
    %6082 = vmatpush.msra.mxu0 %v6028
    %6083 = vmatpush.msra.mxu0 %v6026
    %6084 = vmatpush.msra.mxu0 %v6024
    %6085 = vmatpush.msra.mxu0 %v6022
    %6086 = vmatpush.msra.mxu0 %v6020
    %6087 = vmatpush.msra.mxu0 %v6018
    %6088 = vmatpush.msra.mxu0 %v6016
    %6089 = vmatpush.msra.mxu0 %v6014
    %6090 = vmatmul.f32.gmra.mxu0 %v6011
    %v6091 = vpop.f32.mrf.mxu0
    %v6092 = vadd.f32 %v6048, %v6091
    %6093 = vmatmul.f32.gmra.mxu0 %v6012
    %v6094 = vpop.f32.mrf.mxu0
    %v6095 = vadd.f32 %v6048, %v6094
    %6096 = vdwg.mxu0
    %v6097 = vmax.f32 %v6069, 0.0
    %v6098 = vmax.f32 %v6092, 0.0
    %v6099 = vmax.f32 %v6072, 0.0
    %v6100 = vmax.f32 %v6095, 0.0
    %v6101 = vld [vmem:[%s12] sm:$0xff]
    %v6102 = vld [vmem:[%s12 + $0x8] sm:$0xff]
    %v6103 = vld [vmem:[%s12 + $0x10] sm:$0xff]
    %v6104 = vld [vmem:[%s12 + $0x18] sm:$0xff]
    %v6105 = vld [vmem:[%s12 + $0x20] sm:$0xff]
    %v6106 = vld [vmem:[%s12 + $0x28] sm:$0xff]
    %v6107 = vld [vmem:[%s12 + $0x30] sm:$0xff]
    %v6108 = vld [vmem:[%s12 + $0x38] sm:$0xff]
    %v6109 = vld [vmem:[%s12 + $0x40] sm:$0xff]
    %v6110 = vld [vmem:[%s12 + $0x48] sm:$0xff]
    %v6111 = vld [vmem:[%s12 + $0x50] sm:$0xff]
    %v6112 = vld [vmem:[%s12 + $0x58] sm:$0xff]
    %v6113 = vld [vmem:[%s12 + $0x60] sm:$0xff]
    %v6114 = vld [vmem:[%s12 + $0x68] sm:$0xff]
    %v6115 = vld [vmem:[%s12 + $0x70] sm:$0xff]
    %v6116 = vld [vmem:[%s12 + $0x78] sm:$0xff]
    %v6117 = vld [vmem:[%s12 + $0x80] sm:$0xff]
    %v6118 = vld [vmem:[%s12 + $0x88] sm:$0xff]
    %v6119 = vld [vmem:[%s12 + $0x90] sm:$0xff]
    %v6120 = vld [vmem:[%s12 + $0x98] sm:$0xff]
    %v6121 = vld [vmem:[%s12 + $0xa0] sm:$0xff]
    %v6122 = vld [vmem:[%s12 + $0xa8] sm:$0xff]
    %v6123 = vld [vmem:[%s12 + $0xb0] sm:$0xff]
    %v6124 = vld [vmem:[%s12 + $0xb8] sm:$0xff]
    %v6125 = vld [vmem:[%s12 + $0xc0] sm:$0xff]
    %v6126 = vld [vmem:[%s12 + $0xc8] sm:$0xff]
    %v6127 = vld [vmem:[%s12 + $0xd0] sm:$0xff]
    %v6128 = vld [vmem:[%s12 + $0xd8] sm:$0xff]
    %v6129 = vld [vmem:[%s12 + $0xe0] sm:$0xff]
    %v6130 = vld [vmem:[%s12 + $0xe8] sm:$0xff]
    %v6131 = vld [vmem:[%s12 + $0xf0] sm:$0xff]
    %v6132 = vld [vmem:[%s12 + $0xf8] sm:$0xff]
    %v6133 = vld [vmem:[%s13] sm:$0x1]
    %v6135 = vperm.slane %v6133, 0
    %6137 = vmatpush.msra.mxu0 %v6116
    %6138 = vmatpush.msra.mxu0 %v6115
    %6139 = vmatpush.msra.mxu0 %v6114
    %6140 = vmatpush.msra.mxu0 %v6113
    %6141 = vmatpush.msra.mxu0 %v6112
    %6142 = vmatpush.msra.mxu0 %v6111
    %6143 = vmatpush.msra.mxu0 %v6110
    %6144 = vmatpush.msra.mxu0 %v6109
    %6145 = vmatpush.msra.mxu0 %v6108
    %6146 = vmatpush.msra.mxu0 %v6107
    %6147 = vmatpush.msra.mxu0 %v6106
    %6148 = vmatpush.msra.mxu0 %v6105
    %6149 = vmatpush.msra.mxu0 %v6104
    %6150 = vmatpush.msra.mxu0 %v6103
    %6151 = vmatpush.msra.mxu0 %v6102
    %6152 = vmatpush.msra.mxu0 %v6101
    %6153 = vmatmul.f32.gmra.mxu0 %v6097
    %v6154 = vpop.f32.mrf.mxu0
    %v6155 = vadd.f32 %v6135, %v6154
    %6156 = vmatmul.f32.gmra.mxu0 %v6099
    %v6157 = vpop.f32.mrf.mxu0
    %v6158 = vadd.f32 %v6135, %v6157
    %6159 = vdwg.mxu0
    %6160 = vmatpush.msra.mxu0 %v6132
    %6161 = vmatpush.msra.mxu0 %v6131
    %6162 = vmatpush.msra.mxu0 %v6130
    %6163 = vmatpush.msra.mxu0 %v6129
    %6164 = vmatpush.msra.mxu0 %v6128
    %6165 = vmatpush.msra.mxu0 %v6127
    %6166 = vmatpush.msra.mxu0 %v6126
    %6167 = vmatpush.msra.mxu0 %v6125
    %6168 = vmatpush.msra.mxu0 %v6124
    %6169 = vmatpush.msra.mxu0 %v6123
    %6170 = vmatpush.msra.mxu0 %v6122
    %6171 = vmatpush.msra.mxu0 %v6121
    %6172 = vmatpush.msra.mxu0 %v6120
    %6173 = vmatpush.msra.mxu0 %v6119
    %6174 = vmatpush.msra.mxu0 %v6118
    %6175 = vmatpush.msra.mxu0 %v6117
    %6176 = vmatmul.f32.gmra.mxu0 %v6098
    %v6177 = vpop.f32.mrf.mxu0
    %v6178 = vadd.f32 %v6155, %v6177
    %6179 = vmatmul.f32.gmra.mxu0 %v6100
    %v6180 = vpop.f32.mrf.mxu0
    %v6181 = vadd.f32 %v6158, %v6180
    %6182 = vdwg.mxu0
    %v6183 = vadd.f32 %v6178, %v6011
    %v6184 = vadd.f32 %v6181, %v6012
    %s6185 = scalar_lea.vmem %s13, 1
    %v6186 = vld [vmem:[%s6185] sm:$0x1]
    %s6187 = scalar_lea.vmem %s13, 2
    %v6188 = vld [vmem:[%s6187] sm:$0x1]
    %6189 = vadd.xlane.f32.xlu0 %v6183
    %v6190 = vpop.xlane.xlu0 %6189
    %6191 = vadd.xlane.f32.xlu0 %v6184
    %v6192 = vpop.xlane.xlu0 %6191
    %v6193 = vmul.f32 %v6190, %v2990
    %v6194 = vmul.f32 %v6192, %v2990
    %v6195 = vsub.f32 %v6183, %v6193
    %v6196 = vsub.f32 %v6184, %v6194
    %v6197 = vmul.f32 %v6195, %v6195
    %v6198 = vmul.f32 %v6196, %v6196
    %6199 = vadd.xlane.f32.xlu0 %v6197
    %v6200 = vpop.xlane.xlu0 %6199
    %6201 = vadd.xlane.f32.xlu0 %v6198
    %v6202 = vpop.xlane.xlu0 %6201
    %v6203 = vmul.f32 %v6200, %v2990
    %v6204 = vmul.f32 %v6202, %v2990
    %v6205 = vadd.f32 %v6203, 1e-05
    %v6206 = vadd.f32 %v6204, 1e-05
    %v6207 = vrsqrt.pop %v6205
    %v6208 = vmul.f32 %v6207, %v6205
    %v6209 = vmul.f32 %v6208, %v6207
    %v6210 = vmul.f32 0.5, %v6209
    %v6211 = vsub.f32 1.5, %v6210
    %v6212 = vmul.f32 %v6207, %v6211
    %vm6213 = vweird.f32 %v6205
    %vm6214 = vweird.f32 %v6207
    %vm6215 = vmor %vm6213, %vm6214
    %v6216 = vsel %vm6215, %v6207, %v6212
    %v6217 = vrsqrt.pop %v6206
    %v6218 = vmul.f32 %v6217, %v6206
    %v6219 = vmul.f32 %v6218, %v6217
    %v6220 = vmul.f32 0.5, %v6219
    %v6221 = vsub.f32 1.5, %v6220
    %v6222 = vmul.f32 %v6217, %v6221
    %vm6223 = vweird.f32 %v6206
    %vm6224 = vweird.f32 %v6217
    %vm6225 = vmor %vm6223, %vm6224
    %v6226 = vsel %vm6225, %v6217, %v6222
    %v6227 = vmul.f32 %v6195, %v6216
    %v6228 = vmul.f32 %v6196, %v6226
    %v6230 = vperm.slane %v6186, 0
    %v6232 = vmul.f32 %v6227, %v6230
    %v6233 = vmul.f32 %v6228, %v6230
    %v6235 = vperm.slane %v6188, 0
    %v6237 = vadd.f32 %v6232, %v6235
    %v6238 = vadd.f32 %v6233, %v6235
    %6239 = vst [vmem:[#allocation2] sm:$0xff] %v6237
    %6240 = vst [vmem:[#allocation2 + $0x8] sm:$0xff] %v6238
    // Predicated region
    $region58: #{decoder_layer.1} parent=1 // pred_check
      _
    $region59: #{decoder_layer.1} parent=1 // pred_check_branch
      %6242 = sbr.rel (0) target = $region61
    $region60: #{decoder_layer.1} parent=1 // pred_region
      %6244 = vsyncadd [#allocation3], 0
      %s6245 = sshll.u32 [#allocation2], 4
      %s6246 = int_to_ptr.vmem [resolvable:$true] %s6245
      %s6247 = sshll.u32 %s14, 4
      %s6248 = int_to_ptr.hbm [resolvable:$true] %s6247
      %6253 = dma.vmem_to_hbm [thread:$0]  %s6246, 256, %s6248, [#allocation3], 128, 128, 8
    $region61: #{decoder_layer.1} parent=1 // pred_fallthru
      _
    // Predicated region
    $region62: #{decoder_layer.1} parent=1 // pred_check
      _
    $region63: #{decoder_layer.1} parent=1 // pred_check_branch
      %6255 = sbr.rel (0) target = $region65
    $region64: #{decoder_layer.1} parent=1 // pred_region
      %6257 = dma.done [#allocation3], 256
    $region65: #{decoder_layer.1} parent=1 // pred_fallthru
      _
    %6258 = vsyncpa [#allocation3], 1

</llo_original>
